<compile_context>
chip_gen: v7x
topology: tpu7x:2x2x1
jax: 0.10.0
libtpu: 0.0.40
codegen_flags: <defaults>
</compile_context>

<pallas_src>
import functools

import jax
import jax.numpy as jnp
from jax.experimental import pallas as pl
from jax.experimental.pallas import tpu as pltpu

BN_EPS = 1e-5
_FUSED_VMEM_BUDGET = 40 * 1024 * 1024   # stay under the 48 MiB scoped limit


def _align8(x):
    return (x + 7) // 8 * 8


# ----------------------------------------------------------------------------
# Fused kernel: conv1+BN+ReLU -> conv2+BN+ReLU -> conv3+BN+ReLU, one image per
# grid step, all intermediates in VMEM scratch slabs.
# ----------------------------------------------------------------------------
def _fused_kernel(x_ref, m_ref, w1_ref, b1_ref, w2_ref, b2_ref, w3_ref, b3_ref,
                  o_ref, slab_a, slab_b,
                  *, kernels, pads, wp, out_rows, s_in, s_scr):
    """x_ref : (1, rows_in, Cin) bf16  zero-padded, flattened input slab
    m_ref  : (out_rows, 1)      f32   1.0 where the padded column < W else 0.0
    w*_ref : (k*k, Cin_l, D)    bf16  BN scale folded in
    b*_ref : (1, D)             f32   conv bias + BN shift folded
    o_ref  : (1, out_rows, D)   bf16  rows are (h, padded-w); valid cols < W
    slab_a/b: (slab_rows, D)    bf16  padded-flattened intermediate activations
    """
    mask = m_ref[...]                                  # (out_rows, 1)

    def conv(load, w_ref, b_ref, k, p, base):
        acc = jnp.zeros((out_rows, w_ref.shape[-1]), jnp.float32)
        # Window offset (dy, dx) is a contiguous row slice of the flattened
        # padded slab starting at base + (dy-p)*Wp + (dx-p): one MXU matmul.
        for dy in range(k):
            for dx in range(k):
                off = base + (dy - p) * wp + (dx - p)
                acc = acc + jnp.dot(load(off), w_ref[dy * k + dx],
                                    preferred_element_type=jnp.float32)
        return jnp.maximum(acc + b_ref[...], 0.0)

    k1, k2, k3 = kernels
    p1, p2, p3 = pads

    # ---- stage 1: HBM-pipelined input slab -> slab_a ----------------------
    y1 = conv(lambda off: x_ref[0, pl.ds(off, out_rows), :],
              w1_ref, b1_ref, k1, p1, s_in)
    slab_a[...] = jnp.zeros_like(slab_a)               # zero halos
    slab_a[pl.ds(s_scr, out_rows), :] = (y1 * mask).astype(slab_a.dtype)

    # ---- stage 2: slab_a -> slab_b -----------------------------------------
    y2 = conv(lambda off: slab_a[pl.ds(off, out_rows), :],
              w2_ref, b2_ref, k2, p2, s_scr)
    slab_b[...] = jnp.zeros_like(slab_b)
    slab_b[pl.ds(s_scr, out_rows), :] = (y2 * mask).astype(slab_b.dtype)

    # ---- stage 3: slab_b -> output ------------------------------------------
    y3 = conv(lambda off: slab_b[pl.ds(off, out_rows), :],
              w3_ref, b3_ref, k3, p3, s_scr)
    o_ref[0] = y3.astype(o_ref.dtype)


def _fused_geometry(h, w_img, kernels):
    pads = tuple((k - 1) // 2 for k in kernels)
    big_pad = max(pads)
    wp = w_img + 2 * big_pad
    rows_in = (h + 2 * big_pad + 1) * wp            # +1 row keeps last window in-bounds
    out_rows = h * wp
    s_in = big_pad * wp + big_pad                   # interior start in input slab
    s_scr = _align8(s_in)                           # sublane-aligned interior in scratch
    slab_rows = _align8(s_scr + (h + big_pad) * wp + big_pad + 1)
    return pads, big_pad, wp, rows_in, out_rows, s_in, s_scr, slab_rows


def _fused_vmem_estimate(x_nhwc_shape, params):
    n, h, w_img, cin = x_nhwc_shape
    depth = params[0]["b"].shape[-1]
    kernels = tuple(p["kernel"] for p in params)
    _, _, _, rows_in, out_rows, _, _, slab_rows = _fused_geometry(h, w_img, kernels)
    total = 0
    total += 2 * rows_in * cin * 2                  # input slab (double-buffered)
    total += 2 * out_rows * depth * 2               # output block (double-buffered)
    total += 2 * slab_rows * depth * 2              # two scratch slabs
    total += 2 * out_rows * 4                       # width mask
    for p in params:
        total += 2 * (p["w"].size * 2 + p["b"].size * 4)
    total += 6 * out_rows * depth * 4               # live f32 temps (acc / y / store)
    return total


def feature_extraction_fused(x_nhwc, params):
    """x_nhwc: (N, H, W, Cin) bf16.  Returns (N, H, W, depth) bf16."""
    n, h, w_img, cin = x_nhwc.shape
    depth = params[0]["b"].shape[-1]
    kernels = tuple(p["kernel"] for p in params)
    for k in kernels:
        assert k % 2 == 1, "stride-1 'same' conv assumes odd kernel size"
    (pads, big_pad, wp, rows_in, out_rows,
     s_in, s_scr, slab_rows) = _fused_geometry(h, w_img, kernels)

    # Single spatial zero-pad + free flatten for the whole module.
    xp = jnp.pad(x_nhwc, ((0, 0), (big_pad, big_pad + 1),
                          (big_pad, big_pad), (0, 0)))
    xf = xp.reshape(n, rows_in, cin)

    # 1.0 where the padded column index is a real image column, else 0.0.
    mask = jnp.tile((jnp.arange(wp) < w_img).astype(jnp.float32), h)
    mask = mask.reshape(out_rows, 1)

    kern = functools.partial(_fused_kernel, kernels=kernels, pads=pads,
                             wp=wp, out_rows=out_rows, s_in=s_in, s_scr=s_scr)
    of = pl.pallas_call(
        kern,
        out_shape=jax.ShapeDtypeStruct((n, out_rows, depth), jnp.bfloat16),
        grid_spec=pltpu.PrefetchScalarGridSpec(
            num_scalar_prefetch=0,
            grid=(n,),
            in_specs=[
                pl.BlockSpec((1, rows_in, cin), lambda i: (i, 0, 0)),
                pl.BlockSpec((out_rows, 1), lambda i: (0, 0)),
                pl.BlockSpec(params[0]["w"].shape, lambda i: (0, 0, 0)),
                pl.BlockSpec((1, depth), lambda i: (0, 0)),
                pl.BlockSpec(params[1]["w"].shape, lambda i: (0, 0, 0)),
                pl.BlockSpec((1, depth), lambda i: (0, 0)),
                pl.BlockSpec(params[2]["w"].shape, lambda i: (0, 0, 0)),
                pl.BlockSpec((1, depth), lambda i: (0, 0)),
            ],
            out_specs=pl.BlockSpec((1, out_rows, depth), lambda i: (i, 0, 0)),
            scratch_shapes=[pltpu.VMEM((slab_rows, depth), jnp.bfloat16),
                            pltpu.VMEM((slab_rows, depth), jnp.bfloat16)],
        ),
        compiler_params=pltpu.CompilerParams(
            dimension_semantics=("parallel",),
            vmem_limit_bytes=48 * 1024 * 1024),
    )(xf, mask,
      params[0]["w"], params[0]["b"],
      params[1]["w"], params[1]["b"],
      params[2]["w"], params[2]["b"])

    # Row r = h*Wp + w; keep the first W columns of each row group.
    return of.reshape(n, h, wp, depth)[:, :, :w_img, :]


# ----------------------------------------------------------------------------
# Fallback path: one Pallas kernel per stage (proven, Cout-tiled).
# ----------------------------------------------------------------------------
def _conv_bn_relu_kernel(x_ref, w_ref, b_ref, o_ref, *, kh, kw, wp, out_rows):
    tn = w_ref.shape[-1]
    acc = jnp.zeros((out_rows, tn), jnp.float32)
    for dy in range(kh):
        for dx in range(kw):
            xs = x_ref[0, pl.ds(dy * wp + dx, out_rows), :]
            acc = acc + jnp.dot(xs, w_ref[dy * kw + dx],
                                preferred_element_type=jnp.float32)
    out = jnp.maximum(acc + b_ref[...], 0.0)
    o_ref[0] = out.astype(o_ref.dtype)


def _pick_tn(cout):
    if cout % 256 == 0 and cout >= 512:
        return 256
    if cout % 128 == 0 and cout >= 256:
        return 128
    return cout


def conv_bn_relu(x, w, b, *, kernel):
    n, h, wdt, cin = x.shape
    kk, _, cout = w.shape
    assert kernel % 2 == 1
    p = (kernel - 1) // 2
    wp = wdt + 2 * p
    xp = jnp.pad(x, ((0, 0), (p, p + 1), (p, p), (0, 0)))
    rows_in = (h + 2 * p + 1) * wp
    xf = xp.reshape(n, rows_in, cin)
    out_rows = h * wp
    tn = _pick_tn(cout)

    kern = functools.partial(_conv_bn_relu_kernel, kh=kernel, kw=kernel,
                             wp=wp, out_rows=out_rows)
    of = pl.pallas_call(
        kern,
        out_shape=jax.ShapeDtypeStruct((n, out_rows, cout), jnp.bfloat16),
        grid_spec=pltpu.PrefetchScalarGridSpec(
            num_scalar_prefetch=0,
            grid=(n, cout // tn),
            in_specs=[
                pl.BlockSpec((1, rows_in, cin), lambda i, j: (i, 0, 0)),
                pl.BlockSpec((kk, cin, tn), lambda i, j: (0, 0, j)),
                pl.BlockSpec((1, tn), lambda i, j: (0, j)),
            ],
            out_specs=pl.BlockSpec((1, out_rows, tn), lambda i, j: (i, 0, j)),
        ),
        compiler_params=pltpu.CompilerParams(
            dimension_semantics=("parallel", "parallel"),
            vmem_limit_bytes=48 * 1024 * 1024),
    )(xf, w, b)
    return of.reshape(n, h, wp, cout)[:, :, :wdt, :]


# ----------------------------------------------------------------------------
# Parameter construction (deterministic, synthetic; BN folded at build time)
# ----------------------------------------------------------------------------
def build_params(key, in_channel, depth, kernel):
    specs = [(in_channel, depth, kernel),
             (depth, depth, kernel),
             (depth, depth, 3)]
    keys = jax.random.split(key, 6 * len(specs))
    params = []
    for i, (cin, cout, k) in enumerate(specs):
        kw_, kb_, kg, kbt, km, kv = keys[6 * i:6 * i + 6]
        std = (2.0 / (k * k * cin)) ** 0.5
        w = std * jax.random.normal(kw_, (k, k, cin, cout), jnp.float32)  # HWIO
        conv_b = 0.05 * jax.random.normal(kb_, (cout,), jnp.float32)
        gamma = 1.0 + 0.1 * jax.random.normal(kg, (cout,), jnp.float32)
        beta = 0.1 * jax.random.normal(kbt, (cout,), jnp.float32)
        mean = 0.1 * jax.random.normal(km, (cout,), jnp.float32)
        var = 1.0 + 0.1 * jnp.abs(jax.random.normal(kv, (cout,), jnp.float32))
        scale = gamma / jnp.sqrt(var + BN_EPS)           # eval-mode BN fold
        bias = scale * conv_b + beta - scale * mean
        w_folded = w * scale[None, None, None, :]
        params.append({
            "kernel": k,
            "w_hwio_f32": w_folded,                                   # reference
            "w": w_folded.reshape(k * k, cin, cout).astype(jnp.bfloat16),
            "b": bias.reshape(1, cout),                               # f32
        })
    return params


# ----------------------------------------------------------------------------
# Model forward (NCHW in / NCHW out, like the PyTorch module)
# ----------------------------------------------------------------------------
def feature_extraction_forward(x_nchw, params, *, force_path=None):
    x = jnp.transpose(x_nchw, (0, 2, 3, 1)).astype(jnp.bfloat16)     # NHWC bf16
    if force_path is not None:
        path = force_path
    else:
        path = ("fused"
                if _fused_vmem_estimate(x.shape, params) <= _FUSED_VMEM_BUDGET
                else "layered")
    if path == "fused":
        y = feature_extraction_fused(x, params)
    else:
        y = x
        for layer in params:
            y = conv_bn_relu(y, layer["w"], layer["b"], kernel=layer["kernel"])
    return jnp.transpose(y, (0, 3, 1, 2)).astype(jnp.float32)        # NCHW f32


def _reference_forward(x_nchw, params):
    """Pure-JAX f32 reference with the same folded BN parameters."""
    x = jnp.transpose(x_nchw, (0, 2, 3, 1)).astype(jnp.float32)
    for layer in params:
        k = layer["kernel"]
        p = (k - 1) // 2
        y = jax.lax.conv_general_dilated(
            x, layer["w_hwio_f32"], window_strides=(1, 1),
            padding=((p, p), (p, p)),
            dimension_numbers=("NHWC", "HWIO", "NHWC"))
        x = jnp.maximum(y + layer["b"].reshape(1, 1, 1, -1), 0.0)
    return jnp.transpose(x, (0, 3, 1, 2))


# ----------------------------------------------------------------------------
if __name__ == "__main__":
    key = jax.random.PRNGKey(0)
    k_params, k_input = jax.random.split(key)

    IN_CH, DEPTH, KERNEL = 4, 32, 3
    params = build_params(k_params, IN_CH, DEPTH, KERNEL)
    x = jax.random.normal(k_input, (2, IN_CH, 16, 16), jnp.float32)   # NCHW

    ref = _reference_forward(x, params)

    for path in ("fused", "layered"):   # fused = default; layered = fallback
        fwd = jax.jit(functools.partial(feature_extraction_forward,
                                        params=params, force_path=path))
        out = jax.block_until_ready(fwd(x))
        assert out.shape == (2, DEPTH, 16, 16), (path, out.shape)
        assert bool(jnp.all(jnp.isfinite(out))), path
        rel = float(jnp.max(jnp.abs(out - ref)) /
                    (jnp.max(jnp.abs(ref)) + 1e-6))
        assert rel < 8e-2, f"{path}: mismatch vs f32 reference: {rel}"

    print("KERNEL_OK")
</pallas_src>

<mosaic_0001>
module attributes {stable_mosaic.version = 11 : i64} {
  func.func @_fused_kernel(%arg0: i32, %arg1: memref<1x342x4xbf16, #tpu.memory_space<vmem>>, %arg2: memref<288x1xf32, #tpu.memory_space<vmem>>, %arg3: memref<9x4x32xbf16, #tpu.memory_space<vmem>>, %arg4: memref<1x32xf32, #tpu.memory_space<vmem>>, %arg5: memref<9x32x32xbf16, #tpu.memory_space<vmem>>, %arg6: memref<1x32xf32, #tpu.memory_space<vmem>>, %arg7: memref<9x32x32xbf16, #tpu.memory_space<vmem>>, %arg8: memref<1x32xf32, #tpu.memory_space<vmem>>, %arg9: memref<1x288x32xbf16, #tpu.memory_space<vmem>>, %arg10: memref<336x32xbf16, #tpu.memory_space<vmem>>, %arg11: memref<336x32xbf16, #tpu.memory_space<vmem>>) attributes {dimension_semantics = [#tpu.dimension_semantics<parallel>], iteration_bounds = array<i64: 2>, scalar_prefetch = 0 : i64, scratch_operands = 2 : i64, tpu.core_type = #tpu.core_type<tc>, window_params = [{transform_indices = @transform_0, window_bounds = array<i64: 1, 342, 4>}, {pipeline_mode = #tpu.pipeline_mode<synchronous>, transform_indices = @transform_1, window_bounds = array<i64: 288, 1>}, {pipeline_mode = #tpu.pipeline_mode<synchronous>, transform_indices = @transform_2, window_bounds = array<i64: 9, 4, 32>}, {pipeline_mode = #tpu.pipeline_mode<synchronous>, transform_indices = @transform_3, window_bounds = array<i64: 1, 32>}, {pipeline_mode = #tpu.pipeline_mode<synchronous>, transform_indices = @transform_4, window_bounds = array<i64: 9, 32, 32>}, {pipeline_mode = #tpu.pipeline_mode<synchronous>, transform_indices = @transform_5, window_bounds = array<i64: 1, 32>}, {pipeline_mode = #tpu.pipeline_mode<synchronous>, transform_indices = @transform_6, window_bounds = array<i64: 9, 32, 32>}, {pipeline_mode = #tpu.pipeline_mode<synchronous>, transform_indices = @transform_7, window_bounds = array<i64: 1, 32>}, {transform_indices = @transform_8, window_bounds = array<i64: 1, 288, 32>}]} {
    %c0 = arith.constant 0 : index
    %c0_0 = arith.constant 0 : index
    %0 = vector.load %arg2[%c0, %c0_0] : memref<288x1xf32, #tpu.memory_space<vmem>>, vector<288x1xf32>
    %cst = arith.constant 0.000000e+00 : f32
    %1 = vector.broadcast %cst : f32 to vector<288x32xf32>
    %c0_1 = arith.constant 0 : index
    %c0_2 = arith.constant 0 : index
    %c0_3 = arith.constant 0 : index
    %2 = vector.load %arg1[%c0_1, %c0_2, %c0_3] : memref<1x342x4xbf16, #tpu.memory_space<vmem>>, vector<1x288x4xbf16>
    %3 = vector.shape_cast %2 : vector<1x288x4xbf16> to vector<288x4xbf16>
    %c0_4 = arith.constant 0 : index
    %c0_5 = arith.constant 0 : index
    %c0_6 = arith.constant 0 : index
    %4 = vector.load %arg3[%c0_4, %c0_5, %c0_6] : memref<9x4x32xbf16, #tpu.memory_space<vmem>>, vector<1x4x32xbf16>
    %5 = vector.shape_cast %4 : vector<1x4x32xbf16> to vector<4x32xbf16>
    %cst_7 = arith.constant dense<0.000000e+00> : vector<288x32xf32>
    %6 = tpu.matmul %3, %5, %cst_7 {dimension_numbers = #tpu.dot_dimension_numbers<[1], [0], [0], [1], [0, 0, 1, 1], [], []>} : vector<288x4xbf16>, vector<4x32xbf16>, vector<288x32xf32> -> vector<288x32xf32>
    %7 = arith.addf %1, %6 : vector<288x32xf32>
    %c0_8 = arith.constant 0 : index
    %c1 = arith.constant 1 : index
    %c0_9 = arith.constant 0 : index
    %8 = vector.load %arg1[%c0_8, %c1, %c0_9] : memref<1x342x4xbf16, #tpu.memory_space<vmem>>, vector<1x288x4xbf16>
    %9 = vector.shape_cast %8 : vector<1x288x4xbf16> to vector<288x4xbf16>
    %c1_10 = arith.constant 1 : index
    %c0_11 = arith.constant 0 : index
    %c0_12 = arith.constant 0 : index
    %10 = vector.load %arg3[%c1_10, %c0_11, %c0_12] : memref<9x4x32xbf16, #tpu.memory_space<vmem>>, vector<1x4x32xbf16>
    %11 = vector.shape_cast %10 : vector<1x4x32xbf16> to vector<4x32xbf16>
    %cst_13 = arith.constant dense<0.000000e+00> : vector<288x32xf32>
    %12 = tpu.matmul %9, %11, %cst_13 {dimension_numbers = #tpu.dot_dimension_numbers<[1], [0], [0], [1], [0, 0, 1, 1], [], []>} : vector<288x4xbf16>, vector<4x32xbf16>, vector<288x32xf32> -> vector<288x32xf32>
    %13 = arith.addf %7, %12 : vector<288x32xf32>
    %c0_14 = arith.constant 0 : index
    %c2 = arith.constant 2 : index
    %c0_15 = arith.constant 0 : index
    %14 = vector.load %arg1[%c0_14, %c2, %c0_15] : memref<1x342x4xbf16, #tpu.memory_space<vmem>>, vector<1x288x4xbf16>
    %15 = vector.shape_cast %14 : vector<1x288x4xbf16> to vector<288x4xbf16>
    %c2_16 = arith.constant 2 : index
    %c0_17 = arith.constant 0 : index
    %c0_18 = arith.constant 0 : index
    %16 = vector.load %arg3[%c2_16, %c0_17, %c0_18] : memref<9x4x32xbf16, #tpu.memory_space<vmem>>, vector<1x4x32xbf16>
    %17 = vector.shape_cast %16 : vector<1x4x32xbf16> to vector<4x32xbf16>
    %cst_19 = arith.constant dense<0.000000e+00> : vector<288x32xf32>
    %18 = tpu.matmul %15, %17, %cst_19 {dimension_numbers = #tpu.dot_dimension_numbers<[1], [0], [0], [1], [0, 0, 1, 1], [], []>} : vector<288x4xbf16>, vector<4x32xbf16>, vector<288x32xf32> -> vector<288x32xf32>
    %19 = arith.addf %13, %18 : vector<288x32xf32>
    %c0_20 = arith.constant 0 : index
    %c18 = arith.constant 18 : index
    %c0_21 = arith.constant 0 : index
    %20 = vector.load %arg1[%c0_20, %c18, %c0_21] : memref<1x342x4xbf16, #tpu.memory_space<vmem>>, vector<1x288x4xbf16>
    %21 = vector.shape_cast %20 : vector<1x288x4xbf16> to vector<288x4xbf16>
    %c3 = arith.constant 3 : index
    %c0_22 = arith.constant 0 : index
    %c0_23 = arith.constant 0 : index
    %22 = vector.load %arg3[%c3, %c0_22, %c0_23] : memref<9x4x32xbf16, #tpu.memory_space<vmem>>, vector<1x4x32xbf16>
    %23 = vector.shape_cast %22 : vector<1x4x32xbf16> to vector<4x32xbf16>
    %cst_24 = arith.constant dense<0.000000e+00> : vector<288x32xf32>
    %24 = tpu.matmul %21, %23, %cst_24 {dimension_numbers = #tpu.dot_dimension_numbers<[1], [0], [0], [1], [0, 0, 1, 1], [], []>} : vector<288x4xbf16>, vector<4x32xbf16>, vector<288x32xf32> -> vector<288x32xf32>
    %25 = arith.addf %19, %24 : vector<288x32xf32>
    %c0_25 = arith.constant 0 : index
    %c19 = arith.constant 19 : index
    %c0_26 = arith.constant 0 : index
    %26 = vector.load %arg1[%c0_25, %c19, %c0_26] : memref<1x342x4xbf16, #tpu.memory_space<vmem>>, vector<1x288x4xbf16>
    %27 = vector.shape_cast %26 : vector<1x288x4xbf16> to vector<288x4xbf16>
    %c4 = arith.constant 4 : index
    %c0_27 = arith.constant 0 : index
    %c0_28 = arith.constant 0 : index
    %28 = vector.load %arg3[%c4, %c0_27, %c0_28] : memref<9x4x32xbf16, #tpu.memory_space<vmem>>, vector<1x4x32xbf16>
    %29 = vector.shape_cast %28 : vector<1x4x32xbf16> to vector<4x32xbf16>
    %cst_29 = arith.constant dense<0.000000e+00> : vector<288x32xf32>
    %30 = tpu.matmul %27, %29, %cst_29 {dimension_numbers = #tpu.dot_dimension_numbers<[1], [0], [0], [1], [0, 0, 1, 1], [], []>} : vector<288x4xbf16>, vector<4x32xbf16>, vector<288x32xf32> -> vector<288x32xf32>
    %31 = arith.addf %25, %30 : vector<288x32xf32>
    %c0_30 = arith.constant 0 : index
    %c20 = arith.constant 20 : index
    %c0_31 = arith.constant 0 : index
    %32 = vector.load %arg1[%c0_30, %c20, %c0_31] : memref<1x342x4xbf16, #tpu.memory_space<vmem>>, vector<1x288x4xbf16>
    %33 = vector.shape_cast %32 : vector<1x288x4xbf16> to vector<288x4xbf16>
    %c5 = arith.constant 5 : index
    %c0_32 = arith.constant 0 : index
    %c0_33 = arith.constant 0 : index
    %34 = vector.load %arg3[%c5, %c0_32, %c0_33] : memref<9x4x32xbf16, #tpu.memory_space<vmem>>, vector<1x4x32xbf16>
    %35 = vector.shape_cast %34 : vector<1x4x32xbf16> to vector<4x32xbf16>
    %cst_34 = arith.constant dense<0.000000e+00> : vector<288x32xf32>
    %36 = tpu.matmul %33, %35, %cst_34 {dimension_numbers = #tpu.dot_dimension_numbers<[1], [0], [0], [1], [0, 0, 1, 1], [], []>} : vector<288x4xbf16>, vector<4x32xbf16>, vector<288x32xf32> -> vector<288x32xf32>
    %37 = arith.addf %31, %36 : vector<288x32xf32>
    %c0_35 = arith.constant 0 : index
    %c36 = arith.constant 36 : index
    %c0_36 = arith.constant 0 : index
    %38 = vector.load %arg1[%c0_35, %c36, %c0_36] : memref<1x342x4xbf16, #tpu.memory_space<vmem>>, vector<1x288x4xbf16>
    %39 = vector.shape_cast %38 : vector<1x288x4xbf16> to vector<288x4xbf16>
    %c6 = arith.constant 6 : index
    %c0_37 = arith.constant 0 : index
    %c0_38 = arith.constant 0 : index
    %40 = vector.load %arg3[%c6, %c0_37, %c0_38] : memref<9x4x32xbf16, #tpu.memory_space<vmem>>, vector<1x4x32xbf16>
    %41 = vector.shape_cast %40 : vector<1x4x32xbf16> to vector<4x32xbf16>
    %cst_39 = arith.constant dense<0.000000e+00> : vector<288x32xf32>
    %42 = tpu.matmul %39, %41, %cst_39 {dimension_numbers = #tpu.dot_dimension_numbers<[1], [0], [0], [1], [0, 0, 1, 1], [], []>} : vector<288x4xbf16>, vector<4x32xbf16>, vector<288x32xf32> -> vector<288x32xf32>
    %43 = arith.addf %37, %42 : vector<288x32xf32>
    %c0_40 = arith.constant 0 : index
    %c37 = arith.constant 37 : index
    %c0_41 = arith.constant 0 : index
    %44 = vector.load %arg1[%c0_40, %c37, %c0_41] : memref<1x342x4xbf16, #tpu.memory_space<vmem>>, vector<1x288x4xbf16>
    %45 = vector.shape_cast %44 : vector<1x288x4xbf16> to vector<288x4xbf16>
    %c7 = arith.constant 7 : index
    %c0_42 = arith.constant 0 : index
    %c0_43 = arith.constant 0 : index
    %46 = vector.load %arg3[%c7, %c0_42, %c0_43] : memref<9x4x32xbf16, #tpu.memory_space<vmem>>, vector<1x4x32xbf16>
    %47 = vector.shape_cast %46 : vector<1x4x32xbf16> to vector<4x32xbf16>
    %cst_44 = arith.constant dense<0.000000e+00> : vector<288x32xf32>
    %48 = tpu.matmul %45, %47, %cst_44 {dimension_numbers = #tpu.dot_dimension_numbers<[1], [0], [0], [1], [0, 0, 1, 1], [], []>} : vector<288x4xbf16>, vector<4x32xbf16>, vector<288x32xf32> -> vector<288x32xf32>
    %49 = arith.addf %43, %48 : vector<288x32xf32>
    %c0_45 = arith.constant 0 : index
    %c38 = arith.constant 38 : index
    %c0_46 = arith.constant 0 : index
    %50 = vector.load %arg1[%c0_45, %c38, %c0_46] : memref<1x342x4xbf16, #tpu.memory_space<vmem>>, vector<1x288x4xbf16>
    %51 = vector.shape_cast %50 : vector<1x288x4xbf16> to vector<288x4xbf16>
    %c8 = arith.constant 8 : index
    %c0_47 = arith.constant 0 : index
    %c0_48 = arith.constant 0 : index
    %52 = vector.load %arg3[%c8, %c0_47, %c0_48] : memref<9x4x32xbf16, #tpu.memory_space<vmem>>, vector<1x4x32xbf16>
    %53 = vector.shape_cast %52 : vector<1x4x32xbf16> to vector<4x32xbf16>
    %cst_49 = arith.constant dense<0.000000e+00> : vector<288x32xf32>
    %54 = tpu.matmul %51, %53, %cst_49 {dimension_numbers = #tpu.dot_dimension_numbers<[1], [0], [0], [1], [0, 0, 1, 1], [], []>} : vector<288x4xbf16>, vector<4x32xbf16>, vector<288x32xf32> -> vector<288x32xf32>
    %55 = arith.addf %49, %54 : vector<288x32xf32>
    %c0_50 = arith.constant 0 : index
    %c0_51 = arith.constant 0 : index
    %56 = vector.load %arg4[%c0_50, %c0_51] : memref<1x32xf32, #tpu.memory_space<vmem>>, vector<1x32xf32>
    %57 = vector.broadcast %56 : vector<1x32xf32> to vector<288x32xf32>
    %58 = arith.addf %55, %57 : vector<288x32xf32>
    %cst_52 = arith.constant 0.000000e+00 : f32
    %59 = vector.broadcast %cst_52 : f32 to vector<288x32xf32>
    %60 = arith.maximumf %58, %59 : vector<288x32xf32>
    %cst_53 = arith.constant 0.000000e+00 : bf16
    %61 = vector.broadcast %cst_53 : bf16 to vector<336x32xbf16>
    %c0_54 = arith.constant 0 : index
    %c0_55 = arith.constant 0 : index
    %62 = vector.load %arg10[%c0_54, %c0_55] : memref<336x32xbf16, #tpu.memory_space<vmem>>, vector<336x32xbf16>
    tpu.vector_store %arg10[%c0_54, %c0_55], %61 {strides = array<i32>} : memref<336x32xbf16, #tpu.memory_space<vmem>>, vector<336x32xbf16>,
    %63 = vector.broadcast %0 : vector<288x1xf32> to vector<288x32xf32>
    %64 = arith.mulf %60, %63 : vector<288x32xf32>
    %65 = arith.truncf %64 : vector<288x32xf32> to vector<288x32xbf16>
    %c24 = arith.constant 24 : index
    %c0_56 = arith.constant 0 : index
    %66 = vector.load %arg10[%c24, %c0_56] : memref<336x32xbf16, #tpu.memory_space<vmem>>, vector<288x32xbf16>
    tpu.vector_store %arg10[%c24, %c0_56], %65 {strides = array<i32>} : memref<336x32xbf16, #tpu.memory_space<vmem>>, vector<288x32xbf16>,
    %cst_57 = arith.constant 0.000000e+00 : f32
    %67 = vector.broadcast %cst_57 : f32 to vector<288x32xf32>
    %c5_58 = arith.constant 5 : index
    %c0_59 = arith.constant 0 : index
    %68 = vector.load %arg10[%c5_58, %c0_59] : memref<336x32xbf16, #tpu.memory_space<vmem>>, vector<288x32xbf16>
    %c0_60 = arith.constant 0 : index
    %c0_61 = arith.constant 0 : index
    %c0_62 = arith.constant 0 : index
    %69 = vector.load %arg5[%c0_60, %c0_61, %c0_62] : memref<9x32x32xbf16, #tpu.memory_space<vmem>>, vector<1x32x32xbf16>
    %70 = vector.shape_cast %69 : vector<1x32x32xbf16> to vector<32x32xbf16>
    %cst_63 = arith.constant dense<0.000000e+00> : vector<288x32xf32>
    %71 = tpu.matmul %68, %70, %cst_63 {dimension_numbers = #tpu.dot_dimension_numbers<[1], [0], [0], [1], [0, 0, 1, 1], [], []>} : vector<288x32xbf16>, vector<32x32xbf16>, vector<288x32xf32> -> vector<288x32xf32>
    %72 = arith.addf %67, %71 : vector<288x32xf32>
    %c6_64 = arith.constant 6 : index
    %c0_65 = arith.constant 0 : index
    %73 = vector.load %arg10[%c6_64, %c0_65] : memref<336x32xbf16, #tpu.memory_space<vmem>>, vector<288x32xbf16>
    %c1_66 = arith.constant 1 : index
    %c0_67 = arith.constant 0 : index
    %c0_68 = arith.constant 0 : index
    %74 = vector.load %arg5[%c1_66, %c0_67, %c0_68] : memref<9x32x32xbf16, #tpu.memory_space<vmem>>, vector<1x32x32xbf16>
    %75 = vector.shape_cast %74 : vector<1x32x32xbf16> to vector<32x32xbf16>
    %cst_69 = arith.constant dense<0.000000e+00> : vector<288x32xf32>
    %76 = tpu.matmul %73, %75, %cst_69 {dimension_numbers = #tpu.dot_dimension_numbers<[1], [0], [0], [1], [0, 0, 1, 1], [], []>} : vector<288x32xbf16>, vector<32x32xbf16>, vector<288x32xf32> -> vector<288x32xf32>
    %77 = arith.addf %72, %76 : vector<288x32xf32>
    %c7_70 = arith.constant 7 : index
    %c0_71 = arith.constant 0 : index
    %78 = vector.load %arg10[%c7_70, %c0_71] : memref<336x32xbf16, #tpu.memory_space<vmem>>, vector<288x32xbf16>
    %c2_72 = arith.constant 2 : index
    %c0_73 = arith.constant 0 : index
    %c0_74 = arith.constant 0 : index
    %79 = vector.load %arg5[%c2_72, %c0_73, %c0_74] : memref<9x32x32xbf16, #tpu.memory_space<vmem>>, vector<1x32x32xbf16>
    %80 = vector.shape_cast %79 : vector<1x32x32xbf16> to vector<32x32xbf16>
    %cst_75 = arith.constant dense<0.000000e+00> : vector<288x32xf32>
    %81 = tpu.matmul %78, %80, %cst_75 {dimension_numbers = #tpu.dot_dimension_numbers<[1], [0], [0], [1], [0, 0, 1, 1], [], []>} : vector<288x32xbf16>, vector<32x32xbf16>, vector<288x32xf32> -> vector<288x32xf32>
    %82 = arith.addf %77, %81 : vector<288x32xf32>
    %c23 = arith.constant 23 : index
    %c0_76 = arith.constant 0 : index
    %83 = vector.load %arg10[%c23, %c0_76] : memref<336x32xbf16, #tpu.memory_space<vmem>>, vector<288x32xbf16>
    %c3_77 = arith.constant 3 : index
    %c0_78 = arith.constant 0 : index
    %c0_79 = arith.constant 0 : index
    %84 = vector.load %arg5[%c3_77, %c0_78, %c0_79] : memref<9x32x32xbf16, #tpu.memory_space<vmem>>, vector<1x32x32xbf16>
    %85 = vector.shape_cast %84 : vector<1x32x32xbf16> to vector<32x32xbf16>
    %cst_80 = arith.constant dense<0.000000e+00> : vector<288x32xf32>
    %86 = tpu.matmul %83, %85, %cst_80 {dimension_numbers = #tpu.dot_dimension_numbers<[1], [0], [0], [1], [0, 0, 1, 1], [], []>} : vector<288x32xbf16>, vector<32x32xbf16>, vector<288x32xf32> -> vector<288x32xf32>
    %87 = arith.addf %82, %86 : vector<288x32xf32>
    %c24_81 = arith.constant 24 : index
    %c0_82 = arith.constant 0 : index
    %88 = vector.load %arg10[%c24_81, %c0_82] : memref<336x32xbf16, #tpu.memory_space<vmem>>, vector<288x32xbf16>
    %c4_83 = arith.constant 4 : index
    %c0_84 = arith.constant 0 : index
    %c0_85 = arith.constant 0 : index
    %89 = vector.load %arg5[%c4_83, %c0_84, %c0_85] : memref<9x32x32xbf16, #tpu.memory_space<vmem>>, vector<1x32x32xbf16>
    %90 = vector.shape_cast %89 : vector<1x32x32xbf16> to vector<32x32xbf16>
    %cst_86 = arith.constant dense<0.000000e+00> : vector<288x32xf32>
    %91 = tpu.matmul %88, %90, %cst_86 {dimension_numbers = #tpu.dot_dimension_numbers<[1], [0], [0], [1], [0, 0, 1, 1], [], []>} : vector<288x32xbf16>, vector<32x32xbf16>, vector<288x32xf32> -> vector<288x32xf32>
    %92 = arith.addf %87, %91 : vector<288x32xf32>
    %c25 = arith.constant 25 : index
    %c0_87 = arith.constant 0 : index
    %93 = vector.load %arg10[%c25, %c0_87] : memref<336x32xbf16, #tpu.memory_space<vmem>>, vector<288x32xbf16>
    %c5_88 = arith.constant 5 : index
    %c0_89 = arith.constant 0 : index
    %c0_90 = arith.constant 0 : index
    %94 = vector.load %arg5[%c5_88, %c0_89, %c0_90] : memref<9x32x32xbf16, #tpu.memory_space<vmem>>, vector<1x32x32xbf16>
    %95 = vector.shape_cast %94 : vector<1x32x32xbf16> to vector<32x32xbf16>
    %cst_91 = arith.constant dense<0.000000e+00> : vector<288x32xf32>
    %96 = tpu.matmul %93, %95, %cst_91 {dimension_numbers = #tpu.dot_dimension_numbers<[1], [0], [0], [1], [0, 0, 1, 1], [], []>} : vector<288x32xbf16>, vector<32x32xbf16>, vector<288x32xf32> -> vector<288x32xf32>
    %97 = arith.addf %92, %96 : vector<288x32xf32>
    %c41 = arith.constant 41 : index
    %c0_92 = arith.constant 0 : index
    %98 = vector.load %arg10[%c41, %c0_92] : memref<336x32xbf16, #tpu.memory_space<vmem>>, vector<288x32xbf16>
    %c6_93 = arith.constant 6 : index
    %c0_94 = arith.constant 0 : index
    %c0_95 = arith.constant 0 : index
    %99 = vector.load %arg5[%c6_93, %c0_94, %c0_95] : memref<9x32x32xbf16, #tpu.memory_space<vmem>>, vector<1x32x32xbf16>
    %100 = vector.shape_cast %99 : vector<1x32x32xbf16> to vector<32x32xbf16>
    %cst_96 = arith.constant dense<0.000000e+00> : vector<288x32xf32>
    %101 = tpu.matmul %98, %100, %cst_96 {dimension_numbers = #tpu.dot_dimension_numbers<[1], [0], [0], [1], [0, 0, 1, 1], [], []>} : vector<288x32xbf16>, vector<32x32xbf16>, vector<288x32xf32> -> vector<288x32xf32>
    %102 = arith.addf %97, %101 : vector<288x32xf32>
    %c42 = arith.constant 42 : index
    %c0_97 = arith.constant 0 : index
    %103 = vector.load %arg10[%c42, %c0_97] : memref<336x32xbf16, #tpu.memory_space<vmem>>, vector<288x32xbf16>
    %c7_98 = arith.constant 7 : index
    %c0_99 = arith.constant 0 : index
    %c0_100 = arith.constant 0 : index
    %104 = vector.load %arg5[%c7_98, %c0_99, %c0_100] : memref<9x32x32xbf16, #tpu.memory_space<vmem>>, vector<1x32x32xbf16>
    %105 = vector.shape_cast %104 : vector<1x32x32xbf16> to vector<32x32xbf16>
    %cst_101 = arith.constant dense<0.000000e+00> : vector<288x32xf32>
    %106 = tpu.matmul %103, %105, %cst_101 {dimension_numbers = #tpu.dot_dimension_numbers<[1], [0], [0], [1], [0, 0, 1, 1], [], []>} : vector<288x32xbf16>, vector<32x32xbf16>, vector<288x32xf32> -> vector<288x32xf32>
    %107 = arith.addf %102, %106 : vector<288x32xf32>
    %c43 = arith.constant 43 : index
    %c0_102 = arith.constant 0 : index
    %108 = vector.load %arg10[%c43, %c0_102] : memref<336x32xbf16, #tpu.memory_space<vmem>>, vector<288x32xbf16>
    %c8_103 = arith.constant 8 : index
    %c0_104 = arith.constant 0 : index
    %c0_105 = arith.constant 0 : index
    %109 = vector.load %arg5[%c8_103, %c0_104, %c0_105] : memref<9x32x32xbf16, #tpu.memory_space<vmem>>, vector<1x32x32xbf16>
    %110 = vector.shape_cast %109 : vector<1x32x32xbf16> to vector<32x32xbf16>
    %cst_106 = arith.constant dense<0.000000e+00> : vector<288x32xf32>
    %111 = tpu.matmul %108, %110, %cst_106 {dimension_numbers = #tpu.dot_dimension_numbers<[1], [0], [0], [1], [0, 0, 1, 1], [], []>} : vector<288x32xbf16>, vector<32x32xbf16>, vector<288x32xf32> -> vector<288x32xf32>
    %112 = arith.addf %107, %111 : vector<288x32xf32>
    %c0_107 = arith.constant 0 : index
    %c0_108 = arith.constant 0 : index
    %113 = vector.load %arg6[%c0_107, %c0_108] : memref<1x32xf32, #tpu.memory_space<vmem>>, vector<1x32xf32>
    %114 = vector.broadcast %113 : vector<1x32xf32> to vector<288x32xf32>
    %115 = arith.addf %112, %114 : vector<288x32xf32>
    %cst_109 = arith.constant 0.000000e+00 : f32
    %116 = vector.broadcast %cst_109 : f32 to vector<288x32xf32>
    %117 = arith.maximumf %115, %116 : vector<288x32xf32>
    %cst_110 = arith.constant 0.000000e+00 : bf16
    %118 = vector.broadcast %cst_110 : bf16 to vector<336x32xbf16>
    %c0_111 = arith.constant 0 : index
    %c0_112 = arith.constant 0 : index
    %119 = vector.load %arg11[%c0_111, %c0_112] : memref<336x32xbf16, #tpu.memory_space<vmem>>, vector<336x32xbf16>
    tpu.vector_store %arg11[%c0_111, %c0_112], %118 {strides = array<i32>} : memref<336x32xbf16, #tpu.memory_space<vmem>>, vector<336x32xbf16>,
    %120 = vector.broadcast %0 : vector<288x1xf32> to vector<288x32xf32>
    %121 = arith.mulf %117, %120 : vector<288x32xf32>
    %122 = arith.truncf %121 : vector<288x32xf32> to vector<288x32xbf16>
    %c24_113 = arith.constant 24 : index
    %c0_114 = arith.constant 0 : index
    %123 = vector.load %arg11[%c24_113, %c0_114] : memref<336x32xbf16, #tpu.memory_space<vmem>>, vector<288x32xbf16>
    tpu.vector_store %arg11[%c24_113, %c0_114], %122 {strides = array<i32>} : memref<336x32xbf16, #tpu.memory_space<vmem>>, vector<288x32xbf16>,
    %cst_115 = arith.constant 0.000000e+00 : f32
    %124 = vector.broadcast %cst_115 : f32 to vector<288x32xf32>
    %c5_116 = arith.constant 5 : index
    %c0_117 = arith.constant 0 : index
    %125 = vector.load %arg11[%c5_116, %c0_117] : memref<336x32xbf16, #tpu.memory_space<vmem>>, vector<288x32xbf16>
    %c0_118 = arith.constant 0 : index
    %c0_119 = arith.constant 0 : index
    %c0_120 = arith.constant 0 : index
    %126 = vector.load %arg7[%c0_118, %c0_119, %c0_120] : memref<9x32x32xbf16, #tpu.memory_space<vmem>>, vector<1x32x32xbf16>
    %127 = vector.shape_cast %126 : vector<1x32x32xbf16> to vector<32x32xbf16>
    %cst_121 = arith.constant dense<0.000000e+00> : vector<288x32xf32>
    %128 = tpu.matmul %125, %127, %cst_121 {dimension_numbers = #tpu.dot_dimension_numbers<[1], [0], [0], [1], [0, 0, 1, 1], [], []>} : vector<288x32xbf16>, vector<32x32xbf16>, vector<288x32xf32> -> vector<288x32xf32>
    %129 = arith.addf %124, %128 : vector<288x32xf32>
    %c6_122 = arith.constant 6 : index
    %c0_123 = arith.constant 0 : index
    %130 = vector.load %arg11[%c6_122, %c0_123] : memref<336x32xbf16, #tpu.memory_space<vmem>>, vector<288x32xbf16>
    %c1_124 = arith.constant 1 : index
    %c0_125 = arith.constant 0 : index
    %c0_126 = arith.constant 0 : index
    %131 = vector.load %arg7[%c1_124, %c0_125, %c0_126] : memref<9x32x32xbf16, #tpu.memory_space<vmem>>, vector<1x32x32xbf16>
    %132 = vector.shape_cast %131 : vector<1x32x32xbf16> to vector<32x32xbf16>
    %cst_127 = arith.constant dense<0.000000e+00> : vector<288x32xf32>
    %133 = tpu.matmul %130, %132, %cst_127 {dimension_numbers = #tpu.dot_dimension_numbers<[1], [0], [0], [1], [0, 0, 1, 1], [], []>} : vector<288x32xbf16>, vector<32x32xbf16>, vector<288x32xf32> -> vector<288x32xf32>
    %134 = arith.addf %129, %133 : vector<288x32xf32>
    %c7_128 = arith.constant 7 : index
    %c0_129 = arith.constant 0 : index
    %135 = vector.load %arg11[%c7_128, %c0_129] : memref<336x32xbf16, #tpu.memory_space<vmem>>, vector<288x32xbf16>
    %c2_130 = arith.constant 2 : index
    %c0_131 = arith.constant 0 : index
    %c0_132 = arith.constant 0 : index
    %136 = vector.load %arg7[%c2_130, %c0_131, %c0_132] : memref<9x32x32xbf16, #tpu.memory_space<vmem>>, vector<1x32x32xbf16>
    %137 = vector.shape_cast %136 : vector<1x32x32xbf16> to vector<32x32xbf16>
    %cst_133 = arith.constant dense<0.000000e+00> : vector<288x32xf32>
    %138 = tpu.matmul %135, %137, %cst_133 {dimension_numbers = #tpu.dot_dimension_numbers<[1], [0], [0], [1], [0, 0, 1, 1], [], []>} : vector<288x32xbf16>, vector<32x32xbf16>, vector<288x32xf32> -> vector<288x32xf32>
    %139 = arith.addf %134, %138 : vector<288x32xf32>
    %c23_134 = arith.constant 23 : index
    %c0_135 = arith.constant 0 : index
    %140 = vector.load %arg11[%c23_134, %c0_135] : memref<336x32xbf16, #tpu.memory_space<vmem>>, vector<288x32xbf16>
    %c3_136 = arith.constant 3 : index
    %c0_137 = arith.constant 0 : index
    %c0_138 = arith.constant 0 : index
    %141 = vector.load %arg7[%c3_136, %c0_137, %c0_138] : memref<9x32x32xbf16, #tpu.memory_space<vmem>>, vector<1x32x32xbf16>
    %142 = vector.shape_cast %141 : vector<1x32x32xbf16> to vector<32x32xbf16>
    %cst_139 = arith.constant dense<0.000000e+00> : vector<288x32xf32>
    %143 = tpu.matmul %140, %142, %cst_139 {dimension_numbers = #tpu.dot_dimension_numbers<[1], [0], [0], [1], [0, 0, 1, 1], [], []>} : vector<288x32xbf16>, vector<32x32xbf16>, vector<288x32xf32> -> vector<288x32xf32>
    %144 = arith.addf %139, %143 : vector<288x32xf32>
    %c24_140 = arith.constant 24 : index
    %c0_141 = arith.constant 0 : index
    %145 = vector.load %arg11[%c24_140, %c0_141] : memref<336x32xbf16, #tpu.memory_space<vmem>>, vector<288x32xbf16>
    %c4_142 = arith.constant 4 : index
    %c0_143 = arith.constant 0 : index
    %c0_144 = arith.constant 0 : index
    %146 = vector.load %arg7[%c4_142, %c0_143, %c0_144] : memref<9x32x32xbf16, #tpu.memory_space<vmem>>, vector<1x32x32xbf16>
    %147 = vector.shape_cast %146 : vector<1x32x32xbf16> to vector<32x32xbf16>
    %cst_145 = arith.constant dense<0.000000e+00> : vector<288x32xf32>
    %148 = tpu.matmul %145, %147, %cst_145 {dimension_numbers = #tpu.dot_dimension_numbers<[1], [0], [0], [1], [0, 0, 1, 1], [], []>} : vector<288x32xbf16>, vector<32x32xbf16>, vector<288x32xf32> -> vector<288x32xf32>
    %149 = arith.addf %144, %148 : vector<288x32xf32>
    %c25_146 = arith.constant 25 : index
    %c0_147 = arith.constant 0 : index
    %150 = vector.load %arg11[%c25_146, %c0_147] : memref<336x32xbf16, #tpu.memory_space<vmem>>, vector<288x32xbf16>
    %c5_148 = arith.constant 5 : index
    %c0_149 = arith.constant 0 : index
    %c0_150 = arith.constant 0 : index
    %151 = vector.load %arg7[%c5_148, %c0_149, %c0_150] : memref<9x32x32xbf16, #tpu.memory_space<vmem>>, vector<1x32x32xbf16>
    %152 = vector.shape_cast %151 : vector<1x32x32xbf16> to vector<32x32xbf16>
    %cst_151 = arith.constant dense<0.000000e+00> : vector<288x32xf32>
    %153 = tpu.matmul %150, %152, %cst_151 {dimension_numbers = #tpu.dot_dimension_numbers<[1], [0], [0], [1], [0, 0, 1, 1], [], []>} : vector<288x32xbf16>, vector<32x32xbf16>, vector<288x32xf32> -> vector<288x32xf32>
    %154 = arith.addf %149, %153 : vector<288x32xf32>
    %c41_152 = arith.constant 41 : index
    %c0_153 = arith.constant 0 : index
    %155 = vector.load %arg11[%c41_152, %c0_153] : memref<336x32xbf16, #tpu.memory_space<vmem>>, vector<288x32xbf16>
    %c6_154 = arith.constant 6 : index
    %c0_155 = arith.constant 0 : index
    %c0_156 = arith.constant 0 : index
    %156 = vector.load %arg7[%c6_154, %c0_155, %c0_156] : memref<9x32x32xbf16, #tpu.memory_space<vmem>>, vector<1x32x32xbf16>
    %157 = vector.shape_cast %156 : vector<1x32x32xbf16> to vector<32x32xbf16>
    %cst_157 = arith.constant dense<0.000000e+00> : vector<288x32xf32>
    %158 = tpu.matmul %155, %157, %cst_157 {dimension_numbers = #tpu.dot_dimension_numbers<[1], [0], [0], [1], [0, 0, 1, 1], [], []>} : vector<288x32xbf16>, vector<32x32xbf16>, vector<288x32xf32> -> vector<288x32xf32>
    %159 = arith.addf %154, %158 : vector<288x32xf32>
    %c42_158 = arith.constant 42 : index
    %c0_159 = arith.constant 0 : index
    %160 = vector.load %arg11[%c42_158, %c0_159] : memref<336x32xbf16, #tpu.memory_space<vmem>>, vector<288x32xbf16>
    %c7_160 = arith.constant 7 : index
    %c0_161 = arith.constant 0 : index
    %c0_162 = arith.constant 0 : index
    %161 = vector.load %arg7[%c7_160, %c0_161, %c0_162] : memref<9x32x32xbf16, #tpu.memory_space<vmem>>, vector<1x32x32xbf16>
    %162 = vector.shape_cast %161 : vector<1x32x32xbf16> to vector<32x32xbf16>
    %cst_163 = arith.constant dense<0.000000e+00> : vector<288x32xf32>
    %163 = tpu.matmul %160, %162, %cst_163 {dimension_numbers = #tpu.dot_dimension_numbers<[1], [0], [0], [1], [0, 0, 1, 1], [], []>} : vector<288x32xbf16>, vector<32x32xbf16>, vector<288x32xf32> -> vector<288x32xf32>
    %164 = arith.addf %159, %163 : vector<288x32xf32>
    %c43_164 = arith.constant 43 : index
    %c0_165 = arith.constant 0 : index
    %165 = vector.load %arg11[%c43_164, %c0_165] : memref<336x32xbf16, #tpu.memory_space<vmem>>, vector<288x32xbf16>
    %c8_166 = arith.constant 8 : index
    %c0_167 = arith.constant 0 : index
    %c0_168 = arith.constant 0 : index
    %166 = vector.load %arg7[%c8_166, %c0_167, %c0_168] : memref<9x32x32xbf16, #tpu.memory_space<vmem>>, vector<1x32x32xbf16>
    %167 = vector.shape_cast %166 : vector<1x32x32xbf16> to vector<32x32xbf16>
    %cst_169 = arith.constant dense<0.000000e+00> : vector<288x32xf32>
    %168 = tpu.matmul %165, %167, %cst_169 {dimension_numbers = #tpu.dot_dimension_numbers<[1], [0], [0], [1], [0, 0, 1, 1], [], []>} : vector<288x32xbf16>, vector<32x32xbf16>, vector<288x32xf32> -> vector<288x32xf32>
    %169 = arith.addf %164, %168 : vector<288x32xf32>
    %c0_170 = arith.constant 0 : index
    %c0_171 = arith.constant 0 : index
    %170 = vector.load %arg8[%c0_170, %c0_171] : memref<1x32xf32, #tpu.memory_space<vmem>>, vector<1x32xf32>
    %171 = vector.broadcast %170 : vector<1x32xf32> to vector<288x32xf32>
    %172 = arith.addf %169, %171 : vector<288x32xf32>
    %cst_172 = arith.constant 0.000000e+00 : f32
    %173 = vector.broadcast %cst_172 : f32 to vector<288x32xf32>
    %174 = arith.maximumf %172, %173 : vector<288x32xf32>
    %175 = arith.truncf %174 : vector<288x32xf32> to vector<288x32xbf16>
    %c0_173 = arith.constant 0 : index
    %c0_174 = arith.constant 0 : index
    %c0_175 = arith.constant 0 : index
    %176 = vector.load %arg9[%c0_173, %c0_174, %c0_175] : memref<1x288x32xbf16, #tpu.memory_space<vmem>>, vector<1x288x32xbf16>
    %177 = vector.shape_cast %176 : vector<1x288x32xbf16> to vector<288x32xbf16>
    %178 = vector.shape_cast %175 : vector<288x32xbf16> to vector<1x288x32xbf16>
    tpu.vector_store %arg9[%c0_173, %c0_174, %c0_175], %178 {strides = array<i32>} : memref<1x288x32xbf16, #tpu.memory_space<vmem>>, vector<1x288x32xbf16>,
    return
  }
  func.func @transform_0(%arg0: i32) -> (i32, i32, i32) {
    %c0_i32 = arith.constant 0 : i32
    %c0_i32_0 = arith.constant 0 : i32
    %c0_i32_1 = arith.constant 0 : i32
    return %arg0, %c0_i32, %c0_i32_0 : i32, i32, i32
  }
  func.func @transform_1(%arg0: i32) -> (i32, i32) {
    %c0_i32 = arith.constant 0 : i32
    %c0_i32_0 = arith.constant 0 : i32
    %c0_i32_1 = arith.constant 0 : i32
    return %c0_i32, %c0_i32_0 : i32, i32
  }
  func.func @transform_2(%arg0: i32) -> (i32, i32, i32) {
    %c0_i32 = arith.constant 0 : i32
    %c0_i32_0 = arith.constant 0 : i32
    %c0_i32_1 = arith.constant 0 : i32
    %c0_i32_2 = arith.constant 0 : i32
    return %c0_i32, %c0_i32_0, %c0_i32_1 : i32, i32, i32
  }
  func.func @transform_3(%arg0: i32) -> (i32, i32) {
    %c0_i32 = arith.constant 0 : i32
    %c0_i32_0 = arith.constant 0 : i32
    %c0_i32_1 = arith.constant 0 : i32
    return %c0_i32, %c0_i32_0 : i32, i32
  }
  func.func @transform_4(%arg0: i32) -> (i32, i32, i32) {
    %c0_i32 = arith.constant 0 : i32
    %c0_i32_0 = arith.constant 0 : i32
    %c0_i32_1 = arith.constant 0 : i32
    %c0_i32_2 = arith.constant 0 : i32
    return %c0_i32, %c0_i32_0, %c0_i32_1 : i32, i32, i32
  }
  func.func @transform_5(%arg0: i32) -> (i32, i32) {
    %c0_i32 = arith.constant 0 : i32
    %c0_i32_0 = arith.constant 0 : i32
    %c0_i32_1 = arith.constant 0 : i32
    return %c0_i32, %c0_i32_0 : i32, i32
  }
  func.func @transform_6(%arg0: i32) -> (i32, i32, i32) {
    %c0_i32 = arith.constant 0 : i32
    %c0_i32_0 = arith.constant 0 : i32
    %c0_i32_1 = arith.constant 0 : i32
    %c0_i32_2 = arith.constant 0 : i32
    return %c0_i32, %c0_i32_0, %c0_i32_1 : i32, i32, i32
  }
  func.func @transform_7(%arg0: i32) -> (i32, i32) {
    %c0_i32 = arith.constant 0 : i32
    %c0_i32_0 = arith.constant 0 : i32
    %c0_i32_1 = arith.constant 0 : i32
    return %c0_i32, %c0_i32_0 : i32, i32
  }
  func.func @transform_8(%arg0: i32) -> (i32, i32, i32) {
    %c0_i32 = arith.constant 0 : i32
    %c0_i32_0 = arith.constant 0 : i32
    %c0_i32_1 = arith.constant 0 : i32
    return %arg0, %c0_i32, %c0_i32_0 : i32, i32, i32
  }
}

</mosaic_0001>

<llo_original>
// kernel: tile.8
$region0: #{tile.8}
  #allocation0 [shape = 's32[1]{0}', space=sflag, size = 0x4, scoped, tag = 'scoped memory for tile.8']
  %s0 = inlined_call_operand.vmem [shape: f32[18], index: 0, kind: input, shape index: {}]
  %s1 = inlined_call_operand.vmem [shape: f32[16,18], index: 1, kind: output, shape index: {}]
  // Predicated region
  $region2: #{tile.8} parent=0 // pred_check
    _
  $region3: #{tile.8} parent=0 // pred_check_branch
    %3 = sbr.rel (0) target = $region5
  $region4: #{tile.8} parent=0 // pred_region
    _
  $region5: #{tile.8} parent=0 // pred_fallthru
    _
  %v4 = vld [vmem:[%s0] ss:$0 sm:$0xff]
  %5 = vst [vmem:[%s1] sm:$0xff] %v4
  %s6 = scalar_lea.vmem %s1, 8
  %7 = vst [vmem:[%s6] sm:$0xff] %v4

// kernel: tile.0
$region0: #{tile.0}
  %s0 = inlined_call_operand.vmem [shape: f32[16,18], index: 0, kind: input, shape index: {}]
  %s1 = inlined_call_operand.vmem [shape: f32[288,1], index: 1, kind: output, shape index: {}]
  %v2 = vld [vmem:[%s0] sm:$0xff]
  %vm3 = vcmask 7168
  %4 = vst.msk [vmem:[%s1] ss:$18 sm:$0xff] %vm3, %v2
  %s5 = scalar_lea.vmem %s0, 8
  %v6 = vld [vmem:[%s5] sm:$0xff]
  %vm7 = vcmask 7168
  %s8 = scalar_lea.vmem %s1, 144
  %9 = vst.msk [vmem:[%s8] ss:$18 sm:$0xff] %vm7, %v6
  %v10 = vld.sshfl [vmem:[%s0] sm:$0xff pattern:$0xf6d4b290]
  %11 = vrot.lane.b32.xlu0 %v10, 127
  %v12 = vpop.permute.xlu0 %11
  %vm13 = vcmask 7168
  %s14 = scalar_lea.vmem %s1, 1
  %15 = vst.msk [vmem:[%s14] ss:$162 sm:$0x3] %vm13, %v12
  %s16 = scalar_lea.vmem %s1, 4294967009
  %17 = vst.msk [vmem:[%s16] ss:$162 sm:$0xc] %vm13, %v12
  %s18 = scalar_lea.vmem %s1, 4294966721
  %19 = vst.msk [vmem:[%s18] ss:$162 sm:$0x30] %vm13, %v12
  %s20 = scalar_lea.vmem %s1, 4294966433
  %21 = vst.msk [vmem:[%s20] ss:$162 sm:$0xc0] %vm13, %v12
  %s22 = scalar_lea.vmem %s0, 1
  %v23 = vld.sshfl [vmem:[%s22] sm:$0xff pattern:$0x6d4b2907]
  %24 = vrot.lane.b32.xlu0 %v23, 127
  %v25 = vpop.permute.xlu0 %24
  %vm26 = vcmask 7168
  %s27 = scalar_lea.vmem %s1, 145
  %28 = vst.msk [vmem:[%s27] ss:$-126 sm:$0x3] %vm26, %v25
  %s29 = scalar_lea.vmem %s1, 433
  %30 = vst.msk [vmem:[%s29] ss:$-126 sm:$0xc] %vm26, %v25
  %s31 = scalar_lea.vmem %s1, 721
  %32 = vst.msk [vmem:[%s31] ss:$-126 sm:$0x30] %vm26, %v25
  %s33 = scalar_lea.vmem %s1, 1009
  %34 = vst.msk [vmem:[%s33] ss:$-126 sm:$0xc0] %vm26, %v25
  %v35 = vld.sshfl [vmem:[%s0] sm:$0xff pattern:$0x6d4b2907]
  %36 = vrot.lane.b32.xlu0 %v35, 126
  %v37 = vpop.permute.xlu0 %36
  %vm38 = vcmask 7168
  %s39 = scalar_lea.vmem %s1, 128
  %40 = vst.msk [vmem:[%s39] ss:$-126 sm:$0x3] %vm38, %v37
  %s41 = scalar_lea.vmem %s1, 416
  %42 = vst.msk [vmem:[%s41] ss:$-126 sm:$0xc] %vm38, %v37
  %s43 = scalar_lea.vmem %s1, 704
  %44 = vst.msk [vmem:[%s43] ss:$-126 sm:$0x30] %vm38, %v37
  %s45 = scalar_lea.vmem %s1, 992
  %46 = vst.msk [vmem:[%s45] ss:$-126 sm:$0xc0] %vm38, %v37
  %s47 = scalar_lea.vmem %s0, 1
  %v48 = vld.sshfl [vmem:[%s47] sm:$0xff pattern:$0xd4b2907e]
  %49 = vrot.lane.b32.xlu0 %v48, 126
  %v50 = vpop.permute.xlu0 %49
  %vm51 = vcmask 7168
  %s52 = scalar_lea.vmem %s1, 272
  %53 = vst.msk [vmem:[%s52] ss:$-126 sm:$0x7] %vm51, %v50
  %s54 = scalar_lea.vmem %s1, 560
  %55 = vst.msk [vmem:[%s54] ss:$-126 sm:$0x18] %vm51, %v50
  %s56 = scalar_lea.vmem %s1, 848
  %57 = vst.msk [vmem:[%s56] ss:$-126 sm:$0x60] %vm51, %v50
  %s58 = scalar_lea.vmem %s1, 247
  %59 = vst.msk [vmem:[%s58] sm:$0x80] %vm51, %v50
  %v60 = vld.sshfl [vmem:[%s0] sm:$0xff pattern:$0x6d4b2907]
  %61 = vrot.lane.b32.xlu0 %v60, 125
  %v62 = vpop.permute.xlu0 %61
  %vm63 = vcmask 7168
  %s64 = scalar_lea.vmem %s1, 129
  %65 = vst.msk [vmem:[%s64] ss:$-126 sm:$0x3] %vm63, %v62
  %s66 = scalar_lea.vmem %s1, 417
  %67 = vst.msk [vmem:[%s66] ss:$-126 sm:$0xc] %vm63, %v62
  %s68 = scalar_lea.vmem %s1, 705
  %69 = vst.msk [vmem:[%s68] ss:$-126 sm:$0x30] %vm63, %v62
  %s70 = scalar_lea.vmem %s1, 993
  %71 = vst.msk [vmem:[%s70] ss:$-126 sm:$0xc0] %vm63, %v62
  %s72 = scalar_lea.vmem %s0, 1
  %v73 = vld.sshfl [vmem:[%s72] sm:$0xff pattern:$0xd4b2907e]
  %74 = vrot.lane.b32.xlu0 %v73, 125
  %v75 = vpop.permute.xlu0 %74
  %vm76 = vcmask 7168
  %s77 = scalar_lea.vmem %s1, 273
  %78 = vst.msk [vmem:[%s77] ss:$-126 sm:$0x7] %vm76, %v75
  %s79 = scalar_lea.vmem %s1, 561
  %80 = vst.msk [vmem:[%s79] ss:$-126 sm:$0x18] %vm76, %v75
  %s81 = scalar_lea.vmem %s1, 849
  %82 = vst.msk [vmem:[%s81] ss:$-126 sm:$0x60] %vm76, %v75
  %s83 = scalar_lea.vmem %s1, 248
  %84 = vst.msk [vmem:[%s83] sm:$0x80] %vm76, %v75
  %v85 = vld.sshfl [vmem:[%s0] sm:$0xff pattern:$0xd4b2907e]
  %86 = vrot.lane.b32.xlu0 %v85, 124
  %v87 = vpop.permute.xlu0 %86
  %vm88 = vcmask 7168
  %s89 = scalar_lea.vmem %s1, 256
  %90 = vst.msk [vmem:[%s89] ss:$-126 sm:$0x7] %vm88, %v87
  %s91 = scalar_lea.vmem %s1, 544
  %92 = vst.msk [vmem:[%s91] ss:$-126 sm:$0x18] %vm88, %v87
  %s93 = scalar_lea.vmem %s1, 832
  %94 = vst.msk [vmem:[%s93] ss:$-126 sm:$0x60] %vm88, %v87
  %s95 = scalar_lea.vmem %s1, 231
  %96 = vst.msk [vmem:[%s95] sm:$0x80] %vm88, %v87
  %s97 = scalar_lea.vmem %s0, 1
  %v98 = vld.sshfl [vmem:[%s97] sm:$0xff pattern:$0x4b2907e5]
  %99 = vrot.lane.b32.xlu0 %v98, 124
  %v100 = vpop.permute.xlu0 %99
  %vm101 = vcmask 7168
  %s102 = scalar_lea.vmem %s1, 112
  %103 = vst.msk [vmem:[%s102] ss:$162 sm:$0x3] %vm101, %v100
  %s104 = scalar_lea.vmem %s1, 400
  %105 = vst.msk [vmem:[%s104] ss:$-126 sm:$0xc] %vm101, %v100
  %s106 = scalar_lea.vmem %s1, 688
  %107 = vst.msk [vmem:[%s106] ss:$-126 sm:$0x30] %vm101, %v100
  %s108 = scalar_lea.vmem %s1, 976
  %109 = vst.msk [vmem:[%s108] ss:$-126 sm:$0xc0] %vm101, %v100
  %v110 = vld.sshfl [vmem:[%s0] sm:$0xff pattern:$0xd4b2907e]
  %111 = vrot.lane.b32.xlu0 %v110, 123
  %v112 = vpop.permute.xlu0 %111
  %vm113 = vcmask 7168
  %s114 = scalar_lea.vmem %s1, 257
  %115 = vst.msk [vmem:[%s114] ss:$-126 sm:$0x7] %vm113, %v112
  %s116 = scalar_lea.vmem %s1, 545
  %117 = vst.msk [vmem:[%s116] ss:$-126 sm:$0x18] %vm113, %v112
  %s118 = scalar_lea.vmem %s1, 833
  %119 = vst.msk [vmem:[%s118] ss:$-126 sm:$0x60] %vm113, %v112
  %s120 = scalar_lea.vmem %s1, 232
  %121 = vst.msk [vmem:[%s120] sm:$0x80] %vm113, %v112
  %s122 = scalar_lea.vmem %s0, 1
  %v123 = vld.sshfl [vmem:[%s122] sm:$0xff pattern:$0x4b2907e5]
  %124 = vrot.lane.b32.xlu0 %v123, 123
  %v125 = vpop.permute.xlu0 %124
  %vm126 = vcmask 7168
  %s127 = scalar_lea.vmem %s1, 113
  %128 = vst.msk [vmem:[%s127] ss:$162 sm:$0x3] %vm126, %v125
  %s129 = scalar_lea.vmem %s1, 401
  %130 = vst.msk [vmem:[%s129] ss:$-126 sm:$0xc] %vm126, %v125
  %s131 = scalar_lea.vmem %s1, 689
  %132 = vst.msk [vmem:[%s131] ss:$-126 sm:$0x30] %vm126, %v125
  %s133 = scalar_lea.vmem %s1, 977
  %134 = vst.msk [vmem:[%s133] ss:$-126 sm:$0xc0] %vm126, %v125
  %v135 = vld.sshfl [vmem:[%s0] sm:$0xff pattern:$0x4b2907e5]
  %136 = vrot.lane.b32.xlu0 %v135, 122
  %v137 = vpop.permute.xlu0 %136
  %vm138 = vcmask 7168
  %s139 = scalar_lea.vmem %s1, 96
  %140 = vst.msk [vmem:[%s139] ss:$162 sm:$0x3] %vm138, %v137
  %s141 = scalar_lea.vmem %s1, 384
  %142 = vst.msk [vmem:[%s141] ss:$-126 sm:$0xc] %vm138, %v137
  %s143 = scalar_lea.vmem %s1, 672
  %144 = vst.msk [vmem:[%s143] ss:$-126 sm:$0x30] %vm138, %v137
  %s145 = scalar_lea.vmem %s1, 960
  %146 = vst.msk [vmem:[%s145] ss:$-126 sm:$0xc0] %vm138, %v137
  %s147 = scalar_lea.vmem %s0, 1
  %v148 = vld.sshfl [vmem:[%s147] sm:$0xff pattern:$0xb2907e5c]
  %149 = vrot.lane.b32.xlu0 %v148, 122
  %v150 = vpop.permute.xlu0 %149
  %vm151 = vcmask 7168
  %s152 = scalar_lea.vmem %s1, 240
  %153 = vst.msk [vmem:[%s152] ss:$-126 sm:$0x3] %vm151, %v150
  %s154 = scalar_lea.vmem %s1, 528
  %155 = vst.msk [vmem:[%s154] ss:$-126 sm:$0x1c] %vm151, %v150
  %s156 = scalar_lea.vmem %s1, 816
  %157 = vst.msk [vmem:[%s156] ss:$-126 sm:$0x60] %vm151, %v150
  %s158 = scalar_lea.vmem %s1, 215
  %159 = vst.msk [vmem:[%s158] sm:$0x80] %vm151, %v150
  %v160 = vld.sshfl [vmem:[%s0] sm:$0xff pattern:$0x4b2907e5]
  %161 = vrot.lane.b32.xlu0 %v160, 121
  %v162 = vpop.permute.xlu0 %161
  %vm163 = vcmask 7168
  %s164 = scalar_lea.vmem %s1, 97
  %165 = vst.msk [vmem:[%s164] ss:$162 sm:$0x3] %vm163, %v162
  %s166 = scalar_lea.vmem %s1, 385
  %167 = vst.msk [vmem:[%s166] ss:$-126 sm:$0xc] %vm163, %v162
  %s168 = scalar_lea.vmem %s1, 673
  %169 = vst.msk [vmem:[%s168] ss:$-126 sm:$0x30] %vm163, %v162
  %s170 = scalar_lea.vmem %s1, 961
  %171 = vst.msk [vmem:[%s170] ss:$-126 sm:$0xc0] %vm163, %v162
  %s172 = scalar_lea.vmem %s0, 1
  %v173 = vld.sshfl [vmem:[%s172] sm:$0xff pattern:$0xb2907e5c]
  %174 = vrot.lane.b32.xlu0 %v173, 121
  %v175 = vpop.permute.xlu0 %174
  %vm176 = vcmask 7168
  %s177 = scalar_lea.vmem %s1, 241
  %178 = vst.msk [vmem:[%s177] ss:$-126 sm:$0x3] %vm176, %v175
  %s179 = scalar_lea.vmem %s1, 529
  %180 = vst.msk [vmem:[%s179] ss:$-126 sm:$0x1c] %vm176, %v175
  %s181 = scalar_lea.vmem %s1, 817
  %182 = vst.msk [vmem:[%s181] ss:$-126 sm:$0x60] %vm176, %v175
  %s183 = scalar_lea.vmem %s1, 216
  %184 = vst.msk [vmem:[%s183] sm:$0x80] %vm176, %v175
  %v185 = vld.sshfl [vmem:[%s0] sm:$0xff pattern:$0xb2907e5c]
  %186 = vrot.lane.b32.xlu0 %v185, 120
  %v187 = vpop.permute.xlu0 %186
  %vm188 = vcmask 7168
  %s189 = scalar_lea.vmem %s1, 224
  %190 = vst.msk [vmem:[%s189] ss:$-126 sm:$0x3] %vm188, %v187
  %s191 = scalar_lea.vmem %s1, 512
  %192 = vst.msk [vmem:[%s191] ss:$-126 sm:$0x1c] %vm188, %v187
  %s193 = scalar_lea.vmem %s1, 800
  %194 = vst.msk [vmem:[%s193] ss:$-126 sm:$0x60] %vm188, %v187
  %s195 = scalar_lea.vmem %s1, 199
  %196 = vst.msk [vmem:[%s195] sm:$0x80] %vm188, %v187
  %s197 = scalar_lea.vmem %s0, 1
  %v198 = vld.sshfl [vmem:[%s197] sm:$0xff pattern:$0x2907e5c3]
  %199 = vrot.lane.b32.xlu0 %v198, 120
  %v200 = vpop.permute.xlu0 %199
  %vm201 = vcmask 7168
  %s202 = scalar_lea.vmem %s1, 80
  %203 = vst.msk [vmem:[%s202] ss:$162 sm:$0x3] %vm201, %v200
  %s204 = scalar_lea.vmem %s1, 4294967088
  %205 = vst.msk [vmem:[%s204] ss:$162 sm:$0xc] %vm201, %v200
  %s206 = scalar_lea.vmem %s1, 656
  %207 = vst.msk [vmem:[%s206] ss:$-126 sm:$0x30] %vm201, %v200
  %s208 = scalar_lea.vmem %s1, 944
  %209 = vst.msk [vmem:[%s208] ss:$-126 sm:$0xc0] %vm201, %v200
  %v210 = vld.sshfl [vmem:[%s0] sm:$0xff pattern:$0xb2907e5c]
  %211 = vrot.lane.b32.xlu0 %v210, 119
  %v212 = vpop.permute.xlu0 %211
  %vm213 = vcmask 7168
  %s214 = scalar_lea.vmem %s1, 225
  %215 = vst.msk [vmem:[%s214] ss:$-126 sm:$0x3] %vm213, %v212
  %s216 = scalar_lea.vmem %s1, 513
  %217 = vst.msk [vmem:[%s216] ss:$-126 sm:$0x1c] %vm213, %v212
  %s218 = scalar_lea.vmem %s1, 801
  %219 = vst.msk [vmem:[%s218] ss:$-126 sm:$0x60] %vm213, %v212
  %s220 = scalar_lea.vmem %s1, 200
  %221 = vst.msk [vmem:[%s220] sm:$0x80] %vm213, %v212
  %s222 = scalar_lea.vmem %s0, 1
  %v223 = vld.sshfl [vmem:[%s222] sm:$0xff pattern:$0x2907e5c3]
  %224 = vrot.lane.b32.xlu0 %v223, 119
  %v225 = vpop.permute.xlu0 %224
  %vm226 = vcmask 7168
  %s227 = scalar_lea.vmem %s1, 81
  %228 = vst.msk [vmem:[%s227] ss:$162 sm:$0x3] %vm226, %v225
  %s229 = scalar_lea.vmem %s1, 4294967089
  %230 = vst.msk [vmem:[%s229] ss:$162 sm:$0xc] %vm226, %v225
  %s231 = scalar_lea.vmem %s1, 657
  %232 = vst.msk [vmem:[%s231] ss:$-126 sm:$0x30] %vm226, %v225
  %s233 = scalar_lea.vmem %s1, 945
  %234 = vst.msk [vmem:[%s233] ss:$-126 sm:$0xc0] %vm226, %v225
  %v235 = vld.sshfl [vmem:[%s0] sm:$0xff pattern:$0x2907e5c3]
  %236 = vrot.lane.b32.xlu0 %v235, 118
  %v237 = vpop.permute.xlu0 %236
  %vm238 = vcmask 7168
  %s239 = scalar_lea.vmem %s1, 64
  %240 = vst.msk [vmem:[%s239] ss:$162 sm:$0x3] %vm238, %v237
  %s241 = scalar_lea.vmem %s1, 4294967072
  %242 = vst.msk [vmem:[%s241] ss:$162 sm:$0xc] %vm238, %v237
  %s243 = scalar_lea.vmem %s1, 640
  %244 = vst.msk [vmem:[%s243] ss:$-126 sm:$0x30] %vm238, %v237
  %s245 = scalar_lea.vmem %s1, 928
  %246 = vst.msk [vmem:[%s245] ss:$-126 sm:$0xc0] %vm238, %v237
  %s247 = scalar_lea.vmem %s0, 1
  %v248 = vld.sshfl [vmem:[%s247] sm:$0xff pattern:$0x907e5c3a]
  %249 = vrot.lane.b32.xlu0 %v248, 118
  %v250 = vpop.permute.xlu0 %249
  %vm251 = vcmask 7168
  %s252 = scalar_lea.vmem %s1, 208
  %253 = vst.msk [vmem:[%s252] ss:$-126 sm:$0x3] %vm251, %v250
  %s254 = scalar_lea.vmem %s1, 496
  %255 = vst.msk [vmem:[%s254] ss:$-126 sm:$0xc] %vm251, %v250
  %s256 = scalar_lea.vmem %s1, 784
  %257 = vst.msk [vmem:[%s256] ss:$-126 sm:$0x70] %vm251, %v250
  %s258 = scalar_lea.vmem %s1, 183
  %259 = vst.msk [vmem:[%s258] sm:$0x80] %vm251, %v250
  %v260 = vld.sshfl [vmem:[%s0] sm:$0xff pattern:$0x2907e5c3]
  %261 = vrot.lane.b32.xlu0 %v260, 117
  %v262 = vpop.permute.xlu0 %261
  %vm263 = vcmask 7168
  %s264 = scalar_lea.vmem %s1, 65
  %265 = vst.msk [vmem:[%s264] ss:$162 sm:$0x3] %vm263, %v262
  %s266 = scalar_lea.vmem %s1, 4294967073
  %267 = vst.msk [vmem:[%s266] ss:$162 sm:$0xc] %vm263, %v262
  %s268 = scalar_lea.vmem %s1, 641
  %269 = vst.msk [vmem:[%s268] ss:$-126 sm:$0x30] %vm263, %v262
  %s270 = scalar_lea.vmem %s1, 929
  %271 = vst.msk [vmem:[%s270] ss:$-126 sm:$0xc0] %vm263, %v262
  %s272 = scalar_lea.vmem %s0, 1
  %v273 = vld.sshfl [vmem:[%s272] sm:$0xff pattern:$0x907e5c3a]
  %274 = vrot.lane.b32.xlu0 %v273, 117
  %v275 = vpop.permute.xlu0 %274
  %vm276 = vcmask 7168
  %s277 = scalar_lea.vmem %s1, 209
  %278 = vst.msk [vmem:[%s277] ss:$-126 sm:$0x3] %vm276, %v275
  %s279 = scalar_lea.vmem %s1, 497
  %280 = vst.msk [vmem:[%s279] ss:$-126 sm:$0xc] %vm276, %v275
  %s281 = scalar_lea.vmem %s1, 785
  %282 = vst.msk [vmem:[%s281] ss:$-126 sm:$0x70] %vm276, %v275
  %s283 = scalar_lea.vmem %s1, 184
  %284 = vst.msk [vmem:[%s283] sm:$0x80] %vm276, %v275
  %v285 = vld.sshfl [vmem:[%s0] sm:$0xff pattern:$0x907e5c3a]
  %286 = vrot.lane.b32.xlu0 %v285, 116
  %v287 = vpop.permute.xlu0 %286
  %vm288 = vcmask 7168
  %s289 = scalar_lea.vmem %s1, 192
  %290 = vst.msk [vmem:[%s289] ss:$-126 sm:$0x3] %vm288, %v287
  %s291 = scalar_lea.vmem %s1, 480
  %292 = vst.msk [vmem:[%s291] ss:$-126 sm:$0xc] %vm288, %v287
  %s293 = scalar_lea.vmem %s1, 768
  %294 = vst.msk [vmem:[%s293] ss:$-126 sm:$0x70] %vm288, %v287
  %s295 = scalar_lea.vmem %s1, 167
  %296 = vst.msk [vmem:[%s295] sm:$0x80] %vm288, %v287
  %s297 = scalar_lea.vmem %s0, 1
  %v298 = vld.sshfl [vmem:[%s297] sm:$0xff pattern:$0x7e5c3a1]
  %299 = vrot.lane.b32.xlu0 %v298, 116
  %v300 = vpop.permute.xlu0 %299
  %vm301 = vcmask 7168
  %s302 = scalar_lea.vmem %s1, 48
  %303 = vst.msk [vmem:[%s302] ss:$162 sm:$0x3] %vm301, %v300
  %s304 = scalar_lea.vmem %s1, 4294967056
  %305 = vst.msk [vmem:[%s304] ss:$162 sm:$0xc] %vm301, %v300
  %s306 = scalar_lea.vmem %s1, 4294966768
  %307 = vst.msk [vmem:[%s306] ss:$162 sm:$0x30] %vm301, %v300
  %s308 = scalar_lea.vmem %s1, 912
  %309 = vst.msk [vmem:[%s308] ss:$-126 sm:$0xc0] %vm301, %v300
  %v310 = vld.sshfl [vmem:[%s0] sm:$0xff pattern:$0x907e5c3a]
  %311 = vrot.lane.b32.xlu0 %v310, 115
  %v312 = vpop.permute.xlu0 %311
  %vm313 = vcmask 7168
  %s314 = scalar_lea.vmem %s1, 193
  %315 = vst.msk [vmem:[%s314] ss:$-126 sm:$0x3] %vm313, %v312
  %s316 = scalar_lea.vmem %s1, 481
  %317 = vst.msk [vmem:[%s316] ss:$-126 sm:$0xc] %vm313, %v312
  %s318 = scalar_lea.vmem %s1, 769
  %319 = vst.msk [vmem:[%s318] ss:$-126 sm:$0x70] %vm313, %v312
  %s320 = scalar_lea.vmem %s1, 168
  %321 = vst.msk [vmem:[%s320] sm:$0x80] %vm313, %v312
  %s322 = scalar_lea.vmem %s0, 1
  %v323 = vld.sshfl [vmem:[%s322] sm:$0xff pattern:$0x7e5c3a1]
  %324 = vrot.lane.b32.xlu0 %v323, 115
  %v325 = vpop.permute.xlu0 %324
  %vm326 = vcmask 7168
  %s327 = scalar_lea.vmem %s1, 49
  %328 = vst.msk [vmem:[%s327] ss:$162 sm:$0x3] %vm326, %v325
  %s329 = scalar_lea.vmem %s1, 4294967057
  %330 = vst.msk [vmem:[%s329] ss:$162 sm:$0xc] %vm326, %v325
  %s331 = scalar_lea.vmem %s1, 4294966769
  %332 = vst.msk [vmem:[%s331] ss:$162 sm:$0x30] %vm326, %v325
  %s333 = scalar_lea.vmem %s1, 913
  %334 = vst.msk [vmem:[%s333] ss:$-126 sm:$0xc0] %vm326, %v325
  %v335 = vld.sshfl [vmem:[%s0] sm:$0xff pattern:$0x7e5c3a1]
  %336 = vrot.lane.b32.xlu0 %v335, 114
  %v337 = vpop.permute.xlu0 %336
  %vm338 = vcmask 7168
  %s339 = scalar_lea.vmem %s1, 32
  %340 = vst.msk [vmem:[%s339] ss:$162 sm:$0x3] %vm338, %v337
  %s341 = scalar_lea.vmem %s1, 4294967040
  %342 = vst.msk [vmem:[%s341] ss:$162 sm:$0xc] %vm338, %v337
  %s343 = scalar_lea.vmem %s1, 4294966752
  %344 = vst.msk [vmem:[%s343] ss:$162 sm:$0x30] %vm338, %v337
  %s345 = scalar_lea.vmem %s1, 896
  %346 = vst.msk [vmem:[%s345] ss:$-126 sm:$0xc0] %vm338, %v337
  %s347 = scalar_lea.vmem %s0, 2
  %v348 = vld.sshfl [vmem:[%s347] sm:$0xff pattern:$0x6d4b2907]
  %349 = vrot.lane.b32.xlu0 %v348, 114
  %v350 = vpop.permute.xlu0 %349
  %vm351 = vcmask 7168
  %s352 = scalar_lea.vmem %s1, 176
  %353 = vst.msk [vmem:[%s352] ss:$-126 sm:$0x3] %vm351, %v350
  %s354 = scalar_lea.vmem %s1, 464
  %355 = vst.msk [vmem:[%s354] ss:$-126 sm:$0xc] %vm351, %v350
  %s356 = scalar_lea.vmem %s1, 752
  %357 = vst.msk [vmem:[%s356] ss:$-126 sm:$0x30] %vm351, %v350
  %s358 = scalar_lea.vmem %s1, 1040
  %359 = vst.msk [vmem:[%s358] ss:$-126 sm:$0xc0] %vm351, %v350
  %v360 = vld.sshfl [vmem:[%s0] sm:$0xff pattern:$0x7e5c3a1]
  %361 = vrot.lane.b32.xlu0 %v360, 113
  %v362 = vpop.permute.xlu0 %361
  %vm363 = vcmask 7168
  %s364 = scalar_lea.vmem %s1, 33
  %365 = vst.msk [vmem:[%s364] ss:$162 sm:$0x3] %vm363, %v362
  %s366 = scalar_lea.vmem %s1, 4294967041
  %367 = vst.msk [vmem:[%s366] ss:$162 sm:$0xc] %vm363, %v362
  %s368 = scalar_lea.vmem %s1, 4294966753
  %369 = vst.msk [vmem:[%s368] ss:$162 sm:$0x30] %vm363, %v362
  %s370 = scalar_lea.vmem %s1, 897
  %371 = vst.msk [vmem:[%s370] ss:$-126 sm:$0xc0] %vm363, %v362
  %s372 = scalar_lea.vmem %s0, 2
  %v373 = vld.sshfl [vmem:[%s372] sm:$0xff pattern:$0x6d4b2907]
  %374 = vrot.lane.b32.xlu0 %v373, 113
  %v375 = vpop.permute.xlu0 %374
  %vm376 = vcmask 7168
  %s377 = scalar_lea.vmem %s1, 177
  %378 = vst.msk [vmem:[%s377] ss:$-126 sm:$0x3] %vm376, %v375
  %s379 = scalar_lea.vmem %s1, 465
  %380 = vst.msk [vmem:[%s379] ss:$-126 sm:$0xc] %vm376, %v375
  %s381 = scalar_lea.vmem %s1, 753
  %382 = vst.msk [vmem:[%s381] ss:$-126 sm:$0x30] %vm376, %v375
  %s383 = scalar_lea.vmem %s1, 1041
  %384 = vst.msk [vmem:[%s383] ss:$-126 sm:$0xc0] %vm376, %v375
  %s385 = scalar_lea.vmem %s0, 1
  %v386 = vld.sshfl [vmem:[%s385] sm:$0xff pattern:$0x6d4b2907]
  %387 = vrot.lane.b32.xlu0 %v386, 112
  %v388 = vpop.permute.xlu0 %387
  %vm389 = vcmask 7168
  %s390 = scalar_lea.vmem %s1, 160
  %391 = vst.msk [vmem:[%s390] ss:$-126 sm:$0x3] %vm389, %v388
  %s392 = scalar_lea.vmem %s1, 448
  %393 = vst.msk [vmem:[%s392] ss:$-126 sm:$0xc] %vm389, %v388
  %s394 = scalar_lea.vmem %s1, 736
  %395 = vst.msk [vmem:[%s394] ss:$-126 sm:$0x30] %vm389, %v388
  %s396 = scalar_lea.vmem %s1, 1024
  %397 = vst.msk [vmem:[%s396] ss:$-126 sm:$0xc0] %vm389, %v388
  %v398 = vld.sshfl [vmem:[%s0] sm:$0xff pattern:$0xf6d4b290]
  %399 = vrot.lane.b32.xlu0 %v398, 112
  %v400 = vpop.permute.xlu0 %399
  %vm401 = vcmask 7168
  %s402 = scalar_lea.vmem %s1, 16
  %403 = vst.msk [vmem:[%s402] ss:$162 sm:$0x3] %vm401, %v400
  %s404 = scalar_lea.vmem %s1, 4294967024
  %405 = vst.msk [vmem:[%s404] ss:$162 sm:$0xc] %vm401, %v400
  %s406 = scalar_lea.vmem %s1, 4294966736
  %407 = vst.msk [vmem:[%s406] ss:$162 sm:$0x30] %vm401, %v400
  %s408 = scalar_lea.vmem %s1, 4294966448
  %409 = vst.msk [vmem:[%s408] ss:$162 sm:$0xc0] %vm401, %v400
  %s410 = scalar_lea.vmem %s0, 1
  %v411 = vld.sshfl [vmem:[%s410] sm:$0xff pattern:$0x6d4b2907]
  %412 = vrot.lane.b32.xlu0 %v411, 111
  %v413 = vpop.permute.xlu0 %412
  %vm414 = vcmask 7168
  %s415 = scalar_lea.vmem %s1, 161
  %416 = vst.msk [vmem:[%s415] ss:$-126 sm:$0x3] %vm414, %v413
  %s417 = scalar_lea.vmem %s1, 449
  %418 = vst.msk [vmem:[%s417] ss:$-126 sm:$0xc] %vm414, %v413
  %s419 = scalar_lea.vmem %s1, 737
  %420 = vst.msk [vmem:[%s419] ss:$-126 sm:$0x30] %vm414, %v413
  %s421 = scalar_lea.vmem %s1, 1025
  %422 = vst.msk [vmem:[%s421] ss:$-126 sm:$0xc0] %vm414, %v413
  %v423 = vld.sshfl [vmem:[%s0] sm:$0xff pattern:$0xf6d4b290]
  %424 = vrot.lane.b32.xlu0 %v423, 111
  %v425 = vpop.permute.xlu0 %424
  %vm426 = vcmask 7168
  %s427 = scalar_lea.vmem %s1, 17
  %428 = vst.msk [vmem:[%s427] ss:$162 sm:$0x3] %vm426, %v425
  %s429 = scalar_lea.vmem %s1, 4294967025
  %430 = vst.msk [vmem:[%s429] ss:$162 sm:$0xc] %vm426, %v425
  %s431 = scalar_lea.vmem %s1, 4294966737
  %432 = vst.msk [vmem:[%s431] ss:$162 sm:$0x30] %vm426, %v425
  %s433 = scalar_lea.vmem %s1, 4294966449
  %434 = vst.msk [vmem:[%s433] ss:$162 sm:$0xc0] %vm426, %v425

// kernel: feature_extraction_forward.1
$region0: #{feature_extraction_forward.1}
  #allocation0 [shape = 'u32[]', space=smem, size = 0x4, offset = 0x4, fixed_abs, tag = 'smem constant byte address 0x4 - core index']
  #allocation1 [shape = 'u32[144,128]{1,0:T(1,128)}', space=vmem, size = 0x12000, scoped, tag = 'internal scratch']
  #allocation2 [shape = 'bf16[336,32]{1,0:T(16,128)(2,1)}', space=vmem, size = 0x15000, scoped, tag = 'scratch operand']
  #allocation3 [shape = 'bf16[336,32]{1,0:T(16,128)(2,1)}', space=vmem, size = 0x15000, scoped, tag = 'scratch operand']
  %s0 = inlined_call_operand.vmem [shape: bf16[2,342,4], index: 0, kind: input, shape index: {}]
  %s1 = inlined_call_operand.vmem [shape: f32[288,1], index: 1, kind: input, shape index: {}]
  %s2 = inlined_call_operand.vmem [shape: bf16[9,4,32], index: 2, kind: input, shape index: {}]
  %s3 = inlined_call_operand.vmem [shape: f32[1,32], index: 3, kind: input, shape index: {}]
  %s4 = inlined_call_operand.vmem [shape: bf16[9,32,32], index: 4, kind: input, shape index: {}]
  %s5 = inlined_call_operand.vmem [shape: f32[1,32], index: 5, kind: input, shape index: {}]
  %s6 = inlined_call_operand.vmem [shape: bf16[9,32,32], index: 6, kind: input, shape index: {}]
  %s7 = inlined_call_operand.vmem [shape: f32[1,32], index: 7, kind: input, shape index: {}]
  %s8 = inlined_call_operand.vmem [shape: bf16[2,288,32], index: 8, kind: output, shape index: {}]
  %s9 = sld [smem:[#allocation0]]
  $region65: #{feature_extraction_forward.1} parent=0
    _
  %s11 = ssub.s32 1, %s9
  %s12 = scalar_select 0, %s11, %s9
  loop: start=0, step=1, limit=4
  $region2: #{feature_extraction_forward.1} parent=0 // loop_pre_header
    _
  $region3: #{feature_extraction_forward.1} parent=0 // loop_header
    %s14 = sphi 0, %s18
    %p15 = scmp.ge.s32.totalorder %s14, 4
    %s24 = sphi 0, %s26
    %s27 = sphi 0, %s24
    %s28 = sphi 0, %s27
    %s44 = sphi 0, %s28
    %s48 = sphi 0, %s48
    %s50 = sphi 0, %s48
    %s51 = sphi 0, %s50
    %s65 = sphi 0, %s51
    %s69 = sphi 0, %s69
    %s71 = sphi 0, %s69
    %s72 = sphi 0, %s71
    %s86 = sphi 0, %s72
    %s90 = sphi 0, %s90
    %s92 = sphi 0, %s90
    %s93 = sphi 0, %s92
    %s107 = sphi 0, %s93
    %s111 = sphi 0, %s111
    %s113 = sphi 0, %s111
    %s114 = sphi 0, %s113
    %s128 = sphi 0, %s114
    %s132 = sphi 0, %s132
    %s134 = sphi 0, %s132
    %s135 = sphi 0, %s134
    %s149 = sphi 0, %s135
    %s153 = sphi 0, %s153
    %s155 = sphi 0, %s153
    %s156 = sphi 0, %s155
    %s170 = sphi 0, %s156
    %s174 = sphi 0, %s174
    %s176 = sphi 0, %s174
    %s177 = sphi 0, %s176
    %s191 = sphi 0, %s177
    %s197 = sphi 0, %s199
    %s200 = sphi 0, %s197
    %s201 = sphi 0, %s200
    %s217 = sphi 0, %s201
  $region4: #{feature_extraction_forward.1} parent=0 // loop_header_branch
    %17 = sbr.rel (%p15) target = $region8
  $region5: #{feature_extraction_forward.1} parent=0 // loop_body
    %s19 = ssub.s32 %s14, 1
    %s20 = ssub.s32 %s14, 2
    %s21 = sadd.s32 %s14, 1
    %s22 = ssub.s32 %s14, %s21
    %p23 = scmp.eq.s32.totalorder %s22, 0
    %s25 = sadd.s32 %s24, 1
    %s26 = scalar_select %p23, %s24, %s25
    %p29 = pneg %p23
    %p30 = scmp.eq.s32.totalorder %s14, 1
    %p31 = por %p29, %p30
    %p32 = scmp.ne.s32.totalorder %s24, %s27
    %p33 = scmp.eq.s32.totalorder %s14, 0
    %p34 = por %p32, %p33
    %p35 = scmp.ne.s32.totalorder %s24, %s27
    %p36 = scmp.eq.s32.totalorder %s19, 1
    %p37 = por %p35, %p36
    %p38 = scmp.ne.s32.totalorder %s27, %s28
    %p39 = scmp.eq.s32.totalorder %s19, 0
    %p40 = por %p38, %p39
    %p41 = scmp.ne.s32.totalorder %s27, %s28
    %p42 = scmp.eq.s32.totalorder %s20, 1
    %p43 = por %p41, %p42
    %p45 = scmp.ne.s32.totalorder %s28, %s44
    %p46 = scmp.eq.s32.totalorder %s20, 0
    %p47 = por %p45, %p46
    %s49 = sadd.s32 %s48, 1
    %p52 = scmp.eq.s32.totalorder %s14, 1
    %p53 = scmp.ne.s32.totalorder %s48, %s50
    %p54 = scmp.eq.s32.totalorder %s14, 0
    %p55 = por %p53, %p54
    %p56 = scmp.ne.s32.totalorder %s48, %s50
    %p57 = scmp.eq.s32.totalorder %s19, 1
    %p58 = por %p56, %p57
    %p59 = scmp.ne.s32.totalorder %s50, %s51
    %p60 = scmp.eq.s32.totalorder %s19, 0
    %p61 = por %p59, %p60
    %p62 = scmp.ne.s32.totalorder %s50, %s51
    %p63 = scmp.eq.s32.totalorder %s20, 1
    %p64 = por %p62, %p63
    %p66 = scmp.ne.s32.totalorder %s51, %s65
    %p67 = scmp.eq.s32.totalorder %s20, 0
    %p68 = por %p66, %p67
    %s70 = sadd.s32 %s69, 1
    %p73 = scmp.eq.s32.totalorder %s14, 1
    %p74 = scmp.ne.s32.totalorder %s69, %s71
    %p75 = scmp.eq.s32.totalorder %s14, 0
    %p76 = por %p74, %p75
    %p77 = scmp.ne.s32.totalorder %s69, %s71
    %p78 = scmp.eq.s32.totalorder %s19, 1
    %p79 = por %p77, %p78
    %p80 = scmp.ne.s32.totalorder %s71, %s72
    %p81 = scmp.eq.s32.totalorder %s19, 0
    %p82 = por %p80, %p81
    %p83 = scmp.ne.s32.totalorder %s71, %s72
    %p84 = scmp.eq.s32.totalorder %s20, 1
    %p85 = por %p83, %p84
    %p87 = scmp.ne.s32.totalorder %s72, %s86
    %p88 = scmp.eq.s32.totalorder %s20, 0
    %p89 = por %p87, %p88
    %s91 = sadd.s32 %s90, 1
    %p94 = scmp.eq.s32.totalorder %s14, 1
    %p95 = scmp.ne.s32.totalorder %s90, %s92
    %p96 = scmp.eq.s32.totalorder %s14, 0
    %p97 = por %p95, %p96
    %p98 = scmp.ne.s32.totalorder %s90, %s92
    %p99 = scmp.eq.s32.totalorder %s19, 1
    %p100 = por %p98, %p99
    %p101 = scmp.ne.s32.totalorder %s92, %s93
    %p102 = scmp.eq.s32.totalorder %s19, 0
    %p103 = por %p101, %p102
    %p104 = scmp.ne.s32.totalorder %s92, %s93
    %p105 = scmp.eq.s32.totalorder %s20, 1
    %p106 = por %p104, %p105
    %p108 = scmp.ne.s32.totalorder %s93, %s107
    %p109 = scmp.eq.s32.totalorder %s20, 0
    %p110 = por %p108, %p109
    %s112 = sadd.s32 %s111, 1
    %p115 = scmp.eq.s32.totalorder %s14, 1
    %p116 = scmp.ne.s32.totalorder %s111, %s113
    %p117 = scmp.eq.s32.totalorder %s14, 0
    %p118 = por %p116, %p117
    %p119 = scmp.ne.s32.totalorder %s111, %s113
    %p120 = scmp.eq.s32.totalorder %s19, 1
    %p121 = por %p119, %p120
    %p122 = scmp.ne.s32.totalorder %s113, %s114
    %p123 = scmp.eq.s32.totalorder %s19, 0
    %p124 = por %p122, %p123
    %p125 = scmp.ne.s32.totalorder %s113, %s114
    %p126 = scmp.eq.s32.totalorder %s20, 1
    %p127 = por %p125, %p126
    %p129 = scmp.ne.s32.totalorder %s114, %s128
    %p130 = scmp.eq.s32.totalorder %s20, 0
    %p131 = por %p129, %p130
    %s133 = sadd.s32 %s132, 1
    %p136 = scmp.eq.s32.totalorder %s14, 1
    %p137 = scmp.ne.s32.totalorder %s132, %s134
    %p138 = scmp.eq.s32.totalorder %s14, 0
    %p139 = por %p137, %p138
    %p140 = scmp.ne.s32.totalorder %s132, %s134
    %p141 = scmp.eq.s32.totalorder %s19, 1
    %p142 = por %p140, %p141
    %p143 = scmp.ne.s32.totalorder %s134, %s135
    %p144 = scmp.eq.s32.totalorder %s19, 0
    %p145 = por %p143, %p144
    %p146 = scmp.ne.s32.totalorder %s134, %s135
    %p147 = scmp.eq.s32.totalorder %s20, 1
    %p148 = por %p146, %p147
    %p150 = scmp.ne.s32.totalorder %s135, %s149
    %p151 = scmp.eq.s32.totalorder %s20, 0
    %p152 = por %p150, %p151
    %s154 = sadd.s32 %s153, 1
    %p157 = scmp.eq.s32.totalorder %s14, 1
    %p158 = scmp.ne.s32.totalorder %s153, %s155
    %p159 = scmp.eq.s32.totalorder %s14, 0
    %p160 = por %p158, %p159
    %p161 = scmp.ne.s32.totalorder %s153, %s155
    %p162 = scmp.eq.s32.totalorder %s19, 1
    %p163 = por %p161, %p162
    %p164 = scmp.ne.s32.totalorder %s155, %s156
    %p165 = scmp.eq.s32.totalorder %s19, 0
    %p166 = por %p164, %p165
    %p167 = scmp.ne.s32.totalorder %s155, %s156
    %p168 = scmp.eq.s32.totalorder %s20, 1
    %p169 = por %p167, %p168
    %p171 = scmp.ne.s32.totalorder %s156, %s170
    %p172 = scmp.eq.s32.totalorder %s20, 0
    %p173 = por %p171, %p172
    %s175 = sadd.s32 %s174, 1
    %p178 = scmp.eq.s32.totalorder %s14, 1
    %p179 = scmp.ne.s32.totalorder %s174, %s176
    %p180 = scmp.eq.s32.totalorder %s14, 0
    %p181 = por %p179, %p180
    %p182 = scmp.ne.s32.totalorder %s174, %s176
    %p183 = scmp.eq.s32.totalorder %s19, 1
    %p184 = por %p182, %p183
    %p185 = scmp.ne.s32.totalorder %s176, %s177
    %p186 = scmp.eq.s32.totalorder %s19, 0
    %p187 = por %p185, %p186
    %p188 = scmp.ne.s32.totalorder %s176, %s177
    %p189 = scmp.eq.s32.totalorder %s20, 1
    %p190 = por %p188, %p189
    %p192 = scmp.ne.s32.totalorder %s177, %s191
    %p193 = scmp.eq.s32.totalorder %s20, 0
    %p194 = por %p192, %p193
    %s195 = ssub.s32 %s14, %s21
    %p196 = scmp.eq.s32.totalorder %s195, 0
    %s198 = sadd.s32 %s197, 1
    %s199 = scalar_select %p196, %s197, %s198
    %p202 = pneg %p196
    %p203 = scmp.eq.s32.totalorder %s14, 1
    %p204 = por %p202, %p203
    %p205 = scmp.ne.s32.totalorder %s197, %s200
    %p206 = scmp.eq.s32.totalorder %s14, 0
    %p207 = por %p205, %p206
    %p208 = scmp.ne.s32.totalorder %s197, %s200
    %p209 = scmp.eq.s32.totalorder %s19, 1
    %p210 = por %p208, %p209
    %p211 = scmp.ne.s32.totalorder %s200, %s201
    %p212 = scmp.eq.s32.totalorder %s19, 0
    %p213 = por %p211, %p212
    %p214 = scmp.ne.s32.totalorder %s200, %s201
    %p215 = scmp.eq.s32.totalorder %s20, 1
    %p216 = por %p214, %p215
    %p218 = scmp.ne.s32.totalorder %s201, %s217
    %p219 = scmp.eq.s32.totalorder %s20, 0
    %p220 = por %p218, %p219
    %p221 = scmp.le.s32.totalorder 1, %s14
    %p222 = scmp.lt.s32.totalorder %s14, 3
    %p223 = pnand %p221, %p222
    %p224 = pneg %p223
    // Predicated region
    $region9: #{feature_extraction_forward.1} parent=5 // pred_check
      _
    $region10: #{feature_extraction_forward.1} parent=5 // pred_check_branch
      %226 = sbr.rel (%p223) target = $region12
    $region11: #{feature_extraction_forward.1} parent=5 // pred_region
      %s227 = ssub.s32 %s14, 1
      // Predicated region
      $region13: #{feature_extraction_forward.1} parent=11 // pred_check
        %p228 = pneg %p61
      $region14: #{feature_extraction_forward.1} parent=11 // pred_check_branch
        %230 = sbr.rel (%p228) target = $region16
      $region15: #{feature_extraction_forward.1} parent=11 // pred_region
        _
      $region16: #{feature_extraction_forward.1} parent=11 // pred_fallthru
        _
      // Predicated region
      $region17: #{feature_extraction_forward.1} parent=11 // pred_check
        %p231 = pneg %p82
      $region18: #{feature_extraction_forward.1} parent=11 // pred_check_branch
        %233 = sbr.rel (%p231) target = $region20
      $region19: #{feature_extraction_forward.1} parent=11 // pred_region
        _
      $region20: #{feature_extraction_forward.1} parent=11 // pred_fallthru
        _
      // Predicated region
      $region21: #{feature_extraction_forward.1} parent=11 // pred_check
        %p234 = pneg %p103
      $region22: #{feature_extraction_forward.1} parent=11 // pred_check_branch
        %236 = sbr.rel (%p234) target = $region24
      $region23: #{feature_extraction_forward.1} parent=11 // pred_region
        _
      $region24: #{feature_extraction_forward.1} parent=11 // pred_fallthru
        _
      // Predicated region
      $region25: #{feature_extraction_forward.1} parent=11 // pred_check
        %p237 = pneg %p124
      $region26: #{feature_extraction_forward.1} parent=11 // pred_check_branch
        %239 = sbr.rel (%p237) target = $region28
      $region27: #{feature_extraction_forward.1} parent=11 // pred_region
        _
      $region28: #{feature_extraction_forward.1} parent=11 // pred_fallthru
        _
      // Predicated region
      $region29: #{feature_extraction_forward.1} parent=11 // pred_check
        %p240 = pneg %p145
      $region30: #{feature_extraction_forward.1} parent=11 // pred_check_branch
        %242 = sbr.rel (%p240) target = $region32
      $region31: #{feature_extraction_forward.1} parent=11 // pred_region
        _
      $region32: #{feature_extraction_forward.1} parent=11 // pred_fallthru
        _
      // Predicated region
      $region33: #{feature_extraction_forward.1} parent=11 // pred_check
        %p243 = pneg %p166
      $region34: #{feature_extraction_forward.1} parent=11 // pred_check_branch
        %245 = sbr.rel (%p243) target = $region36
      $region35: #{feature_extraction_forward.1} parent=11 // pred_region
        _
      $region36: #{feature_extraction_forward.1} parent=11 // pred_fallthru
        _
      // Predicated region
      $region37: #{feature_extraction_forward.1} parent=11 // pred_check
        %p246 = pneg %p187
      $region38: #{feature_extraction_forward.1} parent=11 // pred_check_branch
        %248 = sbr.rel (%p246) target = $region40
      $region39: #{feature_extraction_forward.1} parent=11 // pred_region
        _
      $region40: #{feature_extraction_forward.1} parent=11 // pred_fallthru
        _
    $region12: #{feature_extraction_forward.1} parent=5 // pred_fallthru
      _
    %p249 = scmp.lt.s32.totalorder %s14, 2
    // Predicated region
    $region41: #{feature_extraction_forward.1} parent=5 // pred_check
      %p250 = pneg %p249
    $region42: #{feature_extraction_forward.1} parent=5 // pred_check_branch
      %252 = sbr.rel (%p250) target = $region44
    $region43: #{feature_extraction_forward.1} parent=5 // pred_region
      // Predicated region
      $region45: #{feature_extraction_forward.1} parent=43 // pred_check
        %p253 = pneg %p34
      $region46: #{feature_extraction_forward.1} parent=43 // pred_check_branch
        %255 = sbr.rel (%p253) target = $region48
      $region47: #{feature_extraction_forward.1} parent=43 // pred_region
        %p256 = scmp.lt.s32.totalorder %s14, 1
        %s257 = scalar_select %p256, %s14, 1
        %s258 = smul.addr %s257, 43
        %s259 = smul.addr %s258, 4
        %s260 = scalar_lea.vmem %s0, %s259
      $region48: #{feature_extraction_forward.1} parent=43 // pred_fallthru
        _
    $region44: #{feature_extraction_forward.1} parent=5 // pred_fallthru
      _
    %p261 = scmp.le.s32.totalorder 1, %s14
    %p262 = scmp.lt.s32.totalorder %s14, 3
    %p263 = pnand %p261, %p262
    %p264 = pneg %p263
    // Predicated region
    $region49: #{feature_extraction_forward.1} parent=5 // pred_check
      _
    $region50: #{feature_extraction_forward.1} parent=5 // pred_check_branch
      %266 = sbr.rel (%p263) target = $region52
    $region51: #{feature_extraction_forward.1} parent=5 // pred_region
      %s267 = ssub.s32 %s14, 1
      %p268 = scmp.lt.s32.totalorder %s19, 1
      %s269 = scalar_select %p268, %s19, 1
      %s270 = smul.addr %s269, 43
      %s271 = smul.addr %s270, 4
      %s272 = scalar_lea.vmem %s0, %s271
      %p273 = pneg %p40
      %p274 = pneg %p37
      %p275 = pneg %p61
      %p276 = pneg %p58
      %p277 = pneg %p82
      %p278 = pneg %p79
      %p279 = pneg %p103
      %p280 = pneg %p100
      %p281 = pneg %p124
      %p282 = pneg %p121
      %p283 = pneg %p145
      %p284 = pneg %p142
      %p285 = pneg %p166
      %p286 = pneg %p163
      %p287 = pneg %p187
      %p288 = pneg %p184
      %p289 = pneg %p213
      %p290 = pneg %p210
      %p291 = scmp.lt.s32.totalorder %s19, 1
      %s292 = scalar_select %p291, %s19, 1
      %s293 = smul.addr %s292, 36
      %s294 = smul.addr %s293, 4
      %s295 = scalar_lea.vmem %s8, %s294
      %p296 = scmp.lt.s32.totalorder %s19, 1
      %s297 = scalar_select %p296, %s19, 1
      %s298 = smul.addr %s297, 43
      %s299 = smul.addr %s298, 4
      %s300 = scalar_lea.vmem %s0, %s299
      %p301 = scmp.lt.s32.totalorder %s19, 1
      %s302 = scalar_select %p301, %s19, 1
      %s303 = smul.addr %s302, 36
      %s304 = smul.addr %s303, 4
      %s305 = scalar_lea.vmem %s8, %s304
      %v307 = vld [vmem:[%s1] sm:$0xff]
      %v308 = vld [vmem:[%s1 + $0x8] sm:$0xff]
      %v309 = vld [vmem:[%s1 + $0x10] sm:$0xff]
      %v310 = vld [vmem:[%s1 + $0x18] sm:$0xff]
      %v311 = vld [vmem:[%s1 + $0x20] sm:$0xff]
      %v312 = vld [vmem:[%s1 + $0x28] sm:$0xff]
      %v313 = vld [vmem:[%s1 + $0x30] sm:$0xff]
      %v314 = vld [vmem:[%s1 + $0x38] sm:$0xff]
      %v315 = vld [vmem:[%s1 + $0x40] sm:$0xff]
      %v316 = vld [vmem:[%s1 + $0x48] sm:$0xff]
      %v317 = vld [vmem:[%s1 + $0x50] sm:$0xff]
      %v318 = vld [vmem:[%s1 + $0x58] sm:$0xff]
      %v319 = vld [vmem:[%s1 + $0x60] sm:$0xff]
      %v320 = vld [vmem:[%s1 + $0x68] sm:$0xff]
      %v321 = vld [vmem:[%s1 + $0x70] sm:$0xff]
      %v322 = vld [vmem:[%s1 + $0x78] sm:$0xff]
      %v323 = vld [vmem:[%s1 + $0x80] sm:$0xff]
      %v324 = vld [vmem:[%s1 + $0x88] sm:$0xff]
      %v325 = vld [vmem:[%s1 + $0x90] sm:$0xff]
      %v326 = vld [vmem:[%s1 + $0x98] sm:$0xff]
      %v327 = vld [vmem:[%s1 + $0xa0] sm:$0xff]
      %v328 = vld [vmem:[%s1 + $0xa8] sm:$0xff]
      %v329 = vld [vmem:[%s1 + $0xb0] sm:$0xff]
      %v330 = vld [vmem:[%s1 + $0xb8] sm:$0xff]
      %v331 = vld [vmem:[%s1 + $0xc0] sm:$0xff]
      %v332 = vld [vmem:[%s1 + $0xc8] sm:$0xff]
      %v333 = vld [vmem:[%s1 + $0xd0] sm:$0xff]
      %v334 = vld [vmem:[%s1 + $0xd8] sm:$0xff]
      %v335 = vld [vmem:[%s1 + $0xe0] sm:$0xff]
      %v336 = vld [vmem:[%s1 + $0xe8] sm:$0xff]
      %v337 = vld [vmem:[%s1 + $0xf0] sm:$0xff]
      %v338 = vld [vmem:[%s1 + $0xf8] sm:$0xff]
      %v339 = vld [vmem:[%s1 + $0x100] sm:$0xff]
      %v340 = vld [vmem:[%s1 + $0x108] sm:$0xff]
      %v341 = vld [vmem:[%s1 + $0x110] sm:$0xff]
      %v342 = vld [vmem:[%s1 + $0x118] sm:$0xff]
      %v343 = vld [vmem:[%s300] sm:$0xf]
      %v344 = vld [vmem:[%s300 + $0x4] sm:$0xf]
      %v345 = vld [vmem:[%s300 + $0x8] sm:$0xf]
      %v346 = vld [vmem:[%s300 + $0xc] sm:$0xf]
      %v347 = vld [vmem:[%s300 + $0x10] sm:$0xf]
      %v348 = vld [vmem:[%s300 + $0x14] sm:$0xf]
      %v349 = vld [vmem:[%s300 + $0x18] sm:$0xf]
      %v350 = vld [vmem:[%s300 + $0x1c] sm:$0xf]
      %v351 = vld [vmem:[%s300 + $0x20] sm:$0xf]
      %v352 = vld [vmem:[%s300 + $0x24] sm:$0xf]
      %v353 = vld [vmem:[%s300 + $0x28] sm:$0xf]
      %v354 = vld [vmem:[%s300 + $0x2c] sm:$0xf]
      %v355 = vld [vmem:[%s300 + $0x30] sm:$0xf]
      %v356 = vld [vmem:[%s300 + $0x34] sm:$0xf]
      %v357 = vld [vmem:[%s300 + $0x38] sm:$0xf]
      %v358 = vld [vmem:[%s300 + $0x3c] sm:$0xf]
      %v359 = vld [vmem:[%s300 + $0x40] sm:$0xf]
      %v360 = vld [vmem:[%s300 + $0x44] sm:$0xf]
      %v361 = vld [vmem:[%s300 + $0x48] sm:$0xf]
      %v362 = vld [vmem:[%s300 + $0x4c] sm:$0xf]
      %v363 = vld [vmem:[%s300 + $0x50] sm:$0xf]
      %v364 = vld [vmem:[%s300 + $0x54] sm:$0xf]
      %v365 = vld [vmem:[%s300 + $0x58] sm:$0xf]
      %v366 = vld [vmem:[%s300 + $0x5c] sm:$0xf]
      %v367 = vld [vmem:[%s300 + $0x60] sm:$0xf]
      %v368 = vld [vmem:[%s300 + $0x64] sm:$0xf]
      %v369 = vld [vmem:[%s300 + $0x68] sm:$0xf]
      %v370 = vld [vmem:[%s300 + $0x6c] sm:$0xf]
      %v371 = vld [vmem:[%s300 + $0x70] sm:$0xf]
      %v372 = vld [vmem:[%s300 + $0x74] sm:$0xf]
      %v373 = vld [vmem:[%s300 + $0x78] sm:$0xf]
      %v374 = vld [vmem:[%s300 + $0x7c] sm:$0xf]
      %v375 = vld [vmem:[%s300 + $0x80] sm:$0xf]
      %v376 = vld [vmem:[%s300 + $0x84] sm:$0xf]
      %v377 = vld [vmem:[%s300 + $0x88] sm:$0xf]
      %v378 = vld [vmem:[%s300 + $0x8c] sm:$0xf]
      %v379 = vld [vmem:[%s2] sm:$0x3]
      %v380 = vld [vmem:[%s300 + $0x90] sm:$0x1]
      %s381 = scalar_lea.vmem %s2, 2
      %v382 = vld [vmem:[%s381] sm:$0x3]
      %v420 = vunpack.c.l.b16 %v343
      %v421 = vunpack.c.l.b16 %v344
      %v422 = vunpack.c.l.b16 %v345
      %v423 = vunpack.c.l.b16 %v346
      %v424 = vunpack.c.l.b16 %v347
      %v425 = vunpack.c.l.b16 %v348
      %v426 = vunpack.c.l.b16 %v349
      %v427 = vunpack.c.l.b16 %v350
      %v428 = vunpack.c.l.b16 %v351
      %v429 = vunpack.c.l.b16 %v352
      %v430 = vunpack.c.l.b16 %v353
      %v431 = vunpack.c.l.b16 %v354
      %v432 = vunpack.c.l.b16 %v355
      %v433 = vunpack.c.l.b16 %v356
      %v434 = vunpack.c.l.b16 %v357
      %v435 = vunpack.c.l.b16 %v358
      %v436 = vunpack.c.l.b16 %v359
      %v437 = vunpack.c.l.b16 %v360
      %v438 = vunpack.c.l.b16 %v361
      %v439 = vunpack.c.l.b16 %v362
      %v440 = vunpack.c.l.b16 %v363
      %v441 = vunpack.c.l.b16 %v364
      %v442 = vunpack.c.l.b16 %v365
      %v443 = vunpack.c.l.b16 %v366
      %v444 = vunpack.c.l.b16 %v367
      %v445 = vunpack.c.l.b16 %v368
      %v446 = vunpack.c.l.b16 %v369
      %v447 = vunpack.c.l.b16 %v370
      %v448 = vunpack.c.l.b16 %v371
      %v449 = vunpack.c.l.b16 %v372
      %v450 = vunpack.c.l.b16 %v373
      %v451 = vunpack.c.l.b16 %v374
      %v452 = vunpack.c.l.b16 %v375
      %v453 = vunpack.c.l.b16 %v376
      %v454 = vunpack.c.l.b16 %v377
      %v455 = vunpack.c.l.b16 %v378
      %v456 = vunpack.c.l.b16 %v380
      %v457 = vpack.c.b16 %v421, %v420
      %v458 = vpack.c.b16 %v423, %v422
      %v459 = vpack.c.b16 %v425, %v424
      %v460 = vpack.c.b16 %v427, %v426
      %v461 = vpack.c.b16 %v429, %v428
      %v462 = vpack.c.b16 %v431, %v430
      %v463 = vpack.c.b16 %v433, %v432
      %v464 = vpack.c.b16 %v435, %v434
      %v465 = vpack.c.b16 %v437, %v436
      %v466 = vpack.c.b16 %v439, %v438
      %v467 = vpack.c.b16 %v441, %v440
      %v468 = vpack.c.b16 %v443, %v442
      %v469 = vpack.c.b16 %v445, %v444
      %v470 = vpack.c.b16 %v447, %v446
      %v471 = vpack.c.b16 %v449, %v448
      %v472 = vpack.c.b16 %v451, %v450
      %v473 = vpack.c.b16 %v453, %v452
      %v474 = vpack.c.b16 %v455, %v454
      %v475 = vpack.c.b16 %v456, %v456
      %vm476 = vsmask.f32 7424
      %v478 = vshrl.u32 %v457, 16
      %v480 = vshll.u32 %v457, 16
      %v482 = vrot.slane %v480, 1
      %v483 = vor.u32 %v478, %v482
      %v485 = vshll.u32 %v458, 16
      %v487 = vrot.slane %v485, 1
      %v488 = vsel %vm476, %v483, %v487
      %v489 = vshrl.u32 %v458, 16
      %v491 = vor.u32 %v489, %v487
      %v493 = vshll.u32 %v459, 16
      %v495 = vrot.slane %v493, 1
      %v496 = vsel %vm476, %v491, %v495
      %v497 = vshrl.u32 %v459, 16
      %v499 = vor.u32 %v497, %v495
      %v501 = vshll.u32 %v460, 16
      %v503 = vrot.slane %v501, 1
      %v504 = vsel %vm476, %v499, %v503
      %v505 = vshrl.u32 %v460, 16
      %v507 = vor.u32 %v505, %v503
      %v509 = vshll.u32 %v461, 16
      %v511 = vrot.slane %v509, 1
      %v512 = vsel %vm476, %v507, %v511
      %v513 = vshrl.u32 %v461, 16
      %v515 = vor.u32 %v513, %v511
      %v517 = vshll.u32 %v462, 16
      %v519 = vrot.slane %v517, 1
      %v520 = vsel %vm476, %v515, %v519
      %v521 = vshrl.u32 %v462, 16
      %v523 = vor.u32 %v521, %v519
      %v525 = vshll.u32 %v463, 16
      %v527 = vrot.slane %v525, 1
      %v528 = vsel %vm476, %v523, %v527
      %v529 = vshrl.u32 %v463, 16
      %v531 = vor.u32 %v529, %v527
      %v533 = vshll.u32 %v464, 16
      %v535 = vrot.slane %v533, 1
      %v536 = vsel %vm476, %v531, %v535
      %v537 = vshrl.u32 %v464, 16
      %v539 = vor.u32 %v537, %v535
      %v541 = vshll.u32 %v465, 16
      %v543 = vrot.slane %v541, 1
      %v544 = vsel %vm476, %v539, %v543
      %v545 = vshrl.u32 %v465, 16
      %v547 = vor.u32 %v545, %v543
      %v549 = vshll.u32 %v466, 16
      %v551 = vrot.slane %v549, 1
      %v552 = vsel %vm476, %v547, %v551
      %v553 = vshrl.u32 %v466, 16
      %v555 = vor.u32 %v553, %v551
      %v557 = vshll.u32 %v467, 16
      %v559 = vrot.slane %v557, 1
      %v560 = vsel %vm476, %v555, %v559
      %v561 = vshrl.u32 %v467, 16
      %v563 = vor.u32 %v561, %v559
      %v565 = vshll.u32 %v468, 16
      %v567 = vrot.slane %v565, 1
      %v568 = vsel %vm476, %v563, %v567
      %v569 = vshrl.u32 %v468, 16
      %v571 = vor.u32 %v569, %v567
      %v573 = vshll.u32 %v469, 16
      %v575 = vrot.slane %v573, 1
      %v576 = vsel %vm476, %v571, %v575
      %v577 = vshrl.u32 %v469, 16
      %v579 = vor.u32 %v577, %v575
      %v581 = vshll.u32 %v470, 16
      %v583 = vrot.slane %v581, 1
      %v584 = vsel %vm476, %v579, %v583
      %v585 = vshrl.u32 %v470, 16
      %v587 = vor.u32 %v585, %v583
      %v589 = vshll.u32 %v471, 16
      %v591 = vrot.slane %v589, 1
      %v592 = vsel %vm476, %v587, %v591
      %v593 = vshrl.u32 %v471, 16
      %v595 = vor.u32 %v593, %v591
      %v597 = vshll.u32 %v472, 16
      %v599 = vrot.slane %v597, 1
      %v600 = vsel %vm476, %v595, %v599
      %v601 = vshrl.u32 %v472, 16
      %v603 = vor.u32 %v601, %v599
      %v605 = vshll.u32 %v473, 16
      %v607 = vrot.slane %v605, 1
      %v608 = vsel %vm476, %v603, %v607
      %v609 = vshrl.u32 %v473, 16
      %v611 = vor.u32 %v609, %v607
      %v613 = vshll.u32 %v474, 16
      %v615 = vrot.slane %v613, 1
      %v616 = vsel %vm476, %v611, %v615
      %v617 = vshrl.u32 %v474, 16
      %v619 = vor.u32 %v617, %v615
      %v621 = vshll.u32 %v475, 16
      %v623 = vrot.slane %v621, 1
      %v624 = vsel %vm476, %v619, %v623
      %vm625 = vcmask 31744
      %v627 = vsel %vm625, %v488, 0
      %v630 = vsel %vm625, %v496, 0
      %v633 = vsel %vm625, %v504, 0
      %v636 = vsel %vm625, %v512, 0
      %v639 = vsel %vm625, %v520, 0
      %v642 = vsel %vm625, %v528, 0
      %v645 = vsel %vm625, %v536, 0
      %v648 = vsel %vm625, %v544, 0
      %v651 = vsel %vm625, %v552, 0
      %v654 = vsel %vm625, %v560, 0
      %v657 = vsel %vm625, %v568, 0
      %v660 = vsel %vm625, %v576, 0
      %v663 = vsel %vm625, %v584, 0
      %v666 = vsel %vm625, %v592, 0
      %v669 = vsel %vm625, %v600, 0
      %v672 = vsel %vm625, %v608, 0
      %v675 = vsel %vm625, %v616, 0
      %v678 = vsel %vm625, %v624, 0
      %vm680 = vcmask 1041408
      %v682 = vsel %vm680, %v382, 0
      %684 = vmatprep.subr.bf16.mxu0 0
      %685 = vmatpush1.bf16.msra.mxu0 %v682
      %686 = vmatprep.subr.bf16.mxu0 0
      %687 = vmatpush1.bf16.msra.mxu0 0
      %688 = vmatprep.subr.bf16.mxu0 0
      %689 = vmatpush1.bf16.msra.mxu0 0
      %690 = vmatprep.subr.bf16.mxu0 0
      %691 = vmatpush1.bf16.msra.mxu0 0
      %692 = vmatprep.subr.bf16.mxu0 0
      %693 = vmatpush1.bf16.msra.mxu0 0
      %694 = vmatprep.subr.bf16.mxu0 0
      %695 = vmatpush1.bf16.msra.mxu0 0
      %696 = vmatprep.subr.bf16.mxu0 0
      %697 = vmatpush1.bf16.msra.mxu0 0
      %698 = vmatprep.subr.bf16.mxu0 0
      %699 = vmatpush1.bf16.msra.mxu0 0
      %700 = vmatprep.subr.bf16.mxu0 0
      %701 = vmatpush1.bf16.msra.mxu0 0
      %702 = vmatprep.subr.bf16.mxu0 0
      %703 = vmatpush1.bf16.msra.mxu0 0
      %704 = vmatprep.subr.bf16.mxu0 0
      %705 = vmatpush1.bf16.msra.mxu0 0
      %706 = vmatprep.subr.bf16.mxu0 0
      %707 = vmatpush1.bf16.msra.mxu0 0
      %708 = vmatprep.subr.bf16.mxu0 0
      %709 = vmatpush1.bf16.msra.mxu0 0
      %710 = vmatprep.subr.bf16.mxu0 0
      %711 = vmatpush1.bf16.msra.mxu0 0
      %712 = vmatprep.subr.bf16.mxu0 0
      %713 = vmatpush1.bf16.msra.mxu0 0
      %714 = vmatprep.subr.bf16.mxu0 0
      %715 = vmatpush1.bf16.msra.mxu0 0
      %716 = vmatprep.mubr.bf16.mxu0 0
      %717 = vmatmul.mubr.bf16.gmra.mrb[0].mxu0 %v627
      %v718 = vpop.f32.mrb[0].mxu0
      %v719 = vadd.f32 0.0, %v718
      %v720 = vpop.f32.mrb[0].mxu0
      %v721 = vpop.f32.mrb[0].mxu0
      %v722 = vadd.f32 0.0, %v721
      %v723 = vpop.f32.mrb[0].mxu0
      %724 = vmatprep.mubr.bf16.mxu0 0
      %725 = vmatmul.mubr.bf16.gmra.mrb[0].mxu0 %v630
      %v726 = vpop.f32.mrb[0].mxu0
      %v727 = vadd.f32 0.0, %v726
      %v728 = vpop.f32.mrb[0].mxu0
      %v729 = vpop.f32.mrb[0].mxu0
      %v730 = vadd.f32 0.0, %v729
      %v731 = vpop.f32.mrb[0].mxu0
      %732 = vmatprep.mubr.bf16.mxu0 0
      %733 = vmatmul.mubr.bf16.gmra.mrb[0].mxu0 %v633
      %v734 = vpop.f32.mrb[0].mxu0
      %v735 = vadd.f32 0.0, %v734
      %v736 = vpop.f32.mrb[0].mxu0
      %v737 = vpop.f32.mrb[0].mxu0
      %v738 = vadd.f32 0.0, %v737
      %v739 = vpop.f32.mrb[0].mxu0
      %740 = vmatprep.mubr.bf16.mxu0 0
      %741 = vmatmul.mubr.bf16.gmra.mrb[0].mxu0 %v636
      %v742 = vpop.f32.mrb[0].mxu0
      %v743 = vadd.f32 0.0, %v742
      %v744 = vpop.f32.mrb[0].mxu0
      %v745 = vpop.f32.mrb[0].mxu0
      %v746 = vadd.f32 0.0, %v745
      %v747 = vpop.f32.mrb[0].mxu0
      %748 = vmatprep.mubr.bf16.mxu0 0
      %749 = vmatmul.mubr.bf16.gmra.mrb[0].mxu0 %v639
      %v750 = vpop.f32.mrb[0].mxu0
      %v751 = vadd.f32 0.0, %v750
      %v752 = vpop.f32.mrb[0].mxu0
      %v753 = vpop.f32.mrb[0].mxu0
      %v754 = vadd.f32 0.0, %v753
      %v755 = vpop.f32.mrb[0].mxu0
      %756 = vmatprep.mubr.bf16.mxu0 0
      %757 = vmatmul.mubr.bf16.gmra.mrb[0].mxu0 %v642
      %v758 = vpop.f32.mrb[0].mxu0
      %v759 = vadd.f32 0.0, %v758
      %v760 = vpop.f32.mrb[0].mxu0
      %v761 = vpop.f32.mrb[0].mxu0
      %v762 = vadd.f32 0.0, %v761
      %v763 = vpop.f32.mrb[0].mxu0
      %764 = vmatprep.mubr.bf16.mxu0 0
      %765 = vmatmul.mubr.bf16.gmra.mrb[0].mxu0 %v645
      %v766 = vpop.f32.mrb[0].mxu0
      %v767 = vadd.f32 0.0, %v766
      %v768 = vpop.f32.mrb[0].mxu0
      %v769 = vpop.f32.mrb[0].mxu0
      %v770 = vadd.f32 0.0, %v769
      %v771 = vpop.f32.mrb[0].mxu0
      %772 = vmatprep.mubr.bf16.mxu0 0
      %773 = vmatmul.mubr.bf16.gmra.mrb[0].mxu0 %v648
      %v774 = vpop.f32.mrb[0].mxu0
      %v775 = vadd.f32 0.0, %v774
      %v776 = vpop.f32.mrb[0].mxu0
      %v777 = vpop.f32.mrb[0].mxu0
      %v778 = vadd.f32 0.0, %v777
      %v779 = vpop.f32.mrb[0].mxu0
      %780 = vmatprep.mubr.bf16.mxu0 0
      %781 = vmatmul.mubr.bf16.gmra.mrb[0].mxu0 %v651
      %v782 = vpop.f32.mrb[0].mxu0
      %v783 = vadd.f32 0.0, %v782
      %v784 = vpop.f32.mrb[0].mxu0
      %v785 = vpop.f32.mrb[0].mxu0
      %v786 = vadd.f32 0.0, %v785
      %v787 = vpop.f32.mrb[0].mxu0
      %788 = vmatprep.mubr.bf16.mxu0 0
      %789 = vmatmul.mubr.bf16.gmra.mrb[0].mxu0 %v654
      %v790 = vpop.f32.mrb[0].mxu0
      %v791 = vadd.f32 0.0, %v790
      %v792 = vpop.f32.mrb[0].mxu0
      %v793 = vpop.f32.mrb[0].mxu0
      %v794 = vadd.f32 0.0, %v793
      %v795 = vpop.f32.mrb[0].mxu0
      %796 = vmatprep.mubr.bf16.mxu0 0
      %797 = vmatmul.mubr.bf16.gmra.mrb[0].mxu0 %v657
      %v798 = vpop.f32.mrb[0].mxu0
      %v799 = vadd.f32 0.0, %v798
      %v800 = vpop.f32.mrb[0].mxu0
      %v801 = vpop.f32.mrb[0].mxu0
      %v802 = vadd.f32 0.0, %v801
      %v803 = vpop.f32.mrb[0].mxu0
      %804 = vmatprep.mubr.bf16.mxu0 0
      %805 = vmatmul.mubr.bf16.gmra.mrb[0].mxu0 %v660
      %v806 = vpop.f32.mrb[0].mxu0
      %v807 = vadd.f32 0.0, %v806
      %v808 = vpop.f32.mrb[0].mxu0
      %v809 = vpop.f32.mrb[0].mxu0
      %v810 = vadd.f32 0.0, %v809
      %v811 = vpop.f32.mrb[0].mxu0
      %812 = vmatprep.mubr.bf16.mxu0 0
      %813 = vmatmul.mubr.bf16.gmra.mrb[0].mxu0 %v663
      %v814 = vpop.f32.mrb[0].mxu0
      %v815 = vadd.f32 0.0, %v814
      %v816 = vpop.f32.mrb[0].mxu0
      %v817 = vpop.f32.mrb[0].mxu0
      %v818 = vadd.f32 0.0, %v817
      %v819 = vpop.f32.mrb[0].mxu0
      %820 = vmatprep.mubr.bf16.mxu0 0
      %821 = vmatmul.mubr.bf16.gmra.mrb[0].mxu0 %v666
      %v822 = vpop.f32.mrb[0].mxu0
      %v823 = vadd.f32 0.0, %v822
      %v824 = vpop.f32.mrb[0].mxu0
      %v825 = vpop.f32.mrb[0].mxu0
      %v826 = vadd.f32 0.0, %v825
      %v827 = vpop.f32.mrb[0].mxu0
      %828 = vmatprep.mubr.bf16.mxu0 0
      %829 = vmatmul.mubr.bf16.gmra.mrb[0].mxu0 %v669
      %v830 = vpop.f32.mrb[0].mxu0
      %v831 = vadd.f32 0.0, %v830
      %v832 = vpop.f32.mrb[0].mxu0
      %v833 = vpop.f32.mrb[0].mxu0
      %v834 = vadd.f32 0.0, %v833
      %v835 = vpop.f32.mrb[0].mxu0
      %836 = vmatprep.mubr.bf16.mxu0 0
      %837 = vmatmul.mubr.bf16.gmra.mrb[0].mxu0 %v672
      %v838 = vpop.f32.mrb[0].mxu0
      %v839 = vadd.f32 0.0, %v838
      %v840 = vpop.f32.mrb[0].mxu0
      %v841 = vpop.f32.mrb[0].mxu0
      %v842 = vadd.f32 0.0, %v841
      %v843 = vpop.f32.mrb[0].mxu0
      %844 = vmatprep.mubr.bf16.mxu0 0
      %845 = vmatmul.mubr.bf16.gmra.mrb[0].mxu0 %v675
      %v846 = vpop.f32.mrb[0].mxu0
      %v847 = vadd.f32 0.0, %v846
      %v848 = vpop.f32.mrb[0].mxu0
      %v849 = vpop.f32.mrb[0].mxu0
      %v850 = vadd.f32 0.0, %v849
      %v851 = vpop.f32.mrb[0].mxu0
      %852 = vmatprep.mubr.bf16.mxu0 0
      %853 = vmatmul.mubr.bf16.gmra.mrb[0].mxu0 %v678
      %v854 = vpop.f32.mrb[0].mxu0
      %v855 = vadd.f32 0.0, %v854
      %v856 = vpop.f32.mrb[0].mxu0
      %v857 = vpop.f32.mrb[0].mxu0
      %v858 = vadd.f32 0.0, %v857
      %v859 = vpop.f32.mrb[0].mxu0
      %860 = vdwg.mxu0
      %v861 = vsel %vm625, %v457, 0
      %v863 = vsel %vm625, %v458, 0
      %v865 = vsel %vm625, %v459, 0
      %v867 = vsel %vm625, %v460, 0
      %v869 = vsel %vm625, %v461, 0
      %v871 = vsel %vm625, %v462, 0
      %v873 = vsel %vm625, %v463, 0
      %v875 = vsel %vm625, %v464, 0
      %v877 = vsel %vm625, %v465, 0
      %v879 = vsel %vm625, %v466, 0
      %v881 = vsel %vm625, %v467, 0
      %v883 = vsel %vm625, %v468, 0
      %v885 = vsel %vm625, %v469, 0
      %v887 = vsel %vm625, %v470, 0
      %v889 = vsel %vm625, %v471, 0
      %v891 = vsel %vm625, %v472, 0
      %v893 = vsel %vm625, %v473, 0
      %v895 = vsel %vm625, %v474, 0
      %v898 = vsel %vm680, %v379, 0
      %900 = vmatprep.subr.bf16.mxu0 0
      %901 = vmatpush1.bf16.msra.mxu0 %v898
      %902 = vmatprep.subr.bf16.mxu0 0
      %903 = vmatpush1.bf16.msra.mxu0 0
      %904 = vmatprep.subr.bf16.mxu0 0
      %905 = vmatpush1.bf16.msra.mxu0 0
      %906 = vmatprep.subr.bf16.mxu0 0
      %907 = vmatpush1.bf16.msra.mxu0 0
      %908 = vmatprep.subr.bf16.mxu0 0
      %909 = vmatpush1.bf16.msra.mxu0 0
      %910 = vmatprep.subr.bf16.mxu0 0
      %911 = vmatpush1.bf16.msra.mxu0 0
      %912 = vmatprep.subr.bf16.mxu0 0
      %913 = vmatpush1.bf16.msra.mxu0 0
      %914 = vmatprep.subr.bf16.mxu0 0
      %915 = vmatpush1.bf16.msra.mxu0 0
      %916 = vmatprep.subr.bf16.mxu0 0
      %917 = vmatpush1.bf16.msra.mxu0 0
      %918 = vmatprep.subr.bf16.mxu0 0
      %919 = vmatpush1.bf16.msra.mxu0 0
      %920 = vmatprep.subr.bf16.mxu0 0
      %921 = vmatpush1.bf16.msra.mxu0 0
      %922 = vmatprep.subr.bf16.mxu0 0
      %923 = vmatpush1.bf16.msra.mxu0 0
      %924 = vmatprep.subr.bf16.mxu0 0
      %925 = vmatpush1.bf16.msra.mxu0 0
      %926 = vmatprep.subr.bf16.mxu0 0
      %927 = vmatpush1.bf16.msra.mxu0 0
      %928 = vmatprep.subr.bf16.mxu0 0
      %929 = vmatpush1.bf16.msra.mxu0 0
      %930 = vmatprep.subr.bf16.mxu0 0
      %931 = vmatpush1.bf16.msra.mxu0 0
      %932 = vmatprep.mubr.bf16.mxu0 0
      %933 = vmatmul.mubr.bf16.gmra.mrb[0].mxu0 %v861
      %v934 = vpop.f32.mrb[0].mxu0
      %v935 = vadd.f32 %v719, %v934
      %v936 = vpop.f32.mrb[0].mxu0
      %v937 = vpop.f32.mrb[0].mxu0
      %v938 = vadd.f32 %v722, %v937
      %v939 = vpop.f32.mrb[0].mxu0
      %940 = vmatprep.mubr.bf16.mxu0 0
      %941 = vmatmul.mubr.bf16.gmra.mrb[0].mxu0 %v863
      %v942 = vpop.f32.mrb[0].mxu0
      %v943 = vadd.f32 %v727, %v942
      %v944 = vpop.f32.mrb[0].mxu0
      %v945 = vpop.f32.mrb[0].mxu0
      %v946 = vadd.f32 %v730, %v945
      %v947 = vpop.f32.mrb[0].mxu0
      %948 = vmatprep.mubr.bf16.mxu0 0
      %949 = vmatmul.mubr.bf16.gmra.mrb[0].mxu0 %v865
      %v950 = vpop.f32.mrb[0].mxu0
      %v951 = vadd.f32 %v735, %v950
      %v952 = vpop.f32.mrb[0].mxu0
      %v953 = vpop.f32.mrb[0].mxu0
      %v954 = vadd.f32 %v738, %v953
      %v955 = vpop.f32.mrb[0].mxu0
      %956 = vmatprep.mubr.bf16.mxu0 0
      %957 = vmatmul.mubr.bf16.gmra.mrb[0].mxu0 %v867
      %v958 = vpop.f32.mrb[0].mxu0
      %v959 = vadd.f32 %v743, %v958
      %v960 = vpop.f32.mrb[0].mxu0
      %v961 = vpop.f32.mrb[0].mxu0
      %v962 = vadd.f32 %v746, %v961
      %v963 = vpop.f32.mrb[0].mxu0
      %964 = vmatprep.mubr.bf16.mxu0 0
      %965 = vmatmul.mubr.bf16.gmra.mrb[0].mxu0 %v869
      %v966 = vpop.f32.mrb[0].mxu0
      %v967 = vadd.f32 %v751, %v966
      %v968 = vpop.f32.mrb[0].mxu0
      %v969 = vpop.f32.mrb[0].mxu0
      %v970 = vadd.f32 %v754, %v969
      %v971 = vpop.f32.mrb[0].mxu0
      %972 = vmatprep.mubr.bf16.mxu0 0
      %973 = vmatmul.mubr.bf16.gmra.mrb[0].mxu0 %v871
      %v974 = vpop.f32.mrb[0].mxu0
      %v975 = vadd.f32 %v759, %v974
      %v976 = vpop.f32.mrb[0].mxu0
      %v977 = vpop.f32.mrb[0].mxu0
      %v978 = vadd.f32 %v762, %v977
      %v979 = vpop.f32.mrb[0].mxu0
      %980 = vmatprep.mubr.bf16.mxu0 0
      %981 = vmatmul.mubr.bf16.gmra.mrb[0].mxu0 %v873
      %v982 = vpop.f32.mrb[0].mxu0
      %v983 = vadd.f32 %v767, %v982
      %v984 = vpop.f32.mrb[0].mxu0
      %v985 = vpop.f32.mrb[0].mxu0
      %v986 = vadd.f32 %v770, %v985
      %v987 = vpop.f32.mrb[0].mxu0
      %988 = vmatprep.mubr.bf16.mxu0 0
      %989 = vmatmul.mubr.bf16.gmra.mrb[0].mxu0 %v875
      %v990 = vpop.f32.mrb[0].mxu0
      %v991 = vadd.f32 %v775, %v990
      %v992 = vpop.f32.mrb[0].mxu0
      %v993 = vpop.f32.mrb[0].mxu0
      %v994 = vadd.f32 %v778, %v993
      %v995 = vpop.f32.mrb[0].mxu0
      %996 = vmatprep.mubr.bf16.mxu0 0
      %997 = vmatmul.mubr.bf16.gmra.mrb[0].mxu0 %v877
      %v998 = vpop.f32.mrb[0].mxu0
      %v999 = vadd.f32 %v783, %v998
      %v1000 = vpop.f32.mrb[0].mxu0
      %v1001 = vpop.f32.mrb[0].mxu0
      %v1002 = vadd.f32 %v786, %v1001
      %v1003 = vpop.f32.mrb[0].mxu0
      %1004 = vmatprep.mubr.bf16.mxu0 0
      %1005 = vmatmul.mubr.bf16.gmra.mrb[0].mxu0 %v879
      %v1006 = vpop.f32.mrb[0].mxu0
      %v1007 = vadd.f32 %v791, %v1006
      %v1008 = vpop.f32.mrb[0].mxu0
      %v1009 = vpop.f32.mrb[0].mxu0
      %v1010 = vadd.f32 %v794, %v1009
      %v1011 = vpop.f32.mrb[0].mxu0
      %1012 = vmatprep.mubr.bf16.mxu0 0
      %1013 = vmatmul.mubr.bf16.gmra.mrb[0].mxu0 %v881
      %v1014 = vpop.f32.mrb[0].mxu0
      %v1015 = vadd.f32 %v799, %v1014
      %v1016 = vpop.f32.mrb[0].mxu0
      %v1017 = vpop.f32.mrb[0].mxu0
      %v1018 = vadd.f32 %v802, %v1017
      %v1019 = vpop.f32.mrb[0].mxu0
      %1020 = vmatprep.mubr.bf16.mxu0 0
      %1021 = vmatmul.mubr.bf16.gmra.mrb[0].mxu0 %v883
      %v1022 = vpop.f32.mrb[0].mxu0
      %v1023 = vadd.f32 %v807, %v1022
      %v1024 = vpop.f32.mrb[0].mxu0
      %v1025 = vpop.f32.mrb[0].mxu0
      %v1026 = vadd.f32 %v810, %v1025
      %v1027 = vpop.f32.mrb[0].mxu0
      %1028 = vmatprep.mubr.bf16.mxu0 0
      %1029 = vmatmul.mubr.bf16.gmra.mrb[0].mxu0 %v885
      %v1030 = vpop.f32.mrb[0].mxu0
      %v1031 = vadd.f32 %v815, %v1030
      %v1032 = vpop.f32.mrb[0].mxu0
      %v1033 = vpop.f32.mrb[0].mxu0
      %v1034 = vadd.f32 %v818, %v1033
      %v1035 = vpop.f32.mrb[0].mxu0
      %1036 = vmatprep.mubr.bf16.mxu0 0
      %1037 = vmatmul.mubr.bf16.gmra.mrb[0].mxu0 %v887
      %v1038 = vpop.f32.mrb[0].mxu0
      %v1039 = vadd.f32 %v823, %v1038
      %v1040 = vpop.f32.mrb[0].mxu0
      %v1041 = vpop.f32.mrb[0].mxu0
      %v1042 = vadd.f32 %v826, %v1041
      %v1043 = vpop.f32.mrb[0].mxu0
      %1044 = vmatprep.mubr.bf16.mxu0 0
      %1045 = vmatmul.mubr.bf16.gmra.mrb[0].mxu0 %v889
      %v1046 = vpop.f32.mrb[0].mxu0
      %v1047 = vadd.f32 %v831, %v1046
      %v1048 = vpop.f32.mrb[0].mxu0
      %v1049 = vpop.f32.mrb[0].mxu0
      %v1050 = vadd.f32 %v834, %v1049
      %v1051 = vpop.f32.mrb[0].mxu0
      %1052 = vmatprep.mubr.bf16.mxu0 0
      %1053 = vmatmul.mubr.bf16.gmra.mrb[0].mxu0 %v891
      %v1054 = vpop.f32.mrb[0].mxu0
      %v1055 = vadd.f32 %v839, %v1054
      %v1056 = vpop.f32.mrb[0].mxu0
      %v1057 = vpop.f32.mrb[0].mxu0
      %v1058 = vadd.f32 %v842, %v1057
      %v1059 = vpop.f32.mrb[0].mxu0
      %1060 = vmatprep.mubr.bf16.mxu0 0
      %1061 = vmatmul.mubr.bf16.gmra.mrb[0].mxu0 %v893
      %v1062 = vpop.f32.mrb[0].mxu0
      %v1063 = vadd.f32 %v847, %v1062
      %v1064 = vpop.f32.mrb[0].mxu0
      %v1065 = vpop.f32.mrb[0].mxu0
      %v1066 = vadd.f32 %v850, %v1065
      %v1067 = vpop.f32.mrb[0].mxu0
      %1068 = vmatprep.mubr.bf16.mxu0 0
      %1069 = vmatmul.mubr.bf16.gmra.mrb[0].mxu0 %v895
      %v1070 = vpop.f32.mrb[0].mxu0
      %v1071 = vadd.f32 %v855, %v1070
      %v1072 = vpop.f32.mrb[0].mxu0
      %v1073 = vpop.f32.mrb[0].mxu0
      %v1074 = vadd.f32 %v858, %v1073
      %v1075 = vpop.f32.mrb[0].mxu0
      %1076 = vdwg.mxu0
      %v1077 = vld [vmem:[%s300] sm:$0xe]
      %s1078 = scalar_lea.vmem %s2, 4
      %v1079 = vld [vmem:[%s1078] sm:$0x3]
      %v1081 = vunpack.c.l.b16 %v1077
      %v1082 = vpack.c.b16 %v421, %v1081
      %vm1083 = vcmask 1046528
      %v1084 = vrot.slane %v1082, 1
      %v1085 = vrot.slane %v458, 1
      %v1086 = vsel %vm1083, %v1084, %v1085
      %v1087 = vrot.slane %v459, 1
      %v1088 = vsel %vm1083, %v1085, %v1087
      %v1089 = vrot.slane %v460, 1
      %v1090 = vsel %vm1083, %v1087, %v1089
      %v1091 = vrot.slane %v461, 1
      %v1092 = vsel %vm1083, %v1089, %v1091
      %v1093 = vrot.slane %v462, 1
      %v1094 = vsel %vm1083, %v1091, %v1093
      %v1095 = vrot.slane %v463, 1
      %v1096 = vsel %vm1083, %v1093, %v1095
      %v1097 = vrot.slane %v464, 1
      %v1098 = vsel %vm1083, %v1095, %v1097
      %v1099 = vrot.slane %v465, 1
      %v1100 = vsel %vm1083, %v1097, %v1099
      %v1101 = vrot.slane %v466, 1
      %v1102 = vsel %vm1083, %v1099, %v1101
      %v1103 = vrot.slane %v467, 1
      %v1104 = vsel %vm1083, %v1101, %v1103
      %v1105 = vrot.slane %v468, 1
      %v1106 = vsel %vm1083, %v1103, %v1105
      %v1107 = vrot.slane %v469, 1
      %v1108 = vsel %vm1083, %v1105, %v1107
      %v1109 = vrot.slane %v470, 1
      %v1110 = vsel %vm1083, %v1107, %v1109
      %v1111 = vrot.slane %v471, 1
      %v1112 = vsel %vm1083, %v1109, %v1111
      %v1113 = vrot.slane %v472, 1
      %v1114 = vsel %vm1083, %v1111, %v1113
      %v1115 = vrot.slane %v473, 1
      %v1116 = vsel %vm1083, %v1113, %v1115
      %v1117 = vrot.slane %v474, 1
      %v1118 = vsel %vm1083, %v1115, %v1117
      %v1119 = vrot.slane %v475, 1
      %v1120 = vsel %vm1083, %v1117, %v1119
      %v1122 = vsel %vm625, %v1086, 0
      %v1125 = vsel %vm625, %v1088, 0
      %v1128 = vsel %vm625, %v1090, 0
      %v1131 = vsel %vm625, %v1092, 0
      %v1134 = vsel %vm625, %v1094, 0
      %v1137 = vsel %vm625, %v1096, 0
      %v1140 = vsel %vm625, %v1098, 0
      %v1143 = vsel %vm625, %v1100, 0
      %v1146 = vsel %vm625, %v1102, 0
      %v1149 = vsel %vm625, %v1104, 0
      %v1152 = vsel %vm625, %v1106, 0
      %v1155 = vsel %vm625, %v1108, 0
      %v1158 = vsel %vm625, %v1110, 0
      %v1161 = vsel %vm625, %v1112, 0
      %v1164 = vsel %vm625, %v1114, 0
      %v1167 = vsel %vm625, %v1116, 0
      %v1170 = vsel %vm625, %v1118, 0
      %v1173 = vsel %vm625, %v1120, 0
      %v1176 = vsel %vm680, %v1079, 0
      %1178 = vmatprep.subr.bf16.mxu0 0
      %1179 = vmatpush1.bf16.msra.mxu0 %v1176
      %1180 = vmatprep.subr.bf16.mxu0 0
      %1181 = vmatpush1.bf16.msra.mxu0 0
      %1182 = vmatprep.subr.bf16.mxu0 0
      %1183 = vmatpush1.bf16.msra.mxu0 0
      %1184 = vmatprep.subr.bf16.mxu0 0
      %1185 = vmatpush1.bf16.msra.mxu0 0
      %1186 = vmatprep.subr.bf16.mxu0 0
      %1187 = vmatpush1.bf16.msra.mxu0 0
      %1188 = vmatprep.subr.bf16.mxu0 0
      %1189 = vmatpush1.bf16.msra.mxu0 0
      %1190 = vmatprep.subr.bf16.mxu0 0
      %1191 = vmatpush1.bf16.msra.mxu0 0
      %1192 = vmatprep.subr.bf16.mxu0 0
      %1193 = vmatpush1.bf16.msra.mxu0 0
      %1194 = vmatprep.subr.bf16.mxu0 0
      %1195 = vmatpush1.bf16.msra.mxu0 0
      %1196 = vmatprep.subr.bf16.mxu0 0
      %1197 = vmatpush1.bf16.msra.mxu0 0
      %1198 = vmatprep.subr.bf16.mxu0 0
      %1199 = vmatpush1.bf16.msra.mxu0 0
      %1200 = vmatprep.subr.bf16.mxu0 0
      %1201 = vmatpush1.bf16.msra.mxu0 0
      %1202 = vmatprep.subr.bf16.mxu0 0
      %1203 = vmatpush1.bf16.msra.mxu0 0
      %1204 = vmatprep.subr.bf16.mxu0 0
      %1205 = vmatpush1.bf16.msra.mxu0 0
      %1206 = vmatprep.subr.bf16.mxu0 0
      %1207 = vmatpush1.bf16.msra.mxu0 0
      %1208 = vmatprep.subr.bf16.mxu0 0
      %1209 = vmatpush1.bf16.msra.mxu0 0
      %1210 = vmatprep.mubr.bf16.mxu0 0
      %1211 = vmatmul.mubr.bf16.gmra.mrb[0].mxu0 %v1122
      %v1212 = vpop.f32.mrb[0].mxu0
      %v1213 = vadd.f32 0.0, %v1212
      %v1214 = vpop.f32.mrb[0].mxu0
      %v1215 = vpop.f32.mrb[0].mxu0
      %v1216 = vadd.f32 0.0, %v1215
      %v1217 = vpop.f32.mrb[0].mxu0
      %1218 = vmatprep.mubr.bf16.mxu0 0
      %1219 = vmatmul.mubr.bf16.gmra.mrb[0].mxu0 %v1125
      %v1220 = vpop.f32.mrb[0].mxu0
      %v1221 = vadd.f32 0.0, %v1220
      %v1222 = vpop.f32.mrb[0].mxu0
      %v1223 = vpop.f32.mrb[0].mxu0
      %v1224 = vadd.f32 0.0, %v1223
      %v1225 = vpop.f32.mrb[0].mxu0
      %1226 = vmatprep.mubr.bf16.mxu0 0
      %1227 = vmatmul.mubr.bf16.gmra.mrb[0].mxu0 %v1128
      %v1228 = vpop.f32.mrb[0].mxu0
      %v1229 = vadd.f32 0.0, %v1228
      %v1230 = vpop.f32.mrb[0].mxu0
      %v1231 = vpop.f32.mrb[0].mxu0
      %v1232 = vadd.f32 0.0, %v1231
      %v1233 = vpop.f32.mrb[0].mxu0
      %1234 = vmatprep.mubr.bf16.mxu0 0
      %1235 = vmatmul.mubr.bf16.gmra.mrb[0].mxu0 %v1131
      %v1236 = vpop.f32.mrb[0].mxu0
      %v1237 = vadd.f32 0.0, %v1236
      %v1238 = vpop.f32.mrb[0].mxu0
      %v1239 = vpop.f32.mrb[0].mxu0
      %v1240 = vadd.f32 0.0, %v1239
      %v1241 = vpop.f32.mrb[0].mxu0
      %1242 = vmatprep.mubr.bf16.mxu0 0
      %1243 = vmatmul.mubr.bf16.gmra.mrb[0].mxu0 %v1134
      %v1244 = vpop.f32.mrb[0].mxu0
      %v1245 = vadd.f32 0.0, %v1244
      %v1246 = vpop.f32.mrb[0].mxu0
      %v1247 = vpop.f32.mrb[0].mxu0
      %v1248 = vadd.f32 0.0, %v1247
      %v1249 = vpop.f32.mrb[0].mxu0
      %1250 = vmatprep.mubr.bf16.mxu0 0
      %1251 = vmatmul.mubr.bf16.gmra.mrb[0].mxu0 %v1137
      %v1252 = vpop.f32.mrb[0].mxu0
      %v1253 = vadd.f32 0.0, %v1252
      %v1254 = vpop.f32.mrb[0].mxu0
      %v1255 = vpop.f32.mrb[0].mxu0
      %v1256 = vadd.f32 0.0, %v1255
      %v1257 = vpop.f32.mrb[0].mxu0
      %1258 = vmatprep.mubr.bf16.mxu0 0
      %1259 = vmatmul.mubr.bf16.gmra.mrb[0].mxu0 %v1140
      %v1260 = vpop.f32.mrb[0].mxu0
      %v1261 = vadd.f32 0.0, %v1260
      %v1262 = vpop.f32.mrb[0].mxu0
      %v1263 = vpop.f32.mrb[0].mxu0
      %v1264 = vadd.f32 0.0, %v1263
      %v1265 = vpop.f32.mrb[0].mxu0
      %1266 = vmatprep.mubr.bf16.mxu0 0
      %1267 = vmatmul.mubr.bf16.gmra.mrb[0].mxu0 %v1143
      %v1268 = vpop.f32.mrb[0].mxu0
      %v1269 = vadd.f32 0.0, %v1268
      %v1270 = vpop.f32.mrb[0].mxu0
      %v1271 = vpop.f32.mrb[0].mxu0
      %v1272 = vadd.f32 0.0, %v1271
      %v1273 = vpop.f32.mrb[0].mxu0
      %1274 = vmatprep.mubr.bf16.mxu0 0
      %1275 = vmatmul.mubr.bf16.gmra.mrb[0].mxu0 %v1146
      %v1276 = vpop.f32.mrb[0].mxu0
      %v1277 = vadd.f32 0.0, %v1276
      %v1278 = vpop.f32.mrb[0].mxu0
      %v1279 = vpop.f32.mrb[0].mxu0
      %v1280 = vadd.f32 0.0, %v1279
      %v1281 = vpop.f32.mrb[0].mxu0
      %1282 = vmatprep.mubr.bf16.mxu0 0
      %1283 = vmatmul.mubr.bf16.gmra.mrb[0].mxu0 %v1149
      %v1284 = vpop.f32.mrb[0].mxu0
      %v1285 = vadd.f32 0.0, %v1284
      %v1286 = vpop.f32.mrb[0].mxu0
      %v1287 = vpop.f32.mrb[0].mxu0
      %v1288 = vadd.f32 0.0, %v1287
      %v1289 = vpop.f32.mrb[0].mxu0
      %1290 = vmatprep.mubr.bf16.mxu0 0
      %1291 = vmatmul.mubr.bf16.gmra.mrb[0].mxu0 %v1152
      %v1292 = vpop.f32.mrb[0].mxu0
      %v1293 = vadd.f32 0.0, %v1292
      %v1294 = vpop.f32.mrb[0].mxu0
      %v1295 = vpop.f32.mrb[0].mxu0
      %v1296 = vadd.f32 0.0, %v1295
      %v1297 = vpop.f32.mrb[0].mxu0
      %1298 = vmatprep.mubr.bf16.mxu0 0
      %1299 = vmatmul.mubr.bf16.gmra.mrb[0].mxu0 %v1155
      %v1300 = vpop.f32.mrb[0].mxu0
      %v1301 = vadd.f32 0.0, %v1300
      %v1302 = vpop.f32.mrb[0].mxu0
      %v1303 = vpop.f32.mrb[0].mxu0
      %v1304 = vadd.f32 0.0, %v1303
      %v1305 = vpop.f32.mrb[0].mxu0
      %1306 = vmatprep.mubr.bf16.mxu0 0
      %1307 = vmatmul.mubr.bf16.gmra.mrb[0].mxu0 %v1158
      %v1308 = vpop.f32.mrb[0].mxu0
      %v1309 = vadd.f32 0.0, %v1308
      %v1310 = vpop.f32.mrb[0].mxu0
      %v1311 = vpop.f32.mrb[0].mxu0
      %v1312 = vadd.f32 0.0, %v1311
      %v1313 = vpop.f32.mrb[0].mxu0
      %1314 = vmatprep.mubr.bf16.mxu0 0
      %1315 = vmatmul.mubr.bf16.gmra.mrb[0].mxu0 %v1161
      %v1316 = vpop.f32.mrb[0].mxu0
      %v1317 = vadd.f32 0.0, %v1316
      %v1318 = vpop.f32.mrb[0].mxu0
      %v1319 = vpop.f32.mrb[0].mxu0
      %v1320 = vadd.f32 0.0, %v1319
      %v1321 = vpop.f32.mrb[0].mxu0
      %1322 = vmatprep.mubr.bf16.mxu0 0
      %1323 = vmatmul.mubr.bf16.gmra.mrb[0].mxu0 %v1164
      %v1324 = vpop.f32.mrb[0].mxu0
      %v1325 = vadd.f32 0.0, %v1324
      %v1326 = vpop.f32.mrb[0].mxu0
      %v1327 = vpop.f32.mrb[0].mxu0
      %v1328 = vadd.f32 0.0, %v1327
      %v1329 = vpop.f32.mrb[0].mxu0
      %1330 = vmatprep.mubr.bf16.mxu0 0
      %1331 = vmatmul.mubr.bf16.gmra.mrb[0].mxu0 %v1167
      %v1332 = vpop.f32.mrb[0].mxu0
      %v1333 = vadd.f32 0.0, %v1332
      %v1334 = vpop.f32.mrb[0].mxu0
      %v1335 = vpop.f32.mrb[0].mxu0
      %v1336 = vadd.f32 0.0, %v1335
      %v1337 = vpop.f32.mrb[0].mxu0
      %1338 = vmatprep.mubr.bf16.mxu0 0
      %1339 = vmatmul.mubr.bf16.gmra.mrb[0].mxu0 %v1170
      %v1340 = vpop.f32.mrb[0].mxu0
      %v1341 = vadd.f32 0.0, %v1340
      %v1342 = vpop.f32.mrb[0].mxu0
      %v1343 = vpop.f32.mrb[0].mxu0
      %v1344 = vadd.f32 0.0, %v1343
      %v1345 = vpop.f32.mrb[0].mxu0
      %1346 = vmatprep.mubr.bf16.mxu0 0
      %1347 = vmatmul.mubr.bf16.gmra.mrb[0].mxu0 %v1173
      %v1348 = vpop.f32.mrb[0].mxu0
      %v1349 = vadd.f32 0.0, %v1348
      %v1350 = vpop.f32.mrb[0].mxu0
      %v1351 = vpop.f32.mrb[0].mxu0
      %v1352 = vadd.f32 0.0, %v1351
      %v1353 = vpop.f32.mrb[0].mxu0
      %1354 = vdwg.mxu0
      %v1355 = vadd.f32 %v935, %v1213
      %v1356 = vadd.f32 %v938, %v1216
      %v1357 = vadd.f32 %v943, %v1221
      %v1358 = vadd.f32 %v946, %v1224
      %v1359 = vadd.f32 %v951, %v1229
      %v1360 = vadd.f32 %v954, %v1232
      %v1361 = vadd.f32 %v959, %v1237
      %v1362 = vadd.f32 %v962, %v1240
      %v1363 = vadd.f32 %v967, %v1245
      %v1364 = vadd.f32 %v970, %v1248
      %v1365 = vadd.f32 %v975, %v1253
      %v1366 = vadd.f32 %v978, %v1256
      %v1367 = vadd.f32 %v983, %v1261
      %v1368 = vadd.f32 %v986, %v1264
      %v1369 = vadd.f32 %v991, %v1269
      %v1370 = vadd.f32 %v994, %v1272
      %v1371 = vadd.f32 %v999, %v1277
      %v1372 = vadd.f32 %v1002, %v1280
      %v1373 = vadd.f32 %v1007, %v1285
      %v1374 = vadd.f32 %v1010, %v1288
      %v1375 = vadd.f32 %v1015, %v1293
      %v1376 = vadd.f32 %v1018, %v1296
      %v1377 = vadd.f32 %v1023, %v1301
      %v1378 = vadd.f32 %v1026, %v1304
      %v1379 = vadd.f32 %v1031, %v1309
      %v1380 = vadd.f32 %v1034, %v1312
      %v1381 = vadd.f32 %v1039, %v1317
      %v1382 = vadd.f32 %v1042, %v1320
      %v1383 = vadd.f32 %v1047, %v1325
      %v1384 = vadd.f32 %v1050, %v1328
      %v1385 = vadd.f32 %v1055, %v1333
      %v1386 = vadd.f32 %v1058, %v1336
      %v1387 = vadd.f32 %v1063, %v1341
      %v1388 = vadd.f32 %v1066, %v1344
      %v1389 = vadd.f32 %v1071, %v1349
      %v1390 = vadd.f32 %v1074, %v1352
      %v1391 = vld [vmem:[%s300 + $0x8] sm:$0xe]
      %v1392 = vld [vmem:[%s300 + $0xc] sm:$0xf]
      %v1393 = vld [vmem:[%s300 + $0x10] sm:$0xf]
      %v1394 = vld [vmem:[%s300 + $0x14] sm:$0xf]
      %v1395 = vld [vmem:[%s300 + $0x18] sm:$0xf]
      %v1396 = vld [vmem:[%s300 + $0x1c] sm:$0xf]
      %v1397 = vld [vmem:[%s300 + $0x20] sm:$0xf]
      %v1398 = vld [vmem:[%s300 + $0x24] sm:$0xf]
      %v1399 = vld [vmem:[%s300 + $0x28] sm:$0xf]
      %v1400 = vld [vmem:[%s300 + $0x2c] sm:$0xf]
      %v1401 = vld [vmem:[%s300 + $0x30] sm:$0xf]
      %v1402 = vld [vmem:[%s300 + $0x34] sm:$0xf]
      %v1403 = vld [vmem:[%s300 + $0x38] sm:$0xf]
      %v1404 = vld [vmem:[%s300 + $0x3c] sm:$0xf]
      %v1405 = vld [vmem:[%s300 + $0x40] sm:$0xf]
      %v1406 = vld [vmem:[%s300 + $0x44] sm:$0xf]
      %v1407 = vld [vmem:[%s300 + $0x48] sm:$0xf]
      %v1408 = vld [vmem:[%s300 + $0x4c] sm:$0xf]
      %v1409 = vld [vmem:[%s300 + $0x50] sm:$0xf]
      %v1410 = vld [vmem:[%s300 + $0x54] sm:$0xf]
      %v1411 = vld [vmem:[%s300 + $0x58] sm:$0xf]
      %v1412 = vld [vmem:[%s300 + $0x5c] sm:$0xf]
      %v1413 = vld [vmem:[%s300 + $0x60] sm:$0xf]
      %v1414 = vld [vmem:[%s300 + $0x64] sm:$0xf]
      %v1415 = vld [vmem:[%s300 + $0x68] sm:$0xf]
      %v1416 = vld [vmem:[%s300 + $0x6c] sm:$0xf]
      %v1417 = vld [vmem:[%s300 + $0x70] sm:$0xf]
      %v1418 = vld [vmem:[%s300 + $0x74] sm:$0xf]
      %v1419 = vld [vmem:[%s300 + $0x78] sm:$0xf]
      %v1420 = vld [vmem:[%s300 + $0x7c] sm:$0xf]
      %v1421 = vld [vmem:[%s300 + $0x80] sm:$0xf]
      %v1422 = vld [vmem:[%s300 + $0x84] sm:$0xf]
      %v1423 = vld [vmem:[%s300 + $0x88] sm:$0xf]
      %v1424 = vld [vmem:[%s300 + $0x8c] sm:$0xf]
      %v1425 = vld [vmem:[%s300 + $0x90] sm:$0xf]
      %v1426 = vld [vmem:[%s300 + $0x94] sm:$0xf]
      %v1427 = vld [vmem:[%s300 + $0x98] sm:$0x1]
      %s1428 = scalar_lea.vmem %s2, 6
      %v1429 = vld [vmem:[%s1428] sm:$0x3]
      %v1467 = vunpack.c.l.b16 %v1391
      %v1468 = vunpack.c.l.b16 %v1392
      %v1469 = vunpack.c.l.b16 %v1393
      %v1470 = vunpack.c.l.b16 %v1394
      %v1471 = vunpack.c.l.b16 %v1395
      %v1472 = vunpack.c.l.b16 %v1396
      %v1473 = vunpack.c.l.b16 %v1397
      %v1474 = vunpack.c.l.b16 %v1398
      %v1475 = vunpack.c.l.b16 %v1399
      %v1476 = vunpack.c.l.b16 %v1400
      %v1477 = vunpack.c.l.b16 %v1401
      %v1478 = vunpack.c.l.b16 %v1402
      %v1479 = vunpack.c.l.b16 %v1403
      %v1480 = vunpack.c.l.b16 %v1404
      %v1481 = vunpack.c.l.b16 %v1405
      %v1482 = vunpack.c.l.b16 %v1406
      %v1483 = vunpack.c.l.b16 %v1407
      %v1484 = vunpack.c.l.b16 %v1408
      %v1485 = vunpack.c.l.b16 %v1409
      %v1486 = vunpack.c.l.b16 %v1410
      %v1487 = vunpack.c.l.b16 %v1411
      %v1488 = vunpack.c.l.b16 %v1412
      %v1489 = vunpack.c.l.b16 %v1413
      %v1490 = vunpack.c.l.b16 %v1414
      %v1491 = vunpack.c.l.b16 %v1415
      %v1492 = vunpack.c.l.b16 %v1416
      %v1493 = vunpack.c.l.b16 %v1417
      %v1494 = vunpack.c.l.b16 %v1418
      %v1495 = vunpack.c.l.b16 %v1419
      %v1496 = vunpack.c.l.b16 %v1420
      %v1497 = vunpack.c.l.b16 %v1421
      %v1498 = vunpack.c.l.b16 %v1422
      %v1499 = vunpack.c.l.b16 %v1423
      %v1500 = vunpack.c.l.b16 %v1424
      %v1501 = vunpack.c.l.b16 %v1425
      %v1502 = vunpack.c.l.b16 %v1426
      %v1503 = vunpack.c.l.b16 %v1427
      %v1504 = vpack.c.b16 %v1468, %v1467
      %v1505 = vpack.c.b16 %v1470, %v1469
      %v1506 = vpack.c.b16 %v1472, %v1471
      %v1507 = vpack.c.b16 %v1474, %v1473
      %v1508 = vpack.c.b16 %v1476, %v1475
      %v1509 = vpack.c.b16 %v1478, %v1477
      %v1510 = vpack.c.b16 %v1480, %v1479
      %v1511 = vpack.c.b16 %v1482, %v1481
      %v1512 = vpack.c.b16 %v1484, %v1483
      %v1513 = vpack.c.b16 %v1486, %v1485
      %v1514 = vpack.c.b16 %v1488, %v1487
      %v1515 = vpack.c.b16 %v1490, %v1489
      %v1516 = vpack.c.b16 %v1492, %v1491
      %v1517 = vpack.c.b16 %v1494, %v1493
      %v1518 = vpack.c.b16 %v1496, %v1495
      %v1519 = vpack.c.b16 %v1498, %v1497
      %v1520 = vpack.c.b16 %v1500, %v1499
      %v1521 = vpack.c.b16 %v1502, %v1501
      %v1522 = vpack.c.b16 %v1503, %v1503
      %v1523 = vrot.slane %v1504, 1
      %v1524 = vrot.slane %v1505, 1
      %v1525 = vsel %vm1083, %v1523, %v1524
      %v1526 = vrot.slane %v1506, 1
      %v1527 = vsel %vm1083, %v1524, %v1526
      %v1528 = vrot.slane %v1507, 1
      %v1529 = vsel %vm1083, %v1526, %v1528
      %v1530 = vrot.slane %v1508, 1
      %v1531 = vsel %vm1083, %v1528, %v1530
      %v1532 = vrot.slane %v1509, 1
      %v1533 = vsel %vm1083, %v1530, %v1532
      %v1534 = vrot.slane %v1510, 1
      %v1535 = vsel %vm1083, %v1532, %v1534
      %v1536 = vrot.slane %v1511, 1
      %v1537 = vsel %vm1083, %v1534, %v1536
      %v1538 = vrot.slane %v1512, 1
      %v1539 = vsel %vm1083, %v1536, %v1538
      %v1540 = vrot.slane %v1513, 1
      %v1541 = vsel %vm1083, %v1538, %v1540
      %v1542 = vrot.slane %v1514, 1
      %v1543 = vsel %vm1083, %v1540, %v1542
      %v1544 = vrot.slane %v1515, 1
      %v1545 = vsel %vm1083, %v1542, %v1544
      %v1546 = vrot.slane %v1516, 1
      %v1547 = vsel %vm1083, %v1544, %v1546
      %v1548 = vrot.slane %v1517, 1
      %v1549 = vsel %vm1083, %v1546, %v1548
      %v1550 = vrot.slane %v1518, 1
      %v1551 = vsel %vm1083, %v1548, %v1550
      %v1552 = vrot.slane %v1519, 1
      %v1553 = vsel %vm1083, %v1550, %v1552
      %v1554 = vrot.slane %v1520, 1
      %v1555 = vsel %vm1083, %v1552, %v1554
      %v1556 = vrot.slane %v1521, 1
      %v1557 = vsel %vm1083, %v1554, %v1556
      %v1558 = vrot.slane %v1522, 1
      %v1559 = vsel %vm1083, %v1556, %v1558
      %v1561 = vsel %vm625, %v1525, 0
      %v1564 = vsel %vm625, %v1527, 0
      %v1567 = vsel %vm625, %v1529, 0
      %v1570 = vsel %vm625, %v1531, 0
      %v1573 = vsel %vm625, %v1533, 0
      %v1576 = vsel %vm625, %v1535, 0
      %v1579 = vsel %vm625, %v1537, 0
      %v1582 = vsel %vm625, %v1539, 0
      %v1585 = vsel %vm625, %v1541, 0
      %v1588 = vsel %vm625, %v1543, 0
      %v1591 = vsel %vm625, %v1545, 0
      %v1594 = vsel %vm625, %v1547, 0
      %v1597 = vsel %vm625, %v1549, 0
      %v1600 = vsel %vm625, %v1551, 0
      %v1603 = vsel %vm625, %v1553, 0
      %v1606 = vsel %vm625, %v1555, 0
      %v1609 = vsel %vm625, %v1557, 0
      %v1612 = vsel %vm625, %v1559, 0
      %v1615 = vsel %vm680, %v1429, 0
      %1617 = vmatprep.subr.bf16.mxu0 0
      %1618 = vmatpush1.bf16.msra.mxu0 %v1615
      %1619 = vmatprep.subr.bf16.mxu0 0
      %1620 = vmatpush1.bf16.msra.mxu0 0
      %1621 = vmatprep.subr.bf16.mxu0 0
      %1622 = vmatpush1.bf16.msra.mxu0 0
      %1623 = vmatprep.subr.bf16.mxu0 0
      %1624 = vmatpush1.bf16.msra.mxu0 0
      %1625 = vmatprep.subr.bf16.mxu0 0
      %1626 = vmatpush1.bf16.msra.mxu0 0
      %1627 = vmatprep.subr.bf16.mxu0 0
      %1628 = vmatpush1.bf16.msra.mxu0 0
      %1629 = vmatprep.subr.bf16.mxu0 0
      %1630 = vmatpush1.bf16.msra.mxu0 0
      %1631 = vmatprep.subr.bf16.mxu0 0
      %1632 = vmatpush1.bf16.msra.mxu0 0
      %1633 = vmatprep.subr.bf16.mxu0 0
      %1634 = vmatpush1.bf16.msra.mxu0 0
      %1635 = vmatprep.subr.bf16.mxu0 0
      %1636 = vmatpush1.bf16.msra.mxu0 0
      %1637 = vmatprep.subr.bf16.mxu0 0
      %1638 = vmatpush1.bf16.msra.mxu0 0
      %1639 = vmatprep.subr.bf16.mxu0 0
      %1640 = vmatpush1.bf16.msra.mxu0 0
      %1641 = vmatprep.subr.bf16.mxu0 0
      %1642 = vmatpush1.bf16.msra.mxu0 0
      %1643 = vmatprep.subr.bf16.mxu0 0
      %1644 = vmatpush1.bf16.msra.mxu0 0
      %1645 = vmatprep.subr.bf16.mxu0 0
      %1646 = vmatpush1.bf16.msra.mxu0 0
      %1647 = vmatprep.subr.bf16.mxu0 0
      %1648 = vmatpush1.bf16.msra.mxu0 0
      %1649 = vmatprep.mubr.bf16.mxu0 0
      %1650 = vmatmul.mubr.bf16.gmra.mrb[0].mxu0 %v1561
      %v1651 = vpop.f32.mrb[0].mxu0
      %v1652 = vadd.f32 0.0, %v1651
      %v1653 = vpop.f32.mrb[0].mxu0
      %v1654 = vpop.f32.mrb[0].mxu0
      %v1655 = vadd.f32 0.0, %v1654
      %v1656 = vpop.f32.mrb[0].mxu0
      %1657 = vmatprep.mubr.bf16.mxu0 0
      %1658 = vmatmul.mubr.bf16.gmra.mrb[0].mxu0 %v1564
      %v1659 = vpop.f32.mrb[0].mxu0
      %v1660 = vadd.f32 0.0, %v1659
      %v1661 = vpop.f32.mrb[0].mxu0
      %v1662 = vpop.f32.mrb[0].mxu0
      %v1663 = vadd.f32 0.0, %v1662
      %v1664 = vpop.f32.mrb[0].mxu0
      %1665 = vmatprep.mubr.bf16.mxu0 0
      %1666 = vmatmul.mubr.bf16.gmra.mrb[0].mxu0 %v1567
      %v1667 = vpop.f32.mrb[0].mxu0
      %v1668 = vadd.f32 0.0, %v1667
      %v1669 = vpop.f32.mrb[0].mxu0
      %v1670 = vpop.f32.mrb[0].mxu0
      %v1671 = vadd.f32 0.0, %v1670
      %v1672 = vpop.f32.mrb[0].mxu0
      %1673 = vmatprep.mubr.bf16.mxu0 0
      %1674 = vmatmul.mubr.bf16.gmra.mrb[0].mxu0 %v1570
      %v1675 = vpop.f32.mrb[0].mxu0
      %v1676 = vadd.f32 0.0, %v1675
      %v1677 = vpop.f32.mrb[0].mxu0
      %v1678 = vpop.f32.mrb[0].mxu0
      %v1679 = vadd.f32 0.0, %v1678
      %v1680 = vpop.f32.mrb[0].mxu0
      %1681 = vmatprep.mubr.bf16.mxu0 0
      %1682 = vmatmul.mubr.bf16.gmra.mrb[0].mxu0 %v1573
      %v1683 = vpop.f32.mrb[0].mxu0
      %v1684 = vadd.f32 0.0, %v1683
      %v1685 = vpop.f32.mrb[0].mxu0
      %v1686 = vpop.f32.mrb[0].mxu0
      %v1687 = vadd.f32 0.0, %v1686
      %v1688 = vpop.f32.mrb[0].mxu0
      %1689 = vmatprep.mubr.bf16.mxu0 0
      %1690 = vmatmul.mubr.bf16.gmra.mrb[0].mxu0 %v1576
      %v1691 = vpop.f32.mrb[0].mxu0
      %v1692 = vadd.f32 0.0, %v1691
      %v1693 = vpop.f32.mrb[0].mxu0
      %v1694 = vpop.f32.mrb[0].mxu0
      %v1695 = vadd.f32 0.0, %v1694
      %v1696 = vpop.f32.mrb[0].mxu0
      %1697 = vmatprep.mubr.bf16.mxu0 0
      %1698 = vmatmul.mubr.bf16.gmra.mrb[0].mxu0 %v1579
      %v1699 = vpop.f32.mrb[0].mxu0
      %v1700 = vadd.f32 0.0, %v1699
      %v1701 = vpop.f32.mrb[0].mxu0
      %v1702 = vpop.f32.mrb[0].mxu0
      %v1703 = vadd.f32 0.0, %v1702
      %v1704 = vpop.f32.mrb[0].mxu0
      %1705 = vmatprep.mubr.bf16.mxu0 0
      %1706 = vmatmul.mubr.bf16.gmra.mrb[0].mxu0 %v1582
      %v1707 = vpop.f32.mrb[0].mxu0
      %v1708 = vadd.f32 0.0, %v1707
      %v1709 = vpop.f32.mrb[0].mxu0
      %v1710 = vpop.f32.mrb[0].mxu0
      %v1711 = vadd.f32 0.0, %v1710
      %v1712 = vpop.f32.mrb[0].mxu0
      %1713 = vmatprep.mubr.bf16.mxu0 0
      %1714 = vmatmul.mubr.bf16.gmra.mrb[0].mxu0 %v1585
      %v1715 = vpop.f32.mrb[0].mxu0
      %v1716 = vadd.f32 0.0, %v1715
      %v1717 = vpop.f32.mrb[0].mxu0
      %v1718 = vpop.f32.mrb[0].mxu0
      %v1719 = vadd.f32 0.0, %v1718
      %v1720 = vpop.f32.mrb[0].mxu0
      %1721 = vmatprep.mubr.bf16.mxu0 0
      %1722 = vmatmul.mubr.bf16.gmra.mrb[0].mxu0 %v1588
      %v1723 = vpop.f32.mrb[0].mxu0
      %v1724 = vadd.f32 0.0, %v1723
      %v1725 = vpop.f32.mrb[0].mxu0
      %v1726 = vpop.f32.mrb[0].mxu0
      %v1727 = vadd.f32 0.0, %v1726
      %v1728 = vpop.f32.mrb[0].mxu0
      %1729 = vmatprep.mubr.bf16.mxu0 0
      %1730 = vmatmul.mubr.bf16.gmra.mrb[0].mxu0 %v1591
      %v1731 = vpop.f32.mrb[0].mxu0
      %v1732 = vadd.f32 0.0, %v1731
      %v1733 = vpop.f32.mrb[0].mxu0
      %v1734 = vpop.f32.mrb[0].mxu0
      %v1735 = vadd.f32 0.0, %v1734
      %v1736 = vpop.f32.mrb[0].mxu0
      %1737 = vmatprep.mubr.bf16.mxu0 0
      %1738 = vmatmul.mubr.bf16.gmra.mrb[0].mxu0 %v1594
      %v1739 = vpop.f32.mrb[0].mxu0
      %v1740 = vadd.f32 0.0, %v1739
      %v1741 = vpop.f32.mrb[0].mxu0
      %v1742 = vpop.f32.mrb[0].mxu0
      %v1743 = vadd.f32 0.0, %v1742
      %v1744 = vpop.f32.mrb[0].mxu0
      %1745 = vmatprep.mubr.bf16.mxu0 0
      %1746 = vmatmul.mubr.bf16.gmra.mrb[0].mxu0 %v1597
      %v1747 = vpop.f32.mrb[0].mxu0
      %v1748 = vadd.f32 0.0, %v1747
      %v1749 = vpop.f32.mrb[0].mxu0
      %v1750 = vpop.f32.mrb[0].mxu0
      %v1751 = vadd.f32 0.0, %v1750
      %v1752 = vpop.f32.mrb[0].mxu0
      %1753 = vmatprep.mubr.bf16.mxu0 0
      %1754 = vmatmul.mubr.bf16.gmra.mrb[0].mxu0 %v1600
      %v1755 = vpop.f32.mrb[0].mxu0
      %v1756 = vadd.f32 0.0, %v1755
      %v1757 = vpop.f32.mrb[0].mxu0
      %v1758 = vpop.f32.mrb[0].mxu0
      %v1759 = vadd.f32 0.0, %v1758
      %v1760 = vpop.f32.mrb[0].mxu0
      %1761 = vmatprep.mubr.bf16.mxu0 0
      %1762 = vmatmul.mubr.bf16.gmra.mrb[0].mxu0 %v1603
      %v1763 = vpop.f32.mrb[0].mxu0
      %v1764 = vadd.f32 0.0, %v1763
      %v1765 = vpop.f32.mrb[0].mxu0
      %v1766 = vpop.f32.mrb[0].mxu0
      %v1767 = vadd.f32 0.0, %v1766
      %v1768 = vpop.f32.mrb[0].mxu0
      %1769 = vmatprep.mubr.bf16.mxu0 0
      %1770 = vmatmul.mubr.bf16.gmra.mrb[0].mxu0 %v1606
      %v1771 = vpop.f32.mrb[0].mxu0
      %v1772 = vadd.f32 0.0, %v1771
      %v1773 = vpop.f32.mrb[0].mxu0
      %v1774 = vpop.f32.mrb[0].mxu0
      %v1775 = vadd.f32 0.0, %v1774
      %v1776 = vpop.f32.mrb[0].mxu0
      %1777 = vmatprep.mubr.bf16.mxu0 0
      %1778 = vmatmul.mubr.bf16.gmra.mrb[0].mxu0 %v1609
      %v1779 = vpop.f32.mrb[0].mxu0
      %v1780 = vadd.f32 0.0, %v1779
      %v1781 = vpop.f32.mrb[0].mxu0
      %v1782 = vpop.f32.mrb[0].mxu0
      %v1783 = vadd.f32 0.0, %v1782
      %v1784 = vpop.f32.mrb[0].mxu0
      %1785 = vmatprep.mubr.bf16.mxu0 0
      %1786 = vmatmul.mubr.bf16.gmra.mrb[0].mxu0 %v1612
      %v1787 = vpop.f32.mrb[0].mxu0
      %v1788 = vadd.f32 0.0, %v1787
      %v1789 = vpop.f32.mrb[0].mxu0
      %v1790 = vpop.f32.mrb[0].mxu0
      %v1791 = vadd.f32 0.0, %v1790
      %v1792 = vpop.f32.mrb[0].mxu0
      %1793 = vdwg.mxu0
      %v1794 = vadd.f32 %v1355, %v1652
      %v1795 = vadd.f32 %v1356, %v1655
      %v1796 = vadd.f32 %v1357, %v1660
      %v1797 = vadd.f32 %v1358, %v1663
      %v1798 = vadd.f32 %v1359, %v1668
      %v1799 = vadd.f32 %v1360, %v1671
      %v1800 = vadd.f32 %v1361, %v1676
      %v1801 = vadd.f32 %v1362, %v1679
      %v1802 = vadd.f32 %v1363, %v1684
      %v1803 = vadd.f32 %v1364, %v1687
      %v1804 = vadd.f32 %v1365, %v1692
      %v1805 = vadd.f32 %v1366, %v1695
      %v1806 = vadd.f32 %v1367, %v1700
      %v1807 = vadd.f32 %v1368, %v1703
      %v1808 = vadd.f32 %v1369, %v1708
      %v1809 = vadd.f32 %v1370, %v1711
      %v1810 = vadd.f32 %v1371, %v1716
      %v1811 = vadd.f32 %v1372, %v1719
      %v1812 = vadd.f32 %v1373, %v1724
      %v1813 = vadd.f32 %v1374, %v1727
      %v1814 = vadd.f32 %v1375, %v1732
      %v1815 = vadd.f32 %v1376, %v1735
      %v1816 = vadd.f32 %v1377, %v1740
      %v1817 = vadd.f32 %v1378, %v1743
      %v1818 = vadd.f32 %v1379, %v1748
      %v1819 = vadd.f32 %v1380, %v1751
      %v1820 = vadd.f32 %v1381, %v1756
      %v1821 = vadd.f32 %v1382, %v1759
      %v1822 = vadd.f32 %v1383, %v1764
      %v1823 = vadd.f32 %v1384, %v1767
      %v1824 = vadd.f32 %v1385, %v1772
      %v1825 = vadd.f32 %v1386, %v1775
      %v1826 = vadd.f32 %v1387, %v1780
      %v1827 = vadd.f32 %v1388, %v1783
      %v1828 = vadd.f32 %v1389, %v1788
      %v1829 = vadd.f32 %v1390, %v1791
      %v1830 = vld [vmem:[%s300 + $0x98] sm:$0x3]
      %s1831 = scalar_lea.vmem %s2, 8
      %v1832 = vld [vmem:[%s1831] sm:$0x3]
      %v1834 = vunpack.c.l.b16 %v1830
      %v1835 = vpack.c.b16 %v1834, %v1834
      %vm1836 = vsmask.f32 6400
      %v1838 = vshrl.u32 %v1504, 16
      %v1840 = vrot.slane %v1838, 1
      %v1841 = vshll.u32 %v1504, 16
      %v1843 = vrot.slane %v1841, 2
      %v1844 = vor.u32 %v1840, %v1843
      %v1846 = vshrl.u32 %v1505, 16
      %v1848 = vrot.slane %v1846, 1
      %v1849 = vshll.u32 %v1505, 16
      %v1851 = vrot.slane %v1849, 2
      %v1852 = vor.u32 %v1848, %v1851
      %v1853 = vsel %vm1836, %v1844, %v1852
      %v1855 = vshrl.u32 %v1506, 16
      %v1857 = vrot.slane %v1855, 1
      %v1858 = vshll.u32 %v1506, 16
      %v1860 = vrot.slane %v1858, 2
      %v1861 = vor.u32 %v1857, %v1860
      %v1862 = vsel %vm1836, %v1852, %v1861
      %v1864 = vshrl.u32 %v1507, 16
      %v1866 = vrot.slane %v1864, 1
      %v1867 = vshll.u32 %v1507, 16
      %v1869 = vrot.slane %v1867, 2
      %v1870 = vor.u32 %v1866, %v1869
      %v1871 = vsel %vm1836, %v1861, %v1870
      %v1873 = vshrl.u32 %v1508, 16
      %v1875 = vrot.slane %v1873, 1
      %v1876 = vshll.u32 %v1508, 16
      %v1878 = vrot.slane %v1876, 2
      %v1879 = vor.u32 %v1875, %v1878
      %v1880 = vsel %vm1836, %v1870, %v1879
      %v1882 = vshrl.u32 %v1509, 16
      %v1884 = vrot.slane %v1882, 1
      %v1885 = vshll.u32 %v1509, 16
      %v1887 = vrot.slane %v1885, 2
      %v1888 = vor.u32 %v1884, %v1887
      %v1889 = vsel %vm1836, %v1879, %v1888
      %v1891 = vshrl.u32 %v1510, 16
      %v1893 = vrot.slane %v1891, 1
      %v1894 = vshll.u32 %v1510, 16
      %v1896 = vrot.slane %v1894, 2
      %v1897 = vor.u32 %v1893, %v1896
      %v1898 = vsel %vm1836, %v1888, %v1897
      %v1900 = vshrl.u32 %v1511, 16
      %v1902 = vrot.slane %v1900, 1
      %v1903 = vshll.u32 %v1511, 16
      %v1905 = vrot.slane %v1903, 2
      %v1906 = vor.u32 %v1902, %v1905
      %v1907 = vsel %vm1836, %v1897, %v1906
      %v1909 = vshrl.u32 %v1512, 16
      %v1911 = vrot.slane %v1909, 1
      %v1912 = vshll.u32 %v1512, 16
      %v1914 = vrot.slane %v1912, 2
      %v1915 = vor.u32 %v1911, %v1914
      %v1916 = vsel %vm1836, %v1906, %v1915
      %v1918 = vshrl.u32 %v1513, 16
      %v1920 = vrot.slane %v1918, 1
      %v1921 = vshll.u32 %v1513, 16
      %v1923 = vrot.slane %v1921, 2
      %v1924 = vor.u32 %v1920, %v1923
      %v1925 = vsel %vm1836, %v1915, %v1924
      %v1927 = vshrl.u32 %v1514, 16
      %v1929 = vrot.slane %v1927, 1
      %v1930 = vshll.u32 %v1514, 16
      %v1932 = vrot.slane %v1930, 2
      %v1933 = vor.u32 %v1929, %v1932
      %v1934 = vsel %vm1836, %v1924, %v1933
      %v1936 = vshrl.u32 %v1515, 16
      %v1938 = vrot.slane %v1936, 1
      %v1939 = vshll.u32 %v1515, 16
      %v1941 = vrot.slane %v1939, 2
      %v1942 = vor.u32 %v1938, %v1941
      %v1943 = vsel %vm1836, %v1933, %v1942
      %v1945 = vshrl.u32 %v1516, 16
      %v1947 = vrot.slane %v1945, 1
      %v1948 = vshll.u32 %v1516, 16
      %v1950 = vrot.slane %v1948, 2
      %v1951 = vor.u32 %v1947, %v1950
      %v1952 = vsel %vm1836, %v1942, %v1951
      %v1954 = vshrl.u32 %v1517, 16
      %v1956 = vrot.slane %v1954, 1
      %v1957 = vshll.u32 %v1517, 16
      %v1959 = vrot.slane %v1957, 2
      %v1960 = vor.u32 %v1956, %v1959
      %v1961 = vsel %vm1836, %v1951, %v1960
      %v1963 = vshrl.u32 %v1518, 16
      %v1965 = vrot.slane %v1963, 1
      %v1966 = vshll.u32 %v1518, 16
      %v1968 = vrot.slane %v1966, 2
      %v1969 = vor.u32 %v1965, %v1968
      %v1970 = vsel %vm1836, %v1960, %v1969
      %v1972 = vshrl.u32 %v1519, 16
      %v1974 = vrot.slane %v1972, 1
      %v1975 = vshll.u32 %v1519, 16
      %v1977 = vrot.slane %v1975, 2
      %v1978 = vor.u32 %v1974, %v1977
      %v1979 = vsel %vm1836, %v1969, %v1978
      %v1981 = vshrl.u32 %v1520, 16
      %v1983 = vrot.slane %v1981, 1
      %v1984 = vshll.u32 %v1520, 16
      %v1986 = vrot.slane %v1984, 2
      %v1987 = vor.u32 %v1983, %v1986
      %v1988 = vsel %vm1836, %v1978, %v1987
      %v1990 = vshrl.u32 %v1521, 16
      %v1992 = vrot.slane %v1990, 1
      %v1993 = vshll.u32 %v1521, 16
      %v1995 = vrot.slane %v1993, 2
      %v1996 = vor.u32 %v1992, %v1995
      %v1997 = vsel %vm1836, %v1987, %v1996
      %v1999 = vshrl.u32 %v1835, 16
      %v2001 = vrot.slane %v1999, 1
      %v2002 = vshll.u32 %v1835, 16
      %v2004 = vrot.slane %v2002, 2
      %v2005 = vor.u32 %v2001, %v2004
      %v2006 = vsel %vm1836, %v1996, %v2005
      %v2008 = vsel %vm625, %v1853, 0
      %v2011 = vsel %vm625, %v1862, 0
      %v2014 = vsel %vm625, %v1871, 0
      %v2017 = vsel %vm625, %v1880, 0
      %v2020 = vsel %vm625, %v1889, 0
      %v2023 = vsel %vm625, %v1898, 0
      %v2026 = vsel %vm625, %v1907, 0
      %v2029 = vsel %vm625, %v1916, 0
      %v2032 = vsel %vm625, %v1925, 0
      %v2035 = vsel %vm625, %v1934, 0
      %v2038 = vsel %vm625, %v1943, 0
      %v2041 = vsel %vm625, %v1952, 0
      %v2044 = vsel %vm625, %v1961, 0
      %v2047 = vsel %vm625, %v1970, 0
      %v2050 = vsel %vm625, %v1979, 0
      %v2053 = vsel %vm625, %v1988, 0
      %v2056 = vsel %vm625, %v1997, 0
      %v2059 = vsel %vm625, %v2006, 0
      %v2062 = vsel %vm680, %v1832, 0
      %2064 = vmatprep.subr.bf16.mxu0 0
      %2065 = vmatpush1.bf16.msra.mxu0 %v2062
      %2066 = vmatprep.subr.bf16.mxu0 0
      %2067 = vmatpush1.bf16.msra.mxu0 0
      %2068 = vmatprep.subr.bf16.mxu0 0
      %2069 = vmatpush1.bf16.msra.mxu0 0
      %2070 = vmatprep.subr.bf16.mxu0 0
      %2071 = vmatpush1.bf16.msra.mxu0 0
      %2072 = vmatprep.subr.bf16.mxu0 0
      %2073 = vmatpush1.bf16.msra.mxu0 0
      %2074 = vmatprep.subr.bf16.mxu0 0
      %2075 = vmatpush1.bf16.msra.mxu0 0
      %2076 = vmatprep.subr.bf16.mxu0 0
      %2077 = vmatpush1.bf16.msra.mxu0 0
      %2078 = vmatprep.subr.bf16.mxu0 0
      %2079 = vmatpush1.bf16.msra.mxu0 0
      %2080 = vmatprep.subr.bf16.mxu0 0
      %2081 = vmatpush1.bf16.msra.mxu0 0
      %2082 = vmatprep.subr.bf16.mxu0 0
      %2083 = vmatpush1.bf16.msra.mxu0 0
      %2084 = vmatprep.subr.bf16.mxu0 0
      %2085 = vmatpush1.bf16.msra.mxu0 0
      %2086 = vmatprep.subr.bf16.mxu0 0
      %2087 = vmatpush1.bf16.msra.mxu0 0
      %2088 = vmatprep.subr.bf16.mxu0 0
      %2089 = vmatpush1.bf16.msra.mxu0 0
      %2090 = vmatprep.subr.bf16.mxu0 0
      %2091 = vmatpush1.bf16.msra.mxu0 0
      %2092 = vmatprep.subr.bf16.mxu0 0
      %2093 = vmatpush1.bf16.msra.mxu0 0
      %2094 = vmatprep.subr.bf16.mxu0 0
      %2095 = vmatpush1.bf16.msra.mxu0 0
      %2096 = vmatprep.mubr.bf16.mxu0 0
      %2097 = vmatmul.mubr.bf16.gmra.mrb[0].mxu0 %v2008
      %v2098 = vpop.f32.mrb[0].mxu0
      %v2099 = vadd.f32 0.0, %v2098
      %v2100 = vpop.f32.mrb[0].mxu0
      %v2101 = vpop.f32.mrb[0].mxu0
      %v2102 = vadd.f32 0.0, %v2101
      %v2103 = vpop.f32.mrb[0].mxu0
      %2104 = vmatprep.mubr.bf16.mxu0 0
      %2105 = vmatmul.mubr.bf16.gmra.mrb[0].mxu0 %v2011
      %v2106 = vpop.f32.mrb[0].mxu0
      %v2107 = vadd.f32 0.0, %v2106
      %v2108 = vpop.f32.mrb[0].mxu0
      %v2109 = vpop.f32.mrb[0].mxu0
      %v2110 = vadd.f32 0.0, %v2109
      %v2111 = vpop.f32.mrb[0].mxu0
      %2112 = vmatprep.mubr.bf16.mxu0 0
      %2113 = vmatmul.mubr.bf16.gmra.mrb[0].mxu0 %v2014
      %v2114 = vpop.f32.mrb[0].mxu0
      %v2115 = vadd.f32 0.0, %v2114
      %v2116 = vpop.f32.mrb[0].mxu0
      %v2117 = vpop.f32.mrb[0].mxu0
      %v2118 = vadd.f32 0.0, %v2117
      %v2119 = vpop.f32.mrb[0].mxu0
      %2120 = vmatprep.mubr.bf16.mxu0 0
      %2121 = vmatmul.mubr.bf16.gmra.mrb[0].mxu0 %v2017
      %v2122 = vpop.f32.mrb[0].mxu0
      %v2123 = vadd.f32 0.0, %v2122
      %v2124 = vpop.f32.mrb[0].mxu0
      %v2125 = vpop.f32.mrb[0].mxu0
      %v2126 = vadd.f32 0.0, %v2125
      %v2127 = vpop.f32.mrb[0].mxu0
      %2128 = vmatprep.mubr.bf16.mxu0 0
      %2129 = vmatmul.mubr.bf16.gmra.mrb[0].mxu0 %v2020
      %v2130 = vpop.f32.mrb[0].mxu0
      %v2131 = vadd.f32 0.0, %v2130
      %v2132 = vpop.f32.mrb[0].mxu0
      %v2133 = vpop.f32.mrb[0].mxu0
      %v2134 = vadd.f32 0.0, %v2133
      %v2135 = vpop.f32.mrb[0].mxu0
      %2136 = vmatprep.mubr.bf16.mxu0 0
      %2137 = vmatmul.mubr.bf16.gmra.mrb[0].mxu0 %v2023
      %v2138 = vpop.f32.mrb[0].mxu0
      %v2139 = vadd.f32 0.0, %v2138
      %v2140 = vpop.f32.mrb[0].mxu0
      %v2141 = vpop.f32.mrb[0].mxu0
      %v2142 = vadd.f32 0.0, %v2141
      %v2143 = vpop.f32.mrb[0].mxu0
      %2144 = vmatprep.mubr.bf16.mxu0 0
      %2145 = vmatmul.mubr.bf16.gmra.mrb[0].mxu0 %v2026
      %v2146 = vpop.f32.mrb[0].mxu0
      %v2147 = vadd.f32 0.0, %v2146
      %v2148 = vpop.f32.mrb[0].mxu0
      %v2149 = vpop.f32.mrb[0].mxu0
      %v2150 = vadd.f32 0.0, %v2149
      %v2151 = vpop.f32.mrb[0].mxu0
      %2152 = vmatprep.mubr.bf16.mxu0 0
      %2153 = vmatmul.mubr.bf16.gmra.mrb[0].mxu0 %v2029
      %v2154 = vpop.f32.mrb[0].mxu0
      %v2155 = vadd.f32 0.0, %v2154
      %v2156 = vpop.f32.mrb[0].mxu0
      %v2157 = vpop.f32.mrb[0].mxu0
      %v2158 = vadd.f32 0.0, %v2157
      %v2159 = vpop.f32.mrb[0].mxu0
      %2160 = vmatprep.mubr.bf16.mxu0 0
      %2161 = vmatmul.mubr.bf16.gmra.mrb[0].mxu0 %v2032
      %v2162 = vpop.f32.mrb[0].mxu0
      %v2163 = vadd.f32 0.0, %v2162
      %v2164 = vpop.f32.mrb[0].mxu0
      %v2165 = vpop.f32.mrb[0].mxu0
      %v2166 = vadd.f32 0.0, %v2165
      %v2167 = vpop.f32.mrb[0].mxu0
      %2168 = vmatprep.mubr.bf16.mxu0 0
      %2169 = vmatmul.mubr.bf16.gmra.mrb[0].mxu0 %v2035
      %v2170 = vpop.f32.mrb[0].mxu0
      %v2171 = vadd.f32 0.0, %v2170
      %v2172 = vpop.f32.mrb[0].mxu0
      %v2173 = vpop.f32.mrb[0].mxu0
      %v2174 = vadd.f32 0.0, %v2173
      %v2175 = vpop.f32.mrb[0].mxu0
      %2176 = vmatprep.mubr.bf16.mxu0 0
      %2177 = vmatmul.mubr.bf16.gmra.mrb[0].mxu0 %v2038
      %v2178 = vpop.f32.mrb[0].mxu0
      %v2179 = vadd.f32 0.0, %v2178
      %v2180 = vpop.f32.mrb[0].mxu0
      %v2181 = vpop.f32.mrb[0].mxu0
      %v2182 = vadd.f32 0.0, %v2181
      %v2183 = vpop.f32.mrb[0].mxu0
      %2184 = vmatprep.mubr.bf16.mxu0 0
      %2185 = vmatmul.mubr.bf16.gmra.mrb[0].mxu0 %v2041
      %v2186 = vpop.f32.mrb[0].mxu0
      %v2187 = vadd.f32 0.0, %v2186
      %v2188 = vpop.f32.mrb[0].mxu0
      %v2189 = vpop.f32.mrb[0].mxu0
      %v2190 = vadd.f32 0.0, %v2189
      %v2191 = vpop.f32.mrb[0].mxu0
      %2192 = vmatprep.mubr.bf16.mxu0 0
      %2193 = vmatmul.mubr.bf16.gmra.mrb[0].mxu0 %v2044
      %v2194 = vpop.f32.mrb[0].mxu0
      %v2195 = vadd.f32 0.0, %v2194
      %v2196 = vpop.f32.mrb[0].mxu0
      %v2197 = vpop.f32.mrb[0].mxu0
      %v2198 = vadd.f32 0.0, %v2197
      %v2199 = vpop.f32.mrb[0].mxu0
      %2200 = vmatprep.mubr.bf16.mxu0 0
      %2201 = vmatmul.mubr.bf16.gmra.mrb[0].mxu0 %v2047
      %v2202 = vpop.f32.mrb[0].mxu0
      %v2203 = vadd.f32 0.0, %v2202
      %v2204 = vpop.f32.mrb[0].mxu0
      %v2205 = vpop.f32.mrb[0].mxu0
      %v2206 = vadd.f32 0.0, %v2205
      %v2207 = vpop.f32.mrb[0].mxu0
      %2208 = vmatprep.mubr.bf16.mxu0 0
      %2209 = vmatmul.mubr.bf16.gmra.mrb[0].mxu0 %v2050
      %v2210 = vpop.f32.mrb[0].mxu0
      %v2211 = vadd.f32 0.0, %v2210
      %v2212 = vpop.f32.mrb[0].mxu0
      %v2213 = vpop.f32.mrb[0].mxu0
      %v2214 = vadd.f32 0.0, %v2213
      %v2215 = vpop.f32.mrb[0].mxu0
      %2216 = vmatprep.mubr.bf16.mxu0 0
      %2217 = vmatmul.mubr.bf16.gmra.mrb[0].mxu0 %v2053
      %v2218 = vpop.f32.mrb[0].mxu0
      %v2219 = vadd.f32 0.0, %v2218
      %v2220 = vpop.f32.mrb[0].mxu0
      %v2221 = vpop.f32.mrb[0].mxu0
      %v2222 = vadd.f32 0.0, %v2221
      %v2223 = vpop.f32.mrb[0].mxu0
      %2224 = vmatprep.mubr.bf16.mxu0 0
      %2225 = vmatmul.mubr.bf16.gmra.mrb[0].mxu0 %v2056
      %v2226 = vpop.f32.mrb[0].mxu0
      %v2227 = vadd.f32 0.0, %v2226
      %v2228 = vpop.f32.mrb[0].mxu0
      %v2229 = vpop.f32.mrb[0].mxu0
      %v2230 = vadd.f32 0.0, %v2229
      %v2231 = vpop.f32.mrb[0].mxu0
      %2232 = vmatprep.mubr.bf16.mxu0 0
      %2233 = vmatmul.mubr.bf16.gmra.mrb[0].mxu0 %v2059
      %v2234 = vpop.f32.mrb[0].mxu0
      %v2235 = vadd.f32 0.0, %v2234
      %v2236 = vpop.f32.mrb[0].mxu0
      %v2237 = vpop.f32.mrb[0].mxu0
      %v2238 = vadd.f32 0.0, %v2237
      %v2239 = vpop.f32.mrb[0].mxu0
      %2240 = vdwg.mxu0
      %v2241 = vadd.f32 %v1794, %v2099
      %v2242 = vadd.f32 %v1795, %v2102
      %v2243 = vadd.f32 %v1796, %v2107
      %v2244 = vadd.f32 %v1797, %v2110
      %v2245 = vadd.f32 %v1798, %v2115
      %v2246 = vadd.f32 %v1799, %v2118
      %v2247 = vadd.f32 %v1800, %v2123
      %v2248 = vadd.f32 %v1801, %v2126
      %v2249 = vadd.f32 %v1802, %v2131
      %v2250 = vadd.f32 %v1803, %v2134
      %v2251 = vadd.f32 %v1804, %v2139
      %v2252 = vadd.f32 %v1805, %v2142
      %v2253 = vadd.f32 %v1806, %v2147
      %v2254 = vadd.f32 %v1807, %v2150
      %v2255 = vadd.f32 %v1808, %v2155
      %v2256 = vadd.f32 %v1809, %v2158
      %v2257 = vadd.f32 %v1810, %v2163
      %v2258 = vadd.f32 %v1811, %v2166
      %v2259 = vadd.f32 %v1812, %v2171
      %v2260 = vadd.f32 %v1813, %v2174
      %v2261 = vadd.f32 %v1814, %v2179
      %v2262 = vadd.f32 %v1815, %v2182
      %v2263 = vadd.f32 %v1816, %v2187
      %v2264 = vadd.f32 %v1817, %v2190
      %v2265 = vadd.f32 %v1818, %v2195
      %v2266 = vadd.f32 %v1819, %v2198
      %v2267 = vadd.f32 %v1820, %v2203
      %v2268 = vadd.f32 %v1821, %v2206
      %v2269 = vadd.f32 %v1822, %v2211
      %v2270 = vadd.f32 %v1823, %v2214
      %v2271 = vadd.f32 %v1824, %v2219
      %v2272 = vadd.f32 %v1825, %v2222
      %v2273 = vadd.f32 %v1826, %v2227
      %v2274 = vadd.f32 %v1827, %v2230
      %v2275 = vadd.f32 %v1828, %v2235
      %v2276 = vadd.f32 %v1829, %v2238
      %v2277 = vld [vmem:[%s300 + $0x8] sm:$0xc]
      %s2278 = scalar_lea.vmem %s2, 10
      %v2279 = vld [vmem:[%s2278] sm:$0x3]
      %v2281 = vunpack.c.l.b16 %v2277
      %v2282 = vpack.c.b16 %v1468, %v2281
      %vm2283 = vcmask 1045504
      %v2284 = vrot.slane %v2282, 2
      %v2285 = vrot.slane %v1505, 2
      %v2286 = vsel %vm2283, %v2284, %v2285
      %v2287 = vrot.slane %v1506, 2
      %v2288 = vsel %vm2283, %v2285, %v2287
      %v2289 = vrot.slane %v1507, 2
      %v2290 = vsel %vm2283, %v2287, %v2289
      %v2291 = vrot.slane %v1508, 2
      %v2292 = vsel %vm2283, %v2289, %v2291
      %v2293 = vrot.slane %v1509, 2
      %v2294 = vsel %vm2283, %v2291, %v2293
      %v2295 = vrot.slane %v1510, 2
      %v2296 = vsel %vm2283, %v2293, %v2295
      %v2297 = vrot.slane %v1511, 2
      %v2298 = vsel %vm2283, %v2295, %v2297
      %v2299 = vrot.slane %v1512, 2
      %v2300 = vsel %vm2283, %v2297, %v2299
      %v2301 = vrot.slane %v1513, 2
      %v2302 = vsel %vm2283, %v2299, %v2301
      %v2303 = vrot.slane %v1514, 2
      %v2304 = vsel %vm2283, %v2301, %v2303
      %v2305 = vrot.slane %v1515, 2
      %v2306 = vsel %vm2283, %v2303, %v2305
      %v2307 = vrot.slane %v1516, 2
      %v2308 = vsel %vm2283, %v2305, %v2307
      %v2309 = vrot.slane %v1517, 2
      %v2310 = vsel %vm2283, %v2307, %v2309
      %v2311 = vrot.slane %v1518, 2
      %v2312 = vsel %vm2283, %v2309, %v2311
      %v2313 = vrot.slane %v1519, 2
      %v2314 = vsel %vm2283, %v2311, %v2313
      %v2315 = vrot.slane %v1520, 2
      %v2316 = vsel %vm2283, %v2313, %v2315
      %v2317 = vrot.slane %v1521, 2
      %v2318 = vsel %vm2283, %v2315, %v2317
      %v2319 = vrot.slane %v1835, 2
      %v2320 = vsel %vm2283, %v2317, %v2319
      %v2322 = vsel %vm625, %v2286, 0
      %v2325 = vsel %vm625, %v2288, 0
      %v2328 = vsel %vm625, %v2290, 0
      %v2331 = vsel %vm625, %v2292, 0
      %v2334 = vsel %vm625, %v2294, 0
      %v2337 = vsel %vm625, %v2296, 0
      %v2340 = vsel %vm625, %v2298, 0
      %v2343 = vsel %vm625, %v2300, 0
      %v2346 = vsel %vm625, %v2302, 0
      %v2349 = vsel %vm625, %v2304, 0
      %v2352 = vsel %vm625, %v2306, 0
      %v2355 = vsel %vm625, %v2308, 0
      %v2358 = vsel %vm625, %v2310, 0
      %v2361 = vsel %vm625, %v2312, 0
      %v2364 = vsel %vm625, %v2314, 0
      %v2367 = vsel %vm625, %v2316, 0
      %v2370 = vsel %vm625, %v2318, 0
      %v2373 = vsel %vm625, %v2320, 0
      %v2376 = vsel %vm680, %v2279, 0
      %2378 = vmatprep.subr.bf16.mxu0 0
      %2379 = vmatpush1.bf16.msra.mxu0 %v2376
      %2380 = vmatprep.subr.bf16.mxu0 0
      %2381 = vmatpush1.bf16.msra.mxu0 0
      %2382 = vmatprep.subr.bf16.mxu0 0
      %2383 = vmatpush1.bf16.msra.mxu0 0
      %2384 = vmatprep.subr.bf16.mxu0 0
      %2385 = vmatpush1.bf16.msra.mxu0 0
      %2386 = vmatprep.subr.bf16.mxu0 0
      %2387 = vmatpush1.bf16.msra.mxu0 0
      %2388 = vmatprep.subr.bf16.mxu0 0
      %2389 = vmatpush1.bf16.msra.mxu0 0
      %2390 = vmatprep.subr.bf16.mxu0 0
      %2391 = vmatpush1.bf16.msra.mxu0 0
      %2392 = vmatprep.subr.bf16.mxu0 0
      %2393 = vmatpush1.bf16.msra.mxu0 0
      %2394 = vmatprep.subr.bf16.mxu0 0
      %2395 = vmatpush1.bf16.msra.mxu0 0
      %2396 = vmatprep.subr.bf16.mxu0 0
      %2397 = vmatpush1.bf16.msra.mxu0 0
      %2398 = vmatprep.subr.bf16.mxu0 0
      %2399 = vmatpush1.bf16.msra.mxu0 0
      %2400 = vmatprep.subr.bf16.mxu0 0
      %2401 = vmatpush1.bf16.msra.mxu0 0
      %2402 = vmatprep.subr.bf16.mxu0 0
      %2403 = vmatpush1.bf16.msra.mxu0 0
      %2404 = vmatprep.subr.bf16.mxu0 0
      %2405 = vmatpush1.bf16.msra.mxu0 0
      %2406 = vmatprep.subr.bf16.mxu0 0
      %2407 = vmatpush1.bf16.msra.mxu0 0
      %2408 = vmatprep.subr.bf16.mxu0 0
      %2409 = vmatpush1.bf16.msra.mxu0 0
      %2410 = vmatprep.mubr.bf16.mxu0 0
      %2411 = vmatmul.mubr.bf16.gmra.mrb[0].mxu0 %v2322
      %v2412 = vpop.f32.mrb[0].mxu0
      %v2413 = vadd.f32 0.0, %v2412
      %v2414 = vpop.f32.mrb[0].mxu0
      %v2415 = vpop.f32.mrb[0].mxu0
      %v2416 = vadd.f32 0.0, %v2415
      %v2417 = vpop.f32.mrb[0].mxu0
      %2418 = vmatprep.mubr.bf16.mxu0 0
      %2419 = vmatmul.mubr.bf16.gmra.mrb[0].mxu0 %v2325
      %v2420 = vpop.f32.mrb[0].mxu0
      %v2421 = vadd.f32 0.0, %v2420
      %v2422 = vpop.f32.mrb[0].mxu0
      %v2423 = vpop.f32.mrb[0].mxu0
      %v2424 = vadd.f32 0.0, %v2423
      %v2425 = vpop.f32.mrb[0].mxu0
      %2426 = vmatprep.mubr.bf16.mxu0 0
      %2427 = vmatmul.mubr.bf16.gmra.mrb[0].mxu0 %v2328
      %v2428 = vpop.f32.mrb[0].mxu0
      %v2429 = vadd.f32 0.0, %v2428
      %v2430 = vpop.f32.mrb[0].mxu0
      %v2431 = vpop.f32.mrb[0].mxu0
      %v2432 = vadd.f32 0.0, %v2431
      %v2433 = vpop.f32.mrb[0].mxu0
      %2434 = vmatprep.mubr.bf16.mxu0 0
      %2435 = vmatmul.mubr.bf16.gmra.mrb[0].mxu0 %v2331
      %v2436 = vpop.f32.mrb[0].mxu0
      %v2437 = vadd.f32 0.0, %v2436
      %v2438 = vpop.f32.mrb[0].mxu0
      %v2439 = vpop.f32.mrb[0].mxu0
      %v2440 = vadd.f32 0.0, %v2439
      %v2441 = vpop.f32.mrb[0].mxu0
      %2442 = vmatprep.mubr.bf16.mxu0 0
      %2443 = vmatmul.mubr.bf16.gmra.mrb[0].mxu0 %v2334
      %v2444 = vpop.f32.mrb[0].mxu0
      %v2445 = vadd.f32 0.0, %v2444
      %v2446 = vpop.f32.mrb[0].mxu0
      %v2447 = vpop.f32.mrb[0].mxu0
      %v2448 = vadd.f32 0.0, %v2447
      %v2449 = vpop.f32.mrb[0].mxu0
      %2450 = vmatprep.mubr.bf16.mxu0 0
      %2451 = vmatmul.mubr.bf16.gmra.mrb[0].mxu0 %v2337
      %v2452 = vpop.f32.mrb[0].mxu0
      %v2453 = vadd.f32 0.0, %v2452
      %v2454 = vpop.f32.mrb[0].mxu0
      %v2455 = vpop.f32.mrb[0].mxu0
      %v2456 = vadd.f32 0.0, %v2455
      %v2457 = vpop.f32.mrb[0].mxu0
      %2458 = vmatprep.mubr.bf16.mxu0 0
      %2459 = vmatmul.mubr.bf16.gmra.mrb[0].mxu0 %v2340
      %v2460 = vpop.f32.mrb[0].mxu0
      %v2461 = vadd.f32 0.0, %v2460
      %v2462 = vpop.f32.mrb[0].mxu0
      %v2463 = vpop.f32.mrb[0].mxu0
      %v2464 = vadd.f32 0.0, %v2463
      %v2465 = vpop.f32.mrb[0].mxu0
      %2466 = vmatprep.mubr.bf16.mxu0 0
      %2467 = vmatmul.mubr.bf16.gmra.mrb[0].mxu0 %v2343
      %v2468 = vpop.f32.mrb[0].mxu0
      %v2469 = vadd.f32 0.0, %v2468
      %v2470 = vpop.f32.mrb[0].mxu0
      %v2471 = vpop.f32.mrb[0].mxu0
      %v2472 = vadd.f32 0.0, %v2471
      %v2473 = vpop.f32.mrb[0].mxu0
      %2474 = vmatprep.mubr.bf16.mxu0 0
      %2475 = vmatmul.mubr.bf16.gmra.mrb[0].mxu0 %v2346
      %v2476 = vpop.f32.mrb[0].mxu0
      %v2477 = vadd.f32 0.0, %v2476
      %v2478 = vpop.f32.mrb[0].mxu0
      %v2479 = vpop.f32.mrb[0].mxu0
      %v2480 = vadd.f32 0.0, %v2479
      %v2481 = vpop.f32.mrb[0].mxu0
      %2482 = vmatprep.mubr.bf16.mxu0 0
      %2483 = vmatmul.mubr.bf16.gmra.mrb[0].mxu0 %v2349
      %v2484 = vpop.f32.mrb[0].mxu0
      %v2485 = vadd.f32 0.0, %v2484
      %v2486 = vpop.f32.mrb[0].mxu0
      %v2487 = vpop.f32.mrb[0].mxu0
      %v2488 = vadd.f32 0.0, %v2487
      %v2489 = vpop.f32.mrb[0].mxu0
      %2490 = vmatprep.mubr.bf16.mxu0 0
      %2491 = vmatmul.mubr.bf16.gmra.mrb[0].mxu0 %v2352
      %v2492 = vpop.f32.mrb[0].mxu0
      %v2493 = vadd.f32 0.0, %v2492
      %v2494 = vpop.f32.mrb[0].mxu0
      %v2495 = vpop.f32.mrb[0].mxu0
      %v2496 = vadd.f32 0.0, %v2495
      %v2497 = vpop.f32.mrb[0].mxu0
      %2498 = vmatprep.mubr.bf16.mxu0 0
      %2499 = vmatmul.mubr.bf16.gmra.mrb[0].mxu0 %v2355
      %v2500 = vpop.f32.mrb[0].mxu0
      %v2501 = vadd.f32 0.0, %v2500
      %v2502 = vpop.f32.mrb[0].mxu0
      %v2503 = vpop.f32.mrb[0].mxu0
      %v2504 = vadd.f32 0.0, %v2503
      %v2505 = vpop.f32.mrb[0].mxu0
      %2506 = vmatprep.mubr.bf16.mxu0 0
      %2507 = vmatmul.mubr.bf16.gmra.mrb[0].mxu0 %v2358
      %v2508 = vpop.f32.mrb[0].mxu0
      %v2509 = vadd.f32 0.0, %v2508
      %v2510 = vpop.f32.mrb[0].mxu0
      %v2511 = vpop.f32.mrb[0].mxu0
      %v2512 = vadd.f32 0.0, %v2511
      %v2513 = vpop.f32.mrb[0].mxu0
      %2514 = vmatprep.mubr.bf16.mxu0 0
      %2515 = vmatmul.mubr.bf16.gmra.mrb[0].mxu0 %v2361
      %v2516 = vpop.f32.mrb[0].mxu0
      %v2517 = vadd.f32 0.0, %v2516
      %v2518 = vpop.f32.mrb[0].mxu0
      %v2519 = vpop.f32.mrb[0].mxu0
      %v2520 = vadd.f32 0.0, %v2519
      %v2521 = vpop.f32.mrb[0].mxu0
      %2522 = vmatprep.mubr.bf16.mxu0 0
      %2523 = vmatmul.mubr.bf16.gmra.mrb[0].mxu0 %v2364
      %v2524 = vpop.f32.mrb[0].mxu0
      %v2525 = vadd.f32 0.0, %v2524
      %v2526 = vpop.f32.mrb[0].mxu0
      %v2527 = vpop.f32.mrb[0].mxu0
      %v2528 = vadd.f32 0.0, %v2527
      %v2529 = vpop.f32.mrb[0].mxu0
      %2530 = vmatprep.mubr.bf16.mxu0 0
      %2531 = vmatmul.mubr.bf16.gmra.mrb[0].mxu0 %v2367
      %v2532 = vpop.f32.mrb[0].mxu0
      %v2533 = vadd.f32 0.0, %v2532
      %v2534 = vpop.f32.mrb[0].mxu0
      %v2535 = vpop.f32.mrb[0].mxu0
      %v2536 = vadd.f32 0.0, %v2535
      %v2537 = vpop.f32.mrb[0].mxu0
      %2538 = vmatprep.mubr.bf16.mxu0 0
      %2539 = vmatmul.mubr.bf16.gmra.mrb[0].mxu0 %v2370
      %v2540 = vpop.f32.mrb[0].mxu0
      %v2541 = vadd.f32 0.0, %v2540
      %v2542 = vpop.f32.mrb[0].mxu0
      %v2543 = vpop.f32.mrb[0].mxu0
      %v2544 = vadd.f32 0.0, %v2543
      %v2545 = vpop.f32.mrb[0].mxu0
      %2546 = vmatprep.mubr.bf16.mxu0 0
      %2547 = vmatmul.mubr.bf16.gmra.mrb[0].mxu0 %v2373
      %v2548 = vpop.f32.mrb[0].mxu0
      %v2549 = vadd.f32 0.0, %v2548
      %v2550 = vpop.f32.mrb[0].mxu0
      %v2551 = vpop.f32.mrb[0].mxu0
      %v2552 = vadd.f32 0.0, %v2551
      %v2553 = vpop.f32.mrb[0].mxu0
      %2554 = vdwg.mxu0
      %v2555 = vadd.f32 %v2241, %v2413
      %v2556 = vadd.f32 %v2242, %v2416
      %v2557 = vadd.f32 %v2243, %v2421
      %v2558 = vadd.f32 %v2244, %v2424
      %v2559 = vadd.f32 %v2245, %v2429
      %v2560 = vadd.f32 %v2246, %v2432
      %v2561 = vadd.f32 %v2247, %v2437
      %v2562 = vadd.f32 %v2248, %v2440
      %v2563 = vadd.f32 %v2249, %v2445
      %v2564 = vadd.f32 %v2250, %v2448
      %v2565 = vadd.f32 %v2251, %v2453
      %v2566 = vadd.f32 %v2252, %v2456
      %v2567 = vadd.f32 %v2253, %v2461
      %v2568 = vadd.f32 %v2254, %v2464
      %v2569 = vadd.f32 %v2255, %v2469
      %v2570 = vadd.f32 %v2256, %v2472
      %v2571 = vadd.f32 %v2257, %v2477
      %v2572 = vadd.f32 %v2258, %v2480
      %v2573 = vadd.f32 %v2259, %v2485
      %v2574 = vadd.f32 %v2260, %v2488
      %v2575 = vadd.f32 %v2261, %v2493
      %v2576 = vadd.f32 %v2262, %v2496
      %v2577 = vadd.f32 %v2263, %v2501
      %v2578 = vadd.f32 %v2264, %v2504
      %v2579 = vadd.f32 %v2265, %v2509
      %v2580 = vadd.f32 %v2266, %v2512
      %v2581 = vadd.f32 %v2267, %v2517
      %v2582 = vadd.f32 %v2268, %v2520
      %v2583 = vadd.f32 %v2269, %v2525
      %v2584 = vadd.f32 %v2270, %v2528
      %v2585 = vadd.f32 %v2271, %v2533
      %v2586 = vadd.f32 %v2272, %v2536
      %v2587 = vadd.f32 %v2273, %v2541
      %v2588 = vadd.f32 %v2274, %v2544
      %v2589 = vadd.f32 %v2275, %v2549
      %v2590 = vadd.f32 %v2276, %v2552
      %v2591 = vld [vmem:[%s300 + $0x10] sm:$0xc]
      %v2592 = vld [vmem:[%s300 + $0x14] sm:$0xf]
      %v2593 = vld [vmem:[%s300 + $0x18] sm:$0xf]
      %v2594 = vld [vmem:[%s300 + $0x1c] sm:$0xf]
      %v2595 = vld [vmem:[%s300 + $0x20] sm:$0xf]
      %v2596 = vld [vmem:[%s300 + $0x24] sm:$0xf]
      %v2597 = vld [vmem:[%s300 + $0x28] sm:$0xf]
      %v2598 = vld [vmem:[%s300 + $0x2c] sm:$0xf]
      %v2599 = vld [vmem:[%s300 + $0x30] sm:$0xf]
      %v2600 = vld [vmem:[%s300 + $0x34] sm:$0xf]
      %v2601 = vld [vmem:[%s300 + $0x38] sm:$0xf]
      %v2602 = vld [vmem:[%s300 + $0x3c] sm:$0xf]
      %v2603 = vld [vmem:[%s300 + $0x40] sm:$0xf]
      %v2604 = vld [vmem:[%s300 + $0x44] sm:$0xf]
      %v2605 = vld [vmem:[%s300 + $0x48] sm:$0xf]
      %v2606 = vld [vmem:[%s300 + $0x4c] sm:$0xf]
      %v2607 = vld [vmem:[%s300 + $0x50] sm:$0xf]
      %v2608 = vld [vmem:[%s300 + $0x54] sm:$0xf]
      %v2609 = vld [vmem:[%s300 + $0x58] sm:$0xf]
      %v2610 = vld [vmem:[%s300 + $0x5c] sm:$0xf]
      %v2611 = vld [vmem:[%s300 + $0x60] sm:$0xf]
      %v2612 = vld [vmem:[%s300 + $0x64] sm:$0xf]
      %v2613 = vld [vmem:[%s300 + $0x68] sm:$0xf]
      %v2614 = vld [vmem:[%s300 + $0x6c] sm:$0xf]
      %v2615 = vld [vmem:[%s300 + $0x70] sm:$0xf]
      %v2616 = vld [vmem:[%s300 + $0x74] sm:$0xf]
      %v2617 = vld [vmem:[%s300 + $0x78] sm:$0xf]
      %v2618 = vld [vmem:[%s300 + $0x7c] sm:$0xf]
      %v2619 = vld [vmem:[%s300 + $0x80] sm:$0xf]
      %v2620 = vld [vmem:[%s300 + $0x84] sm:$0xf]
      %v2621 = vld [vmem:[%s300 + $0x88] sm:$0xf]
      %v2622 = vld [vmem:[%s300 + $0x8c] sm:$0xf]
      %v2623 = vld [vmem:[%s300 + $0x90] sm:$0xf]
      %v2624 = vld [vmem:[%s300 + $0x94] sm:$0xf]
      %v2625 = vld [vmem:[%s300 + $0x98] sm:$0xf]
      %v2626 = vld [vmem:[%s300 + $0x9c] sm:$0xf]
      %v2627 = vld [vmem:[%s300 + $0xa0] sm:$0x3]
      %s2628 = scalar_lea.vmem %s2, 12
      %v2629 = vld [vmem:[%s2628] sm:$0x3]
      %v2667 = vunpack.c.l.b16 %v2591
      %v2668 = vunpack.c.l.b16 %v2592
      %v2669 = vunpack.c.l.b16 %v2593
      %v2670 = vunpack.c.l.b16 %v2594
      %v2671 = vunpack.c.l.b16 %v2595
      %v2672 = vunpack.c.l.b16 %v2596
      %v2673 = vunpack.c.l.b16 %v2597
      %v2674 = vunpack.c.l.b16 %v2598
      %v2675 = vunpack.c.l.b16 %v2599
      %v2676 = vunpack.c.l.b16 %v2600
      %v2677 = vunpack.c.l.b16 %v2601
      %v2678 = vunpack.c.l.b16 %v2602
      %v2679 = vunpack.c.l.b16 %v2603
      %v2680 = vunpack.c.l.b16 %v2604
      %v2681 = vunpack.c.l.b16 %v2605
      %v2682 = vunpack.c.l.b16 %v2606
      %v2683 = vunpack.c.l.b16 %v2607
      %v2684 = vunpack.c.l.b16 %v2608
      %v2685 = vunpack.c.l.b16 %v2609
      %v2686 = vunpack.c.l.b16 %v2610
      %v2687 = vunpack.c.l.b16 %v2611
      %v2688 = vunpack.c.l.b16 %v2612
      %v2689 = vunpack.c.l.b16 %v2613
      %v2690 = vunpack.c.l.b16 %v2614
      %v2691 = vunpack.c.l.b16 %v2615
      %v2692 = vunpack.c.l.b16 %v2616
      %v2693 = vunpack.c.l.b16 %v2617
      %v2694 = vunpack.c.l.b16 %v2618
      %v2695 = vunpack.c.l.b16 %v2619
      %v2696 = vunpack.c.l.b16 %v2620
      %v2697 = vunpack.c.l.b16 %v2621
      %v2698 = vunpack.c.l.b16 %v2622
      %v2699 = vunpack.c.l.b16 %v2623
      %v2700 = vunpack.c.l.b16 %v2624
      %v2701 = vunpack.c.l.b16 %v2625
      %v2702 = vunpack.c.l.b16 %v2626
      %v2703 = vunpack.c.l.b16 %v2627
      %v2704 = vpack.c.b16 %v2668, %v2667
      %v2705 = vpack.c.b16 %v2670, %v2669
      %v2706 = vpack.c.b16 %v2672, %v2671
      %v2707 = vpack.c.b16 %v2674, %v2673
      %v2708 = vpack.c.b16 %v2676, %v2675
      %v2709 = vpack.c.b16 %v2678, %v2677
      %v2710 = vpack.c.b16 %v2680, %v2679
      %v2711 = vpack.c.b16 %v2682, %v2681
      %v2712 = vpack.c.b16 %v2684, %v2683
      %v2713 = vpack.c.b16 %v2686, %v2685
      %v2714 = vpack.c.b16 %v2688, %v2687
      %v2715 = vpack.c.b16 %v2690, %v2689
      %v2716 = vpack.c.b16 %v2692, %v2691
      %v2717 = vpack.c.b16 %v2694, %v2693
      %v2718 = vpack.c.b16 %v2696, %v2695
      %v2719 = vpack.c.b16 %v2698, %v2697
      %v2720 = vpack.c.b16 %v2700, %v2699
      %v2721 = vpack.c.b16 %v2702, %v2701
      %v2722 = vpack.c.b16 %v2703, %v2703
      %v2723 = vrot.slane %v2704, 2
      %v2724 = vrot.slane %v2705, 2
      %v2725 = vsel %vm2283, %v2723, %v2724
      %v2726 = vrot.slane %v2706, 2
      %v2727 = vsel %vm2283, %v2724, %v2726
      %v2728 = vrot.slane %v2707, 2
      %v2729 = vsel %vm2283, %v2726, %v2728
      %v2730 = vrot.slane %v2708, 2
      %v2731 = vsel %vm2283, %v2728, %v2730
      %v2732 = vrot.slane %v2709, 2
      %v2733 = vsel %vm2283, %v2730, %v2732
      %v2734 = vrot.slane %v2710, 2
      %v2735 = vsel %vm2283, %v2732, %v2734
      %v2736 = vrot.slane %v2711, 2
      %v2737 = vsel %vm2283, %v2734, %v2736
      %v2738 = vrot.slane %v2712, 2
      %v2739 = vsel %vm2283, %v2736, %v2738
      %v2740 = vrot.slane %v2713, 2
      %v2741 = vsel %vm2283, %v2738, %v2740
      %v2742 = vrot.slane %v2714, 2
      %v2743 = vsel %vm2283, %v2740, %v2742
      %v2744 = vrot.slane %v2715, 2
      %v2745 = vsel %vm2283, %v2742, %v2744
      %v2746 = vrot.slane %v2716, 2
      %v2747 = vsel %vm2283, %v2744, %v2746
      %v2748 = vrot.slane %v2717, 2
      %v2749 = vsel %vm2283, %v2746, %v2748
      %v2750 = vrot.slane %v2718, 2
      %v2751 = vsel %vm2283, %v2748, %v2750
      %v2752 = vrot.slane %v2719, 2
      %v2753 = vsel %vm2283, %v2750, %v2752
      %v2754 = vrot.slane %v2720, 2
      %v2755 = vsel %vm2283, %v2752, %v2754
      %v2756 = vrot.slane %v2721, 2
      %v2757 = vsel %vm2283, %v2754, %v2756
      %v2758 = vrot.slane %v2722, 2
      %v2759 = vsel %vm2283, %v2756, %v2758
      %v2761 = vsel %vm625, %v2725, 0
      %v2764 = vsel %vm625, %v2727, 0
      %v2767 = vsel %vm625, %v2729, 0
      %v2770 = vsel %vm625, %v2731, 0
      %v2773 = vsel %vm625, %v2733, 0
      %v2776 = vsel %vm625, %v2735, 0
      %v2779 = vsel %vm625, %v2737, 0
      %v2782 = vsel %vm625, %v2739, 0
      %v2785 = vsel %vm625, %v2741, 0
      %v2788 = vsel %vm625, %v2743, 0
      %v2791 = vsel %vm625, %v2745, 0
      %v2794 = vsel %vm625, %v2747, 0
      %v2797 = vsel %vm625, %v2749, 0
      %v2800 = vsel %vm625, %v2751, 0
      %v2803 = vsel %vm625, %v2753, 0
      %v2806 = vsel %vm625, %v2755, 0
      %v2809 = vsel %vm625, %v2757, 0
      %v2812 = vsel %vm625, %v2759, 0
      %v2815 = vsel %vm680, %v2629, 0
      %2817 = vmatprep.subr.bf16.mxu0 0
      %2818 = vmatpush1.bf16.msra.mxu0 %v2815
      %2819 = vmatprep.subr.bf16.mxu0 0
      %2820 = vmatpush1.bf16.msra.mxu0 0
      %2821 = vmatprep.subr.bf16.mxu0 0
      %2822 = vmatpush1.bf16.msra.mxu0 0
      %2823 = vmatprep.subr.bf16.mxu0 0
      %2824 = vmatpush1.bf16.msra.mxu0 0
      %2825 = vmatprep.subr.bf16.mxu0 0
      %2826 = vmatpush1.bf16.msra.mxu0 0
      %2827 = vmatprep.subr.bf16.mxu0 0
      %2828 = vmatpush1.bf16.msra.mxu0 0
      %2829 = vmatprep.subr.bf16.mxu0 0
      %2830 = vmatpush1.bf16.msra.mxu0 0
      %2831 = vmatprep.subr.bf16.mxu0 0
      %2832 = vmatpush1.bf16.msra.mxu0 0
      %2833 = vmatprep.subr.bf16.mxu0 0
      %2834 = vmatpush1.bf16.msra.mxu0 0
      %2835 = vmatprep.subr.bf16.mxu0 0
      %2836 = vmatpush1.bf16.msra.mxu0 0
      %2837 = vmatprep.subr.bf16.mxu0 0
      %2838 = vmatpush1.bf16.msra.mxu0 0
      %2839 = vmatprep.subr.bf16.mxu0 0
      %2840 = vmatpush1.bf16.msra.mxu0 0
      %2841 = vmatprep.subr.bf16.mxu0 0
      %2842 = vmatpush1.bf16.msra.mxu0 0
      %2843 = vmatprep.subr.bf16.mxu0 0
      %2844 = vmatpush1.bf16.msra.mxu0 0
      %2845 = vmatprep.subr.bf16.mxu0 0
      %2846 = vmatpush1.bf16.msra.mxu0 0
      %2847 = vmatprep.subr.bf16.mxu0 0
      %2848 = vmatpush1.bf16.msra.mxu0 0
      %2849 = vmatprep.mubr.bf16.mxu0 0
      %2850 = vmatmul.mubr.bf16.gmra.mrb[0].mxu0 %v2761
      %v2851 = vpop.f32.mrb[0].mxu0
      %v2852 = vadd.f32 0.0, %v2851
      %v2853 = vpop.f32.mrb[0].mxu0
      %v2854 = vpop.f32.mrb[0].mxu0
      %v2855 = vadd.f32 0.0, %v2854
      %v2856 = vpop.f32.mrb[0].mxu0
      %2857 = vmatprep.mubr.bf16.mxu0 0
      %2858 = vmatmul.mubr.bf16.gmra.mrb[0].mxu0 %v2764
      %v2859 = vpop.f32.mrb[0].mxu0
      %v2860 = vadd.f32 0.0, %v2859
      %v2861 = vpop.f32.mrb[0].mxu0
      %v2862 = vpop.f32.mrb[0].mxu0
      %v2863 = vadd.f32 0.0, %v2862
      %v2864 = vpop.f32.mrb[0].mxu0
      %2865 = vmatprep.mubr.bf16.mxu0 0
      %2866 = vmatmul.mubr.bf16.gmra.mrb[0].mxu0 %v2767
      %v2867 = vpop.f32.mrb[0].mxu0
      %v2868 = vadd.f32 0.0, %v2867
      %v2869 = vpop.f32.mrb[0].mxu0
      %v2870 = vpop.f32.mrb[0].mxu0
      %v2871 = vadd.f32 0.0, %v2870
      %v2872 = vpop.f32.mrb[0].mxu0
      %2873 = vmatprep.mubr.bf16.mxu0 0
      %2874 = vmatmul.mubr.bf16.gmra.mrb[0].mxu0 %v2770
      %v2875 = vpop.f32.mrb[0].mxu0
      %v2876 = vadd.f32 0.0, %v2875
      %v2877 = vpop.f32.mrb[0].mxu0
      %v2878 = vpop.f32.mrb[0].mxu0
      %v2879 = vadd.f32 0.0, %v2878
      %v2880 = vpop.f32.mrb[0].mxu0
      %2881 = vmatprep.mubr.bf16.mxu0 0
      %2882 = vmatmul.mubr.bf16.gmra.mrb[0].mxu0 %v2773
      %v2883 = vpop.f32.mrb[0].mxu0
      %v2884 = vadd.f32 0.0, %v2883
      %v2885 = vpop.f32.mrb[0].mxu0
      %v2886 = vpop.f32.mrb[0].mxu0
      %v2887 = vadd.f32 0.0, %v2886
      %v2888 = vpop.f32.mrb[0].mxu0
      %2889 = vmatprep.mubr.bf16.mxu0 0
      %2890 = vmatmul.mubr.bf16.gmra.mrb[0].mxu0 %v2776
      %v2891 = vpop.f32.mrb[0].mxu0
      %v2892 = vadd.f32 0.0, %v2891
      %v2893 = vpop.f32.mrb[0].mxu0
      %v2894 = vpop.f32.mrb[0].mxu0
      %v2895 = vadd.f32 0.0, %v2894
      %v2896 = vpop.f32.mrb[0].mxu0
      %2897 = vmatprep.mubr.bf16.mxu0 0
      %2898 = vmatmul.mubr.bf16.gmra.mrb[0].mxu0 %v2779
      %v2899 = vpop.f32.mrb[0].mxu0
      %v2900 = vadd.f32 0.0, %v2899
      %v2901 = vpop.f32.mrb[0].mxu0
      %v2902 = vpop.f32.mrb[0].mxu0
      %v2903 = vadd.f32 0.0, %v2902
      %v2904 = vpop.f32.mrb[0].mxu0
      %2905 = vmatprep.mubr.bf16.mxu0 0
      %2906 = vmatmul.mubr.bf16.gmra.mrb[0].mxu0 %v2782
      %v2907 = vpop.f32.mrb[0].mxu0
      %v2908 = vadd.f32 0.0, %v2907
      %v2909 = vpop.f32.mrb[0].mxu0
      %v2910 = vpop.f32.mrb[0].mxu0
      %v2911 = vadd.f32 0.0, %v2910
      %v2912 = vpop.f32.mrb[0].mxu0
      %2913 = vmatprep.mubr.bf16.mxu0 0
      %2914 = vmatmul.mubr.bf16.gmra.mrb[0].mxu0 %v2785
      %v2915 = vpop.f32.mrb[0].mxu0
      %v2916 = vadd.f32 0.0, %v2915
      %v2917 = vpop.f32.mrb[0].mxu0
      %v2918 = vpop.f32.mrb[0].mxu0
      %v2919 = vadd.f32 0.0, %v2918
      %v2920 = vpop.f32.mrb[0].mxu0
      %2921 = vmatprep.mubr.bf16.mxu0 0
      %2922 = vmatmul.mubr.bf16.gmra.mrb[0].mxu0 %v2788
      %v2923 = vpop.f32.mrb[0].mxu0
      %v2924 = vadd.f32 0.0, %v2923
      %v2925 = vpop.f32.mrb[0].mxu0
      %v2926 = vpop.f32.mrb[0].mxu0
      %v2927 = vadd.f32 0.0, %v2926
      %v2928 = vpop.f32.mrb[0].mxu0
      %2929 = vmatprep.mubr.bf16.mxu0 0
      %2930 = vmatmul.mubr.bf16.gmra.mrb[0].mxu0 %v2791
      %v2931 = vpop.f32.mrb[0].mxu0
      %v2932 = vadd.f32 0.0, %v2931
      %v2933 = vpop.f32.mrb[0].mxu0
      %v2934 = vpop.f32.mrb[0].mxu0
      %v2935 = vadd.f32 0.0, %v2934
      %v2936 = vpop.f32.mrb[0].mxu0
      %2937 = vmatprep.mubr.bf16.mxu0 0
      %2938 = vmatmul.mubr.bf16.gmra.mrb[0].mxu0 %v2794
      %v2939 = vpop.f32.mrb[0].mxu0
      %v2940 = vadd.f32 0.0, %v2939
      %v2941 = vpop.f32.mrb[0].mxu0
      %v2942 = vpop.f32.mrb[0].mxu0
      %v2943 = vadd.f32 0.0, %v2942
      %v2944 = vpop.f32.mrb[0].mxu0
      %2945 = vmatprep.mubr.bf16.mxu0 0
      %2946 = vmatmul.mubr.bf16.gmra.mrb[0].mxu0 %v2797
      %v2947 = vpop.f32.mrb[0].mxu0
      %v2948 = vadd.f32 0.0, %v2947
      %v2949 = vpop.f32.mrb[0].mxu0
      %v2950 = vpop.f32.mrb[0].mxu0
      %v2951 = vadd.f32 0.0, %v2950
      %v2952 = vpop.f32.mrb[0].mxu0
      %2953 = vmatprep.mubr.bf16.mxu0 0
      %2954 = vmatmul.mubr.bf16.gmra.mrb[0].mxu0 %v2800
      %v2955 = vpop.f32.mrb[0].mxu0
      %v2956 = vadd.f32 0.0, %v2955
      %v2957 = vpop.f32.mrb[0].mxu0
      %v2958 = vpop.f32.mrb[0].mxu0
      %v2959 = vadd.f32 0.0, %v2958
      %v2960 = vpop.f32.mrb[0].mxu0
      %2961 = vmatprep.mubr.bf16.mxu0 0
      %2962 = vmatmul.mubr.bf16.gmra.mrb[0].mxu0 %v2803
      %v2963 = vpop.f32.mrb[0].mxu0
      %v2964 = vadd.f32 0.0, %v2963
      %v2965 = vpop.f32.mrb[0].mxu0
      %v2966 = vpop.f32.mrb[0].mxu0
      %v2967 = vadd.f32 0.0, %v2966
      %v2968 = vpop.f32.mrb[0].mxu0
      %2969 = vmatprep.mubr.bf16.mxu0 0
      %2970 = vmatmul.mubr.bf16.gmra.mrb[0].mxu0 %v2806
      %v2971 = vpop.f32.mrb[0].mxu0
      %v2972 = vadd.f32 0.0, %v2971
      %v2973 = vpop.f32.mrb[0].mxu0
      %v2974 = vpop.f32.mrb[0].mxu0
      %v2975 = vadd.f32 0.0, %v2974
      %v2976 = vpop.f32.mrb[0].mxu0
      %2977 = vmatprep.mubr.bf16.mxu0 0
      %2978 = vmatmul.mubr.bf16.gmra.mrb[0].mxu0 %v2809
      %v2979 = vpop.f32.mrb[0].mxu0
      %v2980 = vadd.f32 0.0, %v2979
      %v2981 = vpop.f32.mrb[0].mxu0
      %v2982 = vpop.f32.mrb[0].mxu0
      %v2983 = vadd.f32 0.0, %v2982
      %v2984 = vpop.f32.mrb[0].mxu0
      %2985 = vmatprep.mubr.bf16.mxu0 0
      %2986 = vmatmul.mubr.bf16.gmra.mrb[0].mxu0 %v2812
      %v2987 = vpop.f32.mrb[0].mxu0
      %v2988 = vadd.f32 0.0, %v2987
      %v2989 = vpop.f32.mrb[0].mxu0
      %v2990 = vpop.f32.mrb[0].mxu0
      %v2991 = vadd.f32 0.0, %v2990
      %v2992 = vpop.f32.mrb[0].mxu0
      %2993 = vdwg.mxu0
      %v2994 = vadd.f32 %v2555, %v2852
      %v2995 = vadd.f32 %v2556, %v2855
      %v2996 = vadd.f32 %v2557, %v2860
      %v2997 = vadd.f32 %v2558, %v2863
      %v2998 = vadd.f32 %v2559, %v2868
      %v2999 = vadd.f32 %v2560, %v2871
      %v3000 = vadd.f32 %v2561, %v2876
      %v3001 = vadd.f32 %v2562, %v2879
      %v3002 = vadd.f32 %v2563, %v2884
      %v3003 = vadd.f32 %v2564, %v2887
      %v3004 = vadd.f32 %v2565, %v2892
      %v3005 = vadd.f32 %v2566, %v2895
      %v3006 = vadd.f32 %v2567, %v2900
      %v3007 = vadd.f32 %v2568, %v2903
      %v3008 = vadd.f32 %v2569, %v2908
      %v3009 = vadd.f32 %v2570, %v2911
      %v3010 = vadd.f32 %v2571, %v2916
      %v3011 = vadd.f32 %v2572, %v2919
      %v3012 = vadd.f32 %v2573, %v2924
      %v3013 = vadd.f32 %v2574, %v2927
      %v3014 = vadd.f32 %v2575, %v2932
      %v3015 = vadd.f32 %v2576, %v2935
      %v3016 = vadd.f32 %v2577, %v2940
      %v3017 = vadd.f32 %v2578, %v2943
      %v3018 = vadd.f32 %v2579, %v2948
      %v3019 = vadd.f32 %v2580, %v2951
      %v3020 = vadd.f32 %v2581, %v2956
      %v3021 = vadd.f32 %v2582, %v2959
      %v3022 = vadd.f32 %v2583, %v2964
      %v3023 = vadd.f32 %v2584, %v2967
      %v3024 = vadd.f32 %v2585, %v2972
      %v3025 = vadd.f32 %v2586, %v2975
      %v3026 = vadd.f32 %v2587, %v2980
      %v3027 = vadd.f32 %v2588, %v2983
      %v3028 = vadd.f32 %v2589, %v2988
      %v3029 = vadd.f32 %v2590, %v2991
      %v3030 = vld [vmem:[%s300 + $0xa0] sm:$0x7]
      %s3031 = scalar_lea.vmem %s2, 14
      %v3032 = vld [vmem:[%s3031] sm:$0x3]
      %v3034 = vunpack.c.l.b16 %v3030
      %v3035 = vpack.c.b16 %v3034, %v3034
      %vm3036 = vsmask.f32 5376
      %v3038 = vshrl.u32 %v2704, 16
      %v3040 = vrot.slane %v3038, 2
      %v3041 = vshll.u32 %v2704, 16
      %v3043 = vrot.slane %v3041, 3
      %v3044 = vor.u32 %v3040, %v3043
      %v3046 = vshrl.u32 %v2705, 16
      %v3048 = vrot.slane %v3046, 2
      %v3049 = vshll.u32 %v2705, 16
      %v3051 = vrot.slane %v3049, 3
      %v3052 = vor.u32 %v3048, %v3051
      %v3053 = vsel %vm3036, %v3044, %v3052
      %v3055 = vshrl.u32 %v2706, 16
      %v3057 = vrot.slane %v3055, 2
      %v3058 = vshll.u32 %v2706, 16
      %v3060 = vrot.slane %v3058, 3
      %v3061 = vor.u32 %v3057, %v3060
      %v3062 = vsel %vm3036, %v3052, %v3061
      %v3064 = vshrl.u32 %v2707, 16
      %v3066 = vrot.slane %v3064, 2
      %v3067 = vshll.u32 %v2707, 16
      %v3069 = vrot.slane %v3067, 3
      %v3070 = vor.u32 %v3066, %v3069
      %v3071 = vsel %vm3036, %v3061, %v3070
      %v3073 = vshrl.u32 %v2708, 16
      %v3075 = vrot.slane %v3073, 2
      %v3076 = vshll.u32 %v2708, 16
      %v3078 = vrot.slane %v3076, 3
      %v3079 = vor.u32 %v3075, %v3078
      %v3080 = vsel %vm3036, %v3070, %v3079
      %v3082 = vshrl.u32 %v2709, 16
      %v3084 = vrot.slane %v3082, 2
      %v3085 = vshll.u32 %v2709, 16
      %v3087 = vrot.slane %v3085, 3
      %v3088 = vor.u32 %v3084, %v3087
      %v3089 = vsel %vm3036, %v3079, %v3088
      %v3091 = vshrl.u32 %v2710, 16
      %v3093 = vrot.slane %v3091, 2
      %v3094 = vshll.u32 %v2710, 16
      %v3096 = vrot.slane %v3094, 3
      %v3097 = vor.u32 %v3093, %v3096
      %v3098 = vsel %vm3036, %v3088, %v3097
      %v3100 = vshrl.u32 %v2711, 16
      %v3102 = vrot.slane %v3100, 2
      %v3103 = vshll.u32 %v2711, 16
      %v3105 = vrot.slane %v3103, 3
      %v3106 = vor.u32 %v3102, %v3105
      %v3107 = vsel %vm3036, %v3097, %v3106
      %v3109 = vshrl.u32 %v2712, 16
      %v3111 = vrot.slane %v3109, 2
      %v3112 = vshll.u32 %v2712, 16
      %v3114 = vrot.slane %v3112, 3
      %v3115 = vor.u32 %v3111, %v3114
      %v3116 = vsel %vm3036, %v3106, %v3115
      %v3118 = vshrl.u32 %v2713, 16
      %v3120 = vrot.slane %v3118, 2
      %v3121 = vshll.u32 %v2713, 16
      %v3123 = vrot.slane %v3121, 3
      %v3124 = vor.u32 %v3120, %v3123
      %v3125 = vsel %vm3036, %v3115, %v3124
      %v3127 = vshrl.u32 %v2714, 16
      %v3129 = vrot.slane %v3127, 2
      %v3130 = vshll.u32 %v2714, 16
      %v3132 = vrot.slane %v3130, 3
      %v3133 = vor.u32 %v3129, %v3132
      %v3134 = vsel %vm3036, %v3124, %v3133
      %v3136 = vshrl.u32 %v2715, 16
      %v3138 = vrot.slane %v3136, 2
      %v3139 = vshll.u32 %v2715, 16
      %v3141 = vrot.slane %v3139, 3
      %v3142 = vor.u32 %v3138, %v3141
      %v3143 = vsel %vm3036, %v3133, %v3142
      %v3145 = vshrl.u32 %v2716, 16
      %v3147 = vrot.slane %v3145, 2
      %v3148 = vshll.u32 %v2716, 16
      %v3150 = vrot.slane %v3148, 3
      %v3151 = vor.u32 %v3147, %v3150
      %v3152 = vsel %vm3036, %v3142, %v3151
      %v3154 = vshrl.u32 %v2717, 16
      %v3156 = vrot.slane %v3154, 2
      %v3157 = vshll.u32 %v2717, 16
      %v3159 = vrot.slane %v3157, 3
      %v3160 = vor.u32 %v3156, %v3159
      %v3161 = vsel %vm3036, %v3151, %v3160
      %v3163 = vshrl.u32 %v2718, 16
      %v3165 = vrot.slane %v3163, 2
      %v3166 = vshll.u32 %v2718, 16
      %v3168 = vrot.slane %v3166, 3
      %v3169 = vor.u32 %v3165, %v3168
      %v3170 = vsel %vm3036, %v3160, %v3169
      %v3172 = vshrl.u32 %v2719, 16
      %v3174 = vrot.slane %v3172, 2
      %v3175 = vshll.u32 %v2719, 16
      %v3177 = vrot.slane %v3175, 3
      %v3178 = vor.u32 %v3174, %v3177
      %v3179 = vsel %vm3036, %v3169, %v3178
      %v3181 = vshrl.u32 %v2720, 16
      %v3183 = vrot.slane %v3181, 2
      %v3184 = vshll.u32 %v2720, 16
      %v3186 = vrot.slane %v3184, 3
      %v3187 = vor.u32 %v3183, %v3186
      %v3188 = vsel %vm3036, %v3178, %v3187
      %v3190 = vshrl.u32 %v2721, 16
      %v3192 = vrot.slane %v3190, 2
      %v3193 = vshll.u32 %v2721, 16
      %v3195 = vrot.slane %v3193, 3
      %v3196 = vor.u32 %v3192, %v3195
      %v3197 = vsel %vm3036, %v3187, %v3196
      %v3199 = vshrl.u32 %v3035, 16
      %v3201 = vrot.slane %v3199, 2
      %v3202 = vshll.u32 %v3035, 16
      %v3204 = vrot.slane %v3202, 3
      %v3205 = vor.u32 %v3201, %v3204
      %v3206 = vsel %vm3036, %v3196, %v3205
      %v3208 = vsel %vm625, %v3053, 0
      %v3211 = vsel %vm625, %v3062, 0
      %v3214 = vsel %vm625, %v3071, 0
      %v3217 = vsel %vm625, %v3080, 0
      %v3220 = vsel %vm625, %v3089, 0
      %v3223 = vsel %vm625, %v3098, 0
      %v3226 = vsel %vm625, %v3107, 0
      %v3229 = vsel %vm625, %v3116, 0
      %v3232 = vsel %vm625, %v3125, 0
      %v3235 = vsel %vm625, %v3134, 0
      %v3238 = vsel %vm625, %v3143, 0
      %v3241 = vsel %vm625, %v3152, 0
      %v3244 = vsel %vm625, %v3161, 0
      %v3247 = vsel %vm625, %v3170, 0
      %v3250 = vsel %vm625, %v3179, 0
      %v3253 = vsel %vm625, %v3188, 0
      %v3256 = vsel %vm625, %v3197, 0
      %v3259 = vsel %vm625, %v3206, 0
      %v3262 = vsel %vm680, %v3032, 0
      %3264 = vmatprep.subr.bf16.mxu0 0
      %3265 = vmatpush1.bf16.msra.mxu0 %v3262
      %3266 = vmatprep.subr.bf16.mxu0 0
      %3267 = vmatpush1.bf16.msra.mxu0 0
      %3268 = vmatprep.subr.bf16.mxu0 0
      %3269 = vmatpush1.bf16.msra.mxu0 0
      %3270 = vmatprep.subr.bf16.mxu0 0
      %3271 = vmatpush1.bf16.msra.mxu0 0
      %3272 = vmatprep.subr.bf16.mxu0 0
      %3273 = vmatpush1.bf16.msra.mxu0 0
      %3274 = vmatprep.subr.bf16.mxu0 0
      %3275 = vmatpush1.bf16.msra.mxu0 0
      %3276 = vmatprep.subr.bf16.mxu0 0
      %3277 = vmatpush1.bf16.msra.mxu0 0
      %3278 = vmatprep.subr.bf16.mxu0 0
      %3279 = vmatpush1.bf16.msra.mxu0 0
      %3280 = vmatprep.subr.bf16.mxu0 0
      %3281 = vmatpush1.bf16.msra.mxu0 0
      %3282 = vmatprep.subr.bf16.mxu0 0
      %3283 = vmatpush1.bf16.msra.mxu0 0
      %3284 = vmatprep.subr.bf16.mxu0 0
      %3285 = vmatpush1.bf16.msra.mxu0 0
      %3286 = vmatprep.subr.bf16.mxu0 0
      %3287 = vmatpush1.bf16.msra.mxu0 0
      %3288 = vmatprep.subr.bf16.mxu0 0
      %3289 = vmatpush1.bf16.msra.mxu0 0
      %3290 = vmatprep.subr.bf16.mxu0 0
      %3291 = vmatpush1.bf16.msra.mxu0 0
      %3292 = vmatprep.subr.bf16.mxu0 0
      %3293 = vmatpush1.bf16.msra.mxu0 0
      %3294 = vmatprep.subr.bf16.mxu0 0
      %3295 = vmatpush1.bf16.msra.mxu0 0
      %3296 = vmatprep.mubr.bf16.mxu0 0
      %3297 = vmatmul.mubr.bf16.gmra.mrb[0].mxu0 %v3208
      %v3298 = vpop.f32.mrb[0].mxu0
      %v3299 = vadd.f32 0.0, %v3298
      %v3300 = vpop.f32.mrb[0].mxu0
      %v3301 = vpop.f32.mrb[0].mxu0
      %v3302 = vadd.f32 0.0, %v3301
      %v3303 = vpop.f32.mrb[0].mxu0
      %3304 = vmatprep.mubr.bf16.mxu0 0
      %3305 = vmatmul.mubr.bf16.gmra.mrb[0].mxu0 %v3211
      %v3306 = vpop.f32.mrb[0].mxu0
      %v3307 = vadd.f32 0.0, %v3306
      %v3308 = vpop.f32.mrb[0].mxu0
      %v3309 = vpop.f32.mrb[0].mxu0
      %v3310 = vadd.f32 0.0, %v3309
      %v3311 = vpop.f32.mrb[0].mxu0
      %3312 = vmatprep.mubr.bf16.mxu0 0
      %3313 = vmatmul.mubr.bf16.gmra.mrb[0].mxu0 %v3214
      %v3314 = vpop.f32.mrb[0].mxu0
      %v3315 = vadd.f32 0.0, %v3314
      %v3316 = vpop.f32.mrb[0].mxu0
      %v3317 = vpop.f32.mrb[0].mxu0
      %v3318 = vadd.f32 0.0, %v3317
      %v3319 = vpop.f32.mrb[0].mxu0
      %3320 = vmatprep.mubr.bf16.mxu0 0
      %3321 = vmatmul.mubr.bf16.gmra.mrb[0].mxu0 %v3217
      %v3322 = vpop.f32.mrb[0].mxu0
      %v3323 = vadd.f32 0.0, %v3322
      %v3324 = vpop.f32.mrb[0].mxu0
      %v3325 = vpop.f32.mrb[0].mxu0
      %v3326 = vadd.f32 0.0, %v3325
      %v3327 = vpop.f32.mrb[0].mxu0
      %3328 = vmatprep.mubr.bf16.mxu0 0
      %3329 = vmatmul.mubr.bf16.gmra.mrb[0].mxu0 %v3220
      %v3330 = vpop.f32.mrb[0].mxu0
      %v3331 = vadd.f32 0.0, %v3330
      %v3332 = vpop.f32.mrb[0].mxu0
      %v3333 = vpop.f32.mrb[0].mxu0
      %v3334 = vadd.f32 0.0, %v3333
      %v3335 = vpop.f32.mrb[0].mxu0
      %3336 = vmatprep.mubr.bf16.mxu0 0
      %3337 = vmatmul.mubr.bf16.gmra.mrb[0].mxu0 %v3223
      %v3338 = vpop.f32.mrb[0].mxu0
      %v3339 = vadd.f32 0.0, %v3338
      %v3340 = vpop.f32.mrb[0].mxu0
      %v3341 = vpop.f32.mrb[0].mxu0
      %v3342 = vadd.f32 0.0, %v3341
      %v3343 = vpop.f32.mrb[0].mxu0
      %3344 = vmatprep.mubr.bf16.mxu0 0
      %3345 = vmatmul.mubr.bf16.gmra.mrb[0].mxu0 %v3226
      %v3346 = vpop.f32.mrb[0].mxu0
      %v3347 = vadd.f32 0.0, %v3346
      %v3348 = vpop.f32.mrb[0].mxu0
      %v3349 = vpop.f32.mrb[0].mxu0
      %v3350 = vadd.f32 0.0, %v3349
      %v3351 = vpop.f32.mrb[0].mxu0
      %3352 = vmatprep.mubr.bf16.mxu0 0
      %3353 = vmatmul.mubr.bf16.gmra.mrb[0].mxu0 %v3229
      %v3354 = vpop.f32.mrb[0].mxu0
      %v3355 = vadd.f32 0.0, %v3354
      %v3356 = vpop.f32.mrb[0].mxu0
      %v3357 = vpop.f32.mrb[0].mxu0
      %v3358 = vadd.f32 0.0, %v3357
      %v3359 = vpop.f32.mrb[0].mxu0
      %3360 = vmatprep.mubr.bf16.mxu0 0
      %3361 = vmatmul.mubr.bf16.gmra.mrb[0].mxu0 %v3232
      %v3362 = vpop.f32.mrb[0].mxu0
      %v3363 = vadd.f32 0.0, %v3362
      %v3364 = vpop.f32.mrb[0].mxu0
      %v3365 = vpop.f32.mrb[0].mxu0
      %v3366 = vadd.f32 0.0, %v3365
      %v3367 = vpop.f32.mrb[0].mxu0
      %3368 = vmatprep.mubr.bf16.mxu0 0
      %3369 = vmatmul.mubr.bf16.gmra.mrb[0].mxu0 %v3235
      %v3370 = vpop.f32.mrb[0].mxu0
      %v3371 = vadd.f32 0.0, %v3370
      %v3372 = vpop.f32.mrb[0].mxu0
      %v3373 = vpop.f32.mrb[0].mxu0
      %v3374 = vadd.f32 0.0, %v3373
      %v3375 = vpop.f32.mrb[0].mxu0
      %3376 = vmatprep.mubr.bf16.mxu0 0
      %3377 = vmatmul.mubr.bf16.gmra.mrb[0].mxu0 %v3238
      %v3378 = vpop.f32.mrb[0].mxu0
      %v3379 = vadd.f32 0.0, %v3378
      %v3380 = vpop.f32.mrb[0].mxu0
      %v3381 = vpop.f32.mrb[0].mxu0
      %v3382 = vadd.f32 0.0, %v3381
      %v3383 = vpop.f32.mrb[0].mxu0
      %3384 = vmatprep.mubr.bf16.mxu0 0
      %3385 = vmatmul.mubr.bf16.gmra.mrb[0].mxu0 %v3241
      %v3386 = vpop.f32.mrb[0].mxu0
      %v3387 = vadd.f32 0.0, %v3386
      %v3388 = vpop.f32.mrb[0].mxu0
      %v3389 = vpop.f32.mrb[0].mxu0
      %v3390 = vadd.f32 0.0, %v3389
      %v3391 = vpop.f32.mrb[0].mxu0
      %3392 = vmatprep.mubr.bf16.mxu0 0
      %3393 = vmatmul.mubr.bf16.gmra.mrb[0].mxu0 %v3244
      %v3394 = vpop.f32.mrb[0].mxu0
      %v3395 = vadd.f32 0.0, %v3394
      %v3396 = vpop.f32.mrb[0].mxu0
      %v3397 = vpop.f32.mrb[0].mxu0
      %v3398 = vadd.f32 0.0, %v3397
      %v3399 = vpop.f32.mrb[0].mxu0
      %3400 = vmatprep.mubr.bf16.mxu0 0
      %3401 = vmatmul.mubr.bf16.gmra.mrb[0].mxu0 %v3247
      %v3402 = vpop.f32.mrb[0].mxu0
      %v3403 = vadd.f32 0.0, %v3402
      %v3404 = vpop.f32.mrb[0].mxu0
      %v3405 = vpop.f32.mrb[0].mxu0
      %v3406 = vadd.f32 0.0, %v3405
      %v3407 = vpop.f32.mrb[0].mxu0
      %3408 = vmatprep.mubr.bf16.mxu0 0
      %3409 = vmatmul.mubr.bf16.gmra.mrb[0].mxu0 %v3250
      %v3410 = vpop.f32.mrb[0].mxu0
      %v3411 = vadd.f32 0.0, %v3410
      %v3412 = vpop.f32.mrb[0].mxu0
      %v3413 = vpop.f32.mrb[0].mxu0
      %v3414 = vadd.f32 0.0, %v3413
      %v3415 = vpop.f32.mrb[0].mxu0
      %3416 = vmatprep.mubr.bf16.mxu0 0
      %3417 = vmatmul.mubr.bf16.gmra.mrb[0].mxu0 %v3253
      %v3418 = vpop.f32.mrb[0].mxu0
      %v3419 = vadd.f32 0.0, %v3418
      %v3420 = vpop.f32.mrb[0].mxu0
      %v3421 = vpop.f32.mrb[0].mxu0
      %v3422 = vadd.f32 0.0, %v3421
      %v3423 = vpop.f32.mrb[0].mxu0
      %3424 = vmatprep.mubr.bf16.mxu0 0
      %3425 = vmatmul.mubr.bf16.gmra.mrb[0].mxu0 %v3256
      %v3426 = vpop.f32.mrb[0].mxu0
      %v3427 = vadd.f32 0.0, %v3426
      %v3428 = vpop.f32.mrb[0].mxu0
      %v3429 = vpop.f32.mrb[0].mxu0
      %v3430 = vadd.f32 0.0, %v3429
      %v3431 = vpop.f32.mrb[0].mxu0
      %3432 = vmatprep.mubr.bf16.mxu0 0
      %3433 = vmatmul.mubr.bf16.gmra.mrb[0].mxu0 %v3259
      %v3434 = vpop.f32.mrb[0].mxu0
      %v3435 = vadd.f32 0.0, %v3434
      %v3436 = vpop.f32.mrb[0].mxu0
      %v3437 = vpop.f32.mrb[0].mxu0
      %v3438 = vadd.f32 0.0, %v3437
      %v3439 = vpop.f32.mrb[0].mxu0
      %3440 = vdwg.mxu0
      %v3441 = vadd.f32 %v2994, %v3299
      %v3442 = vadd.f32 %v2995, %v3302
      %v3443 = vadd.f32 %v2996, %v3307
      %v3444 = vadd.f32 %v2997, %v3310
      %v3445 = vadd.f32 %v2998, %v3315
      %v3446 = vadd.f32 %v2999, %v3318
      %v3447 = vadd.f32 %v3000, %v3323
      %v3448 = vadd.f32 %v3001, %v3326
      %v3449 = vadd.f32 %v3002, %v3331
      %v3450 = vadd.f32 %v3003, %v3334
      %v3451 = vadd.f32 %v3004, %v3339
      %v3452 = vadd.f32 %v3005, %v3342
      %v3453 = vadd.f32 %v3006, %v3347
      %v3454 = vadd.f32 %v3007, %v3350
      %v3455 = vadd.f32 %v3008, %v3355
      %v3456 = vadd.f32 %v3009, %v3358
      %v3457 = vadd.f32 %v3010, %v3363
      %v3458 = vadd.f32 %v3011, %v3366
      %v3459 = vadd.f32 %v3012, %v3371
      %v3460 = vadd.f32 %v3013, %v3374
      %v3461 = vadd.f32 %v3014, %v3379
      %v3462 = vadd.f32 %v3015, %v3382
      %v3463 = vadd.f32 %v3016, %v3387
      %v3464 = vadd.f32 %v3017, %v3390
      %v3465 = vadd.f32 %v3018, %v3395
      %v3466 = vadd.f32 %v3019, %v3398
      %v3467 = vadd.f32 %v3020, %v3403
      %v3468 = vadd.f32 %v3021, %v3406
      %v3469 = vadd.f32 %v3022, %v3411
      %v3470 = vadd.f32 %v3023, %v3414
      %v3471 = vadd.f32 %v3024, %v3419
      %v3472 = vadd.f32 %v3025, %v3422
      %v3473 = vadd.f32 %v3026, %v3427
      %v3474 = vadd.f32 %v3027, %v3430
      %v3475 = vadd.f32 %v3028, %v3435
      %v3476 = vadd.f32 %v3029, %v3438
      %v3477 = vld [vmem:[%s300 + $0x10] sm:$0x8]
      %s3478 = scalar_lea.vmem %s2, 16
      %v3479 = vld [vmem:[%s3478] sm:$0x3]
      %v3481 = vunpack.c.l.b16 %v3477
      %v3482 = vpack.c.b16 %v2668, %v3481
      %vm3483 = vcmask 1044480
      %v3484 = vrot.slane %v3482, 3
      %v3485 = vrot.slane %v2705, 3
      %v3486 = vsel %vm3483, %v3484, %v3485
      %v3487 = vrot.slane %v2706, 3
      %v3488 = vsel %vm3483, %v3485, %v3487
      %v3489 = vrot.slane %v2707, 3
      %v3490 = vsel %vm3483, %v3487, %v3489
      %v3491 = vrot.slane %v2708, 3
      %v3492 = vsel %vm3483, %v3489, %v3491
      %v3493 = vrot.slane %v2709, 3
      %v3494 = vsel %vm3483, %v3491, %v3493
      %v3495 = vrot.slane %v2710, 3
      %v3496 = vsel %vm3483, %v3493, %v3495
      %v3497 = vrot.slane %v2711, 3
      %v3498 = vsel %vm3483, %v3495, %v3497
      %v3499 = vrot.slane %v2712, 3
      %v3500 = vsel %vm3483, %v3497, %v3499
      %v3501 = vrot.slane %v2713, 3
      %v3502 = vsel %vm3483, %v3499, %v3501
      %v3503 = vrot.slane %v2714, 3
      %v3504 = vsel %vm3483, %v3501, %v3503
      %v3505 = vrot.slane %v2715, 3
      %v3506 = vsel %vm3483, %v3503, %v3505
      %v3507 = vrot.slane %v2716, 3
      %v3508 = vsel %vm3483, %v3505, %v3507
      %v3509 = vrot.slane %v2717, 3
      %v3510 = vsel %vm3483, %v3507, %v3509
      %v3511 = vrot.slane %v2718, 3
      %v3512 = vsel %vm3483, %v3509, %v3511
      %v3513 = vrot.slane %v2719, 3
      %v3514 = vsel %vm3483, %v3511, %v3513
      %v3515 = vrot.slane %v2720, 3
      %v3516 = vsel %vm3483, %v3513, %v3515
      %v3517 = vrot.slane %v2721, 3
      %v3518 = vsel %vm3483, %v3515, %v3517
      %v3519 = vrot.slane %v3035, 3
      %v3520 = vsel %vm3483, %v3517, %v3519
      %v3522 = vsel %vm625, %v3486, 0
      %v3525 = vsel %vm625, %v3488, 0
      %v3528 = vsel %vm625, %v3490, 0
      %v3531 = vsel %vm625, %v3492, 0
      %v3534 = vsel %vm625, %v3494, 0
      %v3537 = vsel %vm625, %v3496, 0
      %v3540 = vsel %vm625, %v3498, 0
      %v3543 = vsel %vm625, %v3500, 0
      %v3546 = vsel %vm625, %v3502, 0
      %v3549 = vsel %vm625, %v3504, 0
      %v3552 = vsel %vm625, %v3506, 0
      %v3555 = vsel %vm625, %v3508, 0
      %v3558 = vsel %vm625, %v3510, 0
      %v3561 = vsel %vm625, %v3512, 0
      %v3564 = vsel %vm625, %v3514, 0
      %v3567 = vsel %vm625, %v3516, 0
      %v3570 = vsel %vm625, %v3518, 0
      %v3573 = vsel %vm625, %v3520, 0
      %v3576 = vsel %vm680, %v3479, 0
      %3578 = vmatprep.subr.bf16.mxu0 0
      %3579 = vmatpush1.bf16.msra.mxu0 %v3576
      %3580 = vmatprep.subr.bf16.mxu0 0
      %3581 = vmatpush1.bf16.msra.mxu0 0
      %3582 = vmatprep.subr.bf16.mxu0 0
      %3583 = vmatpush1.bf16.msra.mxu0 0
      %3584 = vmatprep.subr.bf16.mxu0 0
      %3585 = vmatpush1.bf16.msra.mxu0 0
      %3586 = vmatprep.subr.bf16.mxu0 0
      %3587 = vmatpush1.bf16.msra.mxu0 0
      %3588 = vmatprep.subr.bf16.mxu0 0
      %3589 = vmatpush1.bf16.msra.mxu0 0
      %3590 = vmatprep.subr.bf16.mxu0 0
      %3591 = vmatpush1.bf16.msra.mxu0 0
      %3592 = vmatprep.subr.bf16.mxu0 0
      %3593 = vmatpush1.bf16.msra.mxu0 0
      %3594 = vmatprep.subr.bf16.mxu0 0
      %3595 = vmatpush1.bf16.msra.mxu0 0
      %3596 = vmatprep.subr.bf16.mxu0 0
      %3597 = vmatpush1.bf16.msra.mxu0 0
      %3598 = vmatprep.subr.bf16.mxu0 0
      %3599 = vmatpush1.bf16.msra.mxu0 0
      %3600 = vmatprep.subr.bf16.mxu0 0
      %3601 = vmatpush1.bf16.msra.mxu0 0
      %3602 = vmatprep.subr.bf16.mxu0 0
      %3603 = vmatpush1.bf16.msra.mxu0 0
      %3604 = vmatprep.subr.bf16.mxu0 0
      %3605 = vmatpush1.bf16.msra.mxu0 0
      %3606 = vmatprep.subr.bf16.mxu0 0
      %3607 = vmatpush1.bf16.msra.mxu0 0
      %3608 = vmatprep.subr.bf16.mxu0 0
      %3609 = vmatpush1.bf16.msra.mxu0 0
      %3610 = vmatprep.mubr.bf16.mxu0 0
      %3611 = vmatmul.mubr.bf16.gmra.mrb[0].mxu0 %v3522
      %v3612 = vpop.f32.mrb[0].mxu0
      %v3613 = vadd.f32 0.0, %v3612
      %v3614 = vpop.f32.mrb[0].mxu0
      %v3615 = vpop.f32.mrb[0].mxu0
      %v3616 = vadd.f32 0.0, %v3615
      %v3617 = vpop.f32.mrb[0].mxu0
      %3618 = vmatprep.mubr.bf16.mxu0 0
      %3619 = vmatmul.mubr.bf16.gmra.mrb[0].mxu0 %v3525
      %v3620 = vpop.f32.mrb[0].mxu0
      %v3621 = vadd.f32 0.0, %v3620
      %v3622 = vpop.f32.mrb[0].mxu0
      %v3623 = vpop.f32.mrb[0].mxu0
      %v3624 = vadd.f32 0.0, %v3623
      %v3625 = vpop.f32.mrb[0].mxu0
      %3626 = vmatprep.mubr.bf16.mxu0 0
      %3627 = vmatmul.mubr.bf16.gmra.mrb[0].mxu0 %v3528
      %v3628 = vpop.f32.mrb[0].mxu0
      %v3629 = vadd.f32 0.0, %v3628
      %v3630 = vpop.f32.mrb[0].mxu0
      %v3631 = vpop.f32.mrb[0].mxu0
      %v3632 = vadd.f32 0.0, %v3631
      %v3633 = vpop.f32.mrb[0].mxu0
      %3634 = vmatprep.mubr.bf16.mxu0 0
      %3635 = vmatmul.mubr.bf16.gmra.mrb[0].mxu0 %v3531
      %v3636 = vpop.f32.mrb[0].mxu0
      %v3637 = vadd.f32 0.0, %v3636
      %v3638 = vpop.f32.mrb[0].mxu0
      %v3639 = vpop.f32.mrb[0].mxu0
      %v3640 = vadd.f32 0.0, %v3639
      %v3641 = vpop.f32.mrb[0].mxu0
      %3642 = vmatprep.mubr.bf16.mxu0 0
      %3643 = vmatmul.mubr.bf16.gmra.mrb[0].mxu0 %v3534
      %v3644 = vpop.f32.mrb[0].mxu0
      %v3645 = vadd.f32 0.0, %v3644
      %v3646 = vpop.f32.mrb[0].mxu0
      %v3647 = vpop.f32.mrb[0].mxu0
      %v3648 = vadd.f32 0.0, %v3647
      %v3649 = vpop.f32.mrb[0].mxu0
      %3650 = vmatprep.mubr.bf16.mxu0 0
      %3651 = vmatmul.mubr.bf16.gmra.mrb[0].mxu0 %v3537
      %v3652 = vpop.f32.mrb[0].mxu0
      %v3653 = vadd.f32 0.0, %v3652
      %v3654 = vpop.f32.mrb[0].mxu0
      %v3655 = vpop.f32.mrb[0].mxu0
      %v3656 = vadd.f32 0.0, %v3655
      %v3657 = vpop.f32.mrb[0].mxu0
      %3658 = vmatprep.mubr.bf16.mxu0 0
      %3659 = vmatmul.mubr.bf16.gmra.mrb[0].mxu0 %v3540
      %v3660 = vpop.f32.mrb[0].mxu0
      %v3661 = vadd.f32 0.0, %v3660
      %v3662 = vpop.f32.mrb[0].mxu0
      %v3663 = vpop.f32.mrb[0].mxu0
      %v3664 = vadd.f32 0.0, %v3663
      %v3665 = vpop.f32.mrb[0].mxu0
      %3666 = vmatprep.mubr.bf16.mxu0 0
      %3667 = vmatmul.mubr.bf16.gmra.mrb[0].mxu0 %v3543
      %v3668 = vpop.f32.mrb[0].mxu0
      %v3669 = vadd.f32 0.0, %v3668
      %v3670 = vpop.f32.mrb[0].mxu0
      %v3671 = vpop.f32.mrb[0].mxu0
      %v3672 = vadd.f32 0.0, %v3671
      %v3673 = vpop.f32.mrb[0].mxu0
      %3674 = vmatprep.mubr.bf16.mxu0 0
      %3675 = vmatmul.mubr.bf16.gmra.mrb[0].mxu0 %v3546
      %v3676 = vpop.f32.mrb[0].mxu0
      %v3677 = vadd.f32 0.0, %v3676
      %v3678 = vpop.f32.mrb[0].mxu0
      %v3679 = vpop.f32.mrb[0].mxu0
      %v3680 = vadd.f32 0.0, %v3679
      %v3681 = vpop.f32.mrb[0].mxu0
      %3682 = vmatprep.mubr.bf16.mxu0 0
      %3683 = vmatmul.mubr.bf16.gmra.mrb[0].mxu0 %v3549
      %v3684 = vpop.f32.mrb[0].mxu0
      %v3685 = vadd.f32 0.0, %v3684
      %v3686 = vpop.f32.mrb[0].mxu0
      %v3687 = vpop.f32.mrb[0].mxu0
      %v3688 = vadd.f32 0.0, %v3687
      %v3689 = vpop.f32.mrb[0].mxu0
      %3690 = vmatprep.mubr.bf16.mxu0 0
      %3691 = vmatmul.mubr.bf16.gmra.mrb[0].mxu0 %v3552
      %v3692 = vpop.f32.mrb[0].mxu0
      %v3693 = vadd.f32 0.0, %v3692
      %v3694 = vpop.f32.mrb[0].mxu0
      %v3695 = vpop.f32.mrb[0].mxu0
      %v3696 = vadd.f32 0.0, %v3695
      %v3697 = vpop.f32.mrb[0].mxu0
      %3698 = vmatprep.mubr.bf16.mxu0 0
      %3699 = vmatmul.mubr.bf16.gmra.mrb[0].mxu0 %v3555
      %v3700 = vpop.f32.mrb[0].mxu0
      %v3701 = vadd.f32 0.0, %v3700
      %v3702 = vpop.f32.mrb[0].mxu0
      %v3703 = vpop.f32.mrb[0].mxu0
      %v3704 = vadd.f32 0.0, %v3703
      %v3705 = vpop.f32.mrb[0].mxu0
      %3706 = vmatprep.mubr.bf16.mxu0 0
      %3707 = vmatmul.mubr.bf16.gmra.mrb[0].mxu0 %v3558
      %v3708 = vpop.f32.mrb[0].mxu0
      %v3709 = vadd.f32 0.0, %v3708
      %v3710 = vpop.f32.mrb[0].mxu0
      %v3711 = vpop.f32.mrb[0].mxu0
      %v3712 = vadd.f32 0.0, %v3711
      %v3713 = vpop.f32.mrb[0].mxu0
      %3714 = vmatprep.mubr.bf16.mxu0 0
      %3715 = vmatmul.mubr.bf16.gmra.mrb[0].mxu0 %v3561
      %v3716 = vpop.f32.mrb[0].mxu0
      %v3717 = vadd.f32 0.0, %v3716
      %v3718 = vpop.f32.mrb[0].mxu0
      %v3719 = vpop.f32.mrb[0].mxu0
      %v3720 = vadd.f32 0.0, %v3719
      %v3721 = vpop.f32.mrb[0].mxu0
      %3722 = vmatprep.mubr.bf16.mxu0 0
      %3723 = vmatmul.mubr.bf16.gmra.mrb[0].mxu0 %v3564
      %v3724 = vpop.f32.mrb[0].mxu0
      %v3725 = vadd.f32 0.0, %v3724
      %v3726 = vpop.f32.mrb[0].mxu0
      %v3727 = vpop.f32.mrb[0].mxu0
      %v3728 = vadd.f32 0.0, %v3727
      %v3729 = vpop.f32.mrb[0].mxu0
      %3730 = vmatprep.mubr.bf16.mxu0 0
      %3731 = vmatmul.mubr.bf16.gmra.mrb[0].mxu0 %v3567
      %v3732 = vpop.f32.mrb[0].mxu0
      %v3733 = vadd.f32 0.0, %v3732
      %v3734 = vpop.f32.mrb[0].mxu0
      %v3735 = vpop.f32.mrb[0].mxu0
      %v3736 = vadd.f32 0.0, %v3735
      %v3737 = vpop.f32.mrb[0].mxu0
      %3738 = vmatprep.mubr.bf16.mxu0 0
      %3739 = vmatmul.mubr.bf16.gmra.mrb[0].mxu0 %v3570
      %v3740 = vpop.f32.mrb[0].mxu0
      %v3741 = vadd.f32 0.0, %v3740
      %v3742 = vpop.f32.mrb[0].mxu0
      %v3743 = vpop.f32.mrb[0].mxu0
      %v3744 = vadd.f32 0.0, %v3743
      %v3745 = vpop.f32.mrb[0].mxu0
      %3746 = vmatprep.mubr.bf16.mxu0 0
      %3747 = vmatmul.mubr.bf16.gmra.mrb[0].mxu0 %v3573
      %v3748 = vpop.f32.mrb[0].mxu0
      %v3749 = vadd.f32 0.0, %v3748
      %v3750 = vpop.f32.mrb[0].mxu0
      %v3751 = vpop.f32.mrb[0].mxu0
      %v3752 = vadd.f32 0.0, %v3751
      %v3753 = vpop.f32.mrb[0].mxu0
      %3754 = vdwg.mxu0
      %v3755 = vadd.f32 %v3441, %v3613
      %v3756 = vadd.f32 %v3442, %v3616
      %v3757 = vadd.f32 %v3443, %v3621
      %v3758 = vadd.f32 %v3444, %v3624
      %v3759 = vadd.f32 %v3445, %v3629
      %v3760 = vadd.f32 %v3446, %v3632
      %v3761 = vadd.f32 %v3447, %v3637
      %v3762 = vadd.f32 %v3448, %v3640
      %v3763 = vadd.f32 %v3449, %v3645
      %v3764 = vadd.f32 %v3450, %v3648
      %v3765 = vadd.f32 %v3451, %v3653
      %v3766 = vadd.f32 %v3452, %v3656
      %v3767 = vadd.f32 %v3453, %v3661
      %v3768 = vadd.f32 %v3454, %v3664
      %v3769 = vadd.f32 %v3455, %v3669
      %v3770 = vadd.f32 %v3456, %v3672
      %v3771 = vadd.f32 %v3457, %v3677
      %v3772 = vadd.f32 %v3458, %v3680
      %v3773 = vadd.f32 %v3459, %v3685
      %v3774 = vadd.f32 %v3460, %v3688
      %v3775 = vadd.f32 %v3461, %v3693
      %v3776 = vadd.f32 %v3462, %v3696
      %v3777 = vadd.f32 %v3463, %v3701
      %v3778 = vadd.f32 %v3464, %v3704
      %v3779 = vadd.f32 %v3465, %v3709
      %v3780 = vadd.f32 %v3466, %v3712
      %v3781 = vadd.f32 %v3467, %v3717
      %v3782 = vadd.f32 %v3468, %v3720
      %v3783 = vadd.f32 %v3469, %v3725
      %v3784 = vadd.f32 %v3470, %v3728
      %v3785 = vadd.f32 %v3471, %v3733
      %v3786 = vadd.f32 %v3472, %v3736
      %v3787 = vadd.f32 %v3473, %v3741
      %v3788 = vadd.f32 %v3474, %v3744
      %v3789 = vadd.f32 %v3475, %v3749
      %v3790 = vadd.f32 %v3476, %v3752
      %v3791 = vld [vmem:[%s3] sm:$0x1]
      %v3793 = vlaneseq
      %v3794 = vshrl.u32 %v3793, 7
      %v3795 = vsub.s32 0, %v3794
      %v3796 = vrot.slane %v3791, %v3795
      %v3798 = vadd.f32 %v3755, %v3796
      %v3799 = vadd.f32 %v3756, %v3796
      %v3800 = vadd.f32 %v3757, %v3796
      %v3801 = vadd.f32 %v3758, %v3796
      %v3802 = vadd.f32 %v3759, %v3796
      %v3803 = vadd.f32 %v3760, %v3796
      %v3804 = vadd.f32 %v3761, %v3796
      %v3805 = vadd.f32 %v3762, %v3796
      %v3806 = vadd.f32 %v3763, %v3796
      %v3807 = vadd.f32 %v3764, %v3796
      %v3808 = vadd.f32 %v3765, %v3796
      %v3809 = vadd.f32 %v3766, %v3796
      %v3810 = vadd.f32 %v3767, %v3796
      %v3811 = vadd.f32 %v3768, %v3796
      %v3812 = vadd.f32 %v3769, %v3796
      %v3813 = vadd.f32 %v3770, %v3796
      %v3814 = vadd.f32 %v3771, %v3796
      %v3815 = vadd.f32 %v3772, %v3796
      %v3816 = vadd.f32 %v3773, %v3796
      %v3817 = vadd.f32 %v3774, %v3796
      %v3818 = vadd.f32 %v3775, %v3796
      %v3819 = vadd.f32 %v3776, %v3796
      %v3820 = vadd.f32 %v3777, %v3796
      %v3821 = vadd.f32 %v3778, %v3796
      %v3822 = vadd.f32 %v3779, %v3796
      %v3823 = vadd.f32 %v3780, %v3796
      %v3824 = vadd.f32 %v3781, %v3796
      %v3825 = vadd.f32 %v3782, %v3796
      %v3826 = vadd.f32 %v3783, %v3796
      %v3827 = vadd.f32 %v3784, %v3796
      %v3828 = vadd.f32 %v3785, %v3796
      %v3829 = vadd.f32 %v3786, %v3796
      %v3830 = vadd.f32 %v3787, %v3796
      %v3831 = vadd.f32 %v3788, %v3796
      %v3832 = vadd.f32 %v3789, %v3796
      %v3833 = vadd.f32 %v3790, %v3796
      %v3834 = vmax.f32 %v3798, 0.0
      %v3835 = vmax.f32 %v3799, 0.0
      %v3836 = vmax.f32 %v3800, 0.0
      %v3837 = vmax.f32 %v3801, 0.0
      %v3838 = vmax.f32 %v3802, 0.0
      %v3839 = vmax.f32 %v3803, 0.0
      %v3840 = vmax.f32 %v3804, 0.0
      %v3841 = vmax.f32 %v3805, 0.0
      %v3842 = vmax.f32 %v3806, 0.0
      %v3843 = vmax.f32 %v3807, 0.0
      %v3844 = vmax.f32 %v3808, 0.0
      %v3845 = vmax.f32 %v3809, 0.0
      %v3846 = vmax.f32 %v3810, 0.0
      %v3847 = vmax.f32 %v3811, 0.0
      %v3848 = vmax.f32 %v3812, 0.0
      %v3849 = vmax.f32 %v3813, 0.0
      %v3850 = vmax.f32 %v3814, 0.0
      %v3851 = vmax.f32 %v3815, 0.0
      %v3852 = vmax.f32 %v3816, 0.0
      %v3853 = vmax.f32 %v3817, 0.0
      %v3854 = vmax.f32 %v3818, 0.0
      %v3855 = vmax.f32 %v3819, 0.0
      %v3856 = vmax.f32 %v3820, 0.0
      %v3857 = vmax.f32 %v3821, 0.0
      %v3858 = vmax.f32 %v3822, 0.0
      %v3859 = vmax.f32 %v3823, 0.0
      %v3860 = vmax.f32 %v3824, 0.0
      %v3861 = vmax.f32 %v3825, 0.0
      %v3862 = vmax.f32 %v3826, 0.0
      %v3863 = vmax.f32 %v3827, 0.0
      %v3864 = vmax.f32 %v3828, 0.0
      %v3865 = vmax.f32 %v3829, 0.0
      %v3866 = vmax.f32 %v3830, 0.0
      %v3867 = vmax.f32 %v3831, 0.0
      %v3868 = vmax.f32 %v3832, 0.0
      %v3869 = vmax.f32 %v3833, 0.0
      %vm3870 = vcmask 261120
      %3871 = vst.msk [vmem:[#allocation2] sm:$0xff] %vm3870, 0
      %3872 = vst.msk [vmem:[#allocation2 + $0x8] sm:$0xff] %vm3870, 0
      %3873 = vst.msk [vmem:[#allocation2 + $0x10] sm:$0xff] %vm3870, 0
      %3874 = vst.msk [vmem:[#allocation2 + $0x18] sm:$0xff] %vm3870, 0
      %3875 = vst.msk [vmem:[#allocation2 + $0x20] sm:$0xff] %vm3870, 0
      %3876 = vst.msk [vmem:[#allocation2 + $0x28] sm:$0xff] %vm3870, 0
      %3877 = vst.msk [vmem:[#allocation2 + $0x30] sm:$0xff] %vm3870, 0
      %3878 = vst.msk [vmem:[#allocation2 + $0x38] sm:$0xff] %vm3870, 0
      %3879 = vst.msk [vmem:[#allocation2 + $0x40] sm:$0xff] %vm3870, 0
      %3880 = vst.msk [vmem:[#allocation2 + $0x48] sm:$0xff] %vm3870, 0
      %3881 = vst.msk [vmem:[#allocation2 + $0x50] sm:$0xff] %vm3870, 0
      %3882 = vst.msk [vmem:[#allocation2 + $0x58] sm:$0xff] %vm3870, 0
      %3883 = vst.msk [vmem:[#allocation2 + $0x60] sm:$0xff] %vm3870, 0
      %3884 = vst.msk [vmem:[#allocation2 + $0x68] sm:$0xff] %vm3870, 0
      %3885 = vst.msk [vmem:[#allocation2 + $0x70] sm:$0xff] %vm3870, 0
      %3886 = vst.msk [vmem:[#allocation2 + $0x78] sm:$0xff] %vm3870, 0
      %3887 = vst.msk [vmem:[#allocation2 + $0x80] sm:$0xff] %vm3870, 0
      %3888 = vst.msk [vmem:[#allocation2 + $0x88] sm:$0xff] %vm3870, 0
      %3889 = vst.msk [vmem:[#allocation2 + $0x90] sm:$0xff] %vm3870, 0
      %3890 = vst.msk [vmem:[#allocation2 + $0x98] sm:$0xff] %vm3870, 0
      %3891 = vst.msk [vmem:[#allocation2 + $0xa0] sm:$0xff] %vm3870, 0
      %3893 = vset.pattern.permute.xlu0 0
      %3894 = vperm.xlu0 %3893, %v307
      %v3895 = vpop.permute.xlu0 %3894
      %3898 = vset.pattern.permute.xlu0 0
      %3899 = vperm.xlu0 %3898, %v308
      %v3900 = vpop.permute.xlu0 %3899
      %3903 = vset.pattern.permute.xlu0 0
      %3904 = vperm.xlu0 %3903, %v309
      %v3905 = vpop.permute.xlu0 %3904
      %3908 = vset.pattern.permute.xlu0 0
      %3909 = vperm.xlu0 %3908, %v310
      %v3910 = vpop.permute.xlu0 %3909
      %3913 = vset.pattern.permute.xlu0 0
      %3914 = vperm.xlu0 %3913, %v311
      %v3915 = vpop.permute.xlu0 %3914
      %3918 = vset.pattern.permute.xlu0 0
      %3919 = vperm.xlu0 %3918, %v312
      %v3920 = vpop.permute.xlu0 %3919
      %3923 = vset.pattern.permute.xlu0 0
      %3924 = vperm.xlu0 %3923, %v313
      %v3925 = vpop.permute.xlu0 %3924
      %3928 = vset.pattern.permute.xlu0 0
      %3929 = vperm.xlu0 %3928, %v314
      %v3930 = vpop.permute.xlu0 %3929
      %3933 = vset.pattern.permute.xlu0 0
      %3934 = vperm.xlu0 %3933, %v315
      %v3935 = vpop.permute.xlu0 %3934
      %3938 = vset.pattern.permute.xlu0 0
      %3939 = vperm.xlu0 %3938, %v316
      %v3940 = vpop.permute.xlu0 %3939
      %3943 = vset.pattern.permute.xlu0 0
      %3944 = vperm.xlu0 %3943, %v317
      %v3945 = vpop.permute.xlu0 %3944
      %3948 = vset.pattern.permute.xlu0 0
      %3949 = vperm.xlu0 %3948, %v318
      %v3950 = vpop.permute.xlu0 %3949
      %3953 = vset.pattern.permute.xlu0 0
      %3954 = vperm.xlu0 %3953, %v319
      %v3955 = vpop.permute.xlu0 %3954
      %3958 = vset.pattern.permute.xlu0 0
      %3959 = vperm.xlu0 %3958, %v320
      %v3960 = vpop.permute.xlu0 %3959
      %3963 = vset.pattern.permute.xlu0 0
      %3964 = vperm.xlu0 %3963, %v321
      %v3965 = vpop.permute.xlu0 %3964
      %3968 = vset.pattern.permute.xlu0 0
      %3969 = vperm.xlu0 %3968, %v322
      %v3970 = vpop.permute.xlu0 %3969
      %3973 = vset.pattern.permute.xlu0 0
      %3974 = vperm.xlu0 %3973, %v323
      %v3975 = vpop.permute.xlu0 %3974
      %3978 = vset.pattern.permute.xlu0 0
      %3979 = vperm.xlu0 %3978, %v324
      %v3980 = vpop.permute.xlu0 %3979
      %3983 = vset.pattern.permute.xlu0 0
      %3984 = vperm.xlu0 %3983, %v325
      %v3985 = vpop.permute.xlu0 %3984
      %3988 = vset.pattern.permute.xlu0 0
      %3989 = vperm.xlu0 %3988, %v326
      %v3990 = vpop.permute.xlu0 %3989
      %3993 = vset.pattern.permute.xlu0 0
      %3994 = vperm.xlu0 %3993, %v327
      %v3995 = vpop.permute.xlu0 %3994
      %3998 = vset.pattern.permute.xlu0 0
      %3999 = vperm.xlu0 %3998, %v328
      %v4000 = vpop.permute.xlu0 %3999
      %4003 = vset.pattern.permute.xlu0 0
      %4004 = vperm.xlu0 %4003, %v329
      %v4005 = vpop.permute.xlu0 %4004
      %4008 = vset.pattern.permute.xlu0 0
      %4009 = vperm.xlu0 %4008, %v330
      %v4010 = vpop.permute.xlu0 %4009
      %4013 = vset.pattern.permute.xlu0 0
      %4014 = vperm.xlu0 %4013, %v331
      %v4015 = vpop.permute.xlu0 %4014
      %4018 = vset.pattern.permute.xlu0 0
      %4019 = vperm.xlu0 %4018, %v332
      %v4020 = vpop.permute.xlu0 %4019
      %4023 = vset.pattern.permute.xlu0 0
      %4024 = vperm.xlu0 %4023, %v333
      %v4025 = vpop.permute.xlu0 %4024
      %4028 = vset.pattern.permute.xlu0 0
      %4029 = vperm.xlu0 %4028, %v334
      %v4030 = vpop.permute.xlu0 %4029
      %4033 = vset.pattern.permute.xlu0 0
      %4034 = vperm.xlu0 %4033, %v335
      %v4035 = vpop.permute.xlu0 %4034
      %4038 = vset.pattern.permute.xlu0 0
      %4039 = vperm.xlu0 %4038, %v336
      %v4040 = vpop.permute.xlu0 %4039
      %4043 = vset.pattern.permute.xlu0 0
      %4044 = vperm.xlu0 %4043, %v337
      %v4045 = vpop.permute.xlu0 %4044
      %4048 = vset.pattern.permute.xlu0 0
      %4049 = vperm.xlu0 %4048, %v338
      %v4050 = vpop.permute.xlu0 %4049
      %4053 = vset.pattern.permute.xlu0 0
      %4054 = vperm.xlu0 %4053, %v339
      %v4055 = vpop.permute.xlu0 %4054
      %4058 = vset.pattern.permute.xlu0 0
      %4059 = vperm.xlu0 %4058, %v340
      %v4060 = vpop.permute.xlu0 %4059
      %4063 = vset.pattern.permute.xlu0 0
      %4064 = vperm.xlu0 %4063, %v341
      %v4065 = vpop.permute.xlu0 %4064
      %4068 = vset.pattern.permute.xlu0 0
      %4069 = vperm.xlu0 %4068, %v342
      %v4070 = vpop.permute.xlu0 %4069
      %v4072 = vmul.f32 %v3834, %v3895
      %v4073 = vmul.f32 %v3835, %v3900
      %v4074 = vmul.f32 %v3836, %v3905
      %v4075 = vmul.f32 %v3837, %v3910
      %v4076 = vmul.f32 %v3838, %v3915
      %v4077 = vmul.f32 %v3839, %v3920
      %v4078 = vmul.f32 %v3840, %v3925
      %v4079 = vmul.f32 %v3841, %v3930
      %v4080 = vmul.f32 %v3842, %v3935
      %v4081 = vmul.f32 %v3843, %v3940
      %v4082 = vmul.f32 %v3844, %v3945
      %v4083 = vmul.f32 %v3845, %v3950
      %v4084 = vmul.f32 %v3846, %v3955
      %v4085 = vmul.f32 %v3847, %v3960
      %v4086 = vmul.f32 %v3848, %v3965
      %v4087 = vmul.f32 %v3849, %v3970
      %v4088 = vmul.f32 %v3850, %v3975
      %v4089 = vmul.f32 %v3851, %v3980
      %v4090 = vmul.f32 %v3852, %v3985
      %v4091 = vmul.f32 %v3853, %v3990
      %v4092 = vmul.f32 %v3854, %v3995
      %v4093 = vmul.f32 %v3855, %v4000
      %v4094 = vmul.f32 %v3856, %v4005
      %v4095 = vmul.f32 %v3857, %v4010
      %v4096 = vmul.f32 %v3858, %v4015
      %v4097 = vmul.f32 %v3859, %v4020
      %v4098 = vmul.f32 %v3860, %v4025
      %v4099 = vmul.f32 %v3861, %v4030
      %v4100 = vmul.f32 %v3862, %v4035
      %v4101 = vmul.f32 %v3863, %v4040
      %v4102 = vmul.f32 %v3864, %v4045
      %v4103 = vmul.f32 %v3865, %v4050
      %v4104 = vmul.f32 %v3866, %v4055
      %v4105 = vmul.f32 %v3867, %v4060
      %v4106 = vmul.f32 %v3868, %v4065
      %v4107 = vmul.f32 %v3869, %v4070
      %v4108 = vpack.c.bf16 %v4073, %v4072
      %v4109 = vpack.c.bf16 %v4075, %v4074
      %v4110 = vpack.c.bf16 %v4077, %v4076
      %v4111 = vpack.c.bf16 %v4079, %v4078
      %v4112 = vpack.c.bf16 %v4081, %v4080
      %v4113 = vpack.c.bf16 %v4083, %v4082
      %v4114 = vpack.c.bf16 %v4085, %v4084
      %v4115 = vpack.c.bf16 %v4087, %v4086
      %v4116 = vpack.c.bf16 %v4089, %v4088
      %v4117 = vpack.c.bf16 %v4091, %v4090
      %v4118 = vpack.c.bf16 %v4093, %v4092
      %v4119 = vpack.c.bf16 %v4095, %v4094
      %v4120 = vpack.c.bf16 %v4097, %v4096
      %v4121 = vpack.c.bf16 %v4099, %v4098
      %v4122 = vpack.c.bf16 %v4101, %v4100
      %v4123 = vpack.c.bf16 %v4103, %v4102
      %v4124 = vpack.c.bf16 %v4105, %v4104
      %v4125 = vpack.c.bf16 %v4107, %v4106
      %vm4144 = vcmask 1043456
      %v4145 = vrot.slane %v4108, 4
      %v4146 = vrot.slane %v4109, 4
      %v4147 = vsel %vm4144, %v4145, %v4146
      %v4148 = vrot.slane %v4110, 4
      %v4149 = vsel %vm4144, %v4146, %v4148
      %v4150 = vrot.slane %v4111, 4
      %v4151 = vsel %vm4144, %v4148, %v4150
      %v4152 = vrot.slane %v4112, 4
      %v4153 = vsel %vm4144, %v4150, %v4152
      %v4154 = vrot.slane %v4113, 4
      %v4155 = vsel %vm4144, %v4152, %v4154
      %v4156 = vrot.slane %v4114, 4
      %v4157 = vsel %vm4144, %v4154, %v4156
      %v4158 = vrot.slane %v4115, 4
      %v4159 = vsel %vm4144, %v4156, %v4158
      %v4160 = vrot.slane %v4116, 4
      %v4161 = vsel %vm4144, %v4158, %v4160
      %v4162 = vrot.slane %v4117, 4
      %v4163 = vsel %vm4144, %v4160, %v4162
      %v4164 = vrot.slane %v4118, 4
      %v4165 = vsel %vm4144, %v4162, %v4164
      %v4166 = vrot.slane %v4119, 4
      %v4167 = vsel %vm4144, %v4164, %v4166
      %v4168 = vrot.slane %v4120, 4
      %v4169 = vsel %vm4144, %v4166, %v4168
      %v4170 = vrot.slane %v4121, 4
      %v4171 = vsel %vm4144, %v4168, %v4170
      %v4172 = vrot.slane %v4122, 4
      %v4173 = vsel %vm4144, %v4170, %v4172
      %v4174 = vrot.slane %v4123, 4
      %v4175 = vsel %vm4144, %v4172, %v4174
      %v4176 = vrot.slane %v4124, 4
      %v4177 = vsel %vm4144, %v4174, %v4176
      %v4178 = vrot.slane %v4125, 4
      %v4179 = vsel %vm4144, %v4176, %v4178
      %vm4199 = vcmask 261124
      %4200 = vst.msk [vmem:[#allocation2 + $0x8] sm:$0xf0] %vm4199, %v4145
      %4201 = vst.msk [vmem:[#allocation2 + $0x10] sm:$0xff] %vm3870, %v4147
      %4202 = vst.msk [vmem:[#allocation2 + $0x18] sm:$0xff] %vm3870, %v4149
      %4203 = vst.msk [vmem:[#allocation2 + $0x20] sm:$0xff] %vm3870, %v4151
      %4204 = vst.msk [vmem:[#allocation2 + $0x28] sm:$0xff] %vm3870, %v4153
      %4205 = vst.msk [vmem:[#allocation2 + $0x30] sm:$0xff] %vm3870, %v4155
      %4206 = vst.msk [vmem:[#allocation2 + $0x38] sm:$0xff] %vm3870, %v4157
      %4207 = vst.msk [vmem:[#allocation2 + $0x40] sm:$0xff] %vm3870, %v4159
      %4208 = vst.msk [vmem:[#allocation2 + $0x48] sm:$0xff] %vm3870, %v4161
      %4209 = vst.msk [vmem:[#allocation2 + $0x50] sm:$0xff] %vm3870, %v4163
      %4210 = vst.msk [vmem:[#allocation2 + $0x58] sm:$0xff] %vm3870, %v4165
      %4211 = vst.msk [vmem:[#allocation2 + $0x60] sm:$0xff] %vm3870, %v4167
      %4212 = vst.msk [vmem:[#allocation2 + $0x68] sm:$0xff] %vm3870, %v4169
      %4213 = vst.msk [vmem:[#allocation2 + $0x70] sm:$0xff] %vm3870, %v4171
      %4214 = vst.msk [vmem:[#allocation2 + $0x78] sm:$0xff] %vm3870, %v4173
      %4215 = vst.msk [vmem:[#allocation2 + $0x80] sm:$0xff] %vm3870, %v4175
      %4216 = vst.msk [vmem:[#allocation2 + $0x88] sm:$0xff] %vm3870, %v4177
      %4217 = vst.msk [vmem:[#allocation2 + $0x90] sm:$0xff] %vm3870, %v4179
      %vm4218 = vcmask 257024
      %4219 = vst.msk [vmem:[#allocation2 + $0x98] sm:$0xf] %vm4218, %v4178
      %v4220 = vld [vmem:[#allocation2] sm:$0xfc]
      %v4221 = vld [vmem:[#allocation2 + $0x8] sm:$0xff]
      %v4222 = vld [vmem:[#allocation2 + $0x10] sm:$0xff]
      %v4223 = vld [vmem:[#allocation2 + $0x18] sm:$0xff]
      %v4224 = vld [vmem:[#allocation2 + $0x20] sm:$0xff]
      %v4225 = vld [vmem:[#allocation2 + $0x28] sm:$0xff]
      %v4226 = vld [vmem:[#allocation2 + $0x30] sm:$0xff]
      %v4227 = vld [vmem:[#allocation2 + $0x38] sm:$0xff]
      %v4228 = vld [vmem:[#allocation2 + $0x40] sm:$0xff]
      %v4229 = vld [vmem:[#allocation2 + $0x48] sm:$0xff]
      %v4230 = vld [vmem:[#allocation2 + $0x50] sm:$0xff]
      %v4231 = vld [vmem:[#allocation2 + $0x58] sm:$0xff]
      %v4232 = vld [vmem:[#allocation2 + $0x60] sm:$0xff]
      %v4233 = vld [vmem:[#allocation2 + $0x68] sm:$0xff]
      %v4234 = vld [vmem:[#allocation2 + $0x70] sm:$0xff]
      %v4235 = vld [vmem:[#allocation2 + $0x78] sm:$0xff]
      %v4236 = vld [vmem:[#allocation2 + $0x80] sm:$0xff]
      %v4237 = vld [vmem:[#allocation2 + $0x88] sm:$0xff]
      %v4238 = vld [vmem:[#allocation2 + $0x90] sm:$0x7]
      %v4239 = vld [vmem:[%s4] sm:$0xf]
      %v4240 = vld [vmem:[%s4 + $0x4] sm:$0xf]
      %v4241 = vld [vmem:[%s4 + $0x8] sm:$0xf]
      %v4242 = vld [vmem:[%s4 + $0xc] sm:$0xf]
      %v4243 = vld [vmem:[#allocation2] sm:$0xf8]
      %s4244 = scalar_lea.vmem %s4, 16
      %v4245 = vld [vmem:[%s4244] sm:$0xf]
      %v4246 = vld [vmem:[%s4244 + $0x4] sm:$0xf]
      %v4247 = vld [vmem:[%s4244 + $0x8] sm:$0xf]
      %v4248 = vld [vmem:[%s4244 + $0xc] sm:$0xf]
      %v4268 = vrot.slane %v4243, 3
      %v4269 = vrot.slane %v4221, 3
      %v4270 = vsel %vm3483, %v4268, %v4269
      %v4271 = vrot.slane %v4222, 3
      %v4272 = vsel %vm3483, %v4269, %v4271
      %v4273 = vrot.slane %v4223, 3
      %v4274 = vsel %vm3483, %v4271, %v4273
      %v4275 = vrot.slane %v4224, 3
      %v4276 = vsel %vm3483, %v4273, %v4275
      %v4277 = vrot.slane %v4225, 3
      %v4278 = vsel %vm3483, %v4275, %v4277
      %v4279 = vrot.slane %v4226, 3
      %v4280 = vsel %vm3483, %v4277, %v4279
      %v4281 = vrot.slane %v4227, 3
      %v4282 = vsel %vm3483, %v4279, %v4281
      %v4283 = vrot.slane %v4228, 3
      %v4284 = vsel %vm3483, %v4281, %v4283
      %v4285 = vrot.slane %v4229, 3
      %v4286 = vsel %vm3483, %v4283, %v4285
      %v4287 = vrot.slane %v4230, 3
      %v4288 = vsel %vm3483, %v4285, %v4287
      %v4289 = vrot.slane %v4231, 3
      %v4290 = vsel %vm3483, %v4287, %v4289
      %v4291 = vrot.slane %v4232, 3
      %v4292 = vsel %vm3483, %v4289, %v4291
      %v4293 = vrot.slane %v4233, 3
      %v4294 = vsel %vm3483, %v4291, %v4293
      %v4295 = vrot.slane %v4234, 3
      %v4296 = vsel %vm3483, %v4293, %v4295
      %v4297 = vrot.slane %v4235, 3
      %v4298 = vsel %vm3483, %v4295, %v4297
      %v4299 = vrot.slane %v4236, 3
      %v4300 = vsel %vm3483, %v4297, %v4299
      %v4301 = vrot.slane %v4237, 3
      %v4302 = vsel %vm3483, %v4299, %v4301
      %v4303 = vrot.slane %v4238, 3
      %v4304 = vsel %vm3483, %v4301, %v4303
      %v4309 = vunpack.c.l.b16 %v4245
      %v4310 = vunpack.c.l.b16 %v4246
      %v4311 = vunpack.c.l.b16 %v4247
      %v4312 = vunpack.c.l.b16 %v4248
      %v4313 = vpack.c.b16 %v4310, %v4309
      %v4314 = vpack.c.b16 %v4312, %v4311
      %v4318 = vsel %vm3870, %v4270, 0
      %v4321 = vsel %vm3870, %v4272, 0
      %v4324 = vsel %vm3870, %v4274, 0
      %v4327 = vsel %vm3870, %v4276, 0
      %v4330 = vsel %vm3870, %v4278, 0
      %v4333 = vsel %vm3870, %v4280, 0
      %v4336 = vsel %vm3870, %v4282, 0
      %v4339 = vsel %vm3870, %v4284, 0
      %v4342 = vsel %vm3870, %v4286, 0
      %v4345 = vsel %vm3870, %v4288, 0
      %v4348 = vsel %vm3870, %v4290, 0
      %v4351 = vsel %vm3870, %v4292, 0
      %v4354 = vsel %vm3870, %v4294, 0
      %v4357 = vsel %vm3870, %v4296, 0
      %v4360 = vsel %vm3870, %v4298, 0
      %v4363 = vsel %vm3870, %v4300, 0
      %v4366 = vsel %vm3870, %v4302, 0
      %v4369 = vsel %vm3870, %v4304, 0
      %4371 = vmatprep.subr.bf16.mxu0 0
      %4372 = vmatpush1.bf16.msra.mxu0 %v4313
      %4373 = vmatprep.subr.bf16.mxu0 0
      %4374 = vmatpush1.bf16.msra.mxu0 %v4314
      %4375 = vmatprep.subr.bf16.mxu0 0
      %4376 = vmatpush1.bf16.msra.mxu0 0
      %4377 = vmatprep.subr.bf16.mxu0 0
      %4378 = vmatpush1.bf16.msra.mxu0 0
      %4379 = vmatprep.subr.bf16.mxu0 0
      %4380 = vmatpush1.bf16.msra.mxu0 0
      %4381 = vmatprep.subr.bf16.mxu0 0
      %4382 = vmatpush1.bf16.msra.mxu0 0
      %4383 = vmatprep.subr.bf16.mxu0 0
      %4384 = vmatpush1.bf16.msra.mxu0 0
      %4385 = vmatprep.subr.bf16.mxu0 0
      %4386 = vmatpush1.bf16.msra.mxu0 0
      %4387 = vmatprep.subr.bf16.mxu0 0
      %4388 = vmatpush1.bf16.msra.mxu0 0
      %4389 = vmatprep.subr.bf16.mxu0 0
      %4390 = vmatpush1.bf16.msra.mxu0 0
      %4391 = vmatprep.subr.bf16.mxu0 0
      %4392 = vmatpush1.bf16.msra.mxu0 0
      %4393 = vmatprep.subr.bf16.mxu0 0
      %4394 = vmatpush1.bf16.msra.mxu0 0
      %4395 = vmatprep.subr.bf16.mxu0 0
      %4396 = vmatpush1.bf16.msra.mxu0 0
      %4397 = vmatprep.subr.bf16.mxu0 0
      %4398 = vmatpush1.bf16.msra.mxu0 0
      %4399 = vmatprep.subr.bf16.mxu0 0
      %4400 = vmatpush1.bf16.msra.mxu0 0
      %4401 = vmatprep.subr.bf16.mxu0 0
      %4402 = vmatpush1.bf16.msra.mxu0 0
      %4403 = vmatprep.mubr.bf16.mxu0 0
      %4404 = vmatmul.mubr.bf16.gmra.mrb[0].mxu0 %v4318
      %v4405 = vpop.f32.mrb[0].mxu0
      %v4406 = vadd.f32 0.0, %v4405
      %v4407 = vpop.f32.mrb[0].mxu0
      %v4408 = vpop.f32.mrb[0].mxu0
      %v4409 = vadd.f32 0.0, %v4408
      %v4410 = vpop.f32.mrb[0].mxu0
      %4411 = vmatprep.mubr.bf16.mxu0 0
      %4412 = vmatmul.mubr.bf16.gmra.mrb[0].mxu0 %v4321
      %v4413 = vpop.f32.mrb[0].mxu0
      %v4414 = vadd.f32 0.0, %v4413
      %v4415 = vpop.f32.mrb[0].mxu0
      %v4416 = vpop.f32.mrb[0].mxu0
      %v4417 = vadd.f32 0.0, %v4416
      %v4418 = vpop.f32.mrb[0].mxu0
      %4419 = vmatprep.mubr.bf16.mxu0 0
      %4420 = vmatmul.mubr.bf16.gmra.mrb[0].mxu0 %v4324
      %v4421 = vpop.f32.mrb[0].mxu0
      %v4422 = vadd.f32 0.0, %v4421
      %v4423 = vpop.f32.mrb[0].mxu0
      %v4424 = vpop.f32.mrb[0].mxu0
      %v4425 = vadd.f32 0.0, %v4424
      %v4426 = vpop.f32.mrb[0].mxu0
      %4427 = vmatprep.mubr.bf16.mxu0 0
      %4428 = vmatmul.mubr.bf16.gmra.mrb[0].mxu0 %v4327
      %v4429 = vpop.f32.mrb[0].mxu0
      %v4430 = vadd.f32 0.0, %v4429
      %v4431 = vpop.f32.mrb[0].mxu0
      %v4432 = vpop.f32.mrb[0].mxu0
      %v4433 = vadd.f32 0.0, %v4432
      %v4434 = vpop.f32.mrb[0].mxu0
      %4435 = vmatprep.mubr.bf16.mxu0 0
      %4436 = vmatmul.mubr.bf16.gmra.mrb[0].mxu0 %v4330
      %v4437 = vpop.f32.mrb[0].mxu0
      %v4438 = vadd.f32 0.0, %v4437
      %v4439 = vpop.f32.mrb[0].mxu0
      %v4440 = vpop.f32.mrb[0].mxu0
      %v4441 = vadd.f32 0.0, %v4440
      %v4442 = vpop.f32.mrb[0].mxu0
      %4443 = vmatprep.mubr.bf16.mxu0 0
      %4444 = vmatmul.mubr.bf16.gmra.mrb[0].mxu0 %v4333
      %v4445 = vpop.f32.mrb[0].mxu0
      %v4446 = vadd.f32 0.0, %v4445
      %v4447 = vpop.f32.mrb[0].mxu0
      %v4448 = vpop.f32.mrb[0].mxu0
      %v4449 = vadd.f32 0.0, %v4448
      %v4450 = vpop.f32.mrb[0].mxu0
      %4451 = vmatprep.mubr.bf16.mxu0 0
      %4452 = vmatmul.mubr.bf16.gmra.mrb[0].mxu0 %v4336
      %v4453 = vpop.f32.mrb[0].mxu0
      %v4454 = vadd.f32 0.0, %v4453
      %v4455 = vpop.f32.mrb[0].mxu0
      %v4456 = vpop.f32.mrb[0].mxu0
      %v4457 = vadd.f32 0.0, %v4456
      %v4458 = vpop.f32.mrb[0].mxu0
      %4459 = vmatprep.mubr.bf16.mxu0 0
      %4460 = vmatmul.mubr.bf16.gmra.mrb[0].mxu0 %v4339
      %v4461 = vpop.f32.mrb[0].mxu0
      %v4462 = vadd.f32 0.0, %v4461
      %v4463 = vpop.f32.mrb[0].mxu0
      %v4464 = vpop.f32.mrb[0].mxu0
      %v4465 = vadd.f32 0.0, %v4464
      %v4466 = vpop.f32.mrb[0].mxu0
      %4467 = vmatprep.mubr.bf16.mxu0 0
      %4468 = vmatmul.mubr.bf16.gmra.mrb[0].mxu0 %v4342
      %v4469 = vpop.f32.mrb[0].mxu0
      %v4470 = vadd.f32 0.0, %v4469
      %v4471 = vpop.f32.mrb[0].mxu0
      %v4472 = vpop.f32.mrb[0].mxu0
      %v4473 = vadd.f32 0.0, %v4472
      %v4474 = vpop.f32.mrb[0].mxu0
      %4475 = vmatprep.mubr.bf16.mxu0 0
      %4476 = vmatmul.mubr.bf16.gmra.mrb[0].mxu0 %v4345
      %v4477 = vpop.f32.mrb[0].mxu0
      %v4478 = vadd.f32 0.0, %v4477
      %v4479 = vpop.f32.mrb[0].mxu0
      %v4480 = vpop.f32.mrb[0].mxu0
      %v4481 = vadd.f32 0.0, %v4480
      %v4482 = vpop.f32.mrb[0].mxu0
      %4483 = vmatprep.mubr.bf16.mxu0 0
      %4484 = vmatmul.mubr.bf16.gmra.mrb[0].mxu0 %v4348
      %v4485 = vpop.f32.mrb[0].mxu0
      %v4486 = vadd.f32 0.0, %v4485
      %v4487 = vpop.f32.mrb[0].mxu0
      %v4488 = vpop.f32.mrb[0].mxu0
      %v4489 = vadd.f32 0.0, %v4488
      %v4490 = vpop.f32.mrb[0].mxu0
      %4491 = vmatprep.mubr.bf16.mxu0 0
      %4492 = vmatmul.mubr.bf16.gmra.mrb[0].mxu0 %v4351
      %v4493 = vpop.f32.mrb[0].mxu0
      %v4494 = vadd.f32 0.0, %v4493
      %v4495 = vpop.f32.mrb[0].mxu0
      %v4496 = vpop.f32.mrb[0].mxu0
      %v4497 = vadd.f32 0.0, %v4496
      %v4498 = vpop.f32.mrb[0].mxu0
      %4499 = vmatprep.mubr.bf16.mxu0 0
      %4500 = vmatmul.mubr.bf16.gmra.mrb[0].mxu0 %v4354
      %v4501 = vpop.f32.mrb[0].mxu0
      %v4502 = vadd.f32 0.0, %v4501
      %v4503 = vpop.f32.mrb[0].mxu0
      %v4504 = vpop.f32.mrb[0].mxu0
      %v4505 = vadd.f32 0.0, %v4504
      %v4506 = vpop.f32.mrb[0].mxu0
      %4507 = vmatprep.mubr.bf16.mxu0 0
      %4508 = vmatmul.mubr.bf16.gmra.mrb[0].mxu0 %v4357
      %v4509 = vpop.f32.mrb[0].mxu0
      %v4510 = vadd.f32 0.0, %v4509
      %v4511 = vpop.f32.mrb[0].mxu0
      %v4512 = vpop.f32.mrb[0].mxu0
      %v4513 = vadd.f32 0.0, %v4512
      %v4514 = vpop.f32.mrb[0].mxu0
      %4515 = vmatprep.mubr.bf16.mxu0 0
      %4516 = vmatmul.mubr.bf16.gmra.mrb[0].mxu0 %v4360
      %v4517 = vpop.f32.mrb[0].mxu0
      %v4518 = vadd.f32 0.0, %v4517
      %v4519 = vpop.f32.mrb[0].mxu0
      %v4520 = vpop.f32.mrb[0].mxu0
      %v4521 = vadd.f32 0.0, %v4520
      %v4522 = vpop.f32.mrb[0].mxu0
      %4523 = vmatprep.mubr.bf16.mxu0 0
      %4524 = vmatmul.mubr.bf16.gmra.mrb[0].mxu0 %v4363
      %v4525 = vpop.f32.mrb[0].mxu0
      %v4526 = vadd.f32 0.0, %v4525
      %v4527 = vpop.f32.mrb[0].mxu0
      %v4528 = vpop.f32.mrb[0].mxu0
      %v4529 = vadd.f32 0.0, %v4528
      %v4530 = vpop.f32.mrb[0].mxu0
      %4531 = vmatprep.mubr.bf16.mxu0 0
      %4532 = vmatmul.mubr.bf16.gmra.mrb[0].mxu0 %v4366
      %v4533 = vpop.f32.mrb[0].mxu0
      %v4534 = vadd.f32 0.0, %v4533
      %v4535 = vpop.f32.mrb[0].mxu0
      %v4536 = vpop.f32.mrb[0].mxu0
      %v4537 = vadd.f32 0.0, %v4536
      %v4538 = vpop.f32.mrb[0].mxu0
      %4539 = vmatprep.mubr.bf16.mxu0 0
      %4540 = vmatmul.mubr.bf16.gmra.mrb[0].mxu0 %v4369
      %v4541 = vpop.f32.mrb[0].mxu0
      %v4542 = vadd.f32 0.0, %v4541
      %v4543 = vpop.f32.mrb[0].mxu0
      %v4544 = vpop.f32.mrb[0].mxu0
      %v4545 = vadd.f32 0.0, %v4544
      %v4546 = vpop.f32.mrb[0].mxu0
      %4547 = vdwg.mxu0
      %v4549 = vshrl.u32 %v4220, 16
      %v4551 = vrot.slane %v4549, 2
      %v4552 = vshll.u32 %v4220, 16
      %v4554 = vrot.slane %v4552, 3
      %v4555 = vor.u32 %v4551, %v4554
      %v4557 = vshrl.u32 %v4221, 16
      %v4559 = vrot.slane %v4557, 2
      %v4560 = vshll.u32 %v4221, 16
      %v4562 = vrot.slane %v4560, 3
      %v4563 = vor.u32 %v4559, %v4562
      %v4564 = vsel %vm3036, %v4555, %v4563
      %v4566 = vshrl.u32 %v4222, 16
      %v4568 = vrot.slane %v4566, 2
      %v4569 = vshll.u32 %v4222, 16
      %v4571 = vrot.slane %v4569, 3
      %v4572 = vor.u32 %v4568, %v4571
      %v4573 = vsel %vm3036, %v4563, %v4572
      %v4575 = vshrl.u32 %v4223, 16
      %v4577 = vrot.slane %v4575, 2
      %v4578 = vshll.u32 %v4223, 16
      %v4580 = vrot.slane %v4578, 3
      %v4581 = vor.u32 %v4577, %v4580
      %v4582 = vsel %vm3036, %v4572, %v4581
      %v4584 = vshrl.u32 %v4224, 16
      %v4586 = vrot.slane %v4584, 2
      %v4587 = vshll.u32 %v4224, 16
      %v4589 = vrot.slane %v4587, 3
      %v4590 = vor.u32 %v4586, %v4589
      %v4591 = vsel %vm3036, %v4581, %v4590
      %v4593 = vshrl.u32 %v4225, 16
      %v4595 = vrot.slane %v4593, 2
      %v4596 = vshll.u32 %v4225, 16
      %v4598 = vrot.slane %v4596, 3
      %v4599 = vor.u32 %v4595, %v4598
      %v4600 = vsel %vm3036, %v4590, %v4599
      %v4602 = vshrl.u32 %v4226, 16
      %v4604 = vrot.slane %v4602, 2
      %v4605 = vshll.u32 %v4226, 16
      %v4607 = vrot.slane %v4605, 3
      %v4608 = vor.u32 %v4604, %v4607
      %v4609 = vsel %vm3036, %v4599, %v4608
      %v4611 = vshrl.u32 %v4227, 16
      %v4613 = vrot.slane %v4611, 2
      %v4614 = vshll.u32 %v4227, 16
      %v4616 = vrot.slane %v4614, 3
      %v4617 = vor.u32 %v4613, %v4616
      %v4618 = vsel %vm3036, %v4608, %v4617
      %v4620 = vshrl.u32 %v4228, 16
      %v4622 = vrot.slane %v4620, 2
      %v4623 = vshll.u32 %v4228, 16
      %v4625 = vrot.slane %v4623, 3
      %v4626 = vor.u32 %v4622, %v4625
      %v4627 = vsel %vm3036, %v4617, %v4626
      %v4629 = vshrl.u32 %v4229, 16
      %v4631 = vrot.slane %v4629, 2
      %v4632 = vshll.u32 %v4229, 16
      %v4634 = vrot.slane %v4632, 3
      %v4635 = vor.u32 %v4631, %v4634
      %v4636 = vsel %vm3036, %v4626, %v4635
      %v4638 = vshrl.u32 %v4230, 16
      %v4640 = vrot.slane %v4638, 2
      %v4641 = vshll.u32 %v4230, 16
      %v4643 = vrot.slane %v4641, 3
      %v4644 = vor.u32 %v4640, %v4643
      %v4645 = vsel %vm3036, %v4635, %v4644
      %v4647 = vshrl.u32 %v4231, 16
      %v4649 = vrot.slane %v4647, 2
      %v4650 = vshll.u32 %v4231, 16
      %v4652 = vrot.slane %v4650, 3
      %v4653 = vor.u32 %v4649, %v4652
      %v4654 = vsel %vm3036, %v4644, %v4653
      %v4656 = vshrl.u32 %v4232, 16
      %v4658 = vrot.slane %v4656, 2
      %v4659 = vshll.u32 %v4232, 16
      %v4661 = vrot.slane %v4659, 3
      %v4662 = vor.u32 %v4658, %v4661
      %v4663 = vsel %vm3036, %v4653, %v4662
      %v4665 = vshrl.u32 %v4233, 16
      %v4667 = vrot.slane %v4665, 2
      %v4668 = vshll.u32 %v4233, 16
      %v4670 = vrot.slane %v4668, 3
      %v4671 = vor.u32 %v4667, %v4670
      %v4672 = vsel %vm3036, %v4662, %v4671
      %v4674 = vshrl.u32 %v4234, 16
      %v4676 = vrot.slane %v4674, 2
      %v4677 = vshll.u32 %v4234, 16
      %v4679 = vrot.slane %v4677, 3
      %v4680 = vor.u32 %v4676, %v4679
      %v4681 = vsel %vm3036, %v4671, %v4680
      %v4683 = vshrl.u32 %v4235, 16
      %v4685 = vrot.slane %v4683, 2
      %v4686 = vshll.u32 %v4235, 16
      %v4688 = vrot.slane %v4686, 3
      %v4689 = vor.u32 %v4685, %v4688
      %v4690 = vsel %vm3036, %v4680, %v4689
      %v4692 = vshrl.u32 %v4236, 16
      %v4694 = vrot.slane %v4692, 2
      %v4695 = vshll.u32 %v4236, 16
      %v4697 = vrot.slane %v4695, 3
      %v4698 = vor.u32 %v4694, %v4697
      %v4699 = vsel %vm3036, %v4689, %v4698
      %v4701 = vshrl.u32 %v4237, 16
      %v4703 = vrot.slane %v4701, 2
      %v4704 = vshll.u32 %v4237, 16
      %v4706 = vrot.slane %v4704, 3
      %v4707 = vor.u32 %v4703, %v4706
      %v4708 = vsel %vm3036, %v4698, %v4707
      %v4710 = vshrl.u32 %v4238, 16
      %v4712 = vrot.slane %v4710, 2
      %v4713 = vshll.u32 %v4238, 16
      %v4715 = vrot.slane %v4713, 3
      %v4716 = vor.u32 %v4712, %v4715
      %v4717 = vsel %vm3036, %v4707, %v4716
      %v4722 = vunpack.c.l.b16 %v4239
      %v4723 = vunpack.c.l.b16 %v4240
      %v4724 = vunpack.c.l.b16 %v4241
      %v4725 = vunpack.c.l.b16 %v4242
      %v4726 = vpack.c.b16 %v4723, %v4722
      %v4727 = vpack.c.b16 %v4725, %v4724
      %v4731 = vsel %vm3870, %v4564, 0
      %v4734 = vsel %vm3870, %v4573, 0
      %v4737 = vsel %vm3870, %v4582, 0
      %v4740 = vsel %vm3870, %v4591, 0
      %v4743 = vsel %vm3870, %v4600, 0
      %v4746 = vsel %vm3870, %v4609, 0
      %v4749 = vsel %vm3870, %v4618, 0
      %v4752 = vsel %vm3870, %v4627, 0
      %v4755 = vsel %vm3870, %v4636, 0
      %v4758 = vsel %vm3870, %v4645, 0
      %v4761 = vsel %vm3870, %v4654, 0
      %v4764 = vsel %vm3870, %v4663, 0
      %v4767 = vsel %vm3870, %v4672, 0
      %v4770 = vsel %vm3870, %v4681, 0
      %v4773 = vsel %vm3870, %v4690, 0
      %v4776 = vsel %vm3870, %v4699, 0
      %v4779 = vsel %vm3870, %v4708, 0
      %v4782 = vsel %vm3870, %v4717, 0
      %4784 = vmatprep.subr.bf16.mxu0 0
      %4785 = vmatpush1.bf16.msra.mxu0 %v4726
      %4786 = vmatprep.subr.bf16.mxu0 0
      %4787 = vmatpush1.bf16.msra.mxu0 %v4727
      %4788 = vmatprep.subr.bf16.mxu0 0
      %4789 = vmatpush1.bf16.msra.mxu0 0
      %4790 = vmatprep.subr.bf16.mxu0 0
      %4791 = vmatpush1.bf16.msra.mxu0 0
      %4792 = vmatprep.subr.bf16.mxu0 0
      %4793 = vmatpush1.bf16.msra.mxu0 0
      %4794 = vmatprep.subr.bf16.mxu0 0
      %4795 = vmatpush1.bf16.msra.mxu0 0
      %4796 = vmatprep.subr.bf16.mxu0 0
      %4797 = vmatpush1.bf16.msra.mxu0 0
      %4798 = vmatprep.subr.bf16.mxu0 0
      %4799 = vmatpush1.bf16.msra.mxu0 0
      %4800 = vmatprep.subr.bf16.mxu0 0
      %4801 = vmatpush1.bf16.msra.mxu0 0
      %4802 = vmatprep.subr.bf16.mxu0 0
      %4803 = vmatpush1.bf16.msra.mxu0 0
      %4804 = vmatprep.subr.bf16.mxu0 0
      %4805 = vmatpush1.bf16.msra.mxu0 0
      %4806 = vmatprep.subr.bf16.mxu0 0
      %4807 = vmatpush1.bf16.msra.mxu0 0
      %4808 = vmatprep.subr.bf16.mxu0 0
      %4809 = vmatpush1.bf16.msra.mxu0 0
      %4810 = vmatprep.subr.bf16.mxu0 0
      %4811 = vmatpush1.bf16.msra.mxu0 0
      %4812 = vmatprep.subr.bf16.mxu0 0
      %4813 = vmatpush1.bf16.msra.mxu0 0
      %4814 = vmatprep.subr.bf16.mxu0 0
      %4815 = vmatpush1.bf16.msra.mxu0 0
      %4816 = vmatprep.mubr.bf16.mxu0 0
      %4817 = vmatmul.mubr.bf16.gmra.mrb[0].mxu0 %v4731
      %v4818 = vpop.f32.mrb[0].mxu0
      %v4819 = vadd.f32 %v4406, %v4818
      %v4820 = vpop.f32.mrb[0].mxu0
      %v4821 = vpop.f32.mrb[0].mxu0
      %v4822 = vadd.f32 %v4409, %v4821
      %v4823 = vpop.f32.mrb[0].mxu0
      %4824 = vmatprep.mubr.bf16.mxu0 0
      %4825 = vmatmul.mubr.bf16.gmra.mrb[0].mxu0 %v4734
      %v4826 = vpop.f32.mrb[0].mxu0
      %v4827 = vadd.f32 %v4414, %v4826
      %v4828 = vpop.f32.mrb[0].mxu0
      %v4829 = vpop.f32.mrb[0].mxu0
      %v4830 = vadd.f32 %v4417, %v4829
      %v4831 = vpop.f32.mrb[0].mxu0
      %4832 = vmatprep.mubr.bf16.mxu0 0
      %4833 = vmatmul.mubr.bf16.gmra.mrb[0].mxu0 %v4737
      %v4834 = vpop.f32.mrb[0].mxu0
      %v4835 = vadd.f32 %v4422, %v4834
      %v4836 = vpop.f32.mrb[0].mxu0
      %v4837 = vpop.f32.mrb[0].mxu0
      %v4838 = vadd.f32 %v4425, %v4837
      %v4839 = vpop.f32.mrb[0].mxu0
      %4840 = vmatprep.mubr.bf16.mxu0 0
      %4841 = vmatmul.mubr.bf16.gmra.mrb[0].mxu0 %v4740
      %v4842 = vpop.f32.mrb[0].mxu0
      %v4843 = vadd.f32 %v4430, %v4842
      %v4844 = vpop.f32.mrb[0].mxu0
      %v4845 = vpop.f32.mrb[0].mxu0
      %v4846 = vadd.f32 %v4433, %v4845
      %v4847 = vpop.f32.mrb[0].mxu0
      %4848 = vmatprep.mubr.bf16.mxu0 0
      %4849 = vmatmul.mubr.bf16.gmra.mrb[0].mxu0 %v4743
      %v4850 = vpop.f32.mrb[0].mxu0
      %v4851 = vadd.f32 %v4438, %v4850
      %v4852 = vpop.f32.mrb[0].mxu0
      %v4853 = vpop.f32.mrb[0].mxu0
      %v4854 = vadd.f32 %v4441, %v4853
      %v4855 = vpop.f32.mrb[0].mxu0
      %4856 = vmatprep.mubr.bf16.mxu0 0
      %4857 = vmatmul.mubr.bf16.gmra.mrb[0].mxu0 %v4746
      %v4858 = vpop.f32.mrb[0].mxu0
      %v4859 = vadd.f32 %v4446, %v4858
      %v4860 = vpop.f32.mrb[0].mxu0
      %v4861 = vpop.f32.mrb[0].mxu0
      %v4862 = vadd.f32 %v4449, %v4861
      %v4863 = vpop.f32.mrb[0].mxu0
      %4864 = vmatprep.mubr.bf16.mxu0 0
      %4865 = vmatmul.mubr.bf16.gmra.mrb[0].mxu0 %v4749
      %v4866 = vpop.f32.mrb[0].mxu0
      %v4867 = vadd.f32 %v4454, %v4866
      %v4868 = vpop.f32.mrb[0].mxu0
      %v4869 = vpop.f32.mrb[0].mxu0
      %v4870 = vadd.f32 %v4457, %v4869
      %v4871 = vpop.f32.mrb[0].mxu0
      %4872 = vmatprep.mubr.bf16.mxu0 0
      %4873 = vmatmul.mubr.bf16.gmra.mrb[0].mxu0 %v4752
      %v4874 = vpop.f32.mrb[0].mxu0
      %v4875 = vadd.f32 %v4462, %v4874
      %v4876 = vpop.f32.mrb[0].mxu0
      %v4877 = vpop.f32.mrb[0].mxu0
      %v4878 = vadd.f32 %v4465, %v4877
      %v4879 = vpop.f32.mrb[0].mxu0
      %4880 = vmatprep.mubr.bf16.mxu0 0
      %4881 = vmatmul.mubr.bf16.gmra.mrb[0].mxu0 %v4755
      %v4882 = vpop.f32.mrb[0].mxu0
      %v4883 = vadd.f32 %v4470, %v4882
      %v4884 = vpop.f32.mrb[0].mxu0
      %v4885 = vpop.f32.mrb[0].mxu0
      %v4886 = vadd.f32 %v4473, %v4885
      %v4887 = vpop.f32.mrb[0].mxu0
      %4888 = vmatprep.mubr.bf16.mxu0 0
      %4889 = vmatmul.mubr.bf16.gmra.mrb[0].mxu0 %v4758
      %v4890 = vpop.f32.mrb[0].mxu0
      %v4891 = vadd.f32 %v4478, %v4890
      %v4892 = vpop.f32.mrb[0].mxu0
      %v4893 = vpop.f32.mrb[0].mxu0
      %v4894 = vadd.f32 %v4481, %v4893
      %v4895 = vpop.f32.mrb[0].mxu0
      %4896 = vmatprep.mubr.bf16.mxu0 0
      %4897 = vmatmul.mubr.bf16.gmra.mrb[0].mxu0 %v4761
      %v4898 = vpop.f32.mrb[0].mxu0
      %v4899 = vadd.f32 %v4486, %v4898
      %v4900 = vpop.f32.mrb[0].mxu0
      %v4901 = vpop.f32.mrb[0].mxu0
      %v4902 = vadd.f32 %v4489, %v4901
      %v4903 = vpop.f32.mrb[0].mxu0
      %4904 = vmatprep.mubr.bf16.mxu0 0
      %4905 = vmatmul.mubr.bf16.gmra.mrb[0].mxu0 %v4764
      %v4906 = vpop.f32.mrb[0].mxu0
      %v4907 = vadd.f32 %v4494, %v4906
      %v4908 = vpop.f32.mrb[0].mxu0
      %v4909 = vpop.f32.mrb[0].mxu0
      %v4910 = vadd.f32 %v4497, %v4909
      %v4911 = vpop.f32.mrb[0].mxu0
      %4912 = vmatprep.mubr.bf16.mxu0 0
      %4913 = vmatmul.mubr.bf16.gmra.mrb[0].mxu0 %v4767
      %v4914 = vpop.f32.mrb[0].mxu0
      %v4915 = vadd.f32 %v4502, %v4914
      %v4916 = vpop.f32.mrb[0].mxu0
      %v4917 = vpop.f32.mrb[0].mxu0
      %v4918 = vadd.f32 %v4505, %v4917
      %v4919 = vpop.f32.mrb[0].mxu0
      %4920 = vmatprep.mubr.bf16.mxu0 0
      %4921 = vmatmul.mubr.bf16.gmra.mrb[0].mxu0 %v4770
      %v4922 = vpop.f32.mrb[0].mxu0
      %v4923 = vadd.f32 %v4510, %v4922
      %v4924 = vpop.f32.mrb[0].mxu0
      %v4925 = vpop.f32.mrb[0].mxu0
      %v4926 = vadd.f32 %v4513, %v4925
      %v4927 = vpop.f32.mrb[0].mxu0
      %4928 = vmatprep.mubr.bf16.mxu0 0
      %4929 = vmatmul.mubr.bf16.gmra.mrb[0].mxu0 %v4773
      %v4930 = vpop.f32.mrb[0].mxu0
      %v4931 = vadd.f32 %v4518, %v4930
      %v4932 = vpop.f32.mrb[0].mxu0
      %v4933 = vpop.f32.mrb[0].mxu0
      %v4934 = vadd.f32 %v4521, %v4933
      %v4935 = vpop.f32.mrb[0].mxu0
      %4936 = vmatprep.mubr.bf16.mxu0 0
      %4937 = vmatmul.mubr.bf16.gmra.mrb[0].mxu0 %v4776
      %v4938 = vpop.f32.mrb[0].mxu0
      %v4939 = vadd.f32 %v4526, %v4938
      %v4940 = vpop.f32.mrb[0].mxu0
      %v4941 = vpop.f32.mrb[0].mxu0
      %v4942 = vadd.f32 %v4529, %v4941
      %v4943 = vpop.f32.mrb[0].mxu0
      %4944 = vmatprep.mubr.bf16.mxu0 0
      %4945 = vmatmul.mubr.bf16.gmra.mrb[0].mxu0 %v4779
      %v4946 = vpop.f32.mrb[0].mxu0
      %v4947 = vadd.f32 %v4534, %v4946
      %v4948 = vpop.f32.mrb[0].mxu0
      %v4949 = vpop.f32.mrb[0].mxu0
      %v4950 = vadd.f32 %v4537, %v4949
      %v4951 = vpop.f32.mrb[0].mxu0
      %4952 = vmatprep.mubr.bf16.mxu0 0
      %4953 = vmatmul.mubr.bf16.gmra.mrb[0].mxu0 %v4782
      %v4954 = vpop.f32.mrb[0].mxu0
      %v4955 = vadd.f32 %v4542, %v4954
      %v4956 = vpop.f32.mrb[0].mxu0
      %v4957 = vpop.f32.mrb[0].mxu0
      %v4958 = vadd.f32 %v4545, %v4957
      %v4959 = vpop.f32.mrb[0].mxu0
      %4960 = vdwg.mxu0
      %v4961 = vld [vmem:[#allocation2 + $0x90] sm:$0xf]
      %s4962 = scalar_lea.vmem %s4, 32
      %v4963 = vld [vmem:[%s4962] sm:$0xf]
      %v4964 = vld [vmem:[%s4962 + $0x4] sm:$0xf]
      %v4965 = vld [vmem:[%s4962 + $0x8] sm:$0xf]
      %v4966 = vld [vmem:[%s4962 + $0xc] sm:$0xf]
      %vm4967 = vsmask.f32 4352
      %v4969 = vshrl.u32 %v4243, 16
      %v4971 = vrot.slane %v4969, 3
      %v4972 = vshll.u32 %v4243, 16
      %v4974 = vrot.slane %v4972, 4
      %v4975 = vor.u32 %v4971, %v4974
      %v4976 = vrot.slane %v4557, 3
      %v4977 = vrot.slane %v4560, 4
      %v4978 = vor.u32 %v4976, %v4977
      %v4979 = vsel %vm4967, %v4975, %v4978
      %v4980 = vrot.slane %v4566, 3
      %v4981 = vrot.slane %v4569, 4
      %v4982 = vor.u32 %v4980, %v4981
      %v4983 = vsel %vm4967, %v4978, %v4982
      %v4984 = vrot.slane %v4575, 3
      %v4985 = vrot.slane %v4578, 4
      %v4986 = vor.u32 %v4984, %v4985
      %v4987 = vsel %vm4967, %v4982, %v4986
      %v4988 = vrot.slane %v4584, 3
      %v4989 = vrot.slane %v4587, 4
      %v4990 = vor.u32 %v4988, %v4989
      %v4991 = vsel %vm4967, %v4986, %v4990
      %v4992 = vrot.slane %v4593, 3
      %v4993 = vrot.slane %v4596, 4
      %v4994 = vor.u32 %v4992, %v4993
      %v4995 = vsel %vm4967, %v4990, %v4994
      %v4996 = vrot.slane %v4602, 3
      %v4997 = vrot.slane %v4605, 4
      %v4998 = vor.u32 %v4996, %v4997
      %v4999 = vsel %vm4967, %v4994, %v4998
      %v5000 = vrot.slane %v4611, 3
      %v5001 = vrot.slane %v4614, 4
      %v5002 = vor.u32 %v5000, %v5001
      %v5003 = vsel %vm4967, %v4998, %v5002
      %v5004 = vrot.slane %v4620, 3
      %v5005 = vrot.slane %v4623, 4
      %v5006 = vor.u32 %v5004, %v5005
      %v5007 = vsel %vm4967, %v5002, %v5006
      %v5008 = vrot.slane %v4629, 3
      %v5009 = vrot.slane %v4632, 4
      %v5010 = vor.u32 %v5008, %v5009
      %v5011 = vsel %vm4967, %v5006, %v5010
      %v5012 = vrot.slane %v4638, 3
      %v5013 = vrot.slane %v4641, 4
      %v5014 = vor.u32 %v5012, %v5013
      %v5015 = vsel %vm4967, %v5010, %v5014
      %v5016 = vrot.slane %v4647, 3
      %v5017 = vrot.slane %v4650, 4
      %v5018 = vor.u32 %v5016, %v5017
      %v5019 = vsel %vm4967, %v5014, %v5018
      %v5020 = vrot.slane %v4656, 3
      %v5021 = vrot.slane %v4659, 4
      %v5022 = vor.u32 %v5020, %v5021
      %v5023 = vsel %vm4967, %v5018, %v5022
      %v5024 = vrot.slane %v4665, 3
      %v5025 = vrot.slane %v4668, 4
      %v5026 = vor.u32 %v5024, %v5025
      %v5027 = vsel %vm4967, %v5022, %v5026
      %v5028 = vrot.slane %v4674, 3
      %v5029 = vrot.slane %v4677, 4
      %v5030 = vor.u32 %v5028, %v5029
      %v5031 = vsel %vm4967, %v5026, %v5030
      %v5032 = vrot.slane %v4683, 3
      %v5033 = vrot.slane %v4686, 4
      %v5034 = vor.u32 %v5032, %v5033
      %v5035 = vsel %vm4967, %v5030, %v5034
      %v5036 = vrot.slane %v4692, 3
      %v5037 = vrot.slane %v4695, 4
      %v5038 = vor.u32 %v5036, %v5037
      %v5039 = vsel %vm4967, %v5034, %v5038
      %v5040 = vrot.slane %v4701, 3
      %v5041 = vrot.slane %v4704, 4
      %v5042 = vor.u32 %v5040, %v5041
      %v5043 = vsel %vm4967, %v5038, %v5042
      %v5045 = vshrl.u32 %v4961, 16
      %v5047 = vrot.slane %v5045, 3
      %v5048 = vshll.u32 %v4961, 16
      %v5050 = vrot.slane %v5048, 4
      %v5051 = vor.u32 %v5047, %v5050
      %v5052 = vsel %vm4967, %v5042, %v5051
      %v5057 = vunpack.c.l.b16 %v4963
      %v5058 = vunpack.c.l.b16 %v4964
      %v5059 = vunpack.c.l.b16 %v4965
      %v5060 = vunpack.c.l.b16 %v4966
      %v5061 = vpack.c.b16 %v5058, %v5057
      %v5062 = vpack.c.b16 %v5060, %v5059
      %v5066 = vsel %vm3870, %v4979, 0
      %v5069 = vsel %vm3870, %v4983, 0
      %v5072 = vsel %vm3870, %v4987, 0
      %v5075 = vsel %vm3870, %v4991, 0
      %v5078 = vsel %vm3870, %v4995, 0
      %v5081 = vsel %vm3870, %v4999, 0
      %v5084 = vsel %vm3870, %v5003, 0
      %v5087 = vsel %vm3870, %v5007, 0
      %v5090 = vsel %vm3870, %v5011, 0
      %v5093 = vsel %vm3870, %v5015, 0
      %v5096 = vsel %vm3870, %v5019, 0
      %v5099 = vsel %vm3870, %v5023, 0
      %v5102 = vsel %vm3870, %v5027, 0
      %v5105 = vsel %vm3870, %v5031, 0
      %v5108 = vsel %vm3870, %v5035, 0
      %v5111 = vsel %vm3870, %v5039, 0
      %v5114 = vsel %vm3870, %v5043, 0
      %v5117 = vsel %vm3870, %v5052, 0
      %5119 = vmatprep.subr.bf16.mxu0 0
      %5120 = vmatpush1.bf16.msra.mxu0 %v5061
      %5121 = vmatprep.subr.bf16.mxu0 0
      %5122 = vmatpush1.bf16.msra.mxu0 %v5062
      %5123 = vmatprep.subr.bf16.mxu0 0
      %5124 = vmatpush1.bf16.msra.mxu0 0
      %5125 = vmatprep.subr.bf16.mxu0 0
      %5126 = vmatpush1.bf16.msra.mxu0 0
      %5127 = vmatprep.subr.bf16.mxu0 0
      %5128 = vmatpush1.bf16.msra.mxu0 0
      %5129 = vmatprep.subr.bf16.mxu0 0
      %5130 = vmatpush1.bf16.msra.mxu0 0
      %5131 = vmatprep.subr.bf16.mxu0 0
      %5132 = vmatpush1.bf16.msra.mxu0 0
      %5133 = vmatprep.subr.bf16.mxu0 0
      %5134 = vmatpush1.bf16.msra.mxu0 0
      %5135 = vmatprep.subr.bf16.mxu0 0
      %5136 = vmatpush1.bf16.msra.mxu0 0
      %5137 = vmatprep.subr.bf16.mxu0 0
      %5138 = vmatpush1.bf16.msra.mxu0 0
      %5139 = vmatprep.subr.bf16.mxu0 0
      %5140 = vmatpush1.bf16.msra.mxu0 0
      %5141 = vmatprep.subr.bf16.mxu0 0
      %5142 = vmatpush1.bf16.msra.mxu0 0
      %5143 = vmatprep.subr.bf16.mxu0 0
      %5144 = vmatpush1.bf16.msra.mxu0 0
      %5145 = vmatprep.subr.bf16.mxu0 0
      %5146 = vmatpush1.bf16.msra.mxu0 0
      %5147 = vmatprep.subr.bf16.mxu0 0
      %5148 = vmatpush1.bf16.msra.mxu0 0
      %5149 = vmatprep.subr.bf16.mxu0 0
      %5150 = vmatpush1.bf16.msra.mxu0 0
      %5151 = vmatprep.mubr.bf16.mxu0 0
      %5152 = vmatmul.mubr.bf16.gmra.mrb[0].mxu0 %v5066
      %v5153 = vpop.f32.mrb[0].mxu0
      %v5154 = vadd.f32 0.0, %v5153
      %v5155 = vpop.f32.mrb[0].mxu0
      %v5156 = vpop.f32.mrb[0].mxu0
      %v5157 = vadd.f32 0.0, %v5156
      %v5158 = vpop.f32.mrb[0].mxu0
      %5159 = vmatprep.mubr.bf16.mxu0 0
      %5160 = vmatmul.mubr.bf16.gmra.mrb[0].mxu0 %v5069
      %v5161 = vpop.f32.mrb[0].mxu0
      %v5162 = vadd.f32 0.0, %v5161
      %v5163 = vpop.f32.mrb[0].mxu0
      %v5164 = vpop.f32.mrb[0].mxu0
      %v5165 = vadd.f32 0.0, %v5164
      %v5166 = vpop.f32.mrb[0].mxu0
      %5167 = vmatprep.mubr.bf16.mxu0 0
      %5168 = vmatmul.mubr.bf16.gmra.mrb[0].mxu0 %v5072
      %v5169 = vpop.f32.mrb[0].mxu0
      %v5170 = vadd.f32 0.0, %v5169
      %v5171 = vpop.f32.mrb[0].mxu0
      %v5172 = vpop.f32.mrb[0].mxu0
      %v5173 = vadd.f32 0.0, %v5172
      %v5174 = vpop.f32.mrb[0].mxu0
      %5175 = vmatprep.mubr.bf16.mxu0 0
      %5176 = vmatmul.mubr.bf16.gmra.mrb[0].mxu0 %v5075
      %v5177 = vpop.f32.mrb[0].mxu0
      %v5178 = vadd.f32 0.0, %v5177
      %v5179 = vpop.f32.mrb[0].mxu0
      %v5180 = vpop.f32.mrb[0].mxu0
      %v5181 = vadd.f32 0.0, %v5180
      %v5182 = vpop.f32.mrb[0].mxu0
      %5183 = vmatprep.mubr.bf16.mxu0 0
      %5184 = vmatmul.mubr.bf16.gmra.mrb[0].mxu0 %v5078
      %v5185 = vpop.f32.mrb[0].mxu0
      %v5186 = vadd.f32 0.0, %v5185
      %v5187 = vpop.f32.mrb[0].mxu0
      %v5188 = vpop.f32.mrb[0].mxu0
      %v5189 = vadd.f32 0.0, %v5188
      %v5190 = vpop.f32.mrb[0].mxu0
      %5191 = vmatprep.mubr.bf16.mxu0 0
      %5192 = vmatmul.mubr.bf16.gmra.mrb[0].mxu0 %v5081
      %v5193 = vpop.f32.mrb[0].mxu0
      %v5194 = vadd.f32 0.0, %v5193
      %v5195 = vpop.f32.mrb[0].mxu0
      %v5196 = vpop.f32.mrb[0].mxu0
      %v5197 = vadd.f32 0.0, %v5196
      %v5198 = vpop.f32.mrb[0].mxu0
      %5199 = vmatprep.mubr.bf16.mxu0 0
      %5200 = vmatmul.mubr.bf16.gmra.mrb[0].mxu0 %v5084
      %v5201 = vpop.f32.mrb[0].mxu0
      %v5202 = vadd.f32 0.0, %v5201
      %v5203 = vpop.f32.mrb[0].mxu0
      %v5204 = vpop.f32.mrb[0].mxu0
      %v5205 = vadd.f32 0.0, %v5204
      %v5206 = vpop.f32.mrb[0].mxu0
      %5207 = vmatprep.mubr.bf16.mxu0 0
      %5208 = vmatmul.mubr.bf16.gmra.mrb[0].mxu0 %v5087
      %v5209 = vpop.f32.mrb[0].mxu0
      %v5210 = vadd.f32 0.0, %v5209
      %v5211 = vpop.f32.mrb[0].mxu0
      %v5212 = vpop.f32.mrb[0].mxu0
      %v5213 = vadd.f32 0.0, %v5212
      %v5214 = vpop.f32.mrb[0].mxu0
      %5215 = vmatprep.mubr.bf16.mxu0 0
      %5216 = vmatmul.mubr.bf16.gmra.mrb[0].mxu0 %v5090
      %v5217 = vpop.f32.mrb[0].mxu0
      %v5218 = vadd.f32 0.0, %v5217
      %v5219 = vpop.f32.mrb[0].mxu0
      %v5220 = vpop.f32.mrb[0].mxu0
      %v5221 = vadd.f32 0.0, %v5220
      %v5222 = vpop.f32.mrb[0].mxu0
      %5223 = vmatprep.mubr.bf16.mxu0 0
      %5224 = vmatmul.mubr.bf16.gmra.mrb[0].mxu0 %v5093
      %v5225 = vpop.f32.mrb[0].mxu0
      %v5226 = vadd.f32 0.0, %v5225
      %v5227 = vpop.f32.mrb[0].mxu0
      %v5228 = vpop.f32.mrb[0].mxu0
      %v5229 = vadd.f32 0.0, %v5228
      %v5230 = vpop.f32.mrb[0].mxu0
      %5231 = vmatprep.mubr.bf16.mxu0 0
      %5232 = vmatmul.mubr.bf16.gmra.mrb[0].mxu0 %v5096
      %v5233 = vpop.f32.mrb[0].mxu0
      %v5234 = vadd.f32 0.0, %v5233
      %v5235 = vpop.f32.mrb[0].mxu0
      %v5236 = vpop.f32.mrb[0].mxu0
      %v5237 = vadd.f32 0.0, %v5236
      %v5238 = vpop.f32.mrb[0].mxu0
      %5239 = vmatprep.mubr.bf16.mxu0 0
      %5240 = vmatmul.mubr.bf16.gmra.mrb[0].mxu0 %v5099
      %v5241 = vpop.f32.mrb[0].mxu0
      %v5242 = vadd.f32 0.0, %v5241
      %v5243 = vpop.f32.mrb[0].mxu0
      %v5244 = vpop.f32.mrb[0].mxu0
      %v5245 = vadd.f32 0.0, %v5244
      %v5246 = vpop.f32.mrb[0].mxu0
      %5247 = vmatprep.mubr.bf16.mxu0 0
      %5248 = vmatmul.mubr.bf16.gmra.mrb[0].mxu0 %v5102
      %v5249 = vpop.f32.mrb[0].mxu0
      %v5250 = vadd.f32 0.0, %v5249
      %v5251 = vpop.f32.mrb[0].mxu0
      %v5252 = vpop.f32.mrb[0].mxu0
      %v5253 = vadd.f32 0.0, %v5252
      %v5254 = vpop.f32.mrb[0].mxu0
      %5255 = vmatprep.mubr.bf16.mxu0 0
      %5256 = vmatmul.mubr.bf16.gmra.mrb[0].mxu0 %v5105
      %v5257 = vpop.f32.mrb[0].mxu0
      %v5258 = vadd.f32 0.0, %v5257
      %v5259 = vpop.f32.mrb[0].mxu0
      %v5260 = vpop.f32.mrb[0].mxu0
      %v5261 = vadd.f32 0.0, %v5260
      %v5262 = vpop.f32.mrb[0].mxu0
      %5263 = vmatprep.mubr.bf16.mxu0 0
      %5264 = vmatmul.mubr.bf16.gmra.mrb[0].mxu0 %v5108
      %v5265 = vpop.f32.mrb[0].mxu0
      %v5266 = vadd.f32 0.0, %v5265
      %v5267 = vpop.f32.mrb[0].mxu0
      %v5268 = vpop.f32.mrb[0].mxu0
      %v5269 = vadd.f32 0.0, %v5268
      %v5270 = vpop.f32.mrb[0].mxu0
      %5271 = vmatprep.mubr.bf16.mxu0 0
      %5272 = vmatmul.mubr.bf16.gmra.mrb[0].mxu0 %v5111
      %v5273 = vpop.f32.mrb[0].mxu0
      %v5274 = vadd.f32 0.0, %v5273
      %v5275 = vpop.f32.mrb[0].mxu0
      %v5276 = vpop.f32.mrb[0].mxu0
      %v5277 = vadd.f32 0.0, %v5276
      %v5278 = vpop.f32.mrb[0].mxu0
      %5279 = vmatprep.mubr.bf16.mxu0 0
      %5280 = vmatmul.mubr.bf16.gmra.mrb[0].mxu0 %v5114
      %v5281 = vpop.f32.mrb[0].mxu0
      %v5282 = vadd.f32 0.0, %v5281
      %v5283 = vpop.f32.mrb[0].mxu0
      %v5284 = vpop.f32.mrb[0].mxu0
      %v5285 = vadd.f32 0.0, %v5284
      %v5286 = vpop.f32.mrb[0].mxu0
      %5287 = vmatprep.mubr.bf16.mxu0 0
      %5288 = vmatmul.mubr.bf16.gmra.mrb[0].mxu0 %v5117
      %v5289 = vpop.f32.mrb[0].mxu0
      %v5290 = vadd.f32 0.0, %v5289
      %v5291 = vpop.f32.mrb[0].mxu0
      %v5292 = vpop.f32.mrb[0].mxu0
      %v5293 = vadd.f32 0.0, %v5292
      %v5294 = vpop.f32.mrb[0].mxu0
      %5295 = vdwg.mxu0
      %v5296 = vadd.f32 %v4819, %v5154
      %v5297 = vadd.f32 %v4822, %v5157
      %v5298 = vadd.f32 %v4827, %v5162
      %v5299 = vadd.f32 %v4830, %v5165
      %v5300 = vadd.f32 %v4835, %v5170
      %v5301 = vadd.f32 %v4838, %v5173
      %v5302 = vadd.f32 %v4843, %v5178
      %v5303 = vadd.f32 %v4846, %v5181
      %v5304 = vadd.f32 %v4851, %v5186
      %v5305 = vadd.f32 %v4854, %v5189
      %v5306 = vadd.f32 %v4859, %v5194
      %v5307 = vadd.f32 %v4862, %v5197
      %v5308 = vadd.f32 %v4867, %v5202
      %v5309 = vadd.f32 %v4870, %v5205
      %v5310 = vadd.f32 %v4875, %v5210
      %v5311 = vadd.f32 %v4878, %v5213
      %v5312 = vadd.f32 %v4883, %v5218
      %v5313 = vadd.f32 %v4886, %v5221
      %v5314 = vadd.f32 %v4891, %v5226
      %v5315 = vadd.f32 %v4894, %v5229
      %v5316 = vadd.f32 %v4899, %v5234
      %v5317 = vadd.f32 %v4902, %v5237
      %v5318 = vadd.f32 %v4907, %v5242
      %v5319 = vadd.f32 %v4910, %v5245
      %v5320 = vadd.f32 %v4915, %v5250
      %v5321 = vadd.f32 %v4918, %v5253
      %v5322 = vadd.f32 %v4923, %v5258
      %v5323 = vadd.f32 %v4926, %v5261
      %v5324 = vadd.f32 %v4931, %v5266
      %v5325 = vadd.f32 %v4934, %v5269
      %v5326 = vadd.f32 %v4939, %v5274
      %v5327 = vadd.f32 %v4942, %v5277
      %v5328 = vadd.f32 %v4947, %v5282
      %v5329 = vadd.f32 %v4950, %v5285
      %v5330 = vadd.f32 %v4955, %v5290
      %v5331 = vadd.f32 %v4958, %v5293
      %v5332 = vld [vmem:[#allocation2 + $0x8] sm:$0xf8]
      %v5333 = vld [vmem:[#allocation2 + $0x10] sm:$0xff]
      %v5334 = vld [vmem:[#allocation2 + $0x18] sm:$0xff]
      %v5335 = vld [vmem:[#allocation2 + $0x20] sm:$0xff]
      %v5336 = vld [vmem:[#allocation2 + $0x28] sm:$0xff]
      %v5337 = vld [vmem:[#allocation2 + $0x30] sm:$0xff]
      %v5338 = vld [vmem:[#allocation2 + $0x38] sm:$0xff]
      %v5339 = vld [vmem:[#allocation2 + $0x40] sm:$0xff]
      %v5340 = vld [vmem:[#allocation2 + $0x48] sm:$0xff]
      %v5341 = vld [vmem:[#allocation2 + $0x50] sm:$0xff]
      %v5342 = vld [vmem:[#allocation2 + $0x58] sm:$0xff]
      %v5343 = vld [vmem:[#allocation2 + $0x60] sm:$0xff]
      %v5344 = vld [vmem:[#allocation2 + $0x68] sm:$0xff]
      %v5345 = vld [vmem:[#allocation2 + $0x70] sm:$0xff]
      %v5346 = vld [vmem:[#allocation2 + $0x78] sm:$0xff]
      %v5347 = vld [vmem:[#allocation2 + $0x80] sm:$0xff]
      %v5348 = vld [vmem:[#allocation2 + $0x88] sm:$0xff]
      %v5349 = vld [vmem:[#allocation2 + $0x90] sm:$0xff]
      %v5350 = vld [vmem:[#allocation2 + $0x98] sm:$0xf]
      %s5351 = scalar_lea.vmem %s4, 48
      %v5352 = vld [vmem:[%s5351] sm:$0xf]
      %v5353 = vld [vmem:[%s5351 + $0x4] sm:$0xf]
      %v5354 = vld [vmem:[%s5351 + $0x8] sm:$0xf]
      %v5355 = vld [vmem:[%s5351 + $0xc] sm:$0xf]
      %v5357 = vshrl.u32 %v5332, 16
      %v5359 = vrot.slane %v5357, 3
      %v5360 = vshll.u32 %v5332, 16
      %v5362 = vrot.slane %v5360, 4
      %v5363 = vor.u32 %v5359, %v5362
      %v5365 = vshrl.u32 %v5333, 16
      %v5367 = vrot.slane %v5365, 3
      %v5368 = vshll.u32 %v5333, 16
      %v5370 = vrot.slane %v5368, 4
      %v5371 = vor.u32 %v5367, %v5370
      %v5372 = vsel %vm4967, %v5363, %v5371
      %v5374 = vshrl.u32 %v5334, 16
      %v5376 = vrot.slane %v5374, 3
      %v5377 = vshll.u32 %v5334, 16
      %v5379 = vrot.slane %v5377, 4
      %v5380 = vor.u32 %v5376, %v5379
      %v5381 = vsel %vm4967, %v5371, %v5380
      %v5383 = vshrl.u32 %v5335, 16
      %v5385 = vrot.slane %v5383, 3
      %v5386 = vshll.u32 %v5335, 16
      %v5388 = vrot.slane %v5386, 4
      %v5389 = vor.u32 %v5385, %v5388
      %v5390 = vsel %vm4967, %v5380, %v5389
      %v5392 = vshrl.u32 %v5336, 16
      %v5394 = vrot.slane %v5392, 3
      %v5395 = vshll.u32 %v5336, 16
      %v5397 = vrot.slane %v5395, 4
      %v5398 = vor.u32 %v5394, %v5397
      %v5399 = vsel %vm4967, %v5389, %v5398
      %v5401 = vshrl.u32 %v5337, 16
      %v5403 = vrot.slane %v5401, 3
      %v5404 = vshll.u32 %v5337, 16
      %v5406 = vrot.slane %v5404, 4
      %v5407 = vor.u32 %v5403, %v5406
      %v5408 = vsel %vm4967, %v5398, %v5407
      %v5410 = vshrl.u32 %v5338, 16
      %v5412 = vrot.slane %v5410, 3
      %v5413 = vshll.u32 %v5338, 16
      %v5415 = vrot.slane %v5413, 4
      %v5416 = vor.u32 %v5412, %v5415
      %v5417 = vsel %vm4967, %v5407, %v5416
      %v5419 = vshrl.u32 %v5339, 16
      %v5421 = vrot.slane %v5419, 3
      %v5422 = vshll.u32 %v5339, 16
      %v5424 = vrot.slane %v5422, 4
      %v5425 = vor.u32 %v5421, %v5424
      %v5426 = vsel %vm4967, %v5416, %v5425
      %v5428 = vshrl.u32 %v5340, 16
      %v5430 = vrot.slane %v5428, 3
      %v5431 = vshll.u32 %v5340, 16
      %v5433 = vrot.slane %v5431, 4
      %v5434 = vor.u32 %v5430, %v5433
      %v5435 = vsel %vm4967, %v5425, %v5434
      %v5437 = vshrl.u32 %v5341, 16
      %v5439 = vrot.slane %v5437, 3
      %v5440 = vshll.u32 %v5341, 16
      %v5442 = vrot.slane %v5440, 4
      %v5443 = vor.u32 %v5439, %v5442
      %v5444 = vsel %vm4967, %v5434, %v5443
      %v5446 = vshrl.u32 %v5342, 16
      %v5448 = vrot.slane %v5446, 3
      %v5449 = vshll.u32 %v5342, 16
      %v5451 = vrot.slane %v5449, 4
      %v5452 = vor.u32 %v5448, %v5451
      %v5453 = vsel %vm4967, %v5443, %v5452
      %v5455 = vshrl.u32 %v5343, 16
      %v5457 = vrot.slane %v5455, 3
      %v5458 = vshll.u32 %v5343, 16
      %v5460 = vrot.slane %v5458, 4
      %v5461 = vor.u32 %v5457, %v5460
      %v5462 = vsel %vm4967, %v5452, %v5461
      %v5464 = vshrl.u32 %v5344, 16
      %v5466 = vrot.slane %v5464, 3
      %v5467 = vshll.u32 %v5344, 16
      %v5469 = vrot.slane %v5467, 4
      %v5470 = vor.u32 %v5466, %v5469
      %v5471 = vsel %vm4967, %v5461, %v5470
      %v5473 = vshrl.u32 %v5345, 16
      %v5475 = vrot.slane %v5473, 3
      %v5476 = vshll.u32 %v5345, 16
      %v5478 = vrot.slane %v5476, 4
      %v5479 = vor.u32 %v5475, %v5478
      %v5480 = vsel %vm4967, %v5470, %v5479
      %v5482 = vshrl.u32 %v5346, 16
      %v5484 = vrot.slane %v5482, 3
      %v5485 = vshll.u32 %v5346, 16
      %v5487 = vrot.slane %v5485, 4
      %v5488 = vor.u32 %v5484, %v5487
      %v5489 = vsel %vm4967, %v5479, %v5488
      %v5491 = vshrl.u32 %v5347, 16
      %v5493 = vrot.slane %v5491, 3
      %v5494 = vshll.u32 %v5347, 16
      %v5496 = vrot.slane %v5494, 4
      %v5497 = vor.u32 %v5493, %v5496
      %v5498 = vsel %vm4967, %v5488, %v5497
      %v5500 = vshrl.u32 %v5348, 16
      %v5502 = vrot.slane %v5500, 3
      %v5503 = vshll.u32 %v5348, 16
      %v5505 = vrot.slane %v5503, 4
      %v5506 = vor.u32 %v5502, %v5505
      %v5507 = vsel %vm4967, %v5497, %v5506
      %v5509 = vshrl.u32 %v5349, 16
      %v5511 = vrot.slane %v5509, 3
      %v5512 = vshll.u32 %v5349, 16
      %v5514 = vrot.slane %v5512, 4
      %v5515 = vor.u32 %v5511, %v5514
      %v5516 = vsel %vm4967, %v5506, %v5515
      %v5518 = vshrl.u32 %v5350, 16
      %v5520 = vrot.slane %v5518, 3
      %v5521 = vshll.u32 %v5350, 16
      %v5523 = vrot.slane %v5521, 4
      %v5524 = vor.u32 %v5520, %v5523
      %v5525 = vsel %vm4967, %v5515, %v5524
      %v5530 = vunpack.c.l.b16 %v5352
      %v5531 = vunpack.c.l.b16 %v5353
      %v5532 = vunpack.c.l.b16 %v5354
      %v5533 = vunpack.c.l.b16 %v5355
      %v5534 = vpack.c.b16 %v5531, %v5530
      %v5535 = vpack.c.b16 %v5533, %v5532
      %v5539 = vsel %vm3870, %v5372, 0
      %v5542 = vsel %vm3870, %v5381, 0
      %v5545 = vsel %vm3870, %v5390, 0
      %v5548 = vsel %vm3870, %v5399, 0
      %v5551 = vsel %vm3870, %v5408, 0
      %v5554 = vsel %vm3870, %v5417, 0
      %v5557 = vsel %vm3870, %v5426, 0
      %v5560 = vsel %vm3870, %v5435, 0
      %v5563 = vsel %vm3870, %v5444, 0
      %v5566 = vsel %vm3870, %v5453, 0
      %v5569 = vsel %vm3870, %v5462, 0
      %v5572 = vsel %vm3870, %v5471, 0
      %v5575 = vsel %vm3870, %v5480, 0
      %v5578 = vsel %vm3870, %v5489, 0
      %v5581 = vsel %vm3870, %v5498, 0
      %v5584 = vsel %vm3870, %v5507, 0
      %v5587 = vsel %vm3870, %v5516, 0
      %v5590 = vsel %vm3870, %v5525, 0
      %5592 = vmatprep.subr.bf16.mxu0 0
      %5593 = vmatpush1.bf16.msra.mxu0 %v5534
      %5594 = vmatprep.subr.bf16.mxu0 0
      %5595 = vmatpush1.bf16.msra.mxu0 %v5535
      %5596 = vmatprep.subr.bf16.mxu0 0
      %5597 = vmatpush1.bf16.msra.mxu0 0
      %5598 = vmatprep.subr.bf16.mxu0 0
      %5599 = vmatpush1.bf16.msra.mxu0 0
      %5600 = vmatprep.subr.bf16.mxu0 0
      %5601 = vmatpush1.bf16.msra.mxu0 0
      %5602 = vmatprep.subr.bf16.mxu0 0
      %5603 = vmatpush1.bf16.msra.mxu0 0
      %5604 = vmatprep.subr.bf16.mxu0 0
      %5605 = vmatpush1.bf16.msra.mxu0 0
      %5606 = vmatprep.subr.bf16.mxu0 0
      %5607 = vmatpush1.bf16.msra.mxu0 0
      %5608 = vmatprep.subr.bf16.mxu0 0
      %5609 = vmatpush1.bf16.msra.mxu0 0
      %5610 = vmatprep.subr.bf16.mxu0 0
      %5611 = vmatpush1.bf16.msra.mxu0 0
      %5612 = vmatprep.subr.bf16.mxu0 0
      %5613 = vmatpush1.bf16.msra.mxu0 0
      %5614 = vmatprep.subr.bf16.mxu0 0
      %5615 = vmatpush1.bf16.msra.mxu0 0
      %5616 = vmatprep.subr.bf16.mxu0 0
      %5617 = vmatpush1.bf16.msra.mxu0 0
      %5618 = vmatprep.subr.bf16.mxu0 0
      %5619 = vmatpush1.bf16.msra.mxu0 0
      %5620 = vmatprep.subr.bf16.mxu0 0
      %5621 = vmatpush1.bf16.msra.mxu0 0
      %5622 = vmatprep.subr.bf16.mxu0 0
      %5623 = vmatpush1.bf16.msra.mxu0 0
      %5624 = vmatprep.mubr.bf16.mxu0 0
      %5625 = vmatmul.mubr.bf16.gmra.mrb[0].mxu0 %v5539
      %v5626 = vpop.f32.mrb[0].mxu0
      %v5627 = vadd.f32 0.0, %v5626
      %v5628 = vpop.f32.mrb[0].mxu0
      %v5629 = vpop.f32.mrb[0].mxu0
      %v5630 = vadd.f32 0.0, %v5629
      %v5631 = vpop.f32.mrb[0].mxu0
      %5632 = vmatprep.mubr.bf16.mxu0 0
      %5633 = vmatmul.mubr.bf16.gmra.mrb[0].mxu0 %v5542
      %v5634 = vpop.f32.mrb[0].mxu0
      %v5635 = vadd.f32 0.0, %v5634
      %v5636 = vpop.f32.mrb[0].mxu0
      %v5637 = vpop.f32.mrb[0].mxu0
      %v5638 = vadd.f32 0.0, %v5637
      %v5639 = vpop.f32.mrb[0].mxu0
      %5640 = vmatprep.mubr.bf16.mxu0 0
      %5641 = vmatmul.mubr.bf16.gmra.mrb[0].mxu0 %v5545
      %v5642 = vpop.f32.mrb[0].mxu0
      %v5643 = vadd.f32 0.0, %v5642
      %v5644 = vpop.f32.mrb[0].mxu0
      %v5645 = vpop.f32.mrb[0].mxu0
      %v5646 = vadd.f32 0.0, %v5645
      %v5647 = vpop.f32.mrb[0].mxu0
      %5648 = vmatprep.mubr.bf16.mxu0 0
      %5649 = vmatmul.mubr.bf16.gmra.mrb[0].mxu0 %v5548
      %v5650 = vpop.f32.mrb[0].mxu0
      %v5651 = vadd.f32 0.0, %v5650
      %v5652 = vpop.f32.mrb[0].mxu0
      %v5653 = vpop.f32.mrb[0].mxu0
      %v5654 = vadd.f32 0.0, %v5653
      %v5655 = vpop.f32.mrb[0].mxu0
      %5656 = vmatprep.mubr.bf16.mxu0 0
      %5657 = vmatmul.mubr.bf16.gmra.mrb[0].mxu0 %v5551
      %v5658 = vpop.f32.mrb[0].mxu0
      %v5659 = vadd.f32 0.0, %v5658
      %v5660 = vpop.f32.mrb[0].mxu0
      %v5661 = vpop.f32.mrb[0].mxu0
      %v5662 = vadd.f32 0.0, %v5661
      %v5663 = vpop.f32.mrb[0].mxu0
      %5664 = vmatprep.mubr.bf16.mxu0 0
      %5665 = vmatmul.mubr.bf16.gmra.mrb[0].mxu0 %v5554
      %v5666 = vpop.f32.mrb[0].mxu0
      %v5667 = vadd.f32 0.0, %v5666
      %v5668 = vpop.f32.mrb[0].mxu0
      %v5669 = vpop.f32.mrb[0].mxu0
      %v5670 = vadd.f32 0.0, %v5669
      %v5671 = vpop.f32.mrb[0].mxu0
      %5672 = vmatprep.mubr.bf16.mxu0 0
      %5673 = vmatmul.mubr.bf16.gmra.mrb[0].mxu0 %v5557
      %v5674 = vpop.f32.mrb[0].mxu0
      %v5675 = vadd.f32 0.0, %v5674
      %v5676 = vpop.f32.mrb[0].mxu0
      %v5677 = vpop.f32.mrb[0].mxu0
      %v5678 = vadd.f32 0.0, %v5677
      %v5679 = vpop.f32.mrb[0].mxu0
      %5680 = vmatprep.mubr.bf16.mxu0 0
      %5681 = vmatmul.mubr.bf16.gmra.mrb[0].mxu0 %v5560
      %v5682 = vpop.f32.mrb[0].mxu0
      %v5683 = vadd.f32 0.0, %v5682
      %v5684 = vpop.f32.mrb[0].mxu0
      %v5685 = vpop.f32.mrb[0].mxu0
      %v5686 = vadd.f32 0.0, %v5685
      %v5687 = vpop.f32.mrb[0].mxu0
      %5688 = vmatprep.mubr.bf16.mxu0 0
      %5689 = vmatmul.mubr.bf16.gmra.mrb[0].mxu0 %v5563
      %v5690 = vpop.f32.mrb[0].mxu0
      %v5691 = vadd.f32 0.0, %v5690
      %v5692 = vpop.f32.mrb[0].mxu0
      %v5693 = vpop.f32.mrb[0].mxu0
      %v5694 = vadd.f32 0.0, %v5693
      %v5695 = vpop.f32.mrb[0].mxu0
      %5696 = vmatprep.mubr.bf16.mxu0 0
      %5697 = vmatmul.mubr.bf16.gmra.mrb[0].mxu0 %v5566
      %v5698 = vpop.f32.mrb[0].mxu0
      %v5699 = vadd.f32 0.0, %v5698
      %v5700 = vpop.f32.mrb[0].mxu0
      %v5701 = vpop.f32.mrb[0].mxu0
      %v5702 = vadd.f32 0.0, %v5701
      %v5703 = vpop.f32.mrb[0].mxu0
      %5704 = vmatprep.mubr.bf16.mxu0 0
      %5705 = vmatmul.mubr.bf16.gmra.mrb[0].mxu0 %v5569
      %v5706 = vpop.f32.mrb[0].mxu0
      %v5707 = vadd.f32 0.0, %v5706
      %v5708 = vpop.f32.mrb[0].mxu0
      %v5709 = vpop.f32.mrb[0].mxu0
      %v5710 = vadd.f32 0.0, %v5709
      %v5711 = vpop.f32.mrb[0].mxu0
      %5712 = vmatprep.mubr.bf16.mxu0 0
      %5713 = vmatmul.mubr.bf16.gmra.mrb[0].mxu0 %v5572
      %v5714 = vpop.f32.mrb[0].mxu0
      %v5715 = vadd.f32 0.0, %v5714
      %v5716 = vpop.f32.mrb[0].mxu0
      %v5717 = vpop.f32.mrb[0].mxu0
      %v5718 = vadd.f32 0.0, %v5717
      %v5719 = vpop.f32.mrb[0].mxu0
      %5720 = vmatprep.mubr.bf16.mxu0 0
      %5721 = vmatmul.mubr.bf16.gmra.mrb[0].mxu0 %v5575
      %v5722 = vpop.f32.mrb[0].mxu0
      %v5723 = vadd.f32 0.0, %v5722
      %v5724 = vpop.f32.mrb[0].mxu0
      %v5725 = vpop.f32.mrb[0].mxu0
      %v5726 = vadd.f32 0.0, %v5725
      %v5727 = vpop.f32.mrb[0].mxu0
      %5728 = vmatprep.mubr.bf16.mxu0 0
      %5729 = vmatmul.mubr.bf16.gmra.mrb[0].mxu0 %v5578
      %v5730 = vpop.f32.mrb[0].mxu0
      %v5731 = vadd.f32 0.0, %v5730
      %v5732 = vpop.f32.mrb[0].mxu0
      %v5733 = vpop.f32.mrb[0].mxu0
      %v5734 = vadd.f32 0.0, %v5733
      %v5735 = vpop.f32.mrb[0].mxu0
      %5736 = vmatprep.mubr.bf16.mxu0 0
      %5737 = vmatmul.mubr.bf16.gmra.mrb[0].mxu0 %v5581
      %v5738 = vpop.f32.mrb[0].mxu0
      %v5739 = vadd.f32 0.0, %v5738
      %v5740 = vpop.f32.mrb[0].mxu0
      %v5741 = vpop.f32.mrb[0].mxu0
      %v5742 = vadd.f32 0.0, %v5741
      %v5743 = vpop.f32.mrb[0].mxu0
      %5744 = vmatprep.mubr.bf16.mxu0 0
      %5745 = vmatmul.mubr.bf16.gmra.mrb[0].mxu0 %v5584
      %v5746 = vpop.f32.mrb[0].mxu0
      %v5747 = vadd.f32 0.0, %v5746
      %v5748 = vpop.f32.mrb[0].mxu0
      %v5749 = vpop.f32.mrb[0].mxu0
      %v5750 = vadd.f32 0.0, %v5749
      %v5751 = vpop.f32.mrb[0].mxu0
      %5752 = vmatprep.mubr.bf16.mxu0 0
      %5753 = vmatmul.mubr.bf16.gmra.mrb[0].mxu0 %v5587
      %v5754 = vpop.f32.mrb[0].mxu0
      %v5755 = vadd.f32 0.0, %v5754
      %v5756 = vpop.f32.mrb[0].mxu0
      %v5757 = vpop.f32.mrb[0].mxu0
      %v5758 = vadd.f32 0.0, %v5757
      %v5759 = vpop.f32.mrb[0].mxu0
      %5760 = vmatprep.mubr.bf16.mxu0 0
      %5761 = vmatmul.mubr.bf16.gmra.mrb[0].mxu0 %v5590
      %v5762 = vpop.f32.mrb[0].mxu0
      %v5763 = vadd.f32 0.0, %v5762
      %v5764 = vpop.f32.mrb[0].mxu0
      %v5765 = vpop.f32.mrb[0].mxu0
      %v5766 = vadd.f32 0.0, %v5765
      %v5767 = vpop.f32.mrb[0].mxu0
      %5768 = vdwg.mxu0
      %v5769 = vadd.f32 %v5296, %v5627
      %v5770 = vadd.f32 %v5297, %v5630
      %v5771 = vadd.f32 %v5298, %v5635
      %v5772 = vadd.f32 %v5299, %v5638
      %v5773 = vadd.f32 %v5300, %v5643
      %v5774 = vadd.f32 %v5301, %v5646
      %v5775 = vadd.f32 %v5302, %v5651
      %v5776 = vadd.f32 %v5303, %v5654
      %v5777 = vadd.f32 %v5304, %v5659
      %v5778 = vadd.f32 %v5305, %v5662
      %v5779 = vadd.f32 %v5306, %v5667
      %v5780 = vadd.f32 %v5307, %v5670
      %v5781 = vadd.f32 %v5308, %v5675
      %v5782 = vadd.f32 %v5309, %v5678
      %v5783 = vadd.f32 %v5310, %v5683
      %v5784 = vadd.f32 %v5311, %v5686
      %v5785 = vadd.f32 %v5312, %v5691
      %v5786 = vadd.f32 %v5313, %v5694
      %v5787 = vadd.f32 %v5314, %v5699
      %v5788 = vadd.f32 %v5315, %v5702
      %v5789 = vadd.f32 %v5316, %v5707
      %v5790 = vadd.f32 %v5317, %v5710
      %v5791 = vadd.f32 %v5318, %v5715
      %v5792 = vadd.f32 %v5319, %v5718
      %v5793 = vadd.f32 %v5320, %v5723
      %v5794 = vadd.f32 %v5321, %v5726
      %v5795 = vadd.f32 %v5322, %v5731
      %v5796 = vadd.f32 %v5323, %v5734
      %v5797 = vadd.f32 %v5324, %v5739
      %v5798 = vadd.f32 %v5325, %v5742
      %v5799 = vadd.f32 %v5326, %v5747
      %v5800 = vadd.f32 %v5327, %v5750
      %v5801 = vadd.f32 %v5328, %v5755
      %v5802 = vadd.f32 %v5329, %v5758
      %v5803 = vadd.f32 %v5330, %v5763
      %v5804 = vadd.f32 %v5331, %v5766
      %v5805 = vld [vmem:[#allocation2 + $0x8] sm:$0xf0]
      %s5806 = scalar_lea.vmem %s4, 64
      %v5807 = vld [vmem:[%s5806] sm:$0xf]
      %v5808 = vld [vmem:[%s5806 + $0x4] sm:$0xf]
      %v5809 = vld [vmem:[%s5806 + $0x8] sm:$0xf]
      %v5810 = vld [vmem:[%s5806 + $0xc] sm:$0xf]
      %v5830 = vrot.slane %v5805, 4
      %v5831 = vrot.slane %v5333, 4
      %v5832 = vsel %vm4144, %v5830, %v5831
      %v5833 = vrot.slane %v5334, 4
      %v5834 = vsel %vm4144, %v5831, %v5833
      %v5835 = vrot.slane %v5335, 4
      %v5836 = vsel %vm4144, %v5833, %v5835
      %v5837 = vrot.slane %v5336, 4
      %v5838 = vsel %vm4144, %v5835, %v5837
      %v5839 = vrot.slane %v5337, 4
      %v5840 = vsel %vm4144, %v5837, %v5839
      %v5841 = vrot.slane %v5338, 4
      %v5842 = vsel %vm4144, %v5839, %v5841
      %v5843 = vrot.slane %v5339, 4
      %v5844 = vsel %vm4144, %v5841, %v5843
      %v5845 = vrot.slane %v5340, 4
      %v5846 = vsel %vm4144, %v5843, %v5845
      %v5847 = vrot.slane %v5341, 4
      %v5848 = vsel %vm4144, %v5845, %v5847
      %v5849 = vrot.slane %v5342, 4
      %v5850 = vsel %vm4144, %v5847, %v5849
      %v5851 = vrot.slane %v5343, 4
      %v5852 = vsel %vm4144, %v5849, %v5851
      %v5853 = vrot.slane %v5344, 4
      %v5854 = vsel %vm4144, %v5851, %v5853
      %v5855 = vrot.slane %v5345, 4
      %v5856 = vsel %vm4144, %v5853, %v5855
      %v5857 = vrot.slane %v5346, 4
      %v5858 = vsel %vm4144, %v5855, %v5857
      %v5859 = vrot.slane %v5347, 4
      %v5860 = vsel %vm4144, %v5857, %v5859
      %v5861 = vrot.slane %v5348, 4
      %v5862 = vsel %vm4144, %v5859, %v5861
      %v5863 = vrot.slane %v5349, 4
      %v5864 = vsel %vm4144, %v5861, %v5863
      %v5865 = vrot.slane %v5350, 4
      %v5866 = vsel %vm4144, %v5863, %v5865
      %v5871 = vunpack.c.l.b16 %v5807
      %v5872 = vunpack.c.l.b16 %v5808
      %v5873 = vunpack.c.l.b16 %v5809
      %v5874 = vunpack.c.l.b16 %v5810
      %v5875 = vpack.c.b16 %v5872, %v5871
      %v5876 = vpack.c.b16 %v5874, %v5873
      %v5880 = vsel %vm3870, %v5832, 0
      %v5883 = vsel %vm3870, %v5834, 0
      %v5886 = vsel %vm3870, %v5836, 0
      %v5889 = vsel %vm3870, %v5838, 0
      %v5892 = vsel %vm3870, %v5840, 0
      %v5895 = vsel %vm3870, %v5842, 0
      %v5898 = vsel %vm3870, %v5844, 0
      %v5901 = vsel %vm3870, %v5846, 0
      %v5904 = vsel %vm3870, %v5848, 0
      %v5907 = vsel %vm3870, %v5850, 0
      %v5910 = vsel %vm3870, %v5852, 0
      %v5913 = vsel %vm3870, %v5854, 0
      %v5916 = vsel %vm3870, %v5856, 0
      %v5919 = vsel %vm3870, %v5858, 0
      %v5922 = vsel %vm3870, %v5860, 0
      %v5925 = vsel %vm3870, %v5862, 0
      %v5928 = vsel %vm3870, %v5864, 0
      %v5931 = vsel %vm3870, %v5866, 0
      %5933 = vmatprep.subr.bf16.mxu0 0
      %5934 = vmatpush1.bf16.msra.mxu0 %v5875
      %5935 = vmatprep.subr.bf16.mxu0 0
      %5936 = vmatpush1.bf16.msra.mxu0 %v5876
      %5937 = vmatprep.subr.bf16.mxu0 0
      %5938 = vmatpush1.bf16.msra.mxu0 0
      %5939 = vmatprep.subr.bf16.mxu0 0
      %5940 = vmatpush1.bf16.msra.mxu0 0
      %5941 = vmatprep.subr.bf16.mxu0 0
      %5942 = vmatpush1.bf16.msra.mxu0 0
      %5943 = vmatprep.subr.bf16.mxu0 0
      %5944 = vmatpush1.bf16.msra.mxu0 0
      %5945 = vmatprep.subr.bf16.mxu0 0
      %5946 = vmatpush1.bf16.msra.mxu0 0
      %5947 = vmatprep.subr.bf16.mxu0 0
      %5948 = vmatpush1.bf16.msra.mxu0 0
      %5949 = vmatprep.subr.bf16.mxu0 0
      %5950 = vmatpush1.bf16.msra.mxu0 0
      %5951 = vmatprep.subr.bf16.mxu0 0
      %5952 = vmatpush1.bf16.msra.mxu0 0
      %5953 = vmatprep.subr.bf16.mxu0 0
      %5954 = vmatpush1.bf16.msra.mxu0 0
      %5955 = vmatprep.subr.bf16.mxu0 0
      %5956 = vmatpush1.bf16.msra.mxu0 0
      %5957 = vmatprep.subr.bf16.mxu0 0
      %5958 = vmatpush1.bf16.msra.mxu0 0
      %5959 = vmatprep.subr.bf16.mxu0 0
      %5960 = vmatpush1.bf16.msra.mxu0 0
      %5961 = vmatprep.subr.bf16.mxu0 0
      %5962 = vmatpush1.bf16.msra.mxu0 0
      %5963 = vmatprep.subr.bf16.mxu0 0
      %5964 = vmatpush1.bf16.msra.mxu0 0
      %5965 = vmatprep.mubr.bf16.mxu0 0
      %5966 = vmatmul.mubr.bf16.gmra.mrb[0].mxu0 %v5880
      %v5967 = vpop.f32.mrb[0].mxu0
      %v5968 = vadd.f32 0.0, %v5967
      %v5969 = vpop.f32.mrb[0].mxu0
      %v5970 = vpop.f32.mrb[0].mxu0
      %v5971 = vadd.f32 0.0, %v5970
      %v5972 = vpop.f32.mrb[0].mxu0
      %5973 = vmatprep.mubr.bf16.mxu0 0
      %5974 = vmatmul.mubr.bf16.gmra.mrb[0].mxu0 %v5883
      %v5975 = vpop.f32.mrb[0].mxu0
      %v5976 = vadd.f32 0.0, %v5975
      %v5977 = vpop.f32.mrb[0].mxu0
      %v5978 = vpop.f32.mrb[0].mxu0
      %v5979 = vadd.f32 0.0, %v5978
      %v5980 = vpop.f32.mrb[0].mxu0
      %5981 = vmatprep.mubr.bf16.mxu0 0
      %5982 = vmatmul.mubr.bf16.gmra.mrb[0].mxu0 %v5886
      %v5983 = vpop.f32.mrb[0].mxu0
      %v5984 = vadd.f32 0.0, %v5983
      %v5985 = vpop.f32.mrb[0].mxu0
      %v5986 = vpop.f32.mrb[0].mxu0
      %v5987 = vadd.f32 0.0, %v5986
      %v5988 = vpop.f32.mrb[0].mxu0
      %5989 = vmatprep.mubr.bf16.mxu0 0
      %5990 = vmatmul.mubr.bf16.gmra.mrb[0].mxu0 %v5889
      %v5991 = vpop.f32.mrb[0].mxu0
      %v5992 = vadd.f32 0.0, %v5991
      %v5993 = vpop.f32.mrb[0].mxu0
      %v5994 = vpop.f32.mrb[0].mxu0
      %v5995 = vadd.f32 0.0, %v5994
      %v5996 = vpop.f32.mrb[0].mxu0
      %5997 = vmatprep.mubr.bf16.mxu0 0
      %5998 = vmatmul.mubr.bf16.gmra.mrb[0].mxu0 %v5892
      %v5999 = vpop.f32.mrb[0].mxu0
      %v6000 = vadd.f32 0.0, %v5999
      %v6001 = vpop.f32.mrb[0].mxu0
      %v6002 = vpop.f32.mrb[0].mxu0
      %v6003 = vadd.f32 0.0, %v6002
      %v6004 = vpop.f32.mrb[0].mxu0
      %6005 = vmatprep.mubr.bf16.mxu0 0
      %6006 = vmatmul.mubr.bf16.gmra.mrb[0].mxu0 %v5895
      %v6007 = vpop.f32.mrb[0].mxu0
      %v6008 = vadd.f32 0.0, %v6007
      %v6009 = vpop.f32.mrb[0].mxu0
      %v6010 = vpop.f32.mrb[0].mxu0
      %v6011 = vadd.f32 0.0, %v6010
      %v6012 = vpop.f32.mrb[0].mxu0
      %6013 = vmatprep.mubr.bf16.mxu0 0
      %6014 = vmatmul.mubr.bf16.gmra.mrb[0].mxu0 %v5898
      %v6015 = vpop.f32.mrb[0].mxu0
      %v6016 = vadd.f32 0.0, %v6015
      %v6017 = vpop.f32.mrb[0].mxu0
      %v6018 = vpop.f32.mrb[0].mxu0
      %v6019 = vadd.f32 0.0, %v6018
      %v6020 = vpop.f32.mrb[0].mxu0
      %6021 = vmatprep.mubr.bf16.mxu0 0
      %6022 = vmatmul.mubr.bf16.gmra.mrb[0].mxu0 %v5901
      %v6023 = vpop.f32.mrb[0].mxu0
      %v6024 = vadd.f32 0.0, %v6023
      %v6025 = vpop.f32.mrb[0].mxu0
      %v6026 = vpop.f32.mrb[0].mxu0
      %v6027 = vadd.f32 0.0, %v6026
      %v6028 = vpop.f32.mrb[0].mxu0
      %6029 = vmatprep.mubr.bf16.mxu0 0
      %6030 = vmatmul.mubr.bf16.gmra.mrb[0].mxu0 %v5904
      %v6031 = vpop.f32.mrb[0].mxu0
      %v6032 = vadd.f32 0.0, %v6031
      %v6033 = vpop.f32.mrb[0].mxu0
      %v6034 = vpop.f32.mrb[0].mxu0
      %v6035 = vadd.f32 0.0, %v6034
      %v6036 = vpop.f32.mrb[0].mxu0
      %6037 = vmatprep.mubr.bf16.mxu0 0
      %6038 = vmatmul.mubr.bf16.gmra.mrb[0].mxu0 %v5907
      %v6039 = vpop.f32.mrb[0].mxu0
      %v6040 = vadd.f32 0.0, %v6039
      %v6041 = vpop.f32.mrb[0].mxu0
      %v6042 = vpop.f32.mrb[0].mxu0
      %v6043 = vadd.f32 0.0, %v6042
      %v6044 = vpop.f32.mrb[0].mxu0
      %6045 = vmatprep.mubr.bf16.mxu0 0
      %6046 = vmatmul.mubr.bf16.gmra.mrb[0].mxu0 %v5910
      %v6047 = vpop.f32.mrb[0].mxu0
      %v6048 = vadd.f32 0.0, %v6047
      %v6049 = vpop.f32.mrb[0].mxu0
      %v6050 = vpop.f32.mrb[0].mxu0
      %v6051 = vadd.f32 0.0, %v6050
      %v6052 = vpop.f32.mrb[0].mxu0
      %6053 = vmatprep.mubr.bf16.mxu0 0
      %6054 = vmatmul.mubr.bf16.gmra.mrb[0].mxu0 %v5913
      %v6055 = vpop.f32.mrb[0].mxu0
      %v6056 = vadd.f32 0.0, %v6055
      %v6057 = vpop.f32.mrb[0].mxu0
      %v6058 = vpop.f32.mrb[0].mxu0
      %v6059 = vadd.f32 0.0, %v6058
      %v6060 = vpop.f32.mrb[0].mxu0
      %6061 = vmatprep.mubr.bf16.mxu0 0
      %6062 = vmatmul.mubr.bf16.gmra.mrb[0].mxu0 %v5916
      %v6063 = vpop.f32.mrb[0].mxu0
      %v6064 = vadd.f32 0.0, %v6063
      %v6065 = vpop.f32.mrb[0].mxu0
      %v6066 = vpop.f32.mrb[0].mxu0
      %v6067 = vadd.f32 0.0, %v6066
      %v6068 = vpop.f32.mrb[0].mxu0
      %6069 = vmatprep.mubr.bf16.mxu0 0
      %6070 = vmatmul.mubr.bf16.gmra.mrb[0].mxu0 %v5919
      %v6071 = vpop.f32.mrb[0].mxu0
      %v6072 = vadd.f32 0.0, %v6071
      %v6073 = vpop.f32.mrb[0].mxu0
      %v6074 = vpop.f32.mrb[0].mxu0
      %v6075 = vadd.f32 0.0, %v6074
      %v6076 = vpop.f32.mrb[0].mxu0
      %6077 = vmatprep.mubr.bf16.mxu0 0
      %6078 = vmatmul.mubr.bf16.gmra.mrb[0].mxu0 %v5922
      %v6079 = vpop.f32.mrb[0].mxu0
      %v6080 = vadd.f32 0.0, %v6079
      %v6081 = vpop.f32.mrb[0].mxu0
      %v6082 = vpop.f32.mrb[0].mxu0
      %v6083 = vadd.f32 0.0, %v6082
      %v6084 = vpop.f32.mrb[0].mxu0
      %6085 = vmatprep.mubr.bf16.mxu0 0
      %6086 = vmatmul.mubr.bf16.gmra.mrb[0].mxu0 %v5925
      %v6087 = vpop.f32.mrb[0].mxu0
      %v6088 = vadd.f32 0.0, %v6087
      %v6089 = vpop.f32.mrb[0].mxu0
      %v6090 = vpop.f32.mrb[0].mxu0
      %v6091 = vadd.f32 0.0, %v6090
      %v6092 = vpop.f32.mrb[0].mxu0
      %6093 = vmatprep.mubr.bf16.mxu0 0
      %6094 = vmatmul.mubr.bf16.gmra.mrb[0].mxu0 %v5928
      %v6095 = vpop.f32.mrb[0].mxu0
      %v6096 = vadd.f32 0.0, %v6095
      %v6097 = vpop.f32.mrb[0].mxu0
      %v6098 = vpop.f32.mrb[0].mxu0
      %v6099 = vadd.f32 0.0, %v6098
      %v6100 = vpop.f32.mrb[0].mxu0
      %6101 = vmatprep.mubr.bf16.mxu0 0
      %6102 = vmatmul.mubr.bf16.gmra.mrb[0].mxu0 %v5931
      %v6103 = vpop.f32.mrb[0].mxu0
      %v6104 = vadd.f32 0.0, %v6103
      %v6105 = vpop.f32.mrb[0].mxu0
      %v6106 = vpop.f32.mrb[0].mxu0
      %v6107 = vadd.f32 0.0, %v6106
      %v6108 = vpop.f32.mrb[0].mxu0
      %6109 = vdwg.mxu0
      %v6110 = vadd.f32 %v5769, %v5968
      %v6111 = vadd.f32 %v5770, %v5971
      %v6112 = vadd.f32 %v5771, %v5976
      %v6113 = vadd.f32 %v5772, %v5979
      %v6114 = vadd.f32 %v5773, %v5984
      %v6115 = vadd.f32 %v5774, %v5987
      %v6116 = vadd.f32 %v5775, %v5992
      %v6117 = vadd.f32 %v5776, %v5995
      %v6118 = vadd.f32 %v5777, %v6000
      %v6119 = vadd.f32 %v5778, %v6003
      %v6120 = vadd.f32 %v5779, %v6008
      %v6121 = vadd.f32 %v5780, %v6011
      %v6122 = vadd.f32 %v5781, %v6016
      %v6123 = vadd.f32 %v5782, %v6019
      %v6124 = vadd.f32 %v5783, %v6024
      %v6125 = vadd.f32 %v5784, %v6027
      %v6126 = vadd.f32 %v5785, %v6032
      %v6127 = vadd.f32 %v5786, %v6035
      %v6128 = vadd.f32 %v5787, %v6040
      %v6129 = vadd.f32 %v5788, %v6043
      %v6130 = vadd.f32 %v5789, %v6048
      %v6131 = vadd.f32 %v5790, %v6051
      %v6132 = vadd.f32 %v5791, %v6056
      %v6133 = vadd.f32 %v5792, %v6059
      %v6134 = vadd.f32 %v5793, %v6064
      %v6135 = vadd.f32 %v5794, %v6067
      %v6136 = vadd.f32 %v5795, %v6072
      %v6137 = vadd.f32 %v5796, %v6075
      %v6138 = vadd.f32 %v5797, %v6080
      %v6139 = vadd.f32 %v5798, %v6083
      %v6140 = vadd.f32 %v5799, %v6088
      %v6141 = vadd.f32 %v5800, %v6091
      %v6142 = vadd.f32 %v5801, %v6096
      %v6143 = vadd.f32 %v5802, %v6099
      %v6144 = vadd.f32 %v5803, %v6104
      %v6145 = vadd.f32 %v5804, %v6107
      %v6146 = vld [vmem:[#allocation2 + $0x98] sm:$0x1f]
      %s6147 = scalar_lea.vmem %s4, 80
      %v6148 = vld [vmem:[%s6147] sm:$0xf]
      %v6149 = vld [vmem:[%s6147 + $0x4] sm:$0xf]
      %v6150 = vld [vmem:[%s6147 + $0x8] sm:$0xf]
      %v6151 = vld [vmem:[%s6147 + $0xc] sm:$0xf]
      %vm6152 = vsmask.f32 3328
      %v6154 = vshrl.u32 %v5805, 16
      %v6156 = vrot.slane %v6154, 4
      %v6157 = vshll.u32 %v5805, 16
      %v6159 = vrot.slane %v6157, 5
      %v6160 = vor.u32 %v6156, %v6159
      %v6161 = vrot.slane %v5365, 4
      %v6162 = vrot.slane %v5368, 5
      %v6163 = vor.u32 %v6161, %v6162
      %v6164 = vsel %vm6152, %v6160, %v6163
      %v6165 = vrot.slane %v5374, 4
      %v6166 = vrot.slane %v5377, 5
      %v6167 = vor.u32 %v6165, %v6166
      %v6168 = vsel %vm6152, %v6163, %v6167
      %v6169 = vrot.slane %v5383, 4
      %v6170 = vrot.slane %v5386, 5
      %v6171 = vor.u32 %v6169, %v6170
      %v6172 = vsel %vm6152, %v6167, %v6171
      %v6173 = vrot.slane %v5392, 4
      %v6174 = vrot.slane %v5395, 5
      %v6175 = vor.u32 %v6173, %v6174
      %v6176 = vsel %vm6152, %v6171, %v6175
      %v6177 = vrot.slane %v5401, 4
      %v6178 = vrot.slane %v5404, 5
      %v6179 = vor.u32 %v6177, %v6178
      %v6180 = vsel %vm6152, %v6175, %v6179
      %v6181 = vrot.slane %v5410, 4
      %v6182 = vrot.slane %v5413, 5
      %v6183 = vor.u32 %v6181, %v6182
      %v6184 = vsel %vm6152, %v6179, %v6183
      %v6185 = vrot.slane %v5419, 4
      %v6186 = vrot.slane %v5422, 5
      %v6187 = vor.u32 %v6185, %v6186
      %v6188 = vsel %vm6152, %v6183, %v6187
      %v6189 = vrot.slane %v5428, 4
      %v6190 = vrot.slane %v5431, 5
      %v6191 = vor.u32 %v6189, %v6190
      %v6192 = vsel %vm6152, %v6187, %v6191
      %v6193 = vrot.slane %v5437, 4
      %v6194 = vrot.slane %v5440, 5
      %v6195 = vor.u32 %v6193, %v6194
      %v6196 = vsel %vm6152, %v6191, %v6195
      %v6197 = vrot.slane %v5446, 4
      %v6198 = vrot.slane %v5449, 5
      %v6199 = vor.u32 %v6197, %v6198
      %v6200 = vsel %vm6152, %v6195, %v6199
      %v6201 = vrot.slane %v5455, 4
      %v6202 = vrot.slane %v5458, 5
      %v6203 = vor.u32 %v6201, %v6202
      %v6204 = vsel %vm6152, %v6199, %v6203
      %v6205 = vrot.slane %v5464, 4
      %v6206 = vrot.slane %v5467, 5
      %v6207 = vor.u32 %v6205, %v6206
      %v6208 = vsel %vm6152, %v6203, %v6207
      %v6209 = vrot.slane %v5473, 4
      %v6210 = vrot.slane %v5476, 5
      %v6211 = vor.u32 %v6209, %v6210
      %v6212 = vsel %vm6152, %v6207, %v6211
      %v6213 = vrot.slane %v5482, 4
      %v6214 = vrot.slane %v5485, 5
      %v6215 = vor.u32 %v6213, %v6214
      %v6216 = vsel %vm6152, %v6211, %v6215
      %v6217 = vrot.slane %v5491, 4
      %v6218 = vrot.slane %v5494, 5
      %v6219 = vor.u32 %v6217, %v6218
      %v6220 = vsel %vm6152, %v6215, %v6219
      %v6221 = vrot.slane %v5500, 4
      %v6222 = vrot.slane %v5503, 5
      %v6223 = vor.u32 %v6221, %v6222
      %v6224 = vsel %vm6152, %v6219, %v6223
      %v6225 = vrot.slane %v5509, 4
      %v6226 = vrot.slane %v5512, 5
      %v6227 = vor.u32 %v6225, %v6226
      %v6228 = vsel %vm6152, %v6223, %v6227
      %v6230 = vshrl.u32 %v6146, 16
      %v6232 = vrot.slane %v6230, 4
      %v6233 = vshll.u32 %v6146, 16
      %v6235 = vrot.slane %v6233, 5
      %v6236 = vor.u32 %v6232, %v6235
      %v6237 = vsel %vm6152, %v6227, %v6236
      %v6242 = vunpack.c.l.b16 %v6148
      %v6243 = vunpack.c.l.b16 %v6149
      %v6244 = vunpack.c.l.b16 %v6150
      %v6245 = vunpack.c.l.b16 %v6151
      %v6246 = vpack.c.b16 %v6243, %v6242
      %v6247 = vpack.c.b16 %v6245, %v6244
      %v6251 = vsel %vm3870, %v6164, 0
      %v6254 = vsel %vm3870, %v6168, 0
      %v6257 = vsel %vm3870, %v6172, 0
      %v6260 = vsel %vm3870, %v6176, 0
      %v6263 = vsel %vm3870, %v6180, 0
      %v6266 = vsel %vm3870, %v6184, 0
      %v6269 = vsel %vm3870, %v6188, 0
      %v6272 = vsel %vm3870, %v6192, 0
      %v6275 = vsel %vm3870, %v6196, 0
      %v6278 = vsel %vm3870, %v6200, 0
      %v6281 = vsel %vm3870, %v6204, 0
      %v6284 = vsel %vm3870, %v6208, 0
      %v6287 = vsel %vm3870, %v6212, 0
      %v6290 = vsel %vm3870, %v6216, 0
      %v6293 = vsel %vm3870, %v6220, 0
      %v6296 = vsel %vm3870, %v6224, 0
      %v6299 = vsel %vm3870, %v6228, 0
      %v6302 = vsel %vm3870, %v6237, 0
      %6304 = vmatprep.subr.bf16.mxu0 0
      %6305 = vmatpush1.bf16.msra.mxu0 %v6246
      %6306 = vmatprep.subr.bf16.mxu0 0
      %6307 = vmatpush1.bf16.msra.mxu0 %v6247
      %6308 = vmatprep.subr.bf16.mxu0 0
      %6309 = vmatpush1.bf16.msra.mxu0 0
      %6310 = vmatprep.subr.bf16.mxu0 0
      %6311 = vmatpush1.bf16.msra.mxu0 0
      %6312 = vmatprep.subr.bf16.mxu0 0
      %6313 = vmatpush1.bf16.msra.mxu0 0
      %6314 = vmatprep.subr.bf16.mxu0 0
      %6315 = vmatpush1.bf16.msra.mxu0 0
      %6316 = vmatprep.subr.bf16.mxu0 0
      %6317 = vmatpush1.bf16.msra.mxu0 0
      %6318 = vmatprep.subr.bf16.mxu0 0
      %6319 = vmatpush1.bf16.msra.mxu0 0
      %6320 = vmatprep.subr.bf16.mxu0 0
      %6321 = vmatpush1.bf16.msra.mxu0 0
      %6322 = vmatprep.subr.bf16.mxu0 0
      %6323 = vmatpush1.bf16.msra.mxu0 0
      %6324 = vmatprep.subr.bf16.mxu0 0
      %6325 = vmatpush1.bf16.msra.mxu0 0
      %6326 = vmatprep.subr.bf16.mxu0 0
      %6327 = vmatpush1.bf16.msra.mxu0 0
      %6328 = vmatprep.subr.bf16.mxu0 0
      %6329 = vmatpush1.bf16.msra.mxu0 0
      %6330 = vmatprep.subr.bf16.mxu0 0
      %6331 = vmatpush1.bf16.msra.mxu0 0
      %6332 = vmatprep.subr.bf16.mxu0 0
      %6333 = vmatpush1.bf16.msra.mxu0 0
      %6334 = vmatprep.subr.bf16.mxu0 0
      %6335 = vmatpush1.bf16.msra.mxu0 0
      %6336 = vmatprep.mubr.bf16.mxu0 0
      %6337 = vmatmul.mubr.bf16.gmra.mrb[0].mxu0 %v6251
      %v6338 = vpop.f32.mrb[0].mxu0
      %v6339 = vadd.f32 0.0, %v6338
      %v6340 = vpop.f32.mrb[0].mxu0
      %v6341 = vpop.f32.mrb[0].mxu0
      %v6342 = vadd.f32 0.0, %v6341
      %v6343 = vpop.f32.mrb[0].mxu0
      %6344 = vmatprep.mubr.bf16.mxu0 0
      %6345 = vmatmul.mubr.bf16.gmra.mrb[0].mxu0 %v6254
      %v6346 = vpop.f32.mrb[0].mxu0
      %v6347 = vadd.f32 0.0, %v6346
      %v6348 = vpop.f32.mrb[0].mxu0
      %v6349 = vpop.f32.mrb[0].mxu0
      %v6350 = vadd.f32 0.0, %v6349
      %v6351 = vpop.f32.mrb[0].mxu0
      %6352 = vmatprep.mubr.bf16.mxu0 0
      %6353 = vmatmul.mubr.bf16.gmra.mrb[0].mxu0 %v6257
      %v6354 = vpop.f32.mrb[0].mxu0
      %v6355 = vadd.f32 0.0, %v6354
      %v6356 = vpop.f32.mrb[0].mxu0
      %v6357 = vpop.f32.mrb[0].mxu0
      %v6358 = vadd.f32 0.0, %v6357
      %v6359 = vpop.f32.mrb[0].mxu0
      %6360 = vmatprep.mubr.bf16.mxu0 0
      %6361 = vmatmul.mubr.bf16.gmra.mrb[0].mxu0 %v6260
      %v6362 = vpop.f32.mrb[0].mxu0
      %v6363 = vadd.f32 0.0, %v6362
      %v6364 = vpop.f32.mrb[0].mxu0
      %v6365 = vpop.f32.mrb[0].mxu0
      %v6366 = vadd.f32 0.0, %v6365
      %v6367 = vpop.f32.mrb[0].mxu0
      %6368 = vmatprep.mubr.bf16.mxu0 0
      %6369 = vmatmul.mubr.bf16.gmra.mrb[0].mxu0 %v6263
      %v6370 = vpop.f32.mrb[0].mxu0
      %v6371 = vadd.f32 0.0, %v6370
      %v6372 = vpop.f32.mrb[0].mxu0
      %v6373 = vpop.f32.mrb[0].mxu0
      %v6374 = vadd.f32 0.0, %v6373
      %v6375 = vpop.f32.mrb[0].mxu0
      %6376 = vmatprep.mubr.bf16.mxu0 0
      %6377 = vmatmul.mubr.bf16.gmra.mrb[0].mxu0 %v6266
      %v6378 = vpop.f32.mrb[0].mxu0
      %v6379 = vadd.f32 0.0, %v6378
      %v6380 = vpop.f32.mrb[0].mxu0
      %v6381 = vpop.f32.mrb[0].mxu0
      %v6382 = vadd.f32 0.0, %v6381
      %v6383 = vpop.f32.mrb[0].mxu0
      %6384 = vmatprep.mubr.bf16.mxu0 0
      %6385 = vmatmul.mubr.bf16.gmra.mrb[0].mxu0 %v6269
      %v6386 = vpop.f32.mrb[0].mxu0
      %v6387 = vadd.f32 0.0, %v6386
      %v6388 = vpop.f32.mrb[0].mxu0
      %v6389 = vpop.f32.mrb[0].mxu0
      %v6390 = vadd.f32 0.0, %v6389
      %v6391 = vpop.f32.mrb[0].mxu0
      %6392 = vmatprep.mubr.bf16.mxu0 0
      %6393 = vmatmul.mubr.bf16.gmra.mrb[0].mxu0 %v6272
      %v6394 = vpop.f32.mrb[0].mxu0
      %v6395 = vadd.f32 0.0, %v6394
      %v6396 = vpop.f32.mrb[0].mxu0
      %v6397 = vpop.f32.mrb[0].mxu0
      %v6398 = vadd.f32 0.0, %v6397
      %v6399 = vpop.f32.mrb[0].mxu0
      %6400 = vmatprep.mubr.bf16.mxu0 0
      %6401 = vmatmul.mubr.bf16.gmra.mrb[0].mxu0 %v6275
      %v6402 = vpop.f32.mrb[0].mxu0
      %v6403 = vadd.f32 0.0, %v6402
      %v6404 = vpop.f32.mrb[0].mxu0
      %v6405 = vpop.f32.mrb[0].mxu0
      %v6406 = vadd.f32 0.0, %v6405
      %v6407 = vpop.f32.mrb[0].mxu0
      %6408 = vmatprep.mubr.bf16.mxu0 0
      %6409 = vmatmul.mubr.bf16.gmra.mrb[0].mxu0 %v6278
      %v6410 = vpop.f32.mrb[0].mxu0
      %v6411 = vadd.f32 0.0, %v6410
      %v6412 = vpop.f32.mrb[0].mxu0
      %v6413 = vpop.f32.mrb[0].mxu0
      %v6414 = vadd.f32 0.0, %v6413
      %v6415 = vpop.f32.mrb[0].mxu0
      %6416 = vmatprep.mubr.bf16.mxu0 0
      %6417 = vmatmul.mubr.bf16.gmra.mrb[0].mxu0 %v6281
      %v6418 = vpop.f32.mrb[0].mxu0
      %v6419 = vadd.f32 0.0, %v6418
      %v6420 = vpop.f32.mrb[0].mxu0
      %v6421 = vpop.f32.mrb[0].mxu0
      %v6422 = vadd.f32 0.0, %v6421
      %v6423 = vpop.f32.mrb[0].mxu0
      %6424 = vmatprep.mubr.bf16.mxu0 0
      %6425 = vmatmul.mubr.bf16.gmra.mrb[0].mxu0 %v6284
      %v6426 = vpop.f32.mrb[0].mxu0
      %v6427 = vadd.f32 0.0, %v6426
      %v6428 = vpop.f32.mrb[0].mxu0
      %v6429 = vpop.f32.mrb[0].mxu0
      %v6430 = vadd.f32 0.0, %v6429
      %v6431 = vpop.f32.mrb[0].mxu0
      %6432 = vmatprep.mubr.bf16.mxu0 0
      %6433 = vmatmul.mubr.bf16.gmra.mrb[0].mxu0 %v6287
      %v6434 = vpop.f32.mrb[0].mxu0
      %v6435 = vadd.f32 0.0, %v6434
      %v6436 = vpop.f32.mrb[0].mxu0
      %v6437 = vpop.f32.mrb[0].mxu0
      %v6438 = vadd.f32 0.0, %v6437
      %v6439 = vpop.f32.mrb[0].mxu0
      %6440 = vmatprep.mubr.bf16.mxu0 0
      %6441 = vmatmul.mubr.bf16.gmra.mrb[0].mxu0 %v6290
      %v6442 = vpop.f32.mrb[0].mxu0
      %v6443 = vadd.f32 0.0, %v6442
      %v6444 = vpop.f32.mrb[0].mxu0
      %v6445 = vpop.f32.mrb[0].mxu0
      %v6446 = vadd.f32 0.0, %v6445
      %v6447 = vpop.f32.mrb[0].mxu0
      %6448 = vmatprep.mubr.bf16.mxu0 0
      %6449 = vmatmul.mubr.bf16.gmra.mrb[0].mxu0 %v6293
      %v6450 = vpop.f32.mrb[0].mxu0
      %v6451 = vadd.f32 0.0, %v6450
      %v6452 = vpop.f32.mrb[0].mxu0
      %v6453 = vpop.f32.mrb[0].mxu0
      %v6454 = vadd.f32 0.0, %v6453
      %v6455 = vpop.f32.mrb[0].mxu0
      %6456 = vmatprep.mubr.bf16.mxu0 0
      %6457 = vmatmul.mubr.bf16.gmra.mrb[0].mxu0 %v6296
      %v6458 = vpop.f32.mrb[0].mxu0
      %v6459 = vadd.f32 0.0, %v6458
      %v6460 = vpop.f32.mrb[0].mxu0
      %v6461 = vpop.f32.mrb[0].mxu0
      %v6462 = vadd.f32 0.0, %v6461
      %v6463 = vpop.f32.mrb[0].mxu0
      %6464 = vmatprep.mubr.bf16.mxu0 0
      %6465 = vmatmul.mubr.bf16.gmra.mrb[0].mxu0 %v6299
      %v6466 = vpop.f32.mrb[0].mxu0
      %v6467 = vadd.f32 0.0, %v6466
      %v6468 = vpop.f32.mrb[0].mxu0
      %v6469 = vpop.f32.mrb[0].mxu0
      %v6470 = vadd.f32 0.0, %v6469
      %v6471 = vpop.f32.mrb[0].mxu0
      %6472 = vmatprep.mubr.bf16.mxu0 0
      %6473 = vmatmul.mubr.bf16.gmra.mrb[0].mxu0 %v6302
      %v6474 = vpop.f32.mrb[0].mxu0
      %v6475 = vadd.f32 0.0, %v6474
      %v6476 = vpop.f32.mrb[0].mxu0
      %v6477 = vpop.f32.mrb[0].mxu0
      %v6478 = vadd.f32 0.0, %v6477
      %v6479 = vpop.f32.mrb[0].mxu0
      %6480 = vdwg.mxu0
      %v6481 = vadd.f32 %v6110, %v6339
      %v6482 = vadd.f32 %v6111, %v6342
      %v6483 = vadd.f32 %v6112, %v6347
      %v6484 = vadd.f32 %v6113, %v6350
      %v6485 = vadd.f32 %v6114, %v6355
      %v6486 = vadd.f32 %v6115, %v6358
      %v6487 = vadd.f32 %v6116, %v6363
      %v6488 = vadd.f32 %v6117, %v6366
      %v6489 = vadd.f32 %v6118, %v6371
      %v6490 = vadd.f32 %v6119, %v6374
      %v6491 = vadd.f32 %v6120, %v6379
      %v6492 = vadd.f32 %v6121, %v6382
      %v6493 = vadd.f32 %v6122, %v6387
      %v6494 = vadd.f32 %v6123, %v6390
      %v6495 = vadd.f32 %v6124, %v6395
      %v6496 = vadd.f32 %v6125, %v6398
      %v6497 = vadd.f32 %v6126, %v6403
      %v6498 = vadd.f32 %v6127, %v6406
      %v6499 = vadd.f32 %v6128, %v6411
      %v6500 = vadd.f32 %v6129, %v6414
      %v6501 = vadd.f32 %v6130, %v6419
      %v6502 = vadd.f32 %v6131, %v6422
      %v6503 = vadd.f32 %v6132, %v6427
      %v6504 = vadd.f32 %v6133, %v6430
      %v6505 = vadd.f32 %v6134, %v6435
      %v6506 = vadd.f32 %v6135, %v6438
      %v6507 = vadd.f32 %v6136, %v6443
      %v6508 = vadd.f32 %v6137, %v6446
      %v6509 = vadd.f32 %v6138, %v6451
      %v6510 = vadd.f32 %v6139, %v6454
      %v6511 = vadd.f32 %v6140, %v6459
      %v6512 = vadd.f32 %v6141, %v6462
      %v6513 = vadd.f32 %v6142, %v6467
      %v6514 = vadd.f32 %v6143, %v6470
      %v6515 = vadd.f32 %v6144, %v6475
      %v6516 = vadd.f32 %v6145, %v6478
      %v6517 = vld [vmem:[#allocation2 + $0x10] sm:$0xf0]
      %v6518 = vld [vmem:[#allocation2 + $0x18] sm:$0xff]
      %v6519 = vld [vmem:[#allocation2 + $0x20] sm:$0xff]
      %v6520 = vld [vmem:[#allocation2 + $0x28] sm:$0xff]
      %v6521 = vld [vmem:[#allocation2 + $0x30] sm:$0xff]
      %v6522 = vld [vmem:[#allocation2 + $0x38] sm:$0xff]
      %v6523 = vld [vmem:[#allocation2 + $0x40] sm:$0xff]
      %v6524 = vld [vmem:[#allocation2 + $0x48] sm:$0xff]
      %v6525 = vld [vmem:[#allocation2 + $0x50] sm:$0xff]
      %v6526 = vld [vmem:[#allocation2 + $0x58] sm:$0xff]
      %v6527 = vld [vmem:[#allocation2 + $0x60] sm:$0xff]
      %v6528 = vld [vmem:[#allocation2 + $0x68] sm:$0xff]
      %v6529 = vld [vmem:[#allocation2 + $0x70] sm:$0xff]
      %v6530 = vld [vmem:[#allocation2 + $0x78] sm:$0xff]
      %v6531 = vld [vmem:[#allocation2 + $0x80] sm:$0xff]
      %v6532 = vld [vmem:[#allocation2 + $0x88] sm:$0xff]
      %v6533 = vld [vmem:[#allocation2 + $0x90] sm:$0xff]
      %v6534 = vld [vmem:[#allocation2 + $0x98] sm:$0xff]
      %v6535 = vld [vmem:[#allocation2 + $0xa0] sm:$0x1f]
      %s6536 = scalar_lea.vmem %s4, 96
      %v6537 = vld [vmem:[%s6536] sm:$0xf]
      %v6538 = vld [vmem:[%s6536 + $0x4] sm:$0xf]
      %v6539 = vld [vmem:[%s6536 + $0x8] sm:$0xf]
      %v6540 = vld [vmem:[%s6536 + $0xc] sm:$0xf]
      %v6542 = vshrl.u32 %v6517, 16
      %v6544 = vrot.slane %v6542, 4
      %v6545 = vshll.u32 %v6517, 16
      %v6547 = vrot.slane %v6545, 5
      %v6548 = vor.u32 %v6544, %v6547
      %v6550 = vshrl.u32 %v6518, 16
      %v6552 = vrot.slane %v6550, 4
      %v6553 = vshll.u32 %v6518, 16
      %v6555 = vrot.slane %v6553, 5
      %v6556 = vor.u32 %v6552, %v6555
      %v6557 = vsel %vm6152, %v6548, %v6556
      %v6559 = vshrl.u32 %v6519, 16
      %v6561 = vrot.slane %v6559, 4
      %v6562 = vshll.u32 %v6519, 16
      %v6564 = vrot.slane %v6562, 5
      %v6565 = vor.u32 %v6561, %v6564
      %v6566 = vsel %vm6152, %v6556, %v6565
      %v6568 = vshrl.u32 %v6520, 16
      %v6570 = vrot.slane %v6568, 4
      %v6571 = vshll.u32 %v6520, 16
      %v6573 = vrot.slane %v6571, 5
      %v6574 = vor.u32 %v6570, %v6573
      %v6575 = vsel %vm6152, %v6565, %v6574
      %v6577 = vshrl.u32 %v6521, 16
      %v6579 = vrot.slane %v6577, 4
      %v6580 = vshll.u32 %v6521, 16
      %v6582 = vrot.slane %v6580, 5
      %v6583 = vor.u32 %v6579, %v6582
      %v6584 = vsel %vm6152, %v6574, %v6583
      %v6586 = vshrl.u32 %v6522, 16
      %v6588 = vrot.slane %v6586, 4
      %v6589 = vshll.u32 %v6522, 16
      %v6591 = vrot.slane %v6589, 5
      %v6592 = vor.u32 %v6588, %v6591
      %v6593 = vsel %vm6152, %v6583, %v6592
      %v6595 = vshrl.u32 %v6523, 16
      %v6597 = vrot.slane %v6595, 4
      %v6598 = vshll.u32 %v6523, 16
      %v6600 = vrot.slane %v6598, 5
      %v6601 = vor.u32 %v6597, %v6600
      %v6602 = vsel %vm6152, %v6592, %v6601
      %v6604 = vshrl.u32 %v6524, 16
      %v6606 = vrot.slane %v6604, 4
      %v6607 = vshll.u32 %v6524, 16
      %v6609 = vrot.slane %v6607, 5
      %v6610 = vor.u32 %v6606, %v6609
      %v6611 = vsel %vm6152, %v6601, %v6610
      %v6613 = vshrl.u32 %v6525, 16
      %v6615 = vrot.slane %v6613, 4
      %v6616 = vshll.u32 %v6525, 16
      %v6618 = vrot.slane %v6616, 5
      %v6619 = vor.u32 %v6615, %v6618
      %v6620 = vsel %vm6152, %v6610, %v6619
      %v6622 = vshrl.u32 %v6526, 16
      %v6624 = vrot.slane %v6622, 4
      %v6625 = vshll.u32 %v6526, 16
      %v6627 = vrot.slane %v6625, 5
      %v6628 = vor.u32 %v6624, %v6627
      %v6629 = vsel %vm6152, %v6619, %v6628
      %v6631 = vshrl.u32 %v6527, 16
      %v6633 = vrot.slane %v6631, 4
      %v6634 = vshll.u32 %v6527, 16
      %v6636 = vrot.slane %v6634, 5
      %v6637 = vor.u32 %v6633, %v6636
      %v6638 = vsel %vm6152, %v6628, %v6637
      %v6640 = vshrl.u32 %v6528, 16
      %v6642 = vrot.slane %v6640, 4
      %v6643 = vshll.u32 %v6528, 16
      %v6645 = vrot.slane %v6643, 5
      %v6646 = vor.u32 %v6642, %v6645
      %v6647 = vsel %vm6152, %v6637, %v6646
      %v6649 = vshrl.u32 %v6529, 16
      %v6651 = vrot.slane %v6649, 4
      %v6652 = vshll.u32 %v6529, 16
      %v6654 = vrot.slane %v6652, 5
      %v6655 = vor.u32 %v6651, %v6654
      %v6656 = vsel %vm6152, %v6646, %v6655
      %v6658 = vshrl.u32 %v6530, 16
      %v6660 = vrot.slane %v6658, 4
      %v6661 = vshll.u32 %v6530, 16
      %v6663 = vrot.slane %v6661, 5
      %v6664 = vor.u32 %v6660, %v6663
      %v6665 = vsel %vm6152, %v6655, %v6664
      %v6667 = vshrl.u32 %v6531, 16
      %v6669 = vrot.slane %v6667, 4
      %v6670 = vshll.u32 %v6531, 16
      %v6672 = vrot.slane %v6670, 5
      %v6673 = vor.u32 %v6669, %v6672
      %v6674 = vsel %vm6152, %v6664, %v6673
      %v6676 = vshrl.u32 %v6532, 16
      %v6678 = vrot.slane %v6676, 4
      %v6679 = vshll.u32 %v6532, 16
      %v6681 = vrot.slane %v6679, 5
      %v6682 = vor.u32 %v6678, %v6681
      %v6683 = vsel %vm6152, %v6673, %v6682
      %v6685 = vshrl.u32 %v6533, 16
      %v6687 = vrot.slane %v6685, 4
      %v6688 = vshll.u32 %v6533, 16
      %v6690 = vrot.slane %v6688, 5
      %v6691 = vor.u32 %v6687, %v6690
      %v6692 = vsel %vm6152, %v6682, %v6691
      %v6694 = vshrl.u32 %v6534, 16
      %v6696 = vrot.slane %v6694, 4
      %v6697 = vshll.u32 %v6534, 16
      %v6699 = vrot.slane %v6697, 5
      %v6700 = vor.u32 %v6696, %v6699
      %v6701 = vsel %vm6152, %v6691, %v6700
      %v6703 = vshrl.u32 %v6535, 16
      %v6705 = vrot.slane %v6703, 4
      %v6706 = vshll.u32 %v6535, 16
      %v6708 = vrot.slane %v6706, 5
      %v6709 = vor.u32 %v6705, %v6708
      %v6710 = vsel %vm6152, %v6700, %v6709
      %v6715 = vunpack.c.l.b16 %v6537
      %v6716 = vunpack.c.l.b16 %v6538
      %v6717 = vunpack.c.l.b16 %v6539
      %v6718 = vunpack.c.l.b16 %v6540
      %v6719 = vpack.c.b16 %v6716, %v6715
      %v6720 = vpack.c.b16 %v6718, %v6717
      %v6724 = vsel %vm3870, %v6557, 0
      %v6727 = vsel %vm3870, %v6566, 0
      %v6730 = vsel %vm3870, %v6575, 0
      %v6733 = vsel %vm3870, %v6584, 0
      %v6736 = vsel %vm3870, %v6593, 0
      %v6739 = vsel %vm3870, %v6602, 0
      %v6742 = vsel %vm3870, %v6611, 0
      %v6745 = vsel %vm3870, %v6620, 0
      %v6748 = vsel %vm3870, %v6629, 0
      %v6751 = vsel %vm3870, %v6638, 0
      %v6754 = vsel %vm3870, %v6647, 0
      %v6757 = vsel %vm3870, %v6656, 0
      %v6760 = vsel %vm3870, %v6665, 0
      %v6763 = vsel %vm3870, %v6674, 0
      %v6766 = vsel %vm3870, %v6683, 0
      %v6769 = vsel %vm3870, %v6692, 0
      %v6772 = vsel %vm3870, %v6701, 0
      %v6775 = vsel %vm3870, %v6710, 0
      %6777 = vmatprep.subr.bf16.mxu0 0
      %6778 = vmatpush1.bf16.msra.mxu0 %v6719
      %6779 = vmatprep.subr.bf16.mxu0 0
      %6780 = vmatpush1.bf16.msra.mxu0 %v6720
      %6781 = vmatprep.subr.bf16.mxu0 0
      %6782 = vmatpush1.bf16.msra.mxu0 0
      %6783 = vmatprep.subr.bf16.mxu0 0
      %6784 = vmatpush1.bf16.msra.mxu0 0
      %6785 = vmatprep.subr.bf16.mxu0 0
      %6786 = vmatpush1.bf16.msra.mxu0 0
      %6787 = vmatprep.subr.bf16.mxu0 0
      %6788 = vmatpush1.bf16.msra.mxu0 0
      %6789 = vmatprep.subr.bf16.mxu0 0
      %6790 = vmatpush1.bf16.msra.mxu0 0
      %6791 = vmatprep.subr.bf16.mxu0 0
      %6792 = vmatpush1.bf16.msra.mxu0 0
      %6793 = vmatprep.subr.bf16.mxu0 0
      %6794 = vmatpush1.bf16.msra.mxu0 0
      %6795 = vmatprep.subr.bf16.mxu0 0
      %6796 = vmatpush1.bf16.msra.mxu0 0
      %6797 = vmatprep.subr.bf16.mxu0 0
      %6798 = vmatpush1.bf16.msra.mxu0 0
      %6799 = vmatprep.subr.bf16.mxu0 0
      %6800 = vmatpush1.bf16.msra.mxu0 0
      %6801 = vmatprep.subr.bf16.mxu0 0
      %6802 = vmatpush1.bf16.msra.mxu0 0
      %6803 = vmatprep.subr.bf16.mxu0 0
      %6804 = vmatpush1.bf16.msra.mxu0 0
      %6805 = vmatprep.subr.bf16.mxu0 0
      %6806 = vmatpush1.bf16.msra.mxu0 0
      %6807 = vmatprep.subr.bf16.mxu0 0
      %6808 = vmatpush1.bf16.msra.mxu0 0
      %6809 = vmatprep.mubr.bf16.mxu0 0
      %6810 = vmatmul.mubr.bf16.gmra.mrb[0].mxu0 %v6724
      %v6811 = vpop.f32.mrb[0].mxu0
      %v6812 = vadd.f32 0.0, %v6811
      %v6813 = vpop.f32.mrb[0].mxu0
      %v6814 = vpop.f32.mrb[0].mxu0
      %v6815 = vadd.f32 0.0, %v6814
      %v6816 = vpop.f32.mrb[0].mxu0
      %6817 = vmatprep.mubr.bf16.mxu0 0
      %6818 = vmatmul.mubr.bf16.gmra.mrb[0].mxu0 %v6727
      %v6819 = vpop.f32.mrb[0].mxu0
      %v6820 = vadd.f32 0.0, %v6819
      %v6821 = vpop.f32.mrb[0].mxu0
      %v6822 = vpop.f32.mrb[0].mxu0
      %v6823 = vadd.f32 0.0, %v6822
      %v6824 = vpop.f32.mrb[0].mxu0
      %6825 = vmatprep.mubr.bf16.mxu0 0
      %6826 = vmatmul.mubr.bf16.gmra.mrb[0].mxu0 %v6730
      %v6827 = vpop.f32.mrb[0].mxu0
      %v6828 = vadd.f32 0.0, %v6827
      %v6829 = vpop.f32.mrb[0].mxu0
      %v6830 = vpop.f32.mrb[0].mxu0
      %v6831 = vadd.f32 0.0, %v6830
      %v6832 = vpop.f32.mrb[0].mxu0
      %6833 = vmatprep.mubr.bf16.mxu0 0
      %6834 = vmatmul.mubr.bf16.gmra.mrb[0].mxu0 %v6733
      %v6835 = vpop.f32.mrb[0].mxu0
      %v6836 = vadd.f32 0.0, %v6835
      %v6837 = vpop.f32.mrb[0].mxu0
      %v6838 = vpop.f32.mrb[0].mxu0
      %v6839 = vadd.f32 0.0, %v6838
      %v6840 = vpop.f32.mrb[0].mxu0
      %6841 = vmatprep.mubr.bf16.mxu0 0
      %6842 = vmatmul.mubr.bf16.gmra.mrb[0].mxu0 %v6736
      %v6843 = vpop.f32.mrb[0].mxu0
      %v6844 = vadd.f32 0.0, %v6843
      %v6845 = vpop.f32.mrb[0].mxu0
      %v6846 = vpop.f32.mrb[0].mxu0
      %v6847 = vadd.f32 0.0, %v6846
      %v6848 = vpop.f32.mrb[0].mxu0
      %6849 = vmatprep.mubr.bf16.mxu0 0
      %6850 = vmatmul.mubr.bf16.gmra.mrb[0].mxu0 %v6739
      %v6851 = vpop.f32.mrb[0].mxu0
      %v6852 = vadd.f32 0.0, %v6851
      %v6853 = vpop.f32.mrb[0].mxu0
      %v6854 = vpop.f32.mrb[0].mxu0
      %v6855 = vadd.f32 0.0, %v6854
      %v6856 = vpop.f32.mrb[0].mxu0
      %6857 = vmatprep.mubr.bf16.mxu0 0
      %6858 = vmatmul.mubr.bf16.gmra.mrb[0].mxu0 %v6742
      %v6859 = vpop.f32.mrb[0].mxu0
      %v6860 = vadd.f32 0.0, %v6859
      %v6861 = vpop.f32.mrb[0].mxu0
      %v6862 = vpop.f32.mrb[0].mxu0
      %v6863 = vadd.f32 0.0, %v6862
      %v6864 = vpop.f32.mrb[0].mxu0
      %6865 = vmatprep.mubr.bf16.mxu0 0
      %6866 = vmatmul.mubr.bf16.gmra.mrb[0].mxu0 %v6745
      %v6867 = vpop.f32.mrb[0].mxu0
      %v6868 = vadd.f32 0.0, %v6867
      %v6869 = vpop.f32.mrb[0].mxu0
      %v6870 = vpop.f32.mrb[0].mxu0
      %v6871 = vadd.f32 0.0, %v6870
      %v6872 = vpop.f32.mrb[0].mxu0
      %6873 = vmatprep.mubr.bf16.mxu0 0
      %6874 = vmatmul.mubr.bf16.gmra.mrb[0].mxu0 %v6748
      %v6875 = vpop.f32.mrb[0].mxu0
      %v6876 = vadd.f32 0.0, %v6875
      %v6877 = vpop.f32.mrb[0].mxu0
      %v6878 = vpop.f32.mrb[0].mxu0
      %v6879 = vadd.f32 0.0, %v6878
      %v6880 = vpop.f32.mrb[0].mxu0
      %6881 = vmatprep.mubr.bf16.mxu0 0
      %6882 = vmatmul.mubr.bf16.gmra.mrb[0].mxu0 %v6751
      %v6883 = vpop.f32.mrb[0].mxu0
      %v6884 = vadd.f32 0.0, %v6883
      %v6885 = vpop.f32.mrb[0].mxu0
      %v6886 = vpop.f32.mrb[0].mxu0
      %v6887 = vadd.f32 0.0, %v6886
      %v6888 = vpop.f32.mrb[0].mxu0
      %6889 = vmatprep.mubr.bf16.mxu0 0
      %6890 = vmatmul.mubr.bf16.gmra.mrb[0].mxu0 %v6754
      %v6891 = vpop.f32.mrb[0].mxu0
      %v6892 = vadd.f32 0.0, %v6891
      %v6893 = vpop.f32.mrb[0].mxu0
      %v6894 = vpop.f32.mrb[0].mxu0
      %v6895 = vadd.f32 0.0, %v6894
      %v6896 = vpop.f32.mrb[0].mxu0
      %6897 = vmatprep.mubr.bf16.mxu0 0
      %6898 = vmatmul.mubr.bf16.gmra.mrb[0].mxu0 %v6757
      %v6899 = vpop.f32.mrb[0].mxu0
      %v6900 = vadd.f32 0.0, %v6899
      %v6901 = vpop.f32.mrb[0].mxu0
      %v6902 = vpop.f32.mrb[0].mxu0
      %v6903 = vadd.f32 0.0, %v6902
      %v6904 = vpop.f32.mrb[0].mxu0
      %6905 = vmatprep.mubr.bf16.mxu0 0
      %6906 = vmatmul.mubr.bf16.gmra.mrb[0].mxu0 %v6760
      %v6907 = vpop.f32.mrb[0].mxu0
      %v6908 = vadd.f32 0.0, %v6907
      %v6909 = vpop.f32.mrb[0].mxu0
      %v6910 = vpop.f32.mrb[0].mxu0
      %v6911 = vadd.f32 0.0, %v6910
      %v6912 = vpop.f32.mrb[0].mxu0
      %6913 = vmatprep.mubr.bf16.mxu0 0
      %6914 = vmatmul.mubr.bf16.gmra.mrb[0].mxu0 %v6763
      %v6915 = vpop.f32.mrb[0].mxu0
      %v6916 = vadd.f32 0.0, %v6915
      %v6917 = vpop.f32.mrb[0].mxu0
      %v6918 = vpop.f32.mrb[0].mxu0
      %v6919 = vadd.f32 0.0, %v6918
      %v6920 = vpop.f32.mrb[0].mxu0
      %6921 = vmatprep.mubr.bf16.mxu0 0
      %6922 = vmatmul.mubr.bf16.gmra.mrb[0].mxu0 %v6766
      %v6923 = vpop.f32.mrb[0].mxu0
      %v6924 = vadd.f32 0.0, %v6923
      %v6925 = vpop.f32.mrb[0].mxu0
      %v6926 = vpop.f32.mrb[0].mxu0
      %v6927 = vadd.f32 0.0, %v6926
      %v6928 = vpop.f32.mrb[0].mxu0
      %6929 = vmatprep.mubr.bf16.mxu0 0
      %6930 = vmatmul.mubr.bf16.gmra.mrb[0].mxu0 %v6769
      %v6931 = vpop.f32.mrb[0].mxu0
      %v6932 = vadd.f32 0.0, %v6931
      %v6933 = vpop.f32.mrb[0].mxu0
      %v6934 = vpop.f32.mrb[0].mxu0
      %v6935 = vadd.f32 0.0, %v6934
      %v6936 = vpop.f32.mrb[0].mxu0
      %6937 = vmatprep.mubr.bf16.mxu0 0
      %6938 = vmatmul.mubr.bf16.gmra.mrb[0].mxu0 %v6772
      %v6939 = vpop.f32.mrb[0].mxu0
      %v6940 = vadd.f32 0.0, %v6939
      %v6941 = vpop.f32.mrb[0].mxu0
      %v6942 = vpop.f32.mrb[0].mxu0
      %v6943 = vadd.f32 0.0, %v6942
      %v6944 = vpop.f32.mrb[0].mxu0
      %6945 = vmatprep.mubr.bf16.mxu0 0
      %6946 = vmatmul.mubr.bf16.gmra.mrb[0].mxu0 %v6775
      %v6947 = vpop.f32.mrb[0].mxu0
      %v6948 = vadd.f32 0.0, %v6947
      %v6949 = vpop.f32.mrb[0].mxu0
      %v6950 = vpop.f32.mrb[0].mxu0
      %v6951 = vadd.f32 0.0, %v6950
      %v6952 = vpop.f32.mrb[0].mxu0
      %6953 = vdwg.mxu0
      %v6954 = vadd.f32 %v6481, %v6812
      %v6955 = vadd.f32 %v6482, %v6815
      %v6956 = vadd.f32 %v6483, %v6820
      %v6957 = vadd.f32 %v6484, %v6823
      %v6958 = vadd.f32 %v6485, %v6828
      %v6959 = vadd.f32 %v6486, %v6831
      %v6960 = vadd.f32 %v6487, %v6836
      %v6961 = vadd.f32 %v6488, %v6839
      %v6962 = vadd.f32 %v6489, %v6844
      %v6963 = vadd.f32 %v6490, %v6847
      %v6964 = vadd.f32 %v6491, %v6852
      %v6965 = vadd.f32 %v6492, %v6855
      %v6966 = vadd.f32 %v6493, %v6860
      %v6967 = vadd.f32 %v6494, %v6863
      %v6968 = vadd.f32 %v6495, %v6868
      %v6969 = vadd.f32 %v6496, %v6871
      %v6970 = vadd.f32 %v6497, %v6876
      %v6971 = vadd.f32 %v6498, %v6879
      %v6972 = vadd.f32 %v6499, %v6884
      %v6973 = vadd.f32 %v6500, %v6887
      %v6974 = vadd.f32 %v6501, %v6892
      %v6975 = vadd.f32 %v6502, %v6895
      %v6976 = vadd.f32 %v6503, %v6900
      %v6977 = vadd.f32 %v6504, %v6903
      %v6978 = vadd.f32 %v6505, %v6908
      %v6979 = vadd.f32 %v6506, %v6911
      %v6980 = vadd.f32 %v6507, %v6916
      %v6981 = vadd.f32 %v6508, %v6919
      %v6982 = vadd.f32 %v6509, %v6924
      %v6983 = vadd.f32 %v6510, %v6927
      %v6984 = vadd.f32 %v6511, %v6932
      %v6985 = vadd.f32 %v6512, %v6935
      %v6986 = vadd.f32 %v6513, %v6940
      %v6987 = vadd.f32 %v6514, %v6943
      %v6988 = vadd.f32 %v6515, %v6948
      %v6989 = vadd.f32 %v6516, %v6951
      %v6990 = vld [vmem:[#allocation2 + $0x10] sm:$0xe0]
      %s6991 = scalar_lea.vmem %s4, 112
      %v6992 = vld [vmem:[%s6991] sm:$0xf]
      %v6993 = vld [vmem:[%s6991 + $0x4] sm:$0xf]
      %v6994 = vld [vmem:[%s6991 + $0x8] sm:$0xf]
      %v6995 = vld [vmem:[%s6991 + $0xc] sm:$0xf]
      %vm7015 = vcmask 1042432
      %v7016 = vrot.slane %v6990, 5
      %v7017 = vrot.slane %v6518, 5
      %v7018 = vsel %vm7015, %v7016, %v7017
      %v7019 = vrot.slane %v6519, 5
      %v7020 = vsel %vm7015, %v7017, %v7019
      %v7021 = vrot.slane %v6520, 5
      %v7022 = vsel %vm7015, %v7019, %v7021
      %v7023 = vrot.slane %v6521, 5
      %v7024 = vsel %vm7015, %v7021, %v7023
      %v7025 = vrot.slane %v6522, 5
      %v7026 = vsel %vm7015, %v7023, %v7025
      %v7027 = vrot.slane %v6523, 5
      %v7028 = vsel %vm7015, %v7025, %v7027
      %v7029 = vrot.slane %v6524, 5
      %v7030 = vsel %vm7015, %v7027, %v7029
      %v7031 = vrot.slane %v6525, 5
      %v7032 = vsel %vm7015, %v7029, %v7031
      %v7033 = vrot.slane %v6526, 5
      %v7034 = vsel %vm7015, %v7031, %v7033
      %v7035 = vrot.slane %v6527, 5
      %v7036 = vsel %vm7015, %v7033, %v7035
      %v7037 = vrot.slane %v6528, 5
      %v7038 = vsel %vm7015, %v7035, %v7037
      %v7039 = vrot.slane %v6529, 5
      %v7040 = vsel %vm7015, %v7037, %v7039
      %v7041 = vrot.slane %v6530, 5
      %v7042 = vsel %vm7015, %v7039, %v7041
      %v7043 = vrot.slane %v6531, 5
      %v7044 = vsel %vm7015, %v7041, %v7043
      %v7045 = vrot.slane %v6532, 5
      %v7046 = vsel %vm7015, %v7043, %v7045
      %v7047 = vrot.slane %v6533, 5
      %v7048 = vsel %vm7015, %v7045, %v7047
      %v7049 = vrot.slane %v6534, 5
      %v7050 = vsel %vm7015, %v7047, %v7049
      %v7051 = vrot.slane %v6535, 5
      %v7052 = vsel %vm7015, %v7049, %v7051
      %v7057 = vunpack.c.l.b16 %v6992
      %v7058 = vunpack.c.l.b16 %v6993
      %v7059 = vunpack.c.l.b16 %v6994
      %v7060 = vunpack.c.l.b16 %v6995
      %v7061 = vpack.c.b16 %v7058, %v7057
      %v7062 = vpack.c.b16 %v7060, %v7059
      %v7066 = vsel %vm3870, %v7018, 0
      %v7069 = vsel %vm3870, %v7020, 0
      %v7072 = vsel %vm3870, %v7022, 0
      %v7075 = vsel %vm3870, %v7024, 0
      %v7078 = vsel %vm3870, %v7026, 0
      %v7081 = vsel %vm3870, %v7028, 0
      %v7084 = vsel %vm3870, %v7030, 0
      %v7087 = vsel %vm3870, %v7032, 0
      %v7090 = vsel %vm3870, %v7034, 0
      %v7093 = vsel %vm3870, %v7036, 0
      %v7096 = vsel %vm3870, %v7038, 0
      %v7099 = vsel %vm3870, %v7040, 0
      %v7102 = vsel %vm3870, %v7042, 0
      %v7105 = vsel %vm3870, %v7044, 0
      %v7108 = vsel %vm3870, %v7046, 0
      %v7111 = vsel %vm3870, %v7048, 0
      %v7114 = vsel %vm3870, %v7050, 0
      %v7117 = vsel %vm3870, %v7052, 0
      %7119 = vmatprep.subr.bf16.mxu0 0
      %7120 = vmatpush1.bf16.msra.mxu0 %v7061
      %7121 = vmatprep.subr.bf16.mxu0 0
      %7122 = vmatpush1.bf16.msra.mxu0 %v7062
      %7123 = vmatprep.subr.bf16.mxu0 0
      %7124 = vmatpush1.bf16.msra.mxu0 0
      %7125 = vmatprep.subr.bf16.mxu0 0
      %7126 = vmatpush1.bf16.msra.mxu0 0
      %7127 = vmatprep.subr.bf16.mxu0 0
      %7128 = vmatpush1.bf16.msra.mxu0 0
      %7129 = vmatprep.subr.bf16.mxu0 0
      %7130 = vmatpush1.bf16.msra.mxu0 0
      %7131 = vmatprep.subr.bf16.mxu0 0
      %7132 = vmatpush1.bf16.msra.mxu0 0
      %7133 = vmatprep.subr.bf16.mxu0 0
      %7134 = vmatpush1.bf16.msra.mxu0 0
      %7135 = vmatprep.subr.bf16.mxu0 0
      %7136 = vmatpush1.bf16.msra.mxu0 0
      %7137 = vmatprep.subr.bf16.mxu0 0
      %7138 = vmatpush1.bf16.msra.mxu0 0
      %7139 = vmatprep.subr.bf16.mxu0 0
      %7140 = vmatpush1.bf16.msra.mxu0 0
      %7141 = vmatprep.subr.bf16.mxu0 0
      %7142 = vmatpush1.bf16.msra.mxu0 0
      %7143 = vmatprep.subr.bf16.mxu0 0
      %7144 = vmatpush1.bf16.msra.mxu0 0
      %7145 = vmatprep.subr.bf16.mxu0 0
      %7146 = vmatpush1.bf16.msra.mxu0 0
      %7147 = vmatprep.subr.bf16.mxu0 0
      %7148 = vmatpush1.bf16.msra.mxu0 0
      %7149 = vmatprep.subr.bf16.mxu0 0
      %7150 = vmatpush1.bf16.msra.mxu0 0
      %7151 = vmatprep.mubr.bf16.mxu0 0
      %7152 = vmatmul.mubr.bf16.gmra.mrb[0].mxu0 %v7066
      %v7153 = vpop.f32.mrb[0].mxu0
      %v7154 = vadd.f32 0.0, %v7153
      %v7155 = vpop.f32.mrb[0].mxu0
      %v7156 = vpop.f32.mrb[0].mxu0
      %v7157 = vadd.f32 0.0, %v7156
      %v7158 = vpop.f32.mrb[0].mxu0
      %7159 = vmatprep.mubr.bf16.mxu0 0
      %7160 = vmatmul.mubr.bf16.gmra.mrb[0].mxu0 %v7069
      %v7161 = vpop.f32.mrb[0].mxu0
      %v7162 = vadd.f32 0.0, %v7161
      %v7163 = vpop.f32.mrb[0].mxu0
      %v7164 = vpop.f32.mrb[0].mxu0
      %v7165 = vadd.f32 0.0, %v7164
      %v7166 = vpop.f32.mrb[0].mxu0
      %7167 = vmatprep.mubr.bf16.mxu0 0
      %7168 = vmatmul.mubr.bf16.gmra.mrb[0].mxu0 %v7072
      %v7169 = vpop.f32.mrb[0].mxu0
      %v7170 = vadd.f32 0.0, %v7169
      %v7171 = vpop.f32.mrb[0].mxu0
      %v7172 = vpop.f32.mrb[0].mxu0
      %v7173 = vadd.f32 0.0, %v7172
      %v7174 = vpop.f32.mrb[0].mxu0
      %7175 = vmatprep.mubr.bf16.mxu0 0
      %7176 = vmatmul.mubr.bf16.gmra.mrb[0].mxu0 %v7075
      %v7177 = vpop.f32.mrb[0].mxu0
      %v7178 = vadd.f32 0.0, %v7177
      %v7179 = vpop.f32.mrb[0].mxu0
      %v7180 = vpop.f32.mrb[0].mxu0
      %v7181 = vadd.f32 0.0, %v7180
      %v7182 = vpop.f32.mrb[0].mxu0
      %7183 = vmatprep.mubr.bf16.mxu0 0
      %7184 = vmatmul.mubr.bf16.gmra.mrb[0].mxu0 %v7078
      %v7185 = vpop.f32.mrb[0].mxu0
      %v7186 = vadd.f32 0.0, %v7185
      %v7187 = vpop.f32.mrb[0].mxu0
      %v7188 = vpop.f32.mrb[0].mxu0
      %v7189 = vadd.f32 0.0, %v7188
      %v7190 = vpop.f32.mrb[0].mxu0
      %7191 = vmatprep.mubr.bf16.mxu0 0
      %7192 = vmatmul.mubr.bf16.gmra.mrb[0].mxu0 %v7081
      %v7193 = vpop.f32.mrb[0].mxu0
      %v7194 = vadd.f32 0.0, %v7193
      %v7195 = vpop.f32.mrb[0].mxu0
      %v7196 = vpop.f32.mrb[0].mxu0
      %v7197 = vadd.f32 0.0, %v7196
      %v7198 = vpop.f32.mrb[0].mxu0
      %7199 = vmatprep.mubr.bf16.mxu0 0
      %7200 = vmatmul.mubr.bf16.gmra.mrb[0].mxu0 %v7084
      %v7201 = vpop.f32.mrb[0].mxu0
      %v7202 = vadd.f32 0.0, %v7201
      %v7203 = vpop.f32.mrb[0].mxu0
      %v7204 = vpop.f32.mrb[0].mxu0
      %v7205 = vadd.f32 0.0, %v7204
      %v7206 = vpop.f32.mrb[0].mxu0
      %7207 = vmatprep.mubr.bf16.mxu0 0
      %7208 = vmatmul.mubr.bf16.gmra.mrb[0].mxu0 %v7087
      %v7209 = vpop.f32.mrb[0].mxu0
      %v7210 = vadd.f32 0.0, %v7209
      %v7211 = vpop.f32.mrb[0].mxu0
      %v7212 = vpop.f32.mrb[0].mxu0
      %v7213 = vadd.f32 0.0, %v7212
      %v7214 = vpop.f32.mrb[0].mxu0
      %7215 = vmatprep.mubr.bf16.mxu0 0
      %7216 = vmatmul.mubr.bf16.gmra.mrb[0].mxu0 %v7090
      %v7217 = vpop.f32.mrb[0].mxu0
      %v7218 = vadd.f32 0.0, %v7217
      %v7219 = vpop.f32.mrb[0].mxu0
      %v7220 = vpop.f32.mrb[0].mxu0
      %v7221 = vadd.f32 0.0, %v7220
      %v7222 = vpop.f32.mrb[0].mxu0
      %7223 = vmatprep.mubr.bf16.mxu0 0
      %7224 = vmatmul.mubr.bf16.gmra.mrb[0].mxu0 %v7093
      %v7225 = vpop.f32.mrb[0].mxu0
      %v7226 = vadd.f32 0.0, %v7225
      %v7227 = vpop.f32.mrb[0].mxu0
      %v7228 = vpop.f32.mrb[0].mxu0
      %v7229 = vadd.f32 0.0, %v7228
      %v7230 = vpop.f32.mrb[0].mxu0
      %7231 = vmatprep.mubr.bf16.mxu0 0
      %7232 = vmatmul.mubr.bf16.gmra.mrb[0].mxu0 %v7096
      %v7233 = vpop.f32.mrb[0].mxu0
      %v7234 = vadd.f32 0.0, %v7233
      %v7235 = vpop.f32.mrb[0].mxu0
      %v7236 = vpop.f32.mrb[0].mxu0
      %v7237 = vadd.f32 0.0, %v7236
      %v7238 = vpop.f32.mrb[0].mxu0
      %7239 = vmatprep.mubr.bf16.mxu0 0
      %7240 = vmatmul.mubr.bf16.gmra.mrb[0].mxu0 %v7099
      %v7241 = vpop.f32.mrb[0].mxu0
      %v7242 = vadd.f32 0.0, %v7241
      %v7243 = vpop.f32.mrb[0].mxu0
      %v7244 = vpop.f32.mrb[0].mxu0
      %v7245 = vadd.f32 0.0, %v7244
      %v7246 = vpop.f32.mrb[0].mxu0
      %7247 = vmatprep.mubr.bf16.mxu0 0
      %7248 = vmatmul.mubr.bf16.gmra.mrb[0].mxu0 %v7102
      %v7249 = vpop.f32.mrb[0].mxu0
      %v7250 = vadd.f32 0.0, %v7249
      %v7251 = vpop.f32.mrb[0].mxu0
      %v7252 = vpop.f32.mrb[0].mxu0
      %v7253 = vadd.f32 0.0, %v7252
      %v7254 = vpop.f32.mrb[0].mxu0
      %7255 = vmatprep.mubr.bf16.mxu0 0
      %7256 = vmatmul.mubr.bf16.gmra.mrb[0].mxu0 %v7105
      %v7257 = vpop.f32.mrb[0].mxu0
      %v7258 = vadd.f32 0.0, %v7257
      %v7259 = vpop.f32.mrb[0].mxu0
      %v7260 = vpop.f32.mrb[0].mxu0
      %v7261 = vadd.f32 0.0, %v7260
      %v7262 = vpop.f32.mrb[0].mxu0
      %7263 = vmatprep.mubr.bf16.mxu0 0
      %7264 = vmatmul.mubr.bf16.gmra.mrb[0].mxu0 %v7108
      %v7265 = vpop.f32.mrb[0].mxu0
      %v7266 = vadd.f32 0.0, %v7265
      %v7267 = vpop.f32.mrb[0].mxu0
      %v7268 = vpop.f32.mrb[0].mxu0
      %v7269 = vadd.f32 0.0, %v7268
      %v7270 = vpop.f32.mrb[0].mxu0
      %7271 = vmatprep.mubr.bf16.mxu0 0
      %7272 = vmatmul.mubr.bf16.gmra.mrb[0].mxu0 %v7111
      %v7273 = vpop.f32.mrb[0].mxu0
      %v7274 = vadd.f32 0.0, %v7273
      %v7275 = vpop.f32.mrb[0].mxu0
      %v7276 = vpop.f32.mrb[0].mxu0
      %v7277 = vadd.f32 0.0, %v7276
      %v7278 = vpop.f32.mrb[0].mxu0
      %7279 = vmatprep.mubr.bf16.mxu0 0
      %7280 = vmatmul.mubr.bf16.gmra.mrb[0].mxu0 %v7114
      %v7281 = vpop.f32.mrb[0].mxu0
      %v7282 = vadd.f32 0.0, %v7281
      %v7283 = vpop.f32.mrb[0].mxu0
      %v7284 = vpop.f32.mrb[0].mxu0
      %v7285 = vadd.f32 0.0, %v7284
      %v7286 = vpop.f32.mrb[0].mxu0
      %7287 = vmatprep.mubr.bf16.mxu0 0
      %7288 = vmatmul.mubr.bf16.gmra.mrb[0].mxu0 %v7117
      %v7289 = vpop.f32.mrb[0].mxu0
      %v7290 = vadd.f32 0.0, %v7289
      %v7291 = vpop.f32.mrb[0].mxu0
      %v7292 = vpop.f32.mrb[0].mxu0
      %v7293 = vadd.f32 0.0, %v7292
      %v7294 = vpop.f32.mrb[0].mxu0
      %7295 = vdwg.mxu0
      %v7296 = vadd.f32 %v6954, %v7154
      %v7297 = vadd.f32 %v6955, %v7157
      %v7298 = vadd.f32 %v6956, %v7162
      %v7299 = vadd.f32 %v6957, %v7165
      %v7300 = vadd.f32 %v6958, %v7170
      %v7301 = vadd.f32 %v6959, %v7173
      %v7302 = vadd.f32 %v6960, %v7178
      %v7303 = vadd.f32 %v6961, %v7181
      %v7304 = vadd.f32 %v6962, %v7186
      %v7305 = vadd.f32 %v6963, %v7189
      %v7306 = vadd.f32 %v6964, %v7194
      %v7307 = vadd.f32 %v6965, %v7197
      %v7308 = vadd.f32 %v6966, %v7202
      %v7309 = vadd.f32 %v6967, %v7205
      %v7310 = vadd.f32 %v6968, %v7210
      %v7311 = vadd.f32 %v6969, %v7213
      %v7312 = vadd.f32 %v6970, %v7218
      %v7313 = vadd.f32 %v6971, %v7221
      %v7314 = vadd.f32 %v6972, %v7226
      %v7315 = vadd.f32 %v6973, %v7229
      %v7316 = vadd.f32 %v6974, %v7234
      %v7317 = vadd.f32 %v6975, %v7237
      %v7318 = vadd.f32 %v6976, %v7242
      %v7319 = vadd.f32 %v6977, %v7245
      %v7320 = vadd.f32 %v6978, %v7250
      %v7321 = vadd.f32 %v6979, %v7253
      %v7322 = vadd.f32 %v6980, %v7258
      %v7323 = vadd.f32 %v6981, %v7261
      %v7324 = vadd.f32 %v6982, %v7266
      %v7325 = vadd.f32 %v6983, %v7269
      %v7326 = vadd.f32 %v6984, %v7274
      %v7327 = vadd.f32 %v6985, %v7277
      %v7328 = vadd.f32 %v6986, %v7282
      %v7329 = vadd.f32 %v6987, %v7285
      %v7330 = vadd.f32 %v6988, %v7290
      %v7331 = vadd.f32 %v6989, %v7293
      %v7332 = vld [vmem:[#allocation2 + $0xa0] sm:$0x3f]
      %s7333 = scalar_lea.vmem %s4, 128
      %v7334 = vld [vmem:[%s7333] sm:$0xf]
      %v7335 = vld [vmem:[%s7333 + $0x4] sm:$0xf]
      %v7336 = vld [vmem:[%s7333 + $0x8] sm:$0xf]
      %v7337 = vld [vmem:[%s7333 + $0xc] sm:$0xf]
      %vm7338 = vsmask.f32 2304
      %v7340 = vshrl.u32 %v6990, 16
      %v7342 = vrot.slane %v7340, 5
      %v7343 = vshll.u32 %v6990, 16
      %v7345 = vrot.slane %v7343, 6
      %v7346 = vor.u32 %v7342, %v7345
      %v7347 = vrot.slane %v6550, 5
      %v7348 = vrot.slane %v6553, 6
      %v7349 = vor.u32 %v7347, %v7348
      %v7350 = vsel %vm7338, %v7346, %v7349
      %v7351 = vrot.slane %v6559, 5
      %v7352 = vrot.slane %v6562, 6
      %v7353 = vor.u32 %v7351, %v7352
      %v7354 = vsel %vm7338, %v7349, %v7353
      %v7355 = vrot.slane %v6568, 5
      %v7356 = vrot.slane %v6571, 6
      %v7357 = vor.u32 %v7355, %v7356
      %v7358 = vsel %vm7338, %v7353, %v7357
      %v7359 = vrot.slane %v6577, 5
      %v7360 = vrot.slane %v6580, 6
      %v7361 = vor.u32 %v7359, %v7360
      %v7362 = vsel %vm7338, %v7357, %v7361
      %v7363 = vrot.slane %v6586, 5
      %v7364 = vrot.slane %v6589, 6
      %v7365 = vor.u32 %v7363, %v7364
      %v7366 = vsel %vm7338, %v7361, %v7365
      %v7367 = vrot.slane %v6595, 5
      %v7368 = vrot.slane %v6598, 6
      %v7369 = vor.u32 %v7367, %v7368
      %v7370 = vsel %vm7338, %v7365, %v7369
      %v7371 = vrot.slane %v6604, 5
      %v7372 = vrot.slane %v6607, 6
      %v7373 = vor.u32 %v7371, %v7372
      %v7374 = vsel %vm7338, %v7369, %v7373
      %v7375 = vrot.slane %v6613, 5
      %v7376 = vrot.slane %v6616, 6
      %v7377 = vor.u32 %v7375, %v7376
      %v7378 = vsel %vm7338, %v7373, %v7377
      %v7379 = vrot.slane %v6622, 5
      %v7380 = vrot.slane %v6625, 6
      %v7381 = vor.u32 %v7379, %v7380
      %v7382 = vsel %vm7338, %v7377, %v7381
      %v7383 = vrot.slane %v6631, 5
      %v7384 = vrot.slane %v6634, 6
      %v7385 = vor.u32 %v7383, %v7384
      %v7386 = vsel %vm7338, %v7381, %v7385
      %v7387 = vrot.slane %v6640, 5
      %v7388 = vrot.slane %v6643, 6
      %v7389 = vor.u32 %v7387, %v7388
      %v7390 = vsel %vm7338, %v7385, %v7389
      %v7391 = vrot.slane %v6649, 5
      %v7392 = vrot.slane %v6652, 6
      %v7393 = vor.u32 %v7391, %v7392
      %v7394 = vsel %vm7338, %v7389, %v7393
      %v7395 = vrot.slane %v6658, 5
      %v7396 = vrot.slane %v6661, 6
      %v7397 = vor.u32 %v7395, %v7396
      %v7398 = vsel %vm7338, %v7393, %v7397
      %v7399 = vrot.slane %v6667, 5
      %v7400 = vrot.slane %v6670, 6
      %v7401 = vor.u32 %v7399, %v7400
      %v7402 = vsel %vm7338, %v7397, %v7401
      %v7403 = vrot.slane %v6676, 5
      %v7404 = vrot.slane %v6679, 6
      %v7405 = vor.u32 %v7403, %v7404
      %v7406 = vsel %vm7338, %v7401, %v7405
      %v7407 = vrot.slane %v6685, 5
      %v7408 = vrot.slane %v6688, 6
      %v7409 = vor.u32 %v7407, %v7408
      %v7410 = vsel %vm7338, %v7405, %v7409
      %v7411 = vrot.slane %v6694, 5
      %v7412 = vrot.slane %v6697, 6
      %v7413 = vor.u32 %v7411, %v7412
      %v7414 = vsel %vm7338, %v7409, %v7413
      %v7416 = vshrl.u32 %v7332, 16
      %v7418 = vrot.slane %v7416, 5
      %v7419 = vshll.u32 %v7332, 16
      %v7421 = vrot.slane %v7419, 6
      %v7422 = vor.u32 %v7418, %v7421
      %v7423 = vsel %vm7338, %v7413, %v7422
      %v7428 = vunpack.c.l.b16 %v7334
      %v7429 = vunpack.c.l.b16 %v7335
      %v7430 = vunpack.c.l.b16 %v7336
      %v7431 = vunpack.c.l.b16 %v7337
      %v7432 = vpack.c.b16 %v7429, %v7428
      %v7433 = vpack.c.b16 %v7431, %v7430
      %v7437 = vsel %vm3870, %v7350, 0
      %v7440 = vsel %vm3870, %v7354, 0
      %v7443 = vsel %vm3870, %v7358, 0
      %v7446 = vsel %vm3870, %v7362, 0
      %v7449 = vsel %vm3870, %v7366, 0
      %v7452 = vsel %vm3870, %v7370, 0
      %v7455 = vsel %vm3870, %v7374, 0
      %v7458 = vsel %vm3870, %v7378, 0
      %v7461 = vsel %vm3870, %v7382, 0
      %v7464 = vsel %vm3870, %v7386, 0
      %v7467 = vsel %vm3870, %v7390, 0
      %v7470 = vsel %vm3870, %v7394, 0
      %v7473 = vsel %vm3870, %v7398, 0
      %v7476 = vsel %vm3870, %v7402, 0
      %v7479 = vsel %vm3870, %v7406, 0
      %v7482 = vsel %vm3870, %v7410, 0
      %v7485 = vsel %vm3870, %v7414, 0
      %v7488 = vsel %vm3870, %v7423, 0
      %7490 = vmatprep.subr.bf16.mxu0 0
      %7491 = vmatpush1.bf16.msra.mxu0 %v7432
      %7492 = vmatprep.subr.bf16.mxu0 0
      %7493 = vmatpush1.bf16.msra.mxu0 %v7433
      %7494 = vmatprep.subr.bf16.mxu0 0
      %7495 = vmatpush1.bf16.msra.mxu0 0
      %7496 = vmatprep.subr.bf16.mxu0 0
      %7497 = vmatpush1.bf16.msra.mxu0 0
      %7498 = vmatprep.subr.bf16.mxu0 0
      %7499 = vmatpush1.bf16.msra.mxu0 0
      %7500 = vmatprep.subr.bf16.mxu0 0
      %7501 = vmatpush1.bf16.msra.mxu0 0
      %7502 = vmatprep.subr.bf16.mxu0 0
      %7503 = vmatpush1.bf16.msra.mxu0 0
      %7504 = vmatprep.subr.bf16.mxu0 0
      %7505 = vmatpush1.bf16.msra.mxu0 0
      %7506 = vmatprep.subr.bf16.mxu0 0
      %7507 = vmatpush1.bf16.msra.mxu0 0
      %7508 = vmatprep.subr.bf16.mxu0 0
      %7509 = vmatpush1.bf16.msra.mxu0 0
      %7510 = vmatprep.subr.bf16.mxu0 0
      %7511 = vmatpush1.bf16.msra.mxu0 0
      %7512 = vmatprep.subr.bf16.mxu0 0
      %7513 = vmatpush1.bf16.msra.mxu0 0
      %7514 = vmatprep.subr.bf16.mxu0 0
      %7515 = vmatpush1.bf16.msra.mxu0 0
      %7516 = vmatprep.subr.bf16.mxu0 0
      %7517 = vmatpush1.bf16.msra.mxu0 0
      %7518 = vmatprep.subr.bf16.mxu0 0
      %7519 = vmatpush1.bf16.msra.mxu0 0
      %7520 = vmatprep.subr.bf16.mxu0 0
      %7521 = vmatpush1.bf16.msra.mxu0 0
      %7522 = vmatprep.mubr.bf16.mxu0 0
      %7523 = vmatmul.mubr.bf16.gmra.mrb[0].mxu0 %v7437
      %v7524 = vpop.f32.mrb[0].mxu0
      %v7525 = vadd.f32 0.0, %v7524
      %v7526 = vpop.f32.mrb[0].mxu0
      %v7527 = vpop.f32.mrb[0].mxu0
      %v7528 = vadd.f32 0.0, %v7527
      %v7529 = vpop.f32.mrb[0].mxu0
      %7530 = vmatprep.mubr.bf16.mxu0 0
      %7531 = vmatmul.mubr.bf16.gmra.mrb[0].mxu0 %v7440
      %v7532 = vpop.f32.mrb[0].mxu0
      %v7533 = vadd.f32 0.0, %v7532
      %v7534 = vpop.f32.mrb[0].mxu0
      %v7535 = vpop.f32.mrb[0].mxu0
      %v7536 = vadd.f32 0.0, %v7535
      %v7537 = vpop.f32.mrb[0].mxu0
      %7538 = vmatprep.mubr.bf16.mxu0 0
      %7539 = vmatmul.mubr.bf16.gmra.mrb[0].mxu0 %v7443
      %v7540 = vpop.f32.mrb[0].mxu0
      %v7541 = vadd.f32 0.0, %v7540
      %v7542 = vpop.f32.mrb[0].mxu0
      %v7543 = vpop.f32.mrb[0].mxu0
      %v7544 = vadd.f32 0.0, %v7543
      %v7545 = vpop.f32.mrb[0].mxu0
      %7546 = vmatprep.mubr.bf16.mxu0 0
      %7547 = vmatmul.mubr.bf16.gmra.mrb[0].mxu0 %v7446
      %v7548 = vpop.f32.mrb[0].mxu0
      %v7549 = vadd.f32 0.0, %v7548
      %v7550 = vpop.f32.mrb[0].mxu0
      %v7551 = vpop.f32.mrb[0].mxu0
      %v7552 = vadd.f32 0.0, %v7551
      %v7553 = vpop.f32.mrb[0].mxu0
      %7554 = vmatprep.mubr.bf16.mxu0 0
      %7555 = vmatmul.mubr.bf16.gmra.mrb[0].mxu0 %v7449
      %v7556 = vpop.f32.mrb[0].mxu0
      %v7557 = vadd.f32 0.0, %v7556
      %v7558 = vpop.f32.mrb[0].mxu0
      %v7559 = vpop.f32.mrb[0].mxu0
      %v7560 = vadd.f32 0.0, %v7559
      %v7561 = vpop.f32.mrb[0].mxu0
      %7562 = vmatprep.mubr.bf16.mxu0 0
      %7563 = vmatmul.mubr.bf16.gmra.mrb[0].mxu0 %v7452
      %v7564 = vpop.f32.mrb[0].mxu0
      %v7565 = vadd.f32 0.0, %v7564
      %v7566 = vpop.f32.mrb[0].mxu0
      %v7567 = vpop.f32.mrb[0].mxu0
      %v7568 = vadd.f32 0.0, %v7567
      %v7569 = vpop.f32.mrb[0].mxu0
      %7570 = vmatprep.mubr.bf16.mxu0 0
      %7571 = vmatmul.mubr.bf16.gmra.mrb[0].mxu0 %v7455
      %v7572 = vpop.f32.mrb[0].mxu0
      %v7573 = vadd.f32 0.0, %v7572
      %v7574 = vpop.f32.mrb[0].mxu0
      %v7575 = vpop.f32.mrb[0].mxu0
      %v7576 = vadd.f32 0.0, %v7575
      %v7577 = vpop.f32.mrb[0].mxu0
      %7578 = vmatprep.mubr.bf16.mxu0 0
      %7579 = vmatmul.mubr.bf16.gmra.mrb[0].mxu0 %v7458
      %v7580 = vpop.f32.mrb[0].mxu0
      %v7581 = vadd.f32 0.0, %v7580
      %v7582 = vpop.f32.mrb[0].mxu0
      %v7583 = vpop.f32.mrb[0].mxu0
      %v7584 = vadd.f32 0.0, %v7583
      %v7585 = vpop.f32.mrb[0].mxu0
      %7586 = vmatprep.mubr.bf16.mxu0 0
      %7587 = vmatmul.mubr.bf16.gmra.mrb[0].mxu0 %v7461
      %v7588 = vpop.f32.mrb[0].mxu0
      %v7589 = vadd.f32 0.0, %v7588
      %v7590 = vpop.f32.mrb[0].mxu0
      %v7591 = vpop.f32.mrb[0].mxu0
      %v7592 = vadd.f32 0.0, %v7591
      %v7593 = vpop.f32.mrb[0].mxu0
      %7594 = vmatprep.mubr.bf16.mxu0 0
      %7595 = vmatmul.mubr.bf16.gmra.mrb[0].mxu0 %v7464
      %v7596 = vpop.f32.mrb[0].mxu0
      %v7597 = vadd.f32 0.0, %v7596
      %v7598 = vpop.f32.mrb[0].mxu0
      %v7599 = vpop.f32.mrb[0].mxu0
      %v7600 = vadd.f32 0.0, %v7599
      %v7601 = vpop.f32.mrb[0].mxu0
      %7602 = vmatprep.mubr.bf16.mxu0 0
      %7603 = vmatmul.mubr.bf16.gmra.mrb[0].mxu0 %v7467
      %v7604 = vpop.f32.mrb[0].mxu0
      %v7605 = vadd.f32 0.0, %v7604
      %v7606 = vpop.f32.mrb[0].mxu0
      %v7607 = vpop.f32.mrb[0].mxu0
      %v7608 = vadd.f32 0.0, %v7607
      %v7609 = vpop.f32.mrb[0].mxu0
      %7610 = vmatprep.mubr.bf16.mxu0 0
      %7611 = vmatmul.mubr.bf16.gmra.mrb[0].mxu0 %v7470
      %v7612 = vpop.f32.mrb[0].mxu0
      %v7613 = vadd.f32 0.0, %v7612
      %v7614 = vpop.f32.mrb[0].mxu0
      %v7615 = vpop.f32.mrb[0].mxu0
      %v7616 = vadd.f32 0.0, %v7615
      %v7617 = vpop.f32.mrb[0].mxu0
      %7618 = vmatprep.mubr.bf16.mxu0 0
      %7619 = vmatmul.mubr.bf16.gmra.mrb[0].mxu0 %v7473
      %v7620 = vpop.f32.mrb[0].mxu0
      %v7621 = vadd.f32 0.0, %v7620
      %v7622 = vpop.f32.mrb[0].mxu0
      %v7623 = vpop.f32.mrb[0].mxu0
      %v7624 = vadd.f32 0.0, %v7623
      %v7625 = vpop.f32.mrb[0].mxu0
      %7626 = vmatprep.mubr.bf16.mxu0 0
      %7627 = vmatmul.mubr.bf16.gmra.mrb[0].mxu0 %v7476
      %v7628 = vpop.f32.mrb[0].mxu0
      %v7629 = vadd.f32 0.0, %v7628
      %v7630 = vpop.f32.mrb[0].mxu0
      %v7631 = vpop.f32.mrb[0].mxu0
      %v7632 = vadd.f32 0.0, %v7631
      %v7633 = vpop.f32.mrb[0].mxu0
      %7634 = vmatprep.mubr.bf16.mxu0 0
      %7635 = vmatmul.mubr.bf16.gmra.mrb[0].mxu0 %v7479
      %v7636 = vpop.f32.mrb[0].mxu0
      %v7637 = vadd.f32 0.0, %v7636
      %v7638 = vpop.f32.mrb[0].mxu0
      %v7639 = vpop.f32.mrb[0].mxu0
      %v7640 = vadd.f32 0.0, %v7639
      %v7641 = vpop.f32.mrb[0].mxu0
      %7642 = vmatprep.mubr.bf16.mxu0 0
      %7643 = vmatmul.mubr.bf16.gmra.mrb[0].mxu0 %v7482
      %v7644 = vpop.f32.mrb[0].mxu0
      %v7645 = vadd.f32 0.0, %v7644
      %v7646 = vpop.f32.mrb[0].mxu0
      %v7647 = vpop.f32.mrb[0].mxu0
      %v7648 = vadd.f32 0.0, %v7647
      %v7649 = vpop.f32.mrb[0].mxu0
      %7650 = vmatprep.mubr.bf16.mxu0 0
      %7651 = vmatmul.mubr.bf16.gmra.mrb[0].mxu0 %v7485
      %v7652 = vpop.f32.mrb[0].mxu0
      %v7653 = vadd.f32 0.0, %v7652
      %v7654 = vpop.f32.mrb[0].mxu0
      %v7655 = vpop.f32.mrb[0].mxu0
      %v7656 = vadd.f32 0.0, %v7655
      %v7657 = vpop.f32.mrb[0].mxu0
      %7658 = vmatprep.mubr.bf16.mxu0 0
      %7659 = vmatmul.mubr.bf16.gmra.mrb[0].mxu0 %v7488
      %v7660 = vpop.f32.mrb[0].mxu0
      %v7661 = vadd.f32 0.0, %v7660
      %v7662 = vpop.f32.mrb[0].mxu0
      %v7663 = vpop.f32.mrb[0].mxu0
      %v7664 = vadd.f32 0.0, %v7663
      %v7665 = vpop.f32.mrb[0].mxu0
      %7666 = vdwg.mxu0
      %v7667 = vadd.f32 %v7296, %v7525
      %v7668 = vadd.f32 %v7297, %v7528
      %v7669 = vadd.f32 %v7298, %v7533
      %v7670 = vadd.f32 %v7299, %v7536
      %v7671 = vadd.f32 %v7300, %v7541
      %v7672 = vadd.f32 %v7301, %v7544
      %v7673 = vadd.f32 %v7302, %v7549
      %v7674 = vadd.f32 %v7303, %v7552
      %v7675 = vadd.f32 %v7304, %v7557
      %v7676 = vadd.f32 %v7305, %v7560
      %v7677 = vadd.f32 %v7306, %v7565
      %v7678 = vadd.f32 %v7307, %v7568
      %v7679 = vadd.f32 %v7308, %v7573
      %v7680 = vadd.f32 %v7309, %v7576
      %v7681 = vadd.f32 %v7310, %v7581
      %v7682 = vadd.f32 %v7311, %v7584
      %v7683 = vadd.f32 %v7312, %v7589
      %v7684 = vadd.f32 %v7313, %v7592
      %v7685 = vadd.f32 %v7314, %v7597
      %v7686 = vadd.f32 %v7315, %v7600
      %v7687 = vadd.f32 %v7316, %v7605
      %v7688 = vadd.f32 %v7317, %v7608
      %v7689 = vadd.f32 %v7318, %v7613
      %v7690 = vadd.f32 %v7319, %v7616
      %v7691 = vadd.f32 %v7320, %v7621
      %v7692 = vadd.f32 %v7321, %v7624
      %v7693 = vadd.f32 %v7322, %v7629
      %v7694 = vadd.f32 %v7323, %v7632
      %v7695 = vadd.f32 %v7324, %v7637
      %v7696 = vadd.f32 %v7325, %v7640
      %v7697 = vadd.f32 %v7326, %v7645
      %v7698 = vadd.f32 %v7327, %v7648
      %v7699 = vadd.f32 %v7328, %v7653
      %v7700 = vadd.f32 %v7329, %v7656
      %v7701 = vadd.f32 %v7330, %v7661
      %v7702 = vadd.f32 %v7331, %v7664
      %v7703 = vld [vmem:[%s5] sm:$0x1]
      %v7705 = vlaneseq
      %v7706 = vshrl.u32 %v7705, 7
      %v7707 = vsub.s32 0, %v7706
      %v7708 = vrot.slane %v7703, %v7707
      %v7710 = vadd.f32 %v7667, %v7708
      %v7711 = vadd.f32 %v7668, %v7708
      %v7712 = vadd.f32 %v7669, %v7708
      %v7713 = vadd.f32 %v7670, %v7708
      %v7714 = vadd.f32 %v7671, %v7708
      %v7715 = vadd.f32 %v7672, %v7708
      %v7716 = vadd.f32 %v7673, %v7708
      %v7717 = vadd.f32 %v7674, %v7708
      %v7718 = vadd.f32 %v7675, %v7708
      %v7719 = vadd.f32 %v7676, %v7708
      %v7720 = vadd.f32 %v7677, %v7708
      %v7721 = vadd.f32 %v7678, %v7708
      %v7722 = vadd.f32 %v7679, %v7708
      %v7723 = vadd.f32 %v7680, %v7708
      %v7724 = vadd.f32 %v7681, %v7708
      %v7725 = vadd.f32 %v7682, %v7708
      %v7726 = vadd.f32 %v7683, %v7708
      %v7727 = vadd.f32 %v7684, %v7708
      %v7728 = vadd.f32 %v7685, %v7708
      %v7729 = vadd.f32 %v7686, %v7708
      %v7730 = vadd.f32 %v7687, %v7708
      %v7731 = vadd.f32 %v7688, %v7708
      %v7732 = vadd.f32 %v7689, %v7708
      %v7733 = vadd.f32 %v7690, %v7708
      %v7734 = vadd.f32 %v7691, %v7708
      %v7735 = vadd.f32 %v7692, %v7708
      %v7736 = vadd.f32 %v7693, %v7708
      %v7737 = vadd.f32 %v7694, %v7708
      %v7738 = vadd.f32 %v7695, %v7708
      %v7739 = vadd.f32 %v7696, %v7708
      %v7740 = vadd.f32 %v7697, %v7708
      %v7741 = vadd.f32 %v7698, %v7708
      %v7742 = vadd.f32 %v7699, %v7708
      %v7743 = vadd.f32 %v7700, %v7708
      %v7744 = vadd.f32 %v7701, %v7708
      %v7745 = vadd.f32 %v7702, %v7708
      %v7746 = vmax.f32 %v7710, 0.0
      %v7747 = vmax.f32 %v7711, 0.0
      %v7748 = vmax.f32 %v7712, 0.0
      %v7749 = vmax.f32 %v7713, 0.0
      %v7750 = vmax.f32 %v7714, 0.0
      %v7751 = vmax.f32 %v7715, 0.0
      %v7752 = vmax.f32 %v7716, 0.0
      %v7753 = vmax.f32 %v7717, 0.0
      %v7754 = vmax.f32 %v7718, 0.0
      %v7755 = vmax.f32 %v7719, 0.0
      %v7756 = vmax.f32 %v7720, 0.0
      %v7757 = vmax.f32 %v7721, 0.0
      %v7758 = vmax.f32 %v7722, 0.0
      %v7759 = vmax.f32 %v7723, 0.0
      %v7760 = vmax.f32 %v7724, 0.0
      %v7761 = vmax.f32 %v7725, 0.0
      %v7762 = vmax.f32 %v7726, 0.0
      %v7763 = vmax.f32 %v7727, 0.0
      %v7764 = vmax.f32 %v7728, 0.0
      %v7765 = vmax.f32 %v7729, 0.0
      %v7766 = vmax.f32 %v7730, 0.0
      %v7767 = vmax.f32 %v7731, 0.0
      %v7768 = vmax.f32 %v7732, 0.0
      %v7769 = vmax.f32 %v7733, 0.0
      %v7770 = vmax.f32 %v7734, 0.0
      %v7771 = vmax.f32 %v7735, 0.0
      %v7772 = vmax.f32 %v7736, 0.0
      %v7773 = vmax.f32 %v7737, 0.0
      %v7774 = vmax.f32 %v7738, 0.0
      %v7775 = vmax.f32 %v7739, 0.0
      %v7776 = vmax.f32 %v7740, 0.0
      %v7777 = vmax.f32 %v7741, 0.0
      %v7778 = vmax.f32 %v7742, 0.0
      %v7779 = vmax.f32 %v7743, 0.0
      %v7780 = vmax.f32 %v7744, 0.0
      %v7781 = vmax.f32 %v7745, 0.0
      %7782 = vst.msk [vmem:[#allocation3] sm:$0xff] %vm3870, 0
      %7783 = vst.msk [vmem:[#allocation3 + $0x8] sm:$0xff] %vm3870, 0
      %7784 = vst.msk [vmem:[#allocation3 + $0x10] sm:$0xff] %vm3870, 0
      %7785 = vst.msk [vmem:[#allocation3 + $0x18] sm:$0xff] %vm3870, 0
      %7786 = vst.msk [vmem:[#allocation3 + $0x20] sm:$0xff] %vm3870, 0
      %7787 = vst.msk [vmem:[#allocation3 + $0x28] sm:$0xff] %vm3870, 0
      %7788 = vst.msk [vmem:[#allocation3 + $0x30] sm:$0xff] %vm3870, 0
      %7789 = vst.msk [vmem:[#allocation3 + $0x38] sm:$0xff] %vm3870, 0
      %7790 = vst.msk [vmem:[#allocation3 + $0x40] sm:$0xff] %vm3870, 0
      %7791 = vst.msk [vmem:[#allocation3 + $0x48] sm:$0xff] %vm3870, 0
      %7792 = vst.msk [vmem:[#allocation3 + $0x50] sm:$0xff] %vm3870, 0
      %7793 = vst.msk [vmem:[#allocation3 + $0x58] sm:$0xff] %vm3870, 0
      %7794 = vst.msk [vmem:[#allocation3 + $0x60] sm:$0xff] %vm3870, 0
      %7795 = vst.msk [vmem:[#allocation3 + $0x68] sm:$0xff] %vm3870, 0
      %7796 = vst.msk [vmem:[#allocation3 + $0x70] sm:$0xff] %vm3870, 0
      %7797 = vst.msk [vmem:[#allocation3 + $0x78] sm:$0xff] %vm3870, 0
      %7798 = vst.msk [vmem:[#allocation3 + $0x80] sm:$0xff] %vm3870, 0
      %7799 = vst.msk [vmem:[#allocation3 + $0x88] sm:$0xff] %vm3870, 0
      %7800 = vst.msk [vmem:[#allocation3 + $0x90] sm:$0xff] %vm3870, 0
      %7801 = vst.msk [vmem:[#allocation3 + $0x98] sm:$0xff] %vm3870, 0
      %7802 = vst.msk [vmem:[#allocation3 + $0xa0] sm:$0xff] %vm3870, 0
      %v7803 = vmul.f32 %v7746, %v3895
      %v7804 = vmul.f32 %v7747, %v3900
      %v7805 = vmul.f32 %v7748, %v3905
      %v7806 = vmul.f32 %v7749, %v3910
      %v7807 = vmul.f32 %v7750, %v3915
      %v7808 = vmul.f32 %v7751, %v3920
      %v7809 = vmul.f32 %v7752, %v3925
      %v7810 = vmul.f32 %v7753, %v3930
      %v7811 = vmul.f32 %v7754, %v3935
      %v7812 = vmul.f32 %v7755, %v3940
      %v7813 = vmul.f32 %v7756, %v3945
      %v7814 = vmul.f32 %v7757, %v3950
      %v7815 = vmul.f32 %v7758, %v3955
      %v7816 = vmul.f32 %v7759, %v3960
      %v7817 = vmul.f32 %v7760, %v3965
      %v7818 = vmul.f32 %v7761, %v3970
      %v7819 = vmul.f32 %v7762, %v3975
      %v7820 = vmul.f32 %v7763, %v3980
      %v7821 = vmul.f32 %v7764, %v3985
      %v7822 = vmul.f32 %v7765, %v3990
      %v7823 = vmul.f32 %v7766, %v3995
      %v7824 = vmul.f32 %v7767, %v4000
      %v7825 = vmul.f32 %v7768, %v4005
      %v7826 = vmul.f32 %v7769, %v4010
      %v7827 = vmul.f32 %v7770, %v4015
      %v7828 = vmul.f32 %v7771, %v4020
      %v7829 = vmul.f32 %v7772, %v4025
      %v7830 = vmul.f32 %v7773, %v4030
      %v7831 = vmul.f32 %v7774, %v4035
      %v7832 = vmul.f32 %v7775, %v4040
      %v7833 = vmul.f32 %v7776, %v4045
      %v7834 = vmul.f32 %v7777, %v4050
      %v7835 = vmul.f32 %v7778, %v4055
      %v7836 = vmul.f32 %v7779, %v4060
      %v7837 = vmul.f32 %v7780, %v4065
      %v7838 = vmul.f32 %v7781, %v4070
      %v7839 = vpack.c.bf16 %v7804, %v7803
      %v7840 = vpack.c.bf16 %v7806, %v7805
      %v7841 = vpack.c.bf16 %v7808, %v7807
      %v7842 = vpack.c.bf16 %v7810, %v7809
      %v7843 = vpack.c.bf16 %v7812, %v7811
      %v7844 = vpack.c.bf16 %v7814, %v7813
      %v7845 = vpack.c.bf16 %v7816, %v7815
      %v7846 = vpack.c.bf16 %v7818, %v7817
      %v7847 = vpack.c.bf16 %v7820, %v7819
      %v7848 = vpack.c.bf16 %v7822, %v7821
      %v7849 = vpack.c.bf16 %v7824, %v7823
      %v7850 = vpack.c.bf16 %v7826, %v7825
      %v7851 = vpack.c.bf16 %v7828, %v7827
      %v7852 = vpack.c.bf16 %v7830, %v7829
      %v7853 = vpack.c.bf16 %v7832, %v7831
      %v7854 = vpack.c.bf16 %v7834, %v7833
      %v7855 = vpack.c.bf16 %v7836, %v7835
      %v7856 = vpack.c.bf16 %v7838, %v7837
      %v7875 = vrot.slane %v7839, 4
      %v7876 = vrot.slane %v7840, 4
      %v7877 = vsel %vm4144, %v7875, %v7876
      %v7878 = vrot.slane %v7841, 4
      %v7879 = vsel %vm4144, %v7876, %v7878
      %v7880 = vrot.slane %v7842, 4
      %v7881 = vsel %vm4144, %v7878, %v7880
      %v7882 = vrot.slane %v7843, 4
      %v7883 = vsel %vm4144, %v7880, %v7882
      %v7884 = vrot.slane %v7844, 4
      %v7885 = vsel %vm4144, %v7882, %v7884
      %v7886 = vrot.slane %v7845, 4
      %v7887 = vsel %vm4144, %v7884, %v7886
      %v7888 = vrot.slane %v7846, 4
      %v7889 = vsel %vm4144, %v7886, %v7888
      %v7890 = vrot.slane %v7847, 4
      %v7891 = vsel %vm4144, %v7888, %v7890
      %v7892 = vrot.slane %v7848, 4
      %v7893 = vsel %vm4144, %v7890, %v7892
      %v7894 = vrot.slane %v7849, 4
      %v7895 = vsel %vm4144, %v7892, %v7894
      %v7896 = vrot.slane %v7850, 4
      %v7897 = vsel %vm4144, %v7894, %v7896
      %v7898 = vrot.slane %v7851, 4
      %v7899 = vsel %vm4144, %v7896, %v7898
      %v7900 = vrot.slane %v7852, 4
      %v7901 = vsel %vm4144, %v7898, %v7900
      %v7902 = vrot.slane %v7853, 4
      %v7903 = vsel %vm4144, %v7900, %v7902
      %v7904 = vrot.slane %v7854, 4
      %v7905 = vsel %vm4144, %v7902, %v7904
      %v7906 = vrot.slane %v7855, 4
      %v7907 = vsel %vm4144, %v7904, %v7906
      %v7908 = vrot.slane %v7856, 4
      %v7909 = vsel %vm4144, %v7906, %v7908
      %7929 = vst.msk [vmem:[#allocation3 + $0x8] sm:$0xf0] %vm4199, %v7875
      %7930 = vst.msk [vmem:[#allocation3 + $0x10] sm:$0xff] %vm3870, %v7877
      %7931 = vst.msk [vmem:[#allocation3 + $0x18] sm:$0xff] %vm3870, %v7879
      %7932 = vst.msk [vmem:[#allocation3 + $0x20] sm:$0xff] %vm3870, %v7881
      %7933 = vst.msk [vmem:[#allocation3 + $0x28] sm:$0xff] %vm3870, %v7883
      %7934 = vst.msk [vmem:[#allocation3 + $0x30] sm:$0xff] %vm3870, %v7885
      %7935 = vst.msk [vmem:[#allocation3 + $0x38] sm:$0xff] %vm3870, %v7887
      %7936 = vst.msk [vmem:[#allocation3 + $0x40] sm:$0xff] %vm3870, %v7889
      %7937 = vst.msk [vmem:[#allocation3 + $0x48] sm:$0xff] %vm3870, %v7891
      %7938 = vst.msk [vmem:[#allocation3 + $0x50] sm:$0xff] %vm3870, %v7893
      %7939 = vst.msk [vmem:[#allocation3 + $0x58] sm:$0xff] %vm3870, %v7895
      %7940 = vst.msk [vmem:[#allocation3 + $0x60] sm:$0xff] %vm3870, %v7897
      %7941 = vst.msk [vmem:[#allocation3 + $0x68] sm:$0xff] %vm3870, %v7899
      %7942 = vst.msk [vmem:[#allocation3 + $0x70] sm:$0xff] %vm3870, %v7901
      %7943 = vst.msk [vmem:[#allocation3 + $0x78] sm:$0xff] %vm3870, %v7903
      %7944 = vst.msk [vmem:[#allocation3 + $0x80] sm:$0xff] %vm3870, %v7905
      %7945 = vst.msk [vmem:[#allocation3 + $0x88] sm:$0xff] %vm3870, %v7907
      %7946 = vst.msk [vmem:[#allocation3 + $0x90] sm:$0xff] %vm3870, %v7909
      %7947 = vst.msk [vmem:[#allocation3 + $0x98] sm:$0xf] %vm4218, %v7908
      %v7948 = vld [vmem:[#allocation3] sm:$0xfc]
      %v7949 = vld [vmem:[#allocation3 + $0x8] sm:$0xff]
      %v7950 = vld [vmem:[#allocation3 + $0x10] sm:$0xff]
      %v7951 = vld [vmem:[#allocation3 + $0x18] sm:$0xff]
      %v7952 = vld [vmem:[#allocation3 + $0x20] sm:$0xff]
      %v7953 = vld [vmem:[#allocation3 + $0x28] sm:$0xff]
      %v7954 = vld [vmem:[#allocation3 + $0x30] sm:$0xff]
      %v7955 = vld [vmem:[#allocation3 + $0x38] sm:$0xff]
      %v7956 = vld [vmem:[#allocation3 + $0x40] sm:$0xff]
      %v7957 = vld [vmem:[#allocation3 + $0x48] sm:$0xff]
      %v7958 = vld [vmem:[#allocation3 + $0x50] sm:$0xff]
      %v7959 = vld [vmem:[#allocation3 + $0x58] sm:$0xff]
      %v7960 = vld [vmem:[#allocation3 + $0x60] sm:$0xff]
      %v7961 = vld [vmem:[#allocation3 + $0x68] sm:$0xff]
      %v7962 = vld [vmem:[#allocation3 + $0x70] sm:$0xff]
      %v7963 = vld [vmem:[#allocation3 + $0x78] sm:$0xff]
      %v7964 = vld [vmem:[#allocation3 + $0x80] sm:$0xff]
      %v7965 = vld [vmem:[#allocation3 + $0x88] sm:$0xff]
      %v7966 = vld [vmem:[#allocation3 + $0x90] sm:$0x7]
      %v7967 = vld [vmem:[%s6] sm:$0xf]
      %v7968 = vld [vmem:[%s6 + $0x4] sm:$0xf]
      %v7969 = vld [vmem:[%s6 + $0x8] sm:$0xf]
      %v7970 = vld [vmem:[%s6 + $0xc] sm:$0xf]
      %v7971 = vld [vmem:[#allocation3] sm:$0xf8]
      %s7972 = scalar_lea.vmem %s6, 16
      %v7973 = vld [vmem:[%s7972] sm:$0xf]
      %v7974 = vld [vmem:[%s7972 + $0x4] sm:$0xf]
      %v7975 = vld [vmem:[%s7972 + $0x8] sm:$0xf]
      %v7976 = vld [vmem:[%s7972 + $0xc] sm:$0xf]
      %v7996 = vrot.slane %v7971, 3
      %v7997 = vrot.slane %v7949, 3
      %v7998 = vsel %vm3483, %v7996, %v7997
      %v7999 = vrot.slane %v7950, 3
      %v8000 = vsel %vm3483, %v7997, %v7999
      %v8001 = vrot.slane %v7951, 3
      %v8002 = vsel %vm3483, %v7999, %v8001
      %v8003 = vrot.slane %v7952, 3
      %v8004 = vsel %vm3483, %v8001, %v8003
      %v8005 = vrot.slane %v7953, 3
      %v8006 = vsel %vm3483, %v8003, %v8005
      %v8007 = vrot.slane %v7954, 3
      %v8008 = vsel %vm3483, %v8005, %v8007
      %v8009 = vrot.slane %v7955, 3
      %v8010 = vsel %vm3483, %v8007, %v8009
      %v8011 = vrot.slane %v7956, 3
      %v8012 = vsel %vm3483, %v8009, %v8011
      %v8013 = vrot.slane %v7957, 3
      %v8014 = vsel %vm3483, %v8011, %v8013
      %v8015 = vrot.slane %v7958, 3
      %v8016 = vsel %vm3483, %v8013, %v8015
      %v8017 = vrot.slane %v7959, 3
      %v8018 = vsel %vm3483, %v8015, %v8017
      %v8019 = vrot.slane %v7960, 3
      %v8020 = vsel %vm3483, %v8017, %v8019
      %v8021 = vrot.slane %v7961, 3
      %v8022 = vsel %vm3483, %v8019, %v8021
      %v8023 = vrot.slane %v7962, 3
      %v8024 = vsel %vm3483, %v8021, %v8023
      %v8025 = vrot.slane %v7963, 3
      %v8026 = vsel %vm3483, %v8023, %v8025
      %v8027 = vrot.slane %v7964, 3
      %v8028 = vsel %vm3483, %v8025, %v8027
      %v8029 = vrot.slane %v7965, 3
      %v8030 = vsel %vm3483, %v8027, %v8029
      %v8031 = vrot.slane %v7966, 3
      %v8032 = vsel %vm3483, %v8029, %v8031
      %v8037 = vunpack.c.l.b16 %v7973
      %v8038 = vunpack.c.l.b16 %v7974
      %v8039 = vunpack.c.l.b16 %v7975
      %v8040 = vunpack.c.l.b16 %v7976
      %v8041 = vpack.c.b16 %v8038, %v8037
      %v8042 = vpack.c.b16 %v8040, %v8039
      %v8046 = vsel %vm3870, %v7998, 0
      %v8049 = vsel %vm3870, %v8000, 0
      %v8052 = vsel %vm3870, %v8002, 0
      %v8055 = vsel %vm3870, %v8004, 0
      %v8058 = vsel %vm3870, %v8006, 0
      %v8061 = vsel %vm3870, %v8008, 0
      %v8064 = vsel %vm3870, %v8010, 0
      %v8067 = vsel %vm3870, %v8012, 0
      %v8070 = vsel %vm3870, %v8014, 0
      %v8073 = vsel %vm3870, %v8016, 0
      %v8076 = vsel %vm3870, %v8018, 0
      %v8079 = vsel %vm3870, %v8020, 0
      %v8082 = vsel %vm3870, %v8022, 0
      %v8085 = vsel %vm3870, %v8024, 0
      %v8088 = vsel %vm3870, %v8026, 0
      %v8091 = vsel %vm3870, %v8028, 0
      %v8094 = vsel %vm3870, %v8030, 0
      %v8097 = vsel %vm3870, %v8032, 0
      %8099 = vmatprep.subr.bf16.mxu0 0
      %8100 = vmatpush1.bf16.msra.mxu0 %v8041
      %8101 = vmatprep.subr.bf16.mxu0 0
      %8102 = vmatpush1.bf16.msra.mxu0 %v8042
      %8103 = vmatprep.subr.bf16.mxu0 0
      %8104 = vmatpush1.bf16.msra.mxu0 0
      %8105 = vmatprep.subr.bf16.mxu0 0
      %8106 = vmatpush1.bf16.msra.mxu0 0
      %8107 = vmatprep.subr.bf16.mxu0 0
      %8108 = vmatpush1.bf16.msra.mxu0 0
      %8109 = vmatprep.subr.bf16.mxu0 0
      %8110 = vmatpush1.bf16.msra.mxu0 0
      %8111 = vmatprep.subr.bf16.mxu0 0
      %8112 = vmatpush1.bf16.msra.mxu0 0
      %8113 = vmatprep.subr.bf16.mxu0 0
      %8114 = vmatpush1.bf16.msra.mxu0 0
      %8115 = vmatprep.subr.bf16.mxu0 0
      %8116 = vmatpush1.bf16.msra.mxu0 0
      %8117 = vmatprep.subr.bf16.mxu0 0
      %8118 = vmatpush1.bf16.msra.mxu0 0
      %8119 = vmatprep.subr.bf16.mxu0 0
      %8120 = vmatpush1.bf16.msra.mxu0 0
      %8121 = vmatprep.subr.bf16.mxu0 0
      %8122 = vmatpush1.bf16.msra.mxu0 0
      %8123 = vmatprep.subr.bf16.mxu0 0
      %8124 = vmatpush1.bf16.msra.mxu0 0
      %8125 = vmatprep.subr.bf16.mxu0 0
      %8126 = vmatpush1.bf16.msra.mxu0 0
      %8127 = vmatprep.subr.bf16.mxu0 0
      %8128 = vmatpush1.bf16.msra.mxu0 0
      %8129 = vmatprep.subr.bf16.mxu0 0
      %8130 = vmatpush1.bf16.msra.mxu0 0
      %8131 = vmatprep.mubr.bf16.mxu0 0
      %8132 = vmatmul.mubr.bf16.gmra.mrb[0].mxu0 %v8046
      %v8133 = vpop.f32.mrb[0].mxu0
      %v8134 = vadd.f32 0.0, %v8133
      %v8135 = vpop.f32.mrb[0].mxu0
      %v8136 = vpop.f32.mrb[0].mxu0
      %v8137 = vadd.f32 0.0, %v8136
      %v8138 = vpop.f32.mrb[0].mxu0
      %8139 = vmatprep.mubr.bf16.mxu0 0
      %8140 = vmatmul.mubr.bf16.gmra.mrb[0].mxu0 %v8049
      %v8141 = vpop.f32.mrb[0].mxu0
      %v8142 = vadd.f32 0.0, %v8141
      %v8143 = vpop.f32.mrb[0].mxu0
      %v8144 = vpop.f32.mrb[0].mxu0
      %v8145 = vadd.f32 0.0, %v8144
      %v8146 = vpop.f32.mrb[0].mxu0
      %8147 = vmatprep.mubr.bf16.mxu0 0
      %8148 = vmatmul.mubr.bf16.gmra.mrb[0].mxu0 %v8052
      %v8149 = vpop.f32.mrb[0].mxu0
      %v8150 = vadd.f32 0.0, %v8149
      %v8151 = vpop.f32.mrb[0].mxu0
      %v8152 = vpop.f32.mrb[0].mxu0
      %v8153 = vadd.f32 0.0, %v8152
      %v8154 = vpop.f32.mrb[0].mxu0
      %8155 = vmatprep.mubr.bf16.mxu0 0
      %8156 = vmatmul.mubr.bf16.gmra.mrb[0].mxu0 %v8055
      %v8157 = vpop.f32.mrb[0].mxu0
      %v8158 = vadd.f32 0.0, %v8157
      %v8159 = vpop.f32.mrb[0].mxu0
      %v8160 = vpop.f32.mrb[0].mxu0
      %v8161 = vadd.f32 0.0, %v8160
      %v8162 = vpop.f32.mrb[0].mxu0
      %8163 = vmatprep.mubr.bf16.mxu0 0
      %8164 = vmatmul.mubr.bf16.gmra.mrb[0].mxu0 %v8058
      %v8165 = vpop.f32.mrb[0].mxu0
      %v8166 = vadd.f32 0.0, %v8165
      %v8167 = vpop.f32.mrb[0].mxu0
      %v8168 = vpop.f32.mrb[0].mxu0
      %v8169 = vadd.f32 0.0, %v8168
      %v8170 = vpop.f32.mrb[0].mxu0
      %8171 = vmatprep.mubr.bf16.mxu0 0
      %8172 = vmatmul.mubr.bf16.gmra.mrb[0].mxu0 %v8061
      %v8173 = vpop.f32.mrb[0].mxu0
      %v8174 = vadd.f32 0.0, %v8173
      %v8175 = vpop.f32.mrb[0].mxu0
      %v8176 = vpop.f32.mrb[0].mxu0
      %v8177 = vadd.f32 0.0, %v8176
      %v8178 = vpop.f32.mrb[0].mxu0
      %8179 = vmatprep.mubr.bf16.mxu0 0
      %8180 = vmatmul.mubr.bf16.gmra.mrb[0].mxu0 %v8064
      %v8181 = vpop.f32.mrb[0].mxu0
      %v8182 = vadd.f32 0.0, %v8181
      %v8183 = vpop.f32.mrb[0].mxu0
      %v8184 = vpop.f32.mrb[0].mxu0
      %v8185 = vadd.f32 0.0, %v8184
      %v8186 = vpop.f32.mrb[0].mxu0
      %8187 = vmatprep.mubr.bf16.mxu0 0
      %8188 = vmatmul.mubr.bf16.gmra.mrb[0].mxu0 %v8067
      %v8189 = vpop.f32.mrb[0].mxu0
      %v8190 = vadd.f32 0.0, %v8189
      %v8191 = vpop.f32.mrb[0].mxu0
      %v8192 = vpop.f32.mrb[0].mxu0
      %v8193 = vadd.f32 0.0, %v8192
      %v8194 = vpop.f32.mrb[0].mxu0
      %8195 = vmatprep.mubr.bf16.mxu0 0
      %8196 = vmatmul.mubr.bf16.gmra.mrb[0].mxu0 %v8070
      %v8197 = vpop.f32.mrb[0].mxu0
      %v8198 = vadd.f32 0.0, %v8197
      %v8199 = vpop.f32.mrb[0].mxu0
      %v8200 = vpop.f32.mrb[0].mxu0
      %v8201 = vadd.f32 0.0, %v8200
      %v8202 = vpop.f32.mrb[0].mxu0
      %8203 = vmatprep.mubr.bf16.mxu0 0
      %8204 = vmatmul.mubr.bf16.gmra.mrb[0].mxu0 %v8073
      %v8205 = vpop.f32.mrb[0].mxu0
      %v8206 = vadd.f32 0.0, %v8205
      %v8207 = vpop.f32.mrb[0].mxu0
      %v8208 = vpop.f32.mrb[0].mxu0
      %v8209 = vadd.f32 0.0, %v8208
      %v8210 = vpop.f32.mrb[0].mxu0
      %8211 = vmatprep.mubr.bf16.mxu0 0
      %8212 = vmatmul.mubr.bf16.gmra.mrb[0].mxu0 %v8076
      %v8213 = vpop.f32.mrb[0].mxu0
      %v8214 = vadd.f32 0.0, %v8213
      %v8215 = vpop.f32.mrb[0].mxu0
      %v8216 = vpop.f32.mrb[0].mxu0
      %v8217 = vadd.f32 0.0, %v8216
      %v8218 = vpop.f32.mrb[0].mxu0
      %8219 = vmatprep.mubr.bf16.mxu0 0
      %8220 = vmatmul.mubr.bf16.gmra.mrb[0].mxu0 %v8079
      %v8221 = vpop.f32.mrb[0].mxu0
      %v8222 = vadd.f32 0.0, %v8221
      %v8223 = vpop.f32.mrb[0].mxu0
      %v8224 = vpop.f32.mrb[0].mxu0
      %v8225 = vadd.f32 0.0, %v8224
      %v8226 = vpop.f32.mrb[0].mxu0
      %8227 = vmatprep.mubr.bf16.mxu0 0
      %8228 = vmatmul.mubr.bf16.gmra.mrb[0].mxu0 %v8082
      %v8229 = vpop.f32.mrb[0].mxu0
      %v8230 = vadd.f32 0.0, %v8229
      %v8231 = vpop.f32.mrb[0].mxu0
      %v8232 = vpop.f32.mrb[0].mxu0
      %v8233 = vadd.f32 0.0, %v8232
      %v8234 = vpop.f32.mrb[0].mxu0
      %8235 = vmatprep.mubr.bf16.mxu0 0
      %8236 = vmatmul.mubr.bf16.gmra.mrb[0].mxu0 %v8085
      %v8237 = vpop.f32.mrb[0].mxu0
      %v8238 = vadd.f32 0.0, %v8237
      %v8239 = vpop.f32.mrb[0].mxu0
      %v8240 = vpop.f32.mrb[0].mxu0
      %v8241 = vadd.f32 0.0, %v8240
      %v8242 = vpop.f32.mrb[0].mxu0
      %8243 = vmatprep.mubr.bf16.mxu0 0
      %8244 = vmatmul.mubr.bf16.gmra.mrb[0].mxu0 %v8088
      %v8245 = vpop.f32.mrb[0].mxu0
      %v8246 = vadd.f32 0.0, %v8245
      %v8247 = vpop.f32.mrb[0].mxu0
      %v8248 = vpop.f32.mrb[0].mxu0
      %v8249 = vadd.f32 0.0, %v8248
      %v8250 = vpop.f32.mrb[0].mxu0
      %8251 = vmatprep.mubr.bf16.mxu0 0
      %8252 = vmatmul.mubr.bf16.gmra.mrb[0].mxu0 %v8091
      %v8253 = vpop.f32.mrb[0].mxu0
      %v8254 = vadd.f32 0.0, %v8253
      %v8255 = vpop.f32.mrb[0].mxu0
      %v8256 = vpop.f32.mrb[0].mxu0
      %v8257 = vadd.f32 0.0, %v8256
      %v8258 = vpop.f32.mrb[0].mxu0
      %8259 = vmatprep.mubr.bf16.mxu0 0
      %8260 = vmatmul.mubr.bf16.gmra.mrb[0].mxu0 %v8094
      %v8261 = vpop.f32.mrb[0].mxu0
      %v8262 = vadd.f32 0.0, %v8261
      %v8263 = vpop.f32.mrb[0].mxu0
      %v8264 = vpop.f32.mrb[0].mxu0
      %v8265 = vadd.f32 0.0, %v8264
      %v8266 = vpop.f32.mrb[0].mxu0
      %8267 = vmatprep.mubr.bf16.mxu0 0
      %8268 = vmatmul.mubr.bf16.gmra.mrb[0].mxu0 %v8097
      %v8269 = vpop.f32.mrb[0].mxu0
      %v8270 = vadd.f32 0.0, %v8269
      %v8271 = vpop.f32.mrb[0].mxu0
      %v8272 = vpop.f32.mrb[0].mxu0
      %v8273 = vadd.f32 0.0, %v8272
      %v8274 = vpop.f32.mrb[0].mxu0
      %8275 = vdwg.mxu0
      %v8277 = vshrl.u32 %v7948, 16
      %v8279 = vrot.slane %v8277, 2
      %v8280 = vshll.u32 %v7948, 16
      %v8282 = vrot.slane %v8280, 3
      %v8283 = vor.u32 %v8279, %v8282
      %v8285 = vshrl.u32 %v7949, 16
      %v8287 = vrot.slane %v8285, 2
      %v8288 = vshll.u32 %v7949, 16
      %v8290 = vrot.slane %v8288, 3
      %v8291 = vor.u32 %v8287, %v8290
      %v8292 = vsel %vm3036, %v8283, %v8291
      %v8294 = vshrl.u32 %v7950, 16
      %v8296 = vrot.slane %v8294, 2
      %v8297 = vshll.u32 %v7950, 16
      %v8299 = vrot.slane %v8297, 3
      %v8300 = vor.u32 %v8296, %v8299
      %v8301 = vsel %vm3036, %v8291, %v8300
      %v8303 = vshrl.u32 %v7951, 16
      %v8305 = vrot.slane %v8303, 2
      %v8306 = vshll.u32 %v7951, 16
      %v8308 = vrot.slane %v8306, 3
      %v8309 = vor.u32 %v8305, %v8308
      %v8310 = vsel %vm3036, %v8300, %v8309
      %v8312 = vshrl.u32 %v7952, 16
      %v8314 = vrot.slane %v8312, 2
      %v8315 = vshll.u32 %v7952, 16
      %v8317 = vrot.slane %v8315, 3
      %v8318 = vor.u32 %v8314, %v8317
      %v8319 = vsel %vm3036, %v8309, %v8318
      %v8321 = vshrl.u32 %v7953, 16
      %v8323 = vrot.slane %v8321, 2
      %v8324 = vshll.u32 %v7953, 16
      %v8326 = vrot.slane %v8324, 3
      %v8327 = vor.u32 %v8323, %v8326
      %v8328 = vsel %vm3036, %v8318, %v8327
      %v8330 = vshrl.u32 %v7954, 16
      %v8332 = vrot.slane %v8330, 2
      %v8333 = vshll.u32 %v7954, 16
      %v8335 = vrot.slane %v8333, 3
      %v8336 = vor.u32 %v8332, %v8335
      %v8337 = vsel %vm3036, %v8327, %v8336
      %v8339 = vshrl.u32 %v7955, 16
      %v8341 = vrot.slane %v8339, 2
      %v8342 = vshll.u32 %v7955, 16
      %v8344 = vrot.slane %v8342, 3
      %v8345 = vor.u32 %v8341, %v8344
      %v8346 = vsel %vm3036, %v8336, %v8345
      %v8348 = vshrl.u32 %v7956, 16
      %v8350 = vrot.slane %v8348, 2
      %v8351 = vshll.u32 %v7956, 16
      %v8353 = vrot.slane %v8351, 3
      %v8354 = vor.u32 %v8350, %v8353
      %v8355 = vsel %vm3036, %v8345, %v8354
      %v8357 = vshrl.u32 %v7957, 16
      %v8359 = vrot.slane %v8357, 2
      %v8360 = vshll.u32 %v7957, 16
      %v8362 = vrot.slane %v8360, 3
      %v8363 = vor.u32 %v8359, %v8362
      %v8364 = vsel %vm3036, %v8354, %v8363
      %v8366 = vshrl.u32 %v7958, 16
      %v8368 = vrot.slane %v8366, 2
      %v8369 = vshll.u32 %v7958, 16
      %v8371 = vrot.slane %v8369, 3
      %v8372 = vor.u32 %v8368, %v8371
      %v8373 = vsel %vm3036, %v8363, %v8372
      %v8375 = vshrl.u32 %v7959, 16
      %v8377 = vrot.slane %v8375, 2
      %v8378 = vshll.u32 %v7959, 16
      %v8380 = vrot.slane %v8378, 3
      %v8381 = vor.u32 %v8377, %v8380
      %v8382 = vsel %vm3036, %v8372, %v8381
      %v8384 = vshrl.u32 %v7960, 16
      %v8386 = vrot.slane %v8384, 2
      %v8387 = vshll.u32 %v7960, 16
      %v8389 = vrot.slane %v8387, 3
      %v8390 = vor.u32 %v8386, %v8389
      %v8391 = vsel %vm3036, %v8381, %v8390
      %v8393 = vshrl.u32 %v7961, 16
      %v8395 = vrot.slane %v8393, 2
      %v8396 = vshll.u32 %v7961, 16
      %v8398 = vrot.slane %v8396, 3
      %v8399 = vor.u32 %v8395, %v8398
      %v8400 = vsel %vm3036, %v8390, %v8399
      %v8402 = vshrl.u32 %v7962, 16
      %v8404 = vrot.slane %v8402, 2
      %v8405 = vshll.u32 %v7962, 16
      %v8407 = vrot.slane %v8405, 3
      %v8408 = vor.u32 %v8404, %v8407
      %v8409 = vsel %vm3036, %v8399, %v8408
      %v8411 = vshrl.u32 %v7963, 16
      %v8413 = vrot.slane %v8411, 2
      %v8414 = vshll.u32 %v7963, 16
      %v8416 = vrot.slane %v8414, 3
      %v8417 = vor.u32 %v8413, %v8416
      %v8418 = vsel %vm3036, %v8408, %v8417
      %v8420 = vshrl.u32 %v7964, 16
      %v8422 = vrot.slane %v8420, 2
      %v8423 = vshll.u32 %v7964, 16
      %v8425 = vrot.slane %v8423, 3
      %v8426 = vor.u32 %v8422, %v8425
      %v8427 = vsel %vm3036, %v8417, %v8426
      %v8429 = vshrl.u32 %v7965, 16
      %v8431 = vrot.slane %v8429, 2
      %v8432 = vshll.u32 %v7965, 16
      %v8434 = vrot.slane %v8432, 3
      %v8435 = vor.u32 %v8431, %v8434
      %v8436 = vsel %vm3036, %v8426, %v8435
      %v8438 = vshrl.u32 %v7966, 16
      %v8440 = vrot.slane %v8438, 2
      %v8441 = vshll.u32 %v7966, 16
      %v8443 = vrot.slane %v8441, 3
      %v8444 = vor.u32 %v8440, %v8443
      %v8445 = vsel %vm3036, %v8435, %v8444
      %v8450 = vunpack.c.l.b16 %v7967
      %v8451 = vunpack.c.l.b16 %v7968
      %v8452 = vunpack.c.l.b16 %v7969
      %v8453 = vunpack.c.l.b16 %v7970
      %v8454 = vpack.c.b16 %v8451, %v8450
      %v8455 = vpack.c.b16 %v8453, %v8452
      %v8459 = vsel %vm3870, %v8292, 0
      %v8462 = vsel %vm3870, %v8301, 0
      %v8465 = vsel %vm3870, %v8310, 0
      %v8468 = vsel %vm3870, %v8319, 0
      %v8471 = vsel %vm3870, %v8328, 0
      %v8474 = vsel %vm3870, %v8337, 0
      %v8477 = vsel %vm3870, %v8346, 0
      %v8480 = vsel %vm3870, %v8355, 0
      %v8483 = vsel %vm3870, %v8364, 0
      %v8486 = vsel %vm3870, %v8373, 0
      %v8489 = vsel %vm3870, %v8382, 0
      %v8492 = vsel %vm3870, %v8391, 0
      %v8495 = vsel %vm3870, %v8400, 0
      %v8498 = vsel %vm3870, %v8409, 0
      %v8501 = vsel %vm3870, %v8418, 0
      %v8504 = vsel %vm3870, %v8427, 0
      %v8507 = vsel %vm3870, %v8436, 0
      %v8510 = vsel %vm3870, %v8445, 0
      %8512 = vmatprep.subr.bf16.mxu0 0
      %8513 = vmatpush1.bf16.msra.mxu0 %v8454
      %8514 = vmatprep.subr.bf16.mxu0 0
      %8515 = vmatpush1.bf16.msra.mxu0 %v8455
      %8516 = vmatprep.subr.bf16.mxu0 0
      %8517 = vmatpush1.bf16.msra.mxu0 0
      %8518 = vmatprep.subr.bf16.mxu0 0
      %8519 = vmatpush1.bf16.msra.mxu0 0
      %8520 = vmatprep.subr.bf16.mxu0 0
      %8521 = vmatpush1.bf16.msra.mxu0 0
      %8522 = vmatprep.subr.bf16.mxu0 0
      %8523 = vmatpush1.bf16.msra.mxu0 0
      %8524 = vmatprep.subr.bf16.mxu0 0
      %8525 = vmatpush1.bf16.msra.mxu0 0
      %8526 = vmatprep.subr.bf16.mxu0 0
      %8527 = vmatpush1.bf16.msra.mxu0 0
      %8528 = vmatprep.subr.bf16.mxu0 0
      %8529 = vmatpush1.bf16.msra.mxu0 0
      %8530 = vmatprep.subr.bf16.mxu0 0
      %8531 = vmatpush1.bf16.msra.mxu0 0
      %8532 = vmatprep.subr.bf16.mxu0 0
      %8533 = vmatpush1.bf16.msra.mxu0 0
      %8534 = vmatprep.subr.bf16.mxu0 0
      %8535 = vmatpush1.bf16.msra.mxu0 0
      %8536 = vmatprep.subr.bf16.mxu0 0
      %8537 = vmatpush1.bf16.msra.mxu0 0
      %8538 = vmatprep.subr.bf16.mxu0 0
      %8539 = vmatpush1.bf16.msra.mxu0 0
      %8540 = vmatprep.subr.bf16.mxu0 0
      %8541 = vmatpush1.bf16.msra.mxu0 0
      %8542 = vmatprep.subr.bf16.mxu0 0
      %8543 = vmatpush1.bf16.msra.mxu0 0
      %8544 = vmatprep.mubr.bf16.mxu0 0
      %8545 = vmatmul.mubr.bf16.gmra.mrb[0].mxu0 %v8459
      %v8546 = vpop.f32.mrb[0].mxu0
      %v8547 = vadd.f32 %v8134, %v8546
      %v8548 = vpop.f32.mrb[0].mxu0
      %v8549 = vpop.f32.mrb[0].mxu0
      %v8550 = vadd.f32 %v8137, %v8549
      %v8551 = vpop.f32.mrb[0].mxu0
      %8552 = vmatprep.mubr.bf16.mxu0 0
      %8553 = vmatmul.mubr.bf16.gmra.mrb[0].mxu0 %v8462
      %v8554 = vpop.f32.mrb[0].mxu0
      %v8555 = vadd.f32 %v8142, %v8554
      %v8556 = vpop.f32.mrb[0].mxu0
      %v8557 = vpop.f32.mrb[0].mxu0
      %v8558 = vadd.f32 %v8145, %v8557
      %v8559 = vpop.f32.mrb[0].mxu0
      %8560 = vmatprep.mubr.bf16.mxu0 0
      %8561 = vmatmul.mubr.bf16.gmra.mrb[0].mxu0 %v8465
      %v8562 = vpop.f32.mrb[0].mxu0
      %v8563 = vadd.f32 %v8150, %v8562
      %v8564 = vpop.f32.mrb[0].mxu0
      %v8565 = vpop.f32.mrb[0].mxu0
      %v8566 = vadd.f32 %v8153, %v8565
      %v8567 = vpop.f32.mrb[0].mxu0
      %8568 = vmatprep.mubr.bf16.mxu0 0
      %8569 = vmatmul.mubr.bf16.gmra.mrb[0].mxu0 %v8468
      %v8570 = vpop.f32.mrb[0].mxu0
      %v8571 = vadd.f32 %v8158, %v8570
      %v8572 = vpop.f32.mrb[0].mxu0
      %v8573 = vpop.f32.mrb[0].mxu0
      %v8574 = vadd.f32 %v8161, %v8573
      %v8575 = vpop.f32.mrb[0].mxu0
      %8576 = vmatprep.mubr.bf16.mxu0 0
      %8577 = vmatmul.mubr.bf16.gmra.mrb[0].mxu0 %v8471
      %v8578 = vpop.f32.mrb[0].mxu0
      %v8579 = vadd.f32 %v8166, %v8578
      %v8580 = vpop.f32.mrb[0].mxu0
      %v8581 = vpop.f32.mrb[0].mxu0
      %v8582 = vadd.f32 %v8169, %v8581
      %v8583 = vpop.f32.mrb[0].mxu0
      %8584 = vmatprep.mubr.bf16.mxu0 0
      %8585 = vmatmul.mubr.bf16.gmra.mrb[0].mxu0 %v8474
      %v8586 = vpop.f32.mrb[0].mxu0
      %v8587 = vadd.f32 %v8174, %v8586
      %v8588 = vpop.f32.mrb[0].mxu0
      %v8589 = vpop.f32.mrb[0].mxu0
      %v8590 = vadd.f32 %v8177, %v8589
      %v8591 = vpop.f32.mrb[0].mxu0
      %8592 = vmatprep.mubr.bf16.mxu0 0
      %8593 = vmatmul.mubr.bf16.gmra.mrb[0].mxu0 %v8477
      %v8594 = vpop.f32.mrb[0].mxu0
      %v8595 = vadd.f32 %v8182, %v8594
      %v8596 = vpop.f32.mrb[0].mxu0
      %v8597 = vpop.f32.mrb[0].mxu0
      %v8598 = vadd.f32 %v8185, %v8597
      %v8599 = vpop.f32.mrb[0].mxu0
      %8600 = vmatprep.mubr.bf16.mxu0 0
      %8601 = vmatmul.mubr.bf16.gmra.mrb[0].mxu0 %v8480
      %v8602 = vpop.f32.mrb[0].mxu0
      %v8603 = vadd.f32 %v8190, %v8602
      %v8604 = vpop.f32.mrb[0].mxu0
      %v8605 = vpop.f32.mrb[0].mxu0
      %v8606 = vadd.f32 %v8193, %v8605
      %v8607 = vpop.f32.mrb[0].mxu0
      %8608 = vmatprep.mubr.bf16.mxu0 0
      %8609 = vmatmul.mubr.bf16.gmra.mrb[0].mxu0 %v8483
      %v8610 = vpop.f32.mrb[0].mxu0
      %v8611 = vadd.f32 %v8198, %v8610
      %v8612 = vpop.f32.mrb[0].mxu0
      %v8613 = vpop.f32.mrb[0].mxu0
      %v8614 = vadd.f32 %v8201, %v8613
      %v8615 = vpop.f32.mrb[0].mxu0
      %8616 = vmatprep.mubr.bf16.mxu0 0
      %8617 = vmatmul.mubr.bf16.gmra.mrb[0].mxu0 %v8486
      %v8618 = vpop.f32.mrb[0].mxu0
      %v8619 = vadd.f32 %v8206, %v8618
      %v8620 = vpop.f32.mrb[0].mxu0
      %v8621 = vpop.f32.mrb[0].mxu0
      %v8622 = vadd.f32 %v8209, %v8621
      %v8623 = vpop.f32.mrb[0].mxu0
      %8624 = vmatprep.mubr.bf16.mxu0 0
      %8625 = vmatmul.mubr.bf16.gmra.mrb[0].mxu0 %v8489
      %v8626 = vpop.f32.mrb[0].mxu0
      %v8627 = vadd.f32 %v8214, %v8626
      %v8628 = vpop.f32.mrb[0].mxu0
      %v8629 = vpop.f32.mrb[0].mxu0
      %v8630 = vadd.f32 %v8217, %v8629
      %v8631 = vpop.f32.mrb[0].mxu0
      %8632 = vmatprep.mubr.bf16.mxu0 0
      %8633 = vmatmul.mubr.bf16.gmra.mrb[0].mxu0 %v8492
      %v8634 = vpop.f32.mrb[0].mxu0
      %v8635 = vadd.f32 %v8222, %v8634
      %v8636 = vpop.f32.mrb[0].mxu0
      %v8637 = vpop.f32.mrb[0].mxu0
      %v8638 = vadd.f32 %v8225, %v8637
      %v8639 = vpop.f32.mrb[0].mxu0
      %8640 = vmatprep.mubr.bf16.mxu0 0
      %8641 = vmatmul.mubr.bf16.gmra.mrb[0].mxu0 %v8495
      %v8642 = vpop.f32.mrb[0].mxu0
      %v8643 = vadd.f32 %v8230, %v8642
      %v8644 = vpop.f32.mrb[0].mxu0
      %v8645 = vpop.f32.mrb[0].mxu0
      %v8646 = vadd.f32 %v8233, %v8645
      %v8647 = vpop.f32.mrb[0].mxu0
      %8648 = vmatprep.mubr.bf16.mxu0 0
      %8649 = vmatmul.mubr.bf16.gmra.mrb[0].mxu0 %v8498
      %v8650 = vpop.f32.mrb[0].mxu0
      %v8651 = vadd.f32 %v8238, %v8650
      %v8652 = vpop.f32.mrb[0].mxu0
      %v8653 = vpop.f32.mrb[0].mxu0
      %v8654 = vadd.f32 %v8241, %v8653
      %v8655 = vpop.f32.mrb[0].mxu0
      %8656 = vmatprep.mubr.bf16.mxu0 0
      %8657 = vmatmul.mubr.bf16.gmra.mrb[0].mxu0 %v8501
      %v8658 = vpop.f32.mrb[0].mxu0
      %v8659 = vadd.f32 %v8246, %v8658
      %v8660 = vpop.f32.mrb[0].mxu0
      %v8661 = vpop.f32.mrb[0].mxu0
      %v8662 = vadd.f32 %v8249, %v8661
      %v8663 = vpop.f32.mrb[0].mxu0
      %8664 = vmatprep.mubr.bf16.mxu0 0
      %8665 = vmatmul.mubr.bf16.gmra.mrb[0].mxu0 %v8504
      %v8666 = vpop.f32.mrb[0].mxu0
      %v8667 = vadd.f32 %v8254, %v8666
      %v8668 = vpop.f32.mrb[0].mxu0
      %v8669 = vpop.f32.mrb[0].mxu0
      %v8670 = vadd.f32 %v8257, %v8669
      %v8671 = vpop.f32.mrb[0].mxu0
      %8672 = vmatprep.mubr.bf16.mxu0 0
      %8673 = vmatmul.mubr.bf16.gmra.mrb[0].mxu0 %v8507
      %v8674 = vpop.f32.mrb[0].mxu0
      %v8675 = vadd.f32 %v8262, %v8674
      %v8676 = vpop.f32.mrb[0].mxu0
      %v8677 = vpop.f32.mrb[0].mxu0
      %v8678 = vadd.f32 %v8265, %v8677
      %v8679 = vpop.f32.mrb[0].mxu0
      %8680 = vmatprep.mubr.bf16.mxu0 0
      %8681 = vmatmul.mubr.bf16.gmra.mrb[0].mxu0 %v8510
      %v8682 = vpop.f32.mrb[0].mxu0
      %v8683 = vadd.f32 %v8270, %v8682
      %v8684 = vpop.f32.mrb[0].mxu0
      %v8685 = vpop.f32.mrb[0].mxu0
      %v8686 = vadd.f32 %v8273, %v8685
      %v8687 = vpop.f32.mrb[0].mxu0
      %8688 = vdwg.mxu0
      %v8689 = vld [vmem:[#allocation3 + $0x90] sm:$0xf]
      %s8690 = scalar_lea.vmem %s6, 32
      %v8691 = vld [vmem:[%s8690] sm:$0xf]
      %v8692 = vld [vmem:[%s8690 + $0x4] sm:$0xf]
      %v8693 = vld [vmem:[%s8690 + $0x8] sm:$0xf]
      %v8694 = vld [vmem:[%s8690 + $0xc] sm:$0xf]
      %v8696 = vshrl.u32 %v7971, 16
      %v8698 = vrot.slane %v8696, 3
      %v8699 = vshll.u32 %v7971, 16
      %v8701 = vrot.slane %v8699, 4
      %v8702 = vor.u32 %v8698, %v8701
      %v8703 = vrot.slane %v8285, 3
      %v8704 = vrot.slane %v8288, 4
      %v8705 = vor.u32 %v8703, %v8704
      %v8706 = vsel %vm4967, %v8702, %v8705
      %v8707 = vrot.slane %v8294, 3
      %v8708 = vrot.slane %v8297, 4
      %v8709 = vor.u32 %v8707, %v8708
      %v8710 = vsel %vm4967, %v8705, %v8709
      %v8711 = vrot.slane %v8303, 3
      %v8712 = vrot.slane %v8306, 4
      %v8713 = vor.u32 %v8711, %v8712
      %v8714 = vsel %vm4967, %v8709, %v8713
      %v8715 = vrot.slane %v8312, 3
      %v8716 = vrot.slane %v8315, 4
      %v8717 = vor.u32 %v8715, %v8716
      %v8718 = vsel %vm4967, %v8713, %v8717
      %v8719 = vrot.slane %v8321, 3
      %v8720 = vrot.slane %v8324, 4
      %v8721 = vor.u32 %v8719, %v8720
      %v8722 = vsel %vm4967, %v8717, %v8721
      %v8723 = vrot.slane %v8330, 3
      %v8724 = vrot.slane %v8333, 4
      %v8725 = vor.u32 %v8723, %v8724
      %v8726 = vsel %vm4967, %v8721, %v8725
      %v8727 = vrot.slane %v8339, 3
      %v8728 = vrot.slane %v8342, 4
      %v8729 = vor.u32 %v8727, %v8728
      %v8730 = vsel %vm4967, %v8725, %v8729
      %v8731 = vrot.slane %v8348, 3
      %v8732 = vrot.slane %v8351, 4
      %v8733 = vor.u32 %v8731, %v8732
      %v8734 = vsel %vm4967, %v8729, %v8733
      %v8735 = vrot.slane %v8357, 3
      %v8736 = vrot.slane %v8360, 4
      %v8737 = vor.u32 %v8735, %v8736
      %v8738 = vsel %vm4967, %v8733, %v8737
      %v8739 = vrot.slane %v8366, 3
      %v8740 = vrot.slane %v8369, 4
      %v8741 = vor.u32 %v8739, %v8740
      %v8742 = vsel %vm4967, %v8737, %v8741
      %v8743 = vrot.slane %v8375, 3
      %v8744 = vrot.slane %v8378, 4
      %v8745 = vor.u32 %v8743, %v8744
      %v8746 = vsel %vm4967, %v8741, %v8745
      %v8747 = vrot.slane %v8384, 3
      %v8748 = vrot.slane %v8387, 4
      %v8749 = vor.u32 %v8747, %v8748
      %v8750 = vsel %vm4967, %v8745, %v8749
      %v8751 = vrot.slane %v8393, 3
      %v8752 = vrot.slane %v8396, 4
      %v8753 = vor.u32 %v8751, %v8752
      %v8754 = vsel %vm4967, %v8749, %v8753
      %v8755 = vrot.slane %v8402, 3
      %v8756 = vrot.slane %v8405, 4
      %v8757 = vor.u32 %v8755, %v8756
      %v8758 = vsel %vm4967, %v8753, %v8757
      %v8759 = vrot.slane %v8411, 3
      %v8760 = vrot.slane %v8414, 4
      %v8761 = vor.u32 %v8759, %v8760
      %v8762 = vsel %vm4967, %v8757, %v8761
      %v8763 = vrot.slane %v8420, 3
      %v8764 = vrot.slane %v8423, 4
      %v8765 = vor.u32 %v8763, %v8764
      %v8766 = vsel %vm4967, %v8761, %v8765
      %v8767 = vrot.slane %v8429, 3
      %v8768 = vrot.slane %v8432, 4
      %v8769 = vor.u32 %v8767, %v8768
      %v8770 = vsel %vm4967, %v8765, %v8769
      %v8772 = vshrl.u32 %v8689, 16
      %v8774 = vrot.slane %v8772, 3
      %v8775 = vshll.u32 %v8689, 16
      %v8777 = vrot.slane %v8775, 4
      %v8778 = vor.u32 %v8774, %v8777
      %v8779 = vsel %vm4967, %v8769, %v8778
      %v8784 = vunpack.c.l.b16 %v8691
      %v8785 = vunpack.c.l.b16 %v8692
      %v8786 = vunpack.c.l.b16 %v8693
      %v8787 = vunpack.c.l.b16 %v8694
      %v8788 = vpack.c.b16 %v8785, %v8784
      %v8789 = vpack.c.b16 %v8787, %v8786
      %v8793 = vsel %vm3870, %v8706, 0
      %v8796 = vsel %vm3870, %v8710, 0
      %v8799 = vsel %vm3870, %v8714, 0
      %v8802 = vsel %vm3870, %v8718, 0
      %v8805 = vsel %vm3870, %v8722, 0
      %v8808 = vsel %vm3870, %v8726, 0
      %v8811 = vsel %vm3870, %v8730, 0
      %v8814 = vsel %vm3870, %v8734, 0
      %v8817 = vsel %vm3870, %v8738, 0
      %v8820 = vsel %vm3870, %v8742, 0
      %v8823 = vsel %vm3870, %v8746, 0
      %v8826 = vsel %vm3870, %v8750, 0
      %v8829 = vsel %vm3870, %v8754, 0
      %v8832 = vsel %vm3870, %v8758, 0
      %v8835 = vsel %vm3870, %v8762, 0
      %v8838 = vsel %vm3870, %v8766, 0
      %v8841 = vsel %vm3870, %v8770, 0
      %v8844 = vsel %vm3870, %v8779, 0
      %8846 = vmatprep.subr.bf16.mxu0 0
      %8847 = vmatpush1.bf16.msra.mxu0 %v8788
      %8848 = vmatprep.subr.bf16.mxu0 0
      %8849 = vmatpush1.bf16.msra.mxu0 %v8789
      %8850 = vmatprep.subr.bf16.mxu0 0
      %8851 = vmatpush1.bf16.msra.mxu0 0
      %8852 = vmatprep.subr.bf16.mxu0 0
      %8853 = vmatpush1.bf16.msra.mxu0 0
      %8854 = vmatprep.subr.bf16.mxu0 0
      %8855 = vmatpush1.bf16.msra.mxu0 0
      %8856 = vmatprep.subr.bf16.mxu0 0
      %8857 = vmatpush1.bf16.msra.mxu0 0
      %8858 = vmatprep.subr.bf16.mxu0 0
      %8859 = vmatpush1.bf16.msra.mxu0 0
      %8860 = vmatprep.subr.bf16.mxu0 0
      %8861 = vmatpush1.bf16.msra.mxu0 0
      %8862 = vmatprep.subr.bf16.mxu0 0
      %8863 = vmatpush1.bf16.msra.mxu0 0
      %8864 = vmatprep.subr.bf16.mxu0 0
      %8865 = vmatpush1.bf16.msra.mxu0 0
      %8866 = vmatprep.subr.bf16.mxu0 0
      %8867 = vmatpush1.bf16.msra.mxu0 0
      %8868 = vmatprep.subr.bf16.mxu0 0
      %8869 = vmatpush1.bf16.msra.mxu0 0
      %8870 = vmatprep.subr.bf16.mxu0 0
      %8871 = vmatpush1.bf16.msra.mxu0 0
      %8872 = vmatprep.subr.bf16.mxu0 0
      %8873 = vmatpush1.bf16.msra.mxu0 0
      %8874 = vmatprep.subr.bf16.mxu0 0
      %8875 = vmatpush1.bf16.msra.mxu0 0
      %8876 = vmatprep.subr.bf16.mxu0 0
      %8877 = vmatpush1.bf16.msra.mxu0 0
      %8878 = vmatprep.mubr.bf16.mxu0 0
      %8879 = vmatmul.mubr.bf16.gmra.mrb[0].mxu0 %v8793
      %v8880 = vpop.f32.mrb[0].mxu0
      %v8881 = vadd.f32 0.0, %v8880
      %v8882 = vpop.f32.mrb[0].mxu0
      %v8883 = vpop.f32.mrb[0].mxu0
      %v8884 = vadd.f32 0.0, %v8883
      %v8885 = vpop.f32.mrb[0].mxu0
      %8886 = vmatprep.mubr.bf16.mxu0 0
      %8887 = vmatmul.mubr.bf16.gmra.mrb[0].mxu0 %v8796
      %v8888 = vpop.f32.mrb[0].mxu0
      %v8889 = vadd.f32 0.0, %v8888
      %v8890 = vpop.f32.mrb[0].mxu0
      %v8891 = vpop.f32.mrb[0].mxu0
      %v8892 = vadd.f32 0.0, %v8891
      %v8893 = vpop.f32.mrb[0].mxu0
      %8894 = vmatprep.mubr.bf16.mxu0 0
      %8895 = vmatmul.mubr.bf16.gmra.mrb[0].mxu0 %v8799
      %v8896 = vpop.f32.mrb[0].mxu0
      %v8897 = vadd.f32 0.0, %v8896
      %v8898 = vpop.f32.mrb[0].mxu0
      %v8899 = vpop.f32.mrb[0].mxu0
      %v8900 = vadd.f32 0.0, %v8899
      %v8901 = vpop.f32.mrb[0].mxu0
      %8902 = vmatprep.mubr.bf16.mxu0 0
      %8903 = vmatmul.mubr.bf16.gmra.mrb[0].mxu0 %v8802
      %v8904 = vpop.f32.mrb[0].mxu0
      %v8905 = vadd.f32 0.0, %v8904
      %v8906 = vpop.f32.mrb[0].mxu0
      %v8907 = vpop.f32.mrb[0].mxu0
      %v8908 = vadd.f32 0.0, %v8907
      %v8909 = vpop.f32.mrb[0].mxu0
      %8910 = vmatprep.mubr.bf16.mxu0 0
      %8911 = vmatmul.mubr.bf16.gmra.mrb[0].mxu0 %v8805
      %v8912 = vpop.f32.mrb[0].mxu0
      %v8913 = vadd.f32 0.0, %v8912
      %v8914 = vpop.f32.mrb[0].mxu0
      %v8915 = vpop.f32.mrb[0].mxu0
      %v8916 = vadd.f32 0.0, %v8915
      %v8917 = vpop.f32.mrb[0].mxu0
      %8918 = vmatprep.mubr.bf16.mxu0 0
      %8919 = vmatmul.mubr.bf16.gmra.mrb[0].mxu0 %v8808
      %v8920 = vpop.f32.mrb[0].mxu0
      %v8921 = vadd.f32 0.0, %v8920
      %v8922 = vpop.f32.mrb[0].mxu0
      %v8923 = vpop.f32.mrb[0].mxu0
      %v8924 = vadd.f32 0.0, %v8923
      %v8925 = vpop.f32.mrb[0].mxu0
      %8926 = vmatprep.mubr.bf16.mxu0 0
      %8927 = vmatmul.mubr.bf16.gmra.mrb[0].mxu0 %v8811
      %v8928 = vpop.f32.mrb[0].mxu0
      %v8929 = vadd.f32 0.0, %v8928
      %v8930 = vpop.f32.mrb[0].mxu0
      %v8931 = vpop.f32.mrb[0].mxu0
      %v8932 = vadd.f32 0.0, %v8931
      %v8933 = vpop.f32.mrb[0].mxu0
      %8934 = vmatprep.mubr.bf16.mxu0 0
      %8935 = vmatmul.mubr.bf16.gmra.mrb[0].mxu0 %v8814
      %v8936 = vpop.f32.mrb[0].mxu0
      %v8937 = vadd.f32 0.0, %v8936
      %v8938 = vpop.f32.mrb[0].mxu0
      %v8939 = vpop.f32.mrb[0].mxu0
      %v8940 = vadd.f32 0.0, %v8939
      %v8941 = vpop.f32.mrb[0].mxu0
      %8942 = vmatprep.mubr.bf16.mxu0 0
      %8943 = vmatmul.mubr.bf16.gmra.mrb[0].mxu0 %v8817
      %v8944 = vpop.f32.mrb[0].mxu0
      %v8945 = vadd.f32 0.0, %v8944
      %v8946 = vpop.f32.mrb[0].mxu0
      %v8947 = vpop.f32.mrb[0].mxu0
      %v8948 = vadd.f32 0.0, %v8947
      %v8949 = vpop.f32.mrb[0].mxu0
      %8950 = vmatprep.mubr.bf16.mxu0 0
      %8951 = vmatmul.mubr.bf16.gmra.mrb[0].mxu0 %v8820
      %v8952 = vpop.f32.mrb[0].mxu0
      %v8953 = vadd.f32 0.0, %v8952
      %v8954 = vpop.f32.mrb[0].mxu0
      %v8955 = vpop.f32.mrb[0].mxu0
      %v8956 = vadd.f32 0.0, %v8955
      %v8957 = vpop.f32.mrb[0].mxu0
      %8958 = vmatprep.mubr.bf16.mxu0 0
      %8959 = vmatmul.mubr.bf16.gmra.mrb[0].mxu0 %v8823
      %v8960 = vpop.f32.mrb[0].mxu0
      %v8961 = vadd.f32 0.0, %v8960
      %v8962 = vpop.f32.mrb[0].mxu0
      %v8963 = vpop.f32.mrb[0].mxu0
      %v8964 = vadd.f32 0.0, %v8963
      %v8965 = vpop.f32.mrb[0].mxu0
      %8966 = vmatprep.mubr.bf16.mxu0 0
      %8967 = vmatmul.mubr.bf16.gmra.mrb[0].mxu0 %v8826
      %v8968 = vpop.f32.mrb[0].mxu0
      %v8969 = vadd.f32 0.0, %v8968
      %v8970 = vpop.f32.mrb[0].mxu0
      %v8971 = vpop.f32.mrb[0].mxu0
      %v8972 = vadd.f32 0.0, %v8971
      %v8973 = vpop.f32.mrb[0].mxu0
      %8974 = vmatprep.mubr.bf16.mxu0 0
      %8975 = vmatmul.mubr.bf16.gmra.mrb[0].mxu0 %v8829
      %v8976 = vpop.f32.mrb[0].mxu0
      %v8977 = vadd.f32 0.0, %v8976
      %v8978 = vpop.f32.mrb[0].mxu0
      %v8979 = vpop.f32.mrb[0].mxu0
      %v8980 = vadd.f32 0.0, %v8979
      %v8981 = vpop.f32.mrb[0].mxu0
      %8982 = vmatprep.mubr.bf16.mxu0 0
      %8983 = vmatmul.mubr.bf16.gmra.mrb[0].mxu0 %v8832
      %v8984 = vpop.f32.mrb[0].mxu0
      %v8985 = vadd.f32 0.0, %v8984
      %v8986 = vpop.f32.mrb[0].mxu0
      %v8987 = vpop.f32.mrb[0].mxu0
      %v8988 = vadd.f32 0.0, %v8987
      %v8989 = vpop.f32.mrb[0].mxu0
      %8990 = vmatprep.mubr.bf16.mxu0 0
      %8991 = vmatmul.mubr.bf16.gmra.mrb[0].mxu0 %v8835
      %v8992 = vpop.f32.mrb[0].mxu0
      %v8993 = vadd.f32 0.0, %v8992
      %v8994 = vpop.f32.mrb[0].mxu0
      %v8995 = vpop.f32.mrb[0].mxu0
      %v8996 = vadd.f32 0.0, %v8995
      %v8997 = vpop.f32.mrb[0].mxu0
      %8998 = vmatprep.mubr.bf16.mxu0 0
      %8999 = vmatmul.mubr.bf16.gmra.mrb[0].mxu0 %v8838
      %v9000 = vpop.f32.mrb[0].mxu0
      %v9001 = vadd.f32 0.0, %v9000
      %v9002 = vpop.f32.mrb[0].mxu0
      %v9003 = vpop.f32.mrb[0].mxu0
      %v9004 = vadd.f32 0.0, %v9003
      %v9005 = vpop.f32.mrb[0].mxu0
      %9006 = vmatprep.mubr.bf16.mxu0 0
      %9007 = vmatmul.mubr.bf16.gmra.mrb[0].mxu0 %v8841
      %v9008 = vpop.f32.mrb[0].mxu0
      %v9009 = vadd.f32 0.0, %v9008
      %v9010 = vpop.f32.mrb[0].mxu0
      %v9011 = vpop.f32.mrb[0].mxu0
      %v9012 = vadd.f32 0.0, %v9011
      %v9013 = vpop.f32.mrb[0].mxu0
      %9014 = vmatprep.mubr.bf16.mxu0 0
      %9015 = vmatmul.mubr.bf16.gmra.mrb[0].mxu0 %v8844
      %v9016 = vpop.f32.mrb[0].mxu0
      %v9017 = vadd.f32 0.0, %v9016
      %v9018 = vpop.f32.mrb[0].mxu0
      %v9019 = vpop.f32.mrb[0].mxu0
      %v9020 = vadd.f32 0.0, %v9019
      %v9021 = vpop.f32.mrb[0].mxu0
      %9022 = vdwg.mxu0
      %v9023 = vadd.f32 %v8547, %v8881
      %v9024 = vadd.f32 %v8550, %v8884
      %v9025 = vadd.f32 %v8555, %v8889
      %v9026 = vadd.f32 %v8558, %v8892
      %v9027 = vadd.f32 %v8563, %v8897
      %v9028 = vadd.f32 %v8566, %v8900
      %v9029 = vadd.f32 %v8571, %v8905
      %v9030 = vadd.f32 %v8574, %v8908
      %v9031 = vadd.f32 %v8579, %v8913
      %v9032 = vadd.f32 %v8582, %v8916
      %v9033 = vadd.f32 %v8587, %v8921
      %v9034 = vadd.f32 %v8590, %v8924
      %v9035 = vadd.f32 %v8595, %v8929
      %v9036 = vadd.f32 %v8598, %v8932
      %v9037 = vadd.f32 %v8603, %v8937
      %v9038 = vadd.f32 %v8606, %v8940
      %v9039 = vadd.f32 %v8611, %v8945
      %v9040 = vadd.f32 %v8614, %v8948
      %v9041 = vadd.f32 %v8619, %v8953
      %v9042 = vadd.f32 %v8622, %v8956
      %v9043 = vadd.f32 %v8627, %v8961
      %v9044 = vadd.f32 %v8630, %v8964
      %v9045 = vadd.f32 %v8635, %v8969
      %v9046 = vadd.f32 %v8638, %v8972
      %v9047 = vadd.f32 %v8643, %v8977
      %v9048 = vadd.f32 %v8646, %v8980
      %v9049 = vadd.f32 %v8651, %v8985
      %v9050 = vadd.f32 %v8654, %v8988
      %v9051 = vadd.f32 %v8659, %v8993
      %v9052 = vadd.f32 %v8662, %v8996
      %v9053 = vadd.f32 %v8667, %v9001
      %v9054 = vadd.f32 %v8670, %v9004
      %v9055 = vadd.f32 %v8675, %v9009
      %v9056 = vadd.f32 %v8678, %v9012
      %v9057 = vadd.f32 %v8683, %v9017
      %v9058 = vadd.f32 %v8686, %v9020
      %v9059 = vld [vmem:[#allocation3 + $0x8] sm:$0xf8]
      %v9060 = vld [vmem:[#allocation3 + $0x10] sm:$0xff]
      %v9061 = vld [vmem:[#allocation3 + $0x18] sm:$0xff]
      %v9062 = vld [vmem:[#allocation3 + $0x20] sm:$0xff]
      %v9063 = vld [vmem:[#allocation3 + $0x28] sm:$0xff]
      %v9064 = vld [vmem:[#allocation3 + $0x30] sm:$0xff]
      %v9065 = vld [vmem:[#allocation3 + $0x38] sm:$0xff]
      %v9066 = vld [vmem:[#allocation3 + $0x40] sm:$0xff]
      %v9067 = vld [vmem:[#allocation3 + $0x48] sm:$0xff]
      %v9068 = vld [vmem:[#allocation3 + $0x50] sm:$0xff]
      %v9069 = vld [vmem:[#allocation3 + $0x58] sm:$0xff]
      %v9070 = vld [vmem:[#allocation3 + $0x60] sm:$0xff]
      %v9071 = vld [vmem:[#allocation3 + $0x68] sm:$0xff]
      %v9072 = vld [vmem:[#allocation3 + $0x70] sm:$0xff]
      %v9073 = vld [vmem:[#allocation3 + $0x78] sm:$0xff]
      %v9074 = vld [vmem:[#allocation3 + $0x80] sm:$0xff]
      %v9075 = vld [vmem:[#allocation3 + $0x88] sm:$0xff]
      %v9076 = vld [vmem:[#allocation3 + $0x90] sm:$0xff]
      %v9077 = vld [vmem:[#allocation3 + $0x98] sm:$0xf]
      %s9078 = scalar_lea.vmem %s6, 48
      %v9079 = vld [vmem:[%s9078] sm:$0xf]
      %v9080 = vld [vmem:[%s9078 + $0x4] sm:$0xf]
      %v9081 = vld [vmem:[%s9078 + $0x8] sm:$0xf]
      %v9082 = vld [vmem:[%s9078 + $0xc] sm:$0xf]
      %v9084 = vshrl.u32 %v9059, 16
      %v9086 = vrot.slane %v9084, 3
      %v9087 = vshll.u32 %v9059, 16
      %v9089 = vrot.slane %v9087, 4
      %v9090 = vor.u32 %v9086, %v9089
      %v9092 = vshrl.u32 %v9060, 16
      %v9094 = vrot.slane %v9092, 3
      %v9095 = vshll.u32 %v9060, 16
      %v9097 = vrot.slane %v9095, 4
      %v9098 = vor.u32 %v9094, %v9097
      %v9099 = vsel %vm4967, %v9090, %v9098
      %v9101 = vshrl.u32 %v9061, 16
      %v9103 = vrot.slane %v9101, 3
      %v9104 = vshll.u32 %v9061, 16
      %v9106 = vrot.slane %v9104, 4
      %v9107 = vor.u32 %v9103, %v9106
      %v9108 = vsel %vm4967, %v9098, %v9107
      %v9110 = vshrl.u32 %v9062, 16
      %v9112 = vrot.slane %v9110, 3
      %v9113 = vshll.u32 %v9062, 16
      %v9115 = vrot.slane %v9113, 4
      %v9116 = vor.u32 %v9112, %v9115
      %v9117 = vsel %vm4967, %v9107, %v9116
      %v9119 = vshrl.u32 %v9063, 16
      %v9121 = vrot.slane %v9119, 3
      %v9122 = vshll.u32 %v9063, 16
      %v9124 = vrot.slane %v9122, 4
      %v9125 = vor.u32 %v9121, %v9124
      %v9126 = vsel %vm4967, %v9116, %v9125
      %v9128 = vshrl.u32 %v9064, 16
      %v9130 = vrot.slane %v9128, 3
      %v9131 = vshll.u32 %v9064, 16
      %v9133 = vrot.slane %v9131, 4
      %v9134 = vor.u32 %v9130, %v9133
      %v9135 = vsel %vm4967, %v9125, %v9134
      %v9137 = vshrl.u32 %v9065, 16
      %v9139 = vrot.slane %v9137, 3
      %v9140 = vshll.u32 %v9065, 16
      %v9142 = vrot.slane %v9140, 4
      %v9143 = vor.u32 %v9139, %v9142
      %v9144 = vsel %vm4967, %v9134, %v9143
      %v9146 = vshrl.u32 %v9066, 16
      %v9148 = vrot.slane %v9146, 3
      %v9149 = vshll.u32 %v9066, 16
      %v9151 = vrot.slane %v9149, 4
      %v9152 = vor.u32 %v9148, %v9151
      %v9153 = vsel %vm4967, %v9143, %v9152
      %v9155 = vshrl.u32 %v9067, 16
      %v9157 = vrot.slane %v9155, 3
      %v9158 = vshll.u32 %v9067, 16
      %v9160 = vrot.slane %v9158, 4
      %v9161 = vor.u32 %v9157, %v9160
      %v9162 = vsel %vm4967, %v9152, %v9161
      %v9164 = vshrl.u32 %v9068, 16
      %v9166 = vrot.slane %v9164, 3
      %v9167 = vshll.u32 %v9068, 16
      %v9169 = vrot.slane %v9167, 4
      %v9170 = vor.u32 %v9166, %v9169
      %v9171 = vsel %vm4967, %v9161, %v9170
      %v9173 = vshrl.u32 %v9069, 16
      %v9175 = vrot.slane %v9173, 3
      %v9176 = vshll.u32 %v9069, 16
      %v9178 = vrot.slane %v9176, 4
      %v9179 = vor.u32 %v9175, %v9178
      %v9180 = vsel %vm4967, %v9170, %v9179
      %v9182 = vshrl.u32 %v9070, 16
      %v9184 = vrot.slane %v9182, 3
      %v9185 = vshll.u32 %v9070, 16
      %v9187 = vrot.slane %v9185, 4
      %v9188 = vor.u32 %v9184, %v9187
      %v9189 = vsel %vm4967, %v9179, %v9188
      %v9191 = vshrl.u32 %v9071, 16
      %v9193 = vrot.slane %v9191, 3
      %v9194 = vshll.u32 %v9071, 16
      %v9196 = vrot.slane %v9194, 4
      %v9197 = vor.u32 %v9193, %v9196
      %v9198 = vsel %vm4967, %v9188, %v9197
      %v9200 = vshrl.u32 %v9072, 16
      %v9202 = vrot.slane %v9200, 3
      %v9203 = vshll.u32 %v9072, 16
      %v9205 = vrot.slane %v9203, 4
      %v9206 = vor.u32 %v9202, %v9205
      %v9207 = vsel %vm4967, %v9197, %v9206
      %v9209 = vshrl.u32 %v9073, 16
      %v9211 = vrot.slane %v9209, 3
      %v9212 = vshll.u32 %v9073, 16
      %v9214 = vrot.slane %v9212, 4
      %v9215 = vor.u32 %v9211, %v9214
      %v9216 = vsel %vm4967, %v9206, %v9215
      %v9218 = vshrl.u32 %v9074, 16
      %v9220 = vrot.slane %v9218, 3
      %v9221 = vshll.u32 %v9074, 16
      %v9223 = vrot.slane %v9221, 4
      %v9224 = vor.u32 %v9220, %v9223
      %v9225 = vsel %vm4967, %v9215, %v9224
      %v9227 = vshrl.u32 %v9075, 16
      %v9229 = vrot.slane %v9227, 3
      %v9230 = vshll.u32 %v9075, 16
      %v9232 = vrot.slane %v9230, 4
      %v9233 = vor.u32 %v9229, %v9232
      %v9234 = vsel %vm4967, %v9224, %v9233
      %v9236 = vshrl.u32 %v9076, 16
      %v9238 = vrot.slane %v9236, 3
      %v9239 = vshll.u32 %v9076, 16
      %v9241 = vrot.slane %v9239, 4
      %v9242 = vor.u32 %v9238, %v9241
      %v9243 = vsel %vm4967, %v9233, %v9242
      %v9245 = vshrl.u32 %v9077, 16
      %v9247 = vrot.slane %v9245, 3
      %v9248 = vshll.u32 %v9077, 16
      %v9250 = vrot.slane %v9248, 4
      %v9251 = vor.u32 %v9247, %v9250
      %v9252 = vsel %vm4967, %v9242, %v9251
      %v9257 = vunpack.c.l.b16 %v9079
      %v9258 = vunpack.c.l.b16 %v9080
      %v9259 = vunpack.c.l.b16 %v9081
      %v9260 = vunpack.c.l.b16 %v9082
      %v9261 = vpack.c.b16 %v9258, %v9257
      %v9262 = vpack.c.b16 %v9260, %v9259
      %v9266 = vsel %vm3870, %v9099, 0
      %v9269 = vsel %vm3870, %v9108, 0
      %v9272 = vsel %vm3870, %v9117, 0
      %v9275 = vsel %vm3870, %v9126, 0
      %v9278 = vsel %vm3870, %v9135, 0
      %v9281 = vsel %vm3870, %v9144, 0
      %v9284 = vsel %vm3870, %v9153, 0
      %v9287 = vsel %vm3870, %v9162, 0
      %v9290 = vsel %vm3870, %v9171, 0
      %v9293 = vsel %vm3870, %v9180, 0
      %v9296 = vsel %vm3870, %v9189, 0
      %v9299 = vsel %vm3870, %v9198, 0
      %v9302 = vsel %vm3870, %v9207, 0
      %v9305 = vsel %vm3870, %v9216, 0
      %v9308 = vsel %vm3870, %v9225, 0
      %v9311 = vsel %vm3870, %v9234, 0
      %v9314 = vsel %vm3870, %v9243, 0
      %v9317 = vsel %vm3870, %v9252, 0
      %9319 = vmatprep.subr.bf16.mxu0 0
      %9320 = vmatpush1.bf16.msra.mxu0 %v9261
      %9321 = vmatprep.subr.bf16.mxu0 0
      %9322 = vmatpush1.bf16.msra.mxu0 %v9262
      %9323 = vmatprep.subr.bf16.mxu0 0
      %9324 = vmatpush1.bf16.msra.mxu0 0
      %9325 = vmatprep.subr.bf16.mxu0 0
      %9326 = vmatpush1.bf16.msra.mxu0 0
      %9327 = vmatprep.subr.bf16.mxu0 0
      %9328 = vmatpush1.bf16.msra.mxu0 0
      %9329 = vmatprep.subr.bf16.mxu0 0
      %9330 = vmatpush1.bf16.msra.mxu0 0
      %9331 = vmatprep.subr.bf16.mxu0 0
      %9332 = vmatpush1.bf16.msra.mxu0 0
      %9333 = vmatprep.subr.bf16.mxu0 0
      %9334 = vmatpush1.bf16.msra.mxu0 0
      %9335 = vmatprep.subr.bf16.mxu0 0
      %9336 = vmatpush1.bf16.msra.mxu0 0
      %9337 = vmatprep.subr.bf16.mxu0 0
      %9338 = vmatpush1.bf16.msra.mxu0 0
      %9339 = vmatprep.subr.bf16.mxu0 0
      %9340 = vmatpush1.bf16.msra.mxu0 0
      %9341 = vmatprep.subr.bf16.mxu0 0
      %9342 = vmatpush1.bf16.msra.mxu0 0
      %9343 = vmatprep.subr.bf16.mxu0 0
      %9344 = vmatpush1.bf16.msra.mxu0 0
      %9345 = vmatprep.subr.bf16.mxu0 0
      %9346 = vmatpush1.bf16.msra.mxu0 0
      %9347 = vmatprep.subr.bf16.mxu0 0
      %9348 = vmatpush1.bf16.msra.mxu0 0
      %9349 = vmatprep.subr.bf16.mxu0 0
      %9350 = vmatpush1.bf16.msra.mxu0 0
      %9351 = vmatprep.mubr.bf16.mxu0 0
      %9352 = vmatmul.mubr.bf16.gmra.mrb[0].mxu0 %v9266
      %v9353 = vpop.f32.mrb[0].mxu0
      %v9354 = vadd.f32 0.0, %v9353
      %v9355 = vpop.f32.mrb[0].mxu0
      %v9356 = vpop.f32.mrb[0].mxu0
      %v9357 = vadd.f32 0.0, %v9356
      %v9358 = vpop.f32.mrb[0].mxu0
      %9359 = vmatprep.mubr.bf16.mxu0 0
      %9360 = vmatmul.mubr.bf16.gmra.mrb[0].mxu0 %v9269
      %v9361 = vpop.f32.mrb[0].mxu0
      %v9362 = vadd.f32 0.0, %v9361
      %v9363 = vpop.f32.mrb[0].mxu0
      %v9364 = vpop.f32.mrb[0].mxu0
      %v9365 = vadd.f32 0.0, %v9364
      %v9366 = vpop.f32.mrb[0].mxu0
      %9367 = vmatprep.mubr.bf16.mxu0 0
      %9368 = vmatmul.mubr.bf16.gmra.mrb[0].mxu0 %v9272
      %v9369 = vpop.f32.mrb[0].mxu0
      %v9370 = vadd.f32 0.0, %v9369
      %v9371 = vpop.f32.mrb[0].mxu0
      %v9372 = vpop.f32.mrb[0].mxu0
      %v9373 = vadd.f32 0.0, %v9372
      %v9374 = vpop.f32.mrb[0].mxu0
      %9375 = vmatprep.mubr.bf16.mxu0 0
      %9376 = vmatmul.mubr.bf16.gmra.mrb[0].mxu0 %v9275
      %v9377 = vpop.f32.mrb[0].mxu0
      %v9378 = vadd.f32 0.0, %v9377
      %v9379 = vpop.f32.mrb[0].mxu0
      %v9380 = vpop.f32.mrb[0].mxu0
      %v9381 = vadd.f32 0.0, %v9380
      %v9382 = vpop.f32.mrb[0].mxu0
      %9383 = vmatprep.mubr.bf16.mxu0 0
      %9384 = vmatmul.mubr.bf16.gmra.mrb[0].mxu0 %v9278
      %v9385 = vpop.f32.mrb[0].mxu0
      %v9386 = vadd.f32 0.0, %v9385
      %v9387 = vpop.f32.mrb[0].mxu0
      %v9388 = vpop.f32.mrb[0].mxu0
      %v9389 = vadd.f32 0.0, %v9388
      %v9390 = vpop.f32.mrb[0].mxu0
      %9391 = vmatprep.mubr.bf16.mxu0 0
      %9392 = vmatmul.mubr.bf16.gmra.mrb[0].mxu0 %v9281
      %v9393 = vpop.f32.mrb[0].mxu0
      %v9394 = vadd.f32 0.0, %v9393
      %v9395 = vpop.f32.mrb[0].mxu0
      %v9396 = vpop.f32.mrb[0].mxu0
      %v9397 = vadd.f32 0.0, %v9396
      %v9398 = vpop.f32.mrb[0].mxu0
      %9399 = vmatprep.mubr.bf16.mxu0 0
      %9400 = vmatmul.mubr.bf16.gmra.mrb[0].mxu0 %v9284
      %v9401 = vpop.f32.mrb[0].mxu0
      %v9402 = vadd.f32 0.0, %v9401
      %v9403 = vpop.f32.mrb[0].mxu0
      %v9404 = vpop.f32.mrb[0].mxu0
      %v9405 = vadd.f32 0.0, %v9404
      %v9406 = vpop.f32.mrb[0].mxu0
      %9407 = vmatprep.mubr.bf16.mxu0 0
      %9408 = vmatmul.mubr.bf16.gmra.mrb[0].mxu0 %v9287
      %v9409 = vpop.f32.mrb[0].mxu0
      %v9410 = vadd.f32 0.0, %v9409
      %v9411 = vpop.f32.mrb[0].mxu0
      %v9412 = vpop.f32.mrb[0].mxu0
      %v9413 = vadd.f32 0.0, %v9412
      %v9414 = vpop.f32.mrb[0].mxu0
      %9415 = vmatprep.mubr.bf16.mxu0 0
      %9416 = vmatmul.mubr.bf16.gmra.mrb[0].mxu0 %v9290
      %v9417 = vpop.f32.mrb[0].mxu0
      %v9418 = vadd.f32 0.0, %v9417
      %v9419 = vpop.f32.mrb[0].mxu0
      %v9420 = vpop.f32.mrb[0].mxu0
      %v9421 = vadd.f32 0.0, %v9420
      %v9422 = vpop.f32.mrb[0].mxu0
      %9423 = vmatprep.mubr.bf16.mxu0 0
      %9424 = vmatmul.mubr.bf16.gmra.mrb[0].mxu0 %v9293
      %v9425 = vpop.f32.mrb[0].mxu0
      %v9426 = vadd.f32 0.0, %v9425
      %v9427 = vpop.f32.mrb[0].mxu0
      %v9428 = vpop.f32.mrb[0].mxu0
      %v9429 = vadd.f32 0.0, %v9428
      %v9430 = vpop.f32.mrb[0].mxu0
      %9431 = vmatprep.mubr.bf16.mxu0 0
      %9432 = vmatmul.mubr.bf16.gmra.mrb[0].mxu0 %v9296
      %v9433 = vpop.f32.mrb[0].mxu0
      %v9434 = vadd.f32 0.0, %v9433
      %v9435 = vpop.f32.mrb[0].mxu0
      %v9436 = vpop.f32.mrb[0].mxu0
      %v9437 = vadd.f32 0.0, %v9436
      %v9438 = vpop.f32.mrb[0].mxu0
      %9439 = vmatprep.mubr.bf16.mxu0 0
      %9440 = vmatmul.mubr.bf16.gmra.mrb[0].mxu0 %v9299
      %v9441 = vpop.f32.mrb[0].mxu0
      %v9442 = vadd.f32 0.0, %v9441
      %v9443 = vpop.f32.mrb[0].mxu0
      %v9444 = vpop.f32.mrb[0].mxu0
      %v9445 = vadd.f32 0.0, %v9444
      %v9446 = vpop.f32.mrb[0].mxu0
      %9447 = vmatprep.mubr.bf16.mxu0 0
      %9448 = vmatmul.mubr.bf16.gmra.mrb[0].mxu0 %v9302
      %v9449 = vpop.f32.mrb[0].mxu0
      %v9450 = vadd.f32 0.0, %v9449
      %v9451 = vpop.f32.mrb[0].mxu0
      %v9452 = vpop.f32.mrb[0].mxu0
      %v9453 = vadd.f32 0.0, %v9452
      %v9454 = vpop.f32.mrb[0].mxu0
      %9455 = vmatprep.mubr.bf16.mxu0 0
      %9456 = vmatmul.mubr.bf16.gmra.mrb[0].mxu0 %v9305
      %v9457 = vpop.f32.mrb[0].mxu0
      %v9458 = vadd.f32 0.0, %v9457
      %v9459 = vpop.f32.mrb[0].mxu0
      %v9460 = vpop.f32.mrb[0].mxu0
      %v9461 = vadd.f32 0.0, %v9460
      %v9462 = vpop.f32.mrb[0].mxu0
      %9463 = vmatprep.mubr.bf16.mxu0 0
      %9464 = vmatmul.mubr.bf16.gmra.mrb[0].mxu0 %v9308
      %v9465 = vpop.f32.mrb[0].mxu0
      %v9466 = vadd.f32 0.0, %v9465
      %v9467 = vpop.f32.mrb[0].mxu0
      %v9468 = vpop.f32.mrb[0].mxu0
      %v9469 = vadd.f32 0.0, %v9468
      %v9470 = vpop.f32.mrb[0].mxu0
      %9471 = vmatprep.mubr.bf16.mxu0 0
      %9472 = vmatmul.mubr.bf16.gmra.mrb[0].mxu0 %v9311
      %v9473 = vpop.f32.mrb[0].mxu0
      %v9474 = vadd.f32 0.0, %v9473
      %v9475 = vpop.f32.mrb[0].mxu0
      %v9476 = vpop.f32.mrb[0].mxu0
      %v9477 = vadd.f32 0.0, %v9476
      %v9478 = vpop.f32.mrb[0].mxu0
      %9479 = vmatprep.mubr.bf16.mxu0 0
      %9480 = vmatmul.mubr.bf16.gmra.mrb[0].mxu0 %v9314
      %v9481 = vpop.f32.mrb[0].mxu0
      %v9482 = vadd.f32 0.0, %v9481
      %v9483 = vpop.f32.mrb[0].mxu0
      %v9484 = vpop.f32.mrb[0].mxu0
      %v9485 = vadd.f32 0.0, %v9484
      %v9486 = vpop.f32.mrb[0].mxu0
      %9487 = vmatprep.mubr.bf16.mxu0 0
      %9488 = vmatmul.mubr.bf16.gmra.mrb[0].mxu0 %v9317
      %v9489 = vpop.f32.mrb[0].mxu0
      %v9490 = vadd.f32 0.0, %v9489
      %v9491 = vpop.f32.mrb[0].mxu0
      %v9492 = vpop.f32.mrb[0].mxu0
      %v9493 = vadd.f32 0.0, %v9492
      %v9494 = vpop.f32.mrb[0].mxu0
      %9495 = vdwg.mxu0
      %v9496 = vadd.f32 %v9023, %v9354
      %v9497 = vadd.f32 %v9024, %v9357
      %v9498 = vadd.f32 %v9025, %v9362
      %v9499 = vadd.f32 %v9026, %v9365
      %v9500 = vadd.f32 %v9027, %v9370
      %v9501 = vadd.f32 %v9028, %v9373
      %v9502 = vadd.f32 %v9029, %v9378
      %v9503 = vadd.f32 %v9030, %v9381
      %v9504 = vadd.f32 %v9031, %v9386
      %v9505 = vadd.f32 %v9032, %v9389
      %v9506 = vadd.f32 %v9033, %v9394
      %v9507 = vadd.f32 %v9034, %v9397
      %v9508 = vadd.f32 %v9035, %v9402
      %v9509 = vadd.f32 %v9036, %v9405
      %v9510 = vadd.f32 %v9037, %v9410
      %v9511 = vadd.f32 %v9038, %v9413
      %v9512 = vadd.f32 %v9039, %v9418
      %v9513 = vadd.f32 %v9040, %v9421
      %v9514 = vadd.f32 %v9041, %v9426
      %v9515 = vadd.f32 %v9042, %v9429
      %v9516 = vadd.f32 %v9043, %v9434
      %v9517 = vadd.f32 %v9044, %v9437
      %v9518 = vadd.f32 %v9045, %v9442
      %v9519 = vadd.f32 %v9046, %v9445
      %v9520 = vadd.f32 %v9047, %v9450
      %v9521 = vadd.f32 %v9048, %v9453
      %v9522 = vadd.f32 %v9049, %v9458
      %v9523 = vadd.f32 %v9050, %v9461
      %v9524 = vadd.f32 %v9051, %v9466
      %v9525 = vadd.f32 %v9052, %v9469
      %v9526 = vadd.f32 %v9053, %v9474
      %v9527 = vadd.f32 %v9054, %v9477
      %v9528 = vadd.f32 %v9055, %v9482
      %v9529 = vadd.f32 %v9056, %v9485
      %v9530 = vadd.f32 %v9057, %v9490
      %v9531 = vadd.f32 %v9058, %v9493
      %v9532 = vld [vmem:[#allocation3 + $0x8] sm:$0xf0]
      %s9533 = scalar_lea.vmem %s6, 64
      %v9534 = vld [vmem:[%s9533] sm:$0xf]
      %v9535 = vld [vmem:[%s9533 + $0x4] sm:$0xf]
      %v9536 = vld [vmem:[%s9533 + $0x8] sm:$0xf]
      %v9537 = vld [vmem:[%s9533 + $0xc] sm:$0xf]
      %v9557 = vrot.slane %v9532, 4
      %v9558 = vrot.slane %v9060, 4
      %v9559 = vsel %vm4144, %v9557, %v9558
      %v9560 = vrot.slane %v9061, 4
      %v9561 = vsel %vm4144, %v9558, %v9560
      %v9562 = vrot.slane %v9062, 4
      %v9563 = vsel %vm4144, %v9560, %v9562
      %v9564 = vrot.slane %v9063, 4
      %v9565 = vsel %vm4144, %v9562, %v9564
      %v9566 = vrot.slane %v9064, 4
      %v9567 = vsel %vm4144, %v9564, %v9566
      %v9568 = vrot.slane %v9065, 4
      %v9569 = vsel %vm4144, %v9566, %v9568
      %v9570 = vrot.slane %v9066, 4
      %v9571 = vsel %vm4144, %v9568, %v9570
      %v9572 = vrot.slane %v9067, 4
      %v9573 = vsel %vm4144, %v9570, %v9572
      %v9574 = vrot.slane %v9068, 4
      %v9575 = vsel %vm4144, %v9572, %v9574
      %v9576 = vrot.slane %v9069, 4
      %v9577 = vsel %vm4144, %v9574, %v9576
      %v9578 = vrot.slane %v9070, 4
      %v9579 = vsel %vm4144, %v9576, %v9578
      %v9580 = vrot.slane %v9071, 4
      %v9581 = vsel %vm4144, %v9578, %v9580
      %v9582 = vrot.slane %v9072, 4
      %v9583 = vsel %vm4144, %v9580, %v9582
      %v9584 = vrot.slane %v9073, 4
      %v9585 = vsel %vm4144, %v9582, %v9584
      %v9586 = vrot.slane %v9074, 4
      %v9587 = vsel %vm4144, %v9584, %v9586
      %v9588 = vrot.slane %v9075, 4
      %v9589 = vsel %vm4144, %v9586, %v9588
      %v9590 = vrot.slane %v9076, 4
      %v9591 = vsel %vm4144, %v9588, %v9590
      %v9592 = vrot.slane %v9077, 4
      %v9593 = vsel %vm4144, %v9590, %v9592
      %v9598 = vunpack.c.l.b16 %v9534
      %v9599 = vunpack.c.l.b16 %v9535
      %v9600 = vunpack.c.l.b16 %v9536
      %v9601 = vunpack.c.l.b16 %v9537
      %v9602 = vpack.c.b16 %v9599, %v9598
      %v9603 = vpack.c.b16 %v9601, %v9600
      %v9607 = vsel %vm3870, %v9559, 0
      %v9610 = vsel %vm3870, %v9561, 0
      %v9613 = vsel %vm3870, %v9563, 0
      %v9616 = vsel %vm3870, %v9565, 0
      %v9619 = vsel %vm3870, %v9567, 0
      %v9622 = vsel %vm3870, %v9569, 0
      %v9625 = vsel %vm3870, %v9571, 0
      %v9628 = vsel %vm3870, %v9573, 0
      %v9631 = vsel %vm3870, %v9575, 0
      %v9634 = vsel %vm3870, %v9577, 0
      %v9637 = vsel %vm3870, %v9579, 0
      %v9640 = vsel %vm3870, %v9581, 0
      %v9643 = vsel %vm3870, %v9583, 0
      %v9646 = vsel %vm3870, %v9585, 0
      %v9649 = vsel %vm3870, %v9587, 0
      %v9652 = vsel %vm3870, %v9589, 0
      %v9655 = vsel %vm3870, %v9591, 0
      %v9658 = vsel %vm3870, %v9593, 0
      %9660 = vmatprep.subr.bf16.mxu0 0
      %9661 = vmatpush1.bf16.msra.mxu0 %v9602
      %9662 = vmatprep.subr.bf16.mxu0 0
      %9663 = vmatpush1.bf16.msra.mxu0 %v9603
      %9664 = vmatprep.subr.bf16.mxu0 0
      %9665 = vmatpush1.bf16.msra.mxu0 0
      %9666 = vmatprep.subr.bf16.mxu0 0
      %9667 = vmatpush1.bf16.msra.mxu0 0
      %9668 = vmatprep.subr.bf16.mxu0 0
      %9669 = vmatpush1.bf16.msra.mxu0 0
      %9670 = vmatprep.subr.bf16.mxu0 0
      %9671 = vmatpush1.bf16.msra.mxu0 0
      %9672 = vmatprep.subr.bf16.mxu0 0
      %9673 = vmatpush1.bf16.msra.mxu0 0
      %9674 = vmatprep.subr.bf16.mxu0 0
      %9675 = vmatpush1.bf16.msra.mxu0 0
      %9676 = vmatprep.subr.bf16.mxu0 0
      %9677 = vmatpush1.bf16.msra.mxu0 0
      %9678 = vmatprep.subr.bf16.mxu0 0
      %9679 = vmatpush1.bf16.msra.mxu0 0
      %9680 = vmatprep.subr.bf16.mxu0 0
      %9681 = vmatpush1.bf16.msra.mxu0 0
      %9682 = vmatprep.subr.bf16.mxu0 0
      %9683 = vmatpush1.bf16.msra.mxu0 0
      %9684 = vmatprep.subr.bf16.mxu0 0
      %9685 = vmatpush1.bf16.msra.mxu0 0
      %9686 = vmatprep.subr.bf16.mxu0 0
      %9687 = vmatpush1.bf16.msra.mxu0 0
      %9688 = vmatprep.subr.bf16.mxu0 0
      %9689 = vmatpush1.bf16.msra.mxu0 0
      %9690 = vmatprep.subr.bf16.mxu0 0
      %9691 = vmatpush1.bf16.msra.mxu0 0
      %9692 = vmatprep.mubr.bf16.mxu0 0
      %9693 = vmatmul.mubr.bf16.gmra.mrb[0].mxu0 %v9607
      %v9694 = vpop.f32.mrb[0].mxu0
      %v9695 = vadd.f32 0.0, %v9694
      %v9696 = vpop.f32.mrb[0].mxu0
      %v9697 = vpop.f32.mrb[0].mxu0
      %v9698 = vadd.f32 0.0, %v9697
      %v9699 = vpop.f32.mrb[0].mxu0
      %9700 = vmatprep.mubr.bf16.mxu0 0
      %9701 = vmatmul.mubr.bf16.gmra.mrb[0].mxu0 %v9610
      %v9702 = vpop.f32.mrb[0].mxu0
      %v9703 = vadd.f32 0.0, %v9702
      %v9704 = vpop.f32.mrb[0].mxu0
      %v9705 = vpop.f32.mrb[0].mxu0
      %v9706 = vadd.f32 0.0, %v9705
      %v9707 = vpop.f32.mrb[0].mxu0
      %9708 = vmatprep.mubr.bf16.mxu0 0
      %9709 = vmatmul.mubr.bf16.gmra.mrb[0].mxu0 %v9613
      %v9710 = vpop.f32.mrb[0].mxu0
      %v9711 = vadd.f32 0.0, %v9710
      %v9712 = vpop.f32.mrb[0].mxu0
      %v9713 = vpop.f32.mrb[0].mxu0
      %v9714 = vadd.f32 0.0, %v9713
      %v9715 = vpop.f32.mrb[0].mxu0
      %9716 = vmatprep.mubr.bf16.mxu0 0
      %9717 = vmatmul.mubr.bf16.gmra.mrb[0].mxu0 %v9616
      %v9718 = vpop.f32.mrb[0].mxu0
      %v9719 = vadd.f32 0.0, %v9718
      %v9720 = vpop.f32.mrb[0].mxu0
      %v9721 = vpop.f32.mrb[0].mxu0
      %v9722 = vadd.f32 0.0, %v9721
      %v9723 = vpop.f32.mrb[0].mxu0
      %9724 = vmatprep.mubr.bf16.mxu0 0
      %9725 = vmatmul.mubr.bf16.gmra.mrb[0].mxu0 %v9619
      %v9726 = vpop.f32.mrb[0].mxu0
      %v9727 = vadd.f32 0.0, %v9726
      %v9728 = vpop.f32.mrb[0].mxu0
      %v9729 = vpop.f32.mrb[0].mxu0
      %v9730 = vadd.f32 0.0, %v9729
      %v9731 = vpop.f32.mrb[0].mxu0
      %9732 = vmatprep.mubr.bf16.mxu0 0
      %9733 = vmatmul.mubr.bf16.gmra.mrb[0].mxu0 %v9622
      %v9734 = vpop.f32.mrb[0].mxu0
      %v9735 = vadd.f32 0.0, %v9734
      %v9736 = vpop.f32.mrb[0].mxu0
      %v9737 = vpop.f32.mrb[0].mxu0
      %v9738 = vadd.f32 0.0, %v9737
      %v9739 = vpop.f32.mrb[0].mxu0
      %9740 = vmatprep.mubr.bf16.mxu0 0
      %9741 = vmatmul.mubr.bf16.gmra.mrb[0].mxu0 %v9625
      %v9742 = vpop.f32.mrb[0].mxu0
      %v9743 = vadd.f32 0.0, %v9742
      %v9744 = vpop.f32.mrb[0].mxu0
      %v9745 = vpop.f32.mrb[0].mxu0
      %v9746 = vadd.f32 0.0, %v9745
      %v9747 = vpop.f32.mrb[0].mxu0
      %9748 = vmatprep.mubr.bf16.mxu0 0
      %9749 = vmatmul.mubr.bf16.gmra.mrb[0].mxu0 %v9628
      %v9750 = vpop.f32.mrb[0].mxu0
      %v9751 = vadd.f32 0.0, %v9750
      %v9752 = vpop.f32.mrb[0].mxu0
      %v9753 = vpop.f32.mrb[0].mxu0
      %v9754 = vadd.f32 0.0, %v9753
      %v9755 = vpop.f32.mrb[0].mxu0
      %9756 = vmatprep.mubr.bf16.mxu0 0
      %9757 = vmatmul.mubr.bf16.gmra.mrb[0].mxu0 %v9631
      %v9758 = vpop.f32.mrb[0].mxu0
      %v9759 = vadd.f32 0.0, %v9758
      %v9760 = vpop.f32.mrb[0].mxu0
      %v9761 = vpop.f32.mrb[0].mxu0
      %v9762 = vadd.f32 0.0, %v9761
      %v9763 = vpop.f32.mrb[0].mxu0
      %9764 = vmatprep.mubr.bf16.mxu0 0
      %9765 = vmatmul.mubr.bf16.gmra.mrb[0].mxu0 %v9634
      %v9766 = vpop.f32.mrb[0].mxu0
      %v9767 = vadd.f32 0.0, %v9766
      %v9768 = vpop.f32.mrb[0].mxu0
      %v9769 = vpop.f32.mrb[0].mxu0
      %v9770 = vadd.f32 0.0, %v9769
      %v9771 = vpop.f32.mrb[0].mxu0
      %9772 = vmatprep.mubr.bf16.mxu0 0
      %9773 = vmatmul.mubr.bf16.gmra.mrb[0].mxu0 %v9637
      %v9774 = vpop.f32.mrb[0].mxu0
      %v9775 = vadd.f32 0.0, %v9774
      %v9776 = vpop.f32.mrb[0].mxu0
      %v9777 = vpop.f32.mrb[0].mxu0
      %v9778 = vadd.f32 0.0, %v9777
      %v9779 = vpop.f32.mrb[0].mxu0
      %9780 = vmatprep.mubr.bf16.mxu0 0
      %9781 = vmatmul.mubr.bf16.gmra.mrb[0].mxu0 %v9640
      %v9782 = vpop.f32.mrb[0].mxu0
      %v9783 = vadd.f32 0.0, %v9782
      %v9784 = vpop.f32.mrb[0].mxu0
      %v9785 = vpop.f32.mrb[0].mxu0
      %v9786 = vadd.f32 0.0, %v9785
      %v9787 = vpop.f32.mrb[0].mxu0
      %9788 = vmatprep.mubr.bf16.mxu0 0
      %9789 = vmatmul.mubr.bf16.gmra.mrb[0].mxu0 %v9643
      %v9790 = vpop.f32.mrb[0].mxu0
      %v9791 = vadd.f32 0.0, %v9790
      %v9792 = vpop.f32.mrb[0].mxu0
      %v9793 = vpop.f32.mrb[0].mxu0
      %v9794 = vadd.f32 0.0, %v9793
      %v9795 = vpop.f32.mrb[0].mxu0
      %9796 = vmatprep.mubr.bf16.mxu0 0
      %9797 = vmatmul.mubr.bf16.gmra.mrb[0].mxu0 %v9646
      %v9798 = vpop.f32.mrb[0].mxu0
      %v9799 = vadd.f32 0.0, %v9798
      %v9800 = vpop.f32.mrb[0].mxu0
      %v9801 = vpop.f32.mrb[0].mxu0
      %v9802 = vadd.f32 0.0, %v9801
      %v9803 = vpop.f32.mrb[0].mxu0
      %9804 = vmatprep.mubr.bf16.mxu0 0
      %9805 = vmatmul.mubr.bf16.gmra.mrb[0].mxu0 %v9649
      %v9806 = vpop.f32.mrb[0].mxu0
      %v9807 = vadd.f32 0.0, %v9806
      %v9808 = vpop.f32.mrb[0].mxu0
      %v9809 = vpop.f32.mrb[0].mxu0
      %v9810 = vadd.f32 0.0, %v9809
      %v9811 = vpop.f32.mrb[0].mxu0
      %9812 = vmatprep.mubr.bf16.mxu0 0
      %9813 = vmatmul.mubr.bf16.gmra.mrb[0].mxu0 %v9652
      %v9814 = vpop.f32.mrb[0].mxu0
      %v9815 = vadd.f32 0.0, %v9814
      %v9816 = vpop.f32.mrb[0].mxu0
      %v9817 = vpop.f32.mrb[0].mxu0
      %v9818 = vadd.f32 0.0, %v9817
      %v9819 = vpop.f32.mrb[0].mxu0
      %9820 = vmatprep.mubr.bf16.mxu0 0
      %9821 = vmatmul.mubr.bf16.gmra.mrb[0].mxu0 %v9655
      %v9822 = vpop.f32.mrb[0].mxu0
      %v9823 = vadd.f32 0.0, %v9822
      %v9824 = vpop.f32.mrb[0].mxu0
      %v9825 = vpop.f32.mrb[0].mxu0
      %v9826 = vadd.f32 0.0, %v9825
      %v9827 = vpop.f32.mrb[0].mxu0
      %9828 = vmatprep.mubr.bf16.mxu0 0
      %9829 = vmatmul.mubr.bf16.gmra.mrb[0].mxu0 %v9658
      %v9830 = vpop.f32.mrb[0].mxu0
      %v9831 = vadd.f32 0.0, %v9830
      %v9832 = vpop.f32.mrb[0].mxu0
      %v9833 = vpop.f32.mrb[0].mxu0
      %v9834 = vadd.f32 0.0, %v9833
      %v9835 = vpop.f32.mrb[0].mxu0
      %9836 = vdwg.mxu0
      %v9837 = vadd.f32 %v9496, %v9695
      %v9838 = vadd.f32 %v9497, %v9698
      %v9839 = vadd.f32 %v9498, %v9703
      %v9840 = vadd.f32 %v9499, %v9706
      %v9841 = vadd.f32 %v9500, %v9711
      %v9842 = vadd.f32 %v9501, %v9714
      %v9843 = vadd.f32 %v9502, %v9719
      %v9844 = vadd.f32 %v9503, %v9722
      %v9845 = vadd.f32 %v9504, %v9727
      %v9846 = vadd.f32 %v9505, %v9730
      %v9847 = vadd.f32 %v9506, %v9735
      %v9848 = vadd.f32 %v9507, %v9738
      %v9849 = vadd.f32 %v9508, %v9743
      %v9850 = vadd.f32 %v9509, %v9746
      %v9851 = vadd.f32 %v9510, %v9751
      %v9852 = vadd.f32 %v9511, %v9754
      %v9853 = vadd.f32 %v9512, %v9759
      %v9854 = vadd.f32 %v9513, %v9762
      %v9855 = vadd.f32 %v9514, %v9767
      %v9856 = vadd.f32 %v9515, %v9770
      %v9857 = vadd.f32 %v9516, %v9775
      %v9858 = vadd.f32 %v9517, %v9778
      %v9859 = vadd.f32 %v9518, %v9783
      %v9860 = vadd.f32 %v9519, %v9786
      %v9861 = vadd.f32 %v9520, %v9791
      %v9862 = vadd.f32 %v9521, %v9794
      %v9863 = vadd.f32 %v9522, %v9799
      %v9864 = vadd.f32 %v9523, %v9802
      %v9865 = vadd.f32 %v9524, %v9807
      %v9866 = vadd.f32 %v9525, %v9810
      %v9867 = vadd.f32 %v9526, %v9815
      %v9868 = vadd.f32 %v9527, %v9818
      %v9869 = vadd.f32 %v9528, %v9823
      %v9870 = vadd.f32 %v9529, %v9826
      %v9871 = vadd.f32 %v9530, %v9831
      %v9872 = vadd.f32 %v9531, %v9834
      %v9873 = vld [vmem:[#allocation3 + $0x98] sm:$0x1f]
      %s9874 = scalar_lea.vmem %s6, 80
      %v9875 = vld [vmem:[%s9874] sm:$0xf]
      %v9876 = vld [vmem:[%s9874 + $0x4] sm:$0xf]
      %v9877 = vld [vmem:[%s9874 + $0x8] sm:$0xf]
      %v9878 = vld [vmem:[%s9874 + $0xc] sm:$0xf]
      %v9880 = vshrl.u32 %v9532, 16
      %v9882 = vrot.slane %v9880, 4
      %v9883 = vshll.u32 %v9532, 16
      %v9885 = vrot.slane %v9883, 5
      %v9886 = vor.u32 %v9882, %v9885
      %v9887 = vrot.slane %v9092, 4
      %v9888 = vrot.slane %v9095, 5
      %v9889 = vor.u32 %v9887, %v9888
      %v9890 = vsel %vm6152, %v9886, %v9889
      %v9891 = vrot.slane %v9101, 4
      %v9892 = vrot.slane %v9104, 5
      %v9893 = vor.u32 %v9891, %v9892
      %v9894 = vsel %vm6152, %v9889, %v9893
      %v9895 = vrot.slane %v9110, 4
      %v9896 = vrot.slane %v9113, 5
      %v9897 = vor.u32 %v9895, %v9896
      %v9898 = vsel %vm6152, %v9893, %v9897
      %v9899 = vrot.slane %v9119, 4
      %v9900 = vrot.slane %v9122, 5
      %v9901 = vor.u32 %v9899, %v9900
      %v9902 = vsel %vm6152, %v9897, %v9901
      %v9903 = vrot.slane %v9128, 4
      %v9904 = vrot.slane %v9131, 5
      %v9905 = vor.u32 %v9903, %v9904
      %v9906 = vsel %vm6152, %v9901, %v9905
      %v9907 = vrot.slane %v9137, 4
      %v9908 = vrot.slane %v9140, 5
      %v9909 = vor.u32 %v9907, %v9908
      %v9910 = vsel %vm6152, %v9905, %v9909
      %v9911 = vrot.slane %v9146, 4
      %v9912 = vrot.slane %v9149, 5
      %v9913 = vor.u32 %v9911, %v9912
      %v9914 = vsel %vm6152, %v9909, %v9913
      %v9915 = vrot.slane %v9155, 4
      %v9916 = vrot.slane %v9158, 5
      %v9917 = vor.u32 %v9915, %v9916
      %v9918 = vsel %vm6152, %v9913, %v9917
      %v9919 = vrot.slane %v9164, 4
      %v9920 = vrot.slane %v9167, 5
      %v9921 = vor.u32 %v9919, %v9920
      %v9922 = vsel %vm6152, %v9917, %v9921
      %v9923 = vrot.slane %v9173, 4
      %v9924 = vrot.slane %v9176, 5
      %v9925 = vor.u32 %v9923, %v9924
      %v9926 = vsel %vm6152, %v9921, %v9925
      %v9927 = vrot.slane %v9182, 4
      %v9928 = vrot.slane %v9185, 5
      %v9929 = vor.u32 %v9927, %v9928
      %v9930 = vsel %vm6152, %v9925, %v9929
      %v9931 = vrot.slane %v9191, 4
      %v9932 = vrot.slane %v9194, 5
      %v9933 = vor.u32 %v9931, %v9932
      %v9934 = vsel %vm6152, %v9929, %v9933
      %v9935 = vrot.slane %v9200, 4
      %v9936 = vrot.slane %v9203, 5
      %v9937 = vor.u32 %v9935, %v9936
      %v9938 = vsel %vm6152, %v9933, %v9937
      %v9939 = vrot.slane %v9209, 4
      %v9940 = vrot.slane %v9212, 5
      %v9941 = vor.u32 %v9939, %v9940
      %v9942 = vsel %vm6152, %v9937, %v9941
      %v9943 = vrot.slane %v9218, 4
      %v9944 = vrot.slane %v9221, 5
      %v9945 = vor.u32 %v9943, %v9944
      %v9946 = vsel %vm6152, %v9941, %v9945
      %v9947 = vrot.slane %v9227, 4
      %v9948 = vrot.slane %v9230, 5
      %v9949 = vor.u32 %v9947, %v9948
      %v9950 = vsel %vm6152, %v9945, %v9949
      %v9951 = vrot.slane %v9236, 4
      %v9952 = vrot.slane %v9239, 5
      %v9953 = vor.u32 %v9951, %v9952
      %v9954 = vsel %vm6152, %v9949, %v9953
      %v9956 = vshrl.u32 %v9873, 16
      %v9958 = vrot.slane %v9956, 4
      %v9959 = vshll.u32 %v9873, 16
      %v9961 = vrot.slane %v9959, 5
      %v9962 = vor.u32 %v9958, %v9961
      %v9963 = vsel %vm6152, %v9953, %v9962
      %v9968 = vunpack.c.l.b16 %v9875
      %v9969 = vunpack.c.l.b16 %v9876
      %v9970 = vunpack.c.l.b16 %v9877
      %v9971 = vunpack.c.l.b16 %v9878
      %v9972 = vpack.c.b16 %v9969, %v9968
      %v9973 = vpack.c.b16 %v9971, %v9970
      %v9977 = vsel %vm3870, %v9890, 0
      %v9980 = vsel %vm3870, %v9894, 0
      %v9983 = vsel %vm3870, %v9898, 0
      %v9986 = vsel %vm3870, %v9902, 0
      %v9989 = vsel %vm3870, %v9906, 0
      %v9992 = vsel %vm3870, %v9910, 0
      %v9995 = vsel %vm3870, %v9914, 0
      %v9998 = vsel %vm3870, %v9918, 0
      %v10001 = vsel %vm3870, %v9922, 0
      %v10004 = vsel %vm3870, %v9926, 0
      %v10007 = vsel %vm3870, %v9930, 0
      %v10010 = vsel %vm3870, %v9934, 0
      %v10013 = vsel %vm3870, %v9938, 0
      %v10016 = vsel %vm3870, %v9942, 0
      %v10019 = vsel %vm3870, %v9946, 0
      %v10022 = vsel %vm3870, %v9950, 0
      %v10025 = vsel %vm3870, %v9954, 0
      %v10028 = vsel %vm3870, %v9963, 0
      %10030 = vmatprep.subr.bf16.mxu0 0
      %10031 = vmatpush1.bf16.msra.mxu0 %v9972
      %10032 = vmatprep.subr.bf16.mxu0 0
      %10033 = vmatpush1.bf16.msra.mxu0 %v9973
      %10034 = vmatprep.subr.bf16.mxu0 0
      %10035 = vmatpush1.bf16.msra.mxu0 0
      %10036 = vmatprep.subr.bf16.mxu0 0
      %10037 = vmatpush1.bf16.msra.mxu0 0
      %10038 = vmatprep.subr.bf16.mxu0 0
      %10039 = vmatpush1.bf16.msra.mxu0 0
      %10040 = vmatprep.subr.bf16.mxu0 0
      %10041 = vmatpush1.bf16.msra.mxu0 0
      %10042 = vmatprep.subr.bf16.mxu0 0
      %10043 = vmatpush1.bf16.msra.mxu0 0
      %10044 = vmatprep.subr.bf16.mxu0 0
      %10045 = vmatpush1.bf16.msra.mxu0 0
      %10046 = vmatprep.subr.bf16.mxu0 0
      %10047 = vmatpush1.bf16.msra.mxu0 0
      %10048 = vmatprep.subr.bf16.mxu0 0
      %10049 = vmatpush1.bf16.msra.mxu0 0
      %10050 = vmatprep.subr.bf16.mxu0 0
      %10051 = vmatpush1.bf16.msra.mxu0 0
      %10052 = vmatprep.subr.bf16.mxu0 0
      %10053 = vmatpush1.bf16.msra.mxu0 0
      %10054 = vmatprep.subr.bf16.mxu0 0
      %10055 = vmatpush1.bf16.msra.mxu0 0
      %10056 = vmatprep.subr.bf16.mxu0 0
      %10057 = vmatpush1.bf16.msra.mxu0 0
      %10058 = vmatprep.subr.bf16.mxu0 0
      %10059 = vmatpush1.bf16.msra.mxu0 0
      %10060 = vmatprep.subr.bf16.mxu0 0
      %10061 = vmatpush1.bf16.msra.mxu0 0
      %10062 = vmatprep.mubr.bf16.mxu0 0
      %10063 = vmatmul.mubr.bf16.gmra.mrb[0].mxu0 %v9977
      %v10064 = vpop.f32.mrb[0].mxu0
      %v10065 = vadd.f32 0.0, %v10064
      %v10066 = vpop.f32.mrb[0].mxu0
      %v10067 = vpop.f32.mrb[0].mxu0
      %v10068 = vadd.f32 0.0, %v10067
      %v10069 = vpop.f32.mrb[0].mxu0
      %10070 = vmatprep.mubr.bf16.mxu0 0
      %10071 = vmatmul.mubr.bf16.gmra.mrb[0].mxu0 %v9980
      %v10072 = vpop.f32.mrb[0].mxu0
      %v10073 = vadd.f32 0.0, %v10072
      %v10074 = vpop.f32.mrb[0].mxu0
      %v10075 = vpop.f32.mrb[0].mxu0
      %v10076 = vadd.f32 0.0, %v10075
      %v10077 = vpop.f32.mrb[0].mxu0
      %10078 = vmatprep.mubr.bf16.mxu0 0
      %10079 = vmatmul.mubr.bf16.gmra.mrb[0].mxu0 %v9983
      %v10080 = vpop.f32.mrb[0].mxu0
      %v10081 = vadd.f32 0.0, %v10080
      %v10082 = vpop.f32.mrb[0].mxu0
      %v10083 = vpop.f32.mrb[0].mxu0
      %v10084 = vadd.f32 0.0, %v10083
      %v10085 = vpop.f32.mrb[0].mxu0
      %10086 = vmatprep.mubr.bf16.mxu0 0
      %10087 = vmatmul.mubr.bf16.gmra.mrb[0].mxu0 %v9986
      %v10088 = vpop.f32.mrb[0].mxu0
      %v10089 = vadd.f32 0.0, %v10088
      %v10090 = vpop.f32.mrb[0].mxu0
      %v10091 = vpop.f32.mrb[0].mxu0
      %v10092 = vadd.f32 0.0, %v10091
      %v10093 = vpop.f32.mrb[0].mxu0
      %10094 = vmatprep.mubr.bf16.mxu0 0
      %10095 = vmatmul.mubr.bf16.gmra.mrb[0].mxu0 %v9989
      %v10096 = vpop.f32.mrb[0].mxu0
      %v10097 = vadd.f32 0.0, %v10096
      %v10098 = vpop.f32.mrb[0].mxu0
      %v10099 = vpop.f32.mrb[0].mxu0
      %v10100 = vadd.f32 0.0, %v10099
      %v10101 = vpop.f32.mrb[0].mxu0
      %10102 = vmatprep.mubr.bf16.mxu0 0
      %10103 = vmatmul.mubr.bf16.gmra.mrb[0].mxu0 %v9992
      %v10104 = vpop.f32.mrb[0].mxu0
      %v10105 = vadd.f32 0.0, %v10104
      %v10106 = vpop.f32.mrb[0].mxu0
      %v10107 = vpop.f32.mrb[0].mxu0
      %v10108 = vadd.f32 0.0, %v10107
      %v10109 = vpop.f32.mrb[0].mxu0
      %10110 = vmatprep.mubr.bf16.mxu0 0
      %10111 = vmatmul.mubr.bf16.gmra.mrb[0].mxu0 %v9995
      %v10112 = vpop.f32.mrb[0].mxu0
      %v10113 = vadd.f32 0.0, %v10112
      %v10114 = vpop.f32.mrb[0].mxu0
      %v10115 = vpop.f32.mrb[0].mxu0
      %v10116 = vadd.f32 0.0, %v10115
      %v10117 = vpop.f32.mrb[0].mxu0
      %10118 = vmatprep.mubr.bf16.mxu0 0
      %10119 = vmatmul.mubr.bf16.gmra.mrb[0].mxu0 %v9998
      %v10120 = vpop.f32.mrb[0].mxu0
      %v10121 = vadd.f32 0.0, %v10120
      %v10122 = vpop.f32.mrb[0].mxu0
      %v10123 = vpop.f32.mrb[0].mxu0
      %v10124 = vadd.f32 0.0, %v10123
      %v10125 = vpop.f32.mrb[0].mxu0
      %10126 = vmatprep.mubr.bf16.mxu0 0
      %10127 = vmatmul.mubr.bf16.gmra.mrb[0].mxu0 %v10001
      %v10128 = vpop.f32.mrb[0].mxu0
      %v10129 = vadd.f32 0.0, %v10128
      %v10130 = vpop.f32.mrb[0].mxu0
      %v10131 = vpop.f32.mrb[0].mxu0
      %v10132 = vadd.f32 0.0, %v10131
      %v10133 = vpop.f32.mrb[0].mxu0
      %10134 = vmatprep.mubr.bf16.mxu0 0
      %10135 = vmatmul.mubr.bf16.gmra.mrb[0].mxu0 %v10004
      %v10136 = vpop.f32.mrb[0].mxu0
      %v10137 = vadd.f32 0.0, %v10136
      %v10138 = vpop.f32.mrb[0].mxu0
      %v10139 = vpop.f32.mrb[0].mxu0
      %v10140 = vadd.f32 0.0, %v10139
      %v10141 = vpop.f32.mrb[0].mxu0
      %10142 = vmatprep.mubr.bf16.mxu0 0
      %10143 = vmatmul.mubr.bf16.gmra.mrb[0].mxu0 %v10007
      %v10144 = vpop.f32.mrb[0].mxu0
      %v10145 = vadd.f32 0.0, %v10144
      %v10146 = vpop.f32.mrb[0].mxu0
      %v10147 = vpop.f32.mrb[0].mxu0
      %v10148 = vadd.f32 0.0, %v10147
      %v10149 = vpop.f32.mrb[0].mxu0
      %10150 = vmatprep.mubr.bf16.mxu0 0
      %10151 = vmatmul.mubr.bf16.gmra.mrb[0].mxu0 %v10010
      %v10152 = vpop.f32.mrb[0].mxu0
      %v10153 = vadd.f32 0.0, %v10152
      %v10154 = vpop.f32.mrb[0].mxu0
      %v10155 = vpop.f32.mrb[0].mxu0
      %v10156 = vadd.f32 0.0, %v10155
      %v10157 = vpop.f32.mrb[0].mxu0
      %10158 = vmatprep.mubr.bf16.mxu0 0
      %10159 = vmatmul.mubr.bf16.gmra.mrb[0].mxu0 %v10013
      %v10160 = vpop.f32.mrb[0].mxu0
      %v10161 = vadd.f32 0.0, %v10160
      %v10162 = vpop.f32.mrb[0].mxu0
      %v10163 = vpop.f32.mrb[0].mxu0
      %v10164 = vadd.f32 0.0, %v10163
      %v10165 = vpop.f32.mrb[0].mxu0
      %10166 = vmatprep.mubr.bf16.mxu0 0
      %10167 = vmatmul.mubr.bf16.gmra.mrb[0].mxu0 %v10016
      %v10168 = vpop.f32.mrb[0].mxu0
      %v10169 = vadd.f32 0.0, %v10168
      %v10170 = vpop.f32.mrb[0].mxu0
      %v10171 = vpop.f32.mrb[0].mxu0
      %v10172 = vadd.f32 0.0, %v10171
      %v10173 = vpop.f32.mrb[0].mxu0
      %10174 = vmatprep.mubr.bf16.mxu0 0
      %10175 = vmatmul.mubr.bf16.gmra.mrb[0].mxu0 %v10019
      %v10176 = vpop.f32.mrb[0].mxu0
      %v10177 = vadd.f32 0.0, %v10176
      %v10178 = vpop.f32.mrb[0].mxu0
      %v10179 = vpop.f32.mrb[0].mxu0
      %v10180 = vadd.f32 0.0, %v10179
      %v10181 = vpop.f32.mrb[0].mxu0
      %10182 = vmatprep.mubr.bf16.mxu0 0
      %10183 = vmatmul.mubr.bf16.gmra.mrb[0].mxu0 %v10022
      %v10184 = vpop.f32.mrb[0].mxu0
      %v10185 = vadd.f32 0.0, %v10184
      %v10186 = vpop.f32.mrb[0].mxu0
      %v10187 = vpop.f32.mrb[0].mxu0
      %v10188 = vadd.f32 0.0, %v10187
      %v10189 = vpop.f32.mrb[0].mxu0
      %10190 = vmatprep.mubr.bf16.mxu0 0
      %10191 = vmatmul.mubr.bf16.gmra.mrb[0].mxu0 %v10025
      %v10192 = vpop.f32.mrb[0].mxu0
      %v10193 = vadd.f32 0.0, %v10192
      %v10194 = vpop.f32.mrb[0].mxu0
      %v10195 = vpop.f32.mrb[0].mxu0
      %v10196 = vadd.f32 0.0, %v10195
      %v10197 = vpop.f32.mrb[0].mxu0
      %10198 = vmatprep.mubr.bf16.mxu0 0
      %10199 = vmatmul.mubr.bf16.gmra.mrb[0].mxu0 %v10028
      %v10200 = vpop.f32.mrb[0].mxu0
      %v10201 = vadd.f32 0.0, %v10200
      %v10202 = vpop.f32.mrb[0].mxu0
      %v10203 = vpop.f32.mrb[0].mxu0
      %v10204 = vadd.f32 0.0, %v10203
      %v10205 = vpop.f32.mrb[0].mxu0
      %10206 = vdwg.mxu0
      %v10207 = vadd.f32 %v9837, %v10065
      %v10208 = vadd.f32 %v9838, %v10068
      %v10209 = vadd.f32 %v9839, %v10073
      %v10210 = vadd.f32 %v9840, %v10076
      %v10211 = vadd.f32 %v9841, %v10081
      %v10212 = vadd.f32 %v9842, %v10084
      %v10213 = vadd.f32 %v9843, %v10089
      %v10214 = vadd.f32 %v9844, %v10092
      %v10215 = vadd.f32 %v9845, %v10097
      %v10216 = vadd.f32 %v9846, %v10100
      %v10217 = vadd.f32 %v9847, %v10105
      %v10218 = vadd.f32 %v9848, %v10108
      %v10219 = vadd.f32 %v9849, %v10113
      %v10220 = vadd.f32 %v9850, %v10116
      %v10221 = vadd.f32 %v9851, %v10121
      %v10222 = vadd.f32 %v9852, %v10124
      %v10223 = vadd.f32 %v9853, %v10129
      %v10224 = vadd.f32 %v9854, %v10132
      %v10225 = vadd.f32 %v9855, %v10137
      %v10226 = vadd.f32 %v9856, %v10140
      %v10227 = vadd.f32 %v9857, %v10145
      %v10228 = vadd.f32 %v9858, %v10148
      %v10229 = vadd.f32 %v9859, %v10153
      %v10230 = vadd.f32 %v9860, %v10156
      %v10231 = vadd.f32 %v9861, %v10161
      %v10232 = vadd.f32 %v9862, %v10164
      %v10233 = vadd.f32 %v9863, %v10169
      %v10234 = vadd.f32 %v9864, %v10172
      %v10235 = vadd.f32 %v9865, %v10177
      %v10236 = vadd.f32 %v9866, %v10180
      %v10237 = vadd.f32 %v9867, %v10185
      %v10238 = vadd.f32 %v9868, %v10188
      %v10239 = vadd.f32 %v9869, %v10193
      %v10240 = vadd.f32 %v9870, %v10196
      %v10241 = vadd.f32 %v9871, %v10201
      %v10242 = vadd.f32 %v9872, %v10204
      %v10243 = vld [vmem:[#allocation3 + $0x10] sm:$0xf0]
      %v10244 = vld [vmem:[#allocation3 + $0x18] sm:$0xff]
      %v10245 = vld [vmem:[#allocation3 + $0x20] sm:$0xff]
      %v10246 = vld [vmem:[#allocation3 + $0x28] sm:$0xff]
      %v10247 = vld [vmem:[#allocation3 + $0x30] sm:$0xff]
      %v10248 = vld [vmem:[#allocation3 + $0x38] sm:$0xff]
      %v10249 = vld [vmem:[#allocation3 + $0x40] sm:$0xff]
      %v10250 = vld [vmem:[#allocation3 + $0x48] sm:$0xff]
      %v10251 = vld [vmem:[#allocation3 + $0x50] sm:$0xff]
      %v10252 = vld [vmem:[#allocation3 + $0x58] sm:$0xff]
      %v10253 = vld [vmem:[#allocation3 + $0x60] sm:$0xff]
      %v10254 = vld [vmem:[#allocation3 + $0x68] sm:$0xff]
      %v10255 = vld [vmem:[#allocation3 + $0x70] sm:$0xff]
      %v10256 = vld [vmem:[#allocation3 + $0x78] sm:$0xff]
      %v10257 = vld [vmem:[#allocation3 + $0x80] sm:$0xff]
      %v10258 = vld [vmem:[#allocation3 + $0x88] sm:$0xff]
      %v10259 = vld [vmem:[#allocation3 + $0x90] sm:$0xff]
      %v10260 = vld [vmem:[#allocation3 + $0x98] sm:$0xff]
      %v10261 = vld [vmem:[#allocation3 + $0xa0] sm:$0x1f]
      %s10262 = scalar_lea.vmem %s6, 96
      %v10263 = vld [vmem:[%s10262] sm:$0xf]
      %v10264 = vld [vmem:[%s10262 + $0x4] sm:$0xf]
      %v10265 = vld [vmem:[%s10262 + $0x8] sm:$0xf]
      %v10266 = vld [vmem:[%s10262 + $0xc] sm:$0xf]
      %v10268 = vshrl.u32 %v10243, 16
      %v10270 = vrot.slane %v10268, 4
      %v10271 = vshll.u32 %v10243, 16
      %v10273 = vrot.slane %v10271, 5
      %v10274 = vor.u32 %v10270, %v10273
      %v10276 = vshrl.u32 %v10244, 16
      %v10278 = vrot.slane %v10276, 4
      %v10279 = vshll.u32 %v10244, 16
      %v10281 = vrot.slane %v10279, 5
      %v10282 = vor.u32 %v10278, %v10281
      %v10283 = vsel %vm6152, %v10274, %v10282
      %v10285 = vshrl.u32 %v10245, 16
      %v10287 = vrot.slane %v10285, 4
      %v10288 = vshll.u32 %v10245, 16
      %v10290 = vrot.slane %v10288, 5
      %v10291 = vor.u32 %v10287, %v10290
      %v10292 = vsel %vm6152, %v10282, %v10291
      %v10294 = vshrl.u32 %v10246, 16
      %v10296 = vrot.slane %v10294, 4
      %v10297 = vshll.u32 %v10246, 16
      %v10299 = vrot.slane %v10297, 5
      %v10300 = vor.u32 %v10296, %v10299
      %v10301 = vsel %vm6152, %v10291, %v10300
      %v10303 = vshrl.u32 %v10247, 16
      %v10305 = vrot.slane %v10303, 4
      %v10306 = vshll.u32 %v10247, 16
      %v10308 = vrot.slane %v10306, 5
      %v10309 = vor.u32 %v10305, %v10308
      %v10310 = vsel %vm6152, %v10300, %v10309
      %v10312 = vshrl.u32 %v10248, 16
      %v10314 = vrot.slane %v10312, 4
      %v10315 = vshll.u32 %v10248, 16
      %v10317 = vrot.slane %v10315, 5
      %v10318 = vor.u32 %v10314, %v10317
      %v10319 = vsel %vm6152, %v10309, %v10318
      %v10321 = vshrl.u32 %v10249, 16
      %v10323 = vrot.slane %v10321, 4
      %v10324 = vshll.u32 %v10249, 16
      %v10326 = vrot.slane %v10324, 5
      %v10327 = vor.u32 %v10323, %v10326
      %v10328 = vsel %vm6152, %v10318, %v10327
      %v10330 = vshrl.u32 %v10250, 16
      %v10332 = vrot.slane %v10330, 4
      %v10333 = vshll.u32 %v10250, 16
      %v10335 = vrot.slane %v10333, 5
      %v10336 = vor.u32 %v10332, %v10335
      %v10337 = vsel %vm6152, %v10327, %v10336
      %v10339 = vshrl.u32 %v10251, 16
      %v10341 = vrot.slane %v10339, 4
      %v10342 = vshll.u32 %v10251, 16
      %v10344 = vrot.slane %v10342, 5
      %v10345 = vor.u32 %v10341, %v10344
      %v10346 = vsel %vm6152, %v10336, %v10345
      %v10348 = vshrl.u32 %v10252, 16
      %v10350 = vrot.slane %v10348, 4
      %v10351 = vshll.u32 %v10252, 16
      %v10353 = vrot.slane %v10351, 5
      %v10354 = vor.u32 %v10350, %v10353
      %v10355 = vsel %vm6152, %v10345, %v10354
      %v10357 = vshrl.u32 %v10253, 16
      %v10359 = vrot.slane %v10357, 4
      %v10360 = vshll.u32 %v10253, 16
      %v10362 = vrot.slane %v10360, 5
      %v10363 = vor.u32 %v10359, %v10362
      %v10364 = vsel %vm6152, %v10354, %v10363
      %v10366 = vshrl.u32 %v10254, 16
      %v10368 = vrot.slane %v10366, 4
      %v10369 = vshll.u32 %v10254, 16
      %v10371 = vrot.slane %v10369, 5
      %v10372 = vor.u32 %v10368, %v10371
      %v10373 = vsel %vm6152, %v10363, %v10372
      %v10375 = vshrl.u32 %v10255, 16
      %v10377 = vrot.slane %v10375, 4
      %v10378 = vshll.u32 %v10255, 16
      %v10380 = vrot.slane %v10378, 5
      %v10381 = vor.u32 %v10377, %v10380
      %v10382 = vsel %vm6152, %v10372, %v10381
      %v10384 = vshrl.u32 %v10256, 16
      %v10386 = vrot.slane %v10384, 4
      %v10387 = vshll.u32 %v10256, 16
      %v10389 = vrot.slane %v10387, 5
      %v10390 = vor.u32 %v10386, %v10389
      %v10391 = vsel %vm6152, %v10381, %v10390
      %v10393 = vshrl.u32 %v10257, 16
      %v10395 = vrot.slane %v10393, 4
      %v10396 = vshll.u32 %v10257, 16
      %v10398 = vrot.slane %v10396, 5
      %v10399 = vor.u32 %v10395, %v10398
      %v10400 = vsel %vm6152, %v10390, %v10399
      %v10402 = vshrl.u32 %v10258, 16
      %v10404 = vrot.slane %v10402, 4
      %v10405 = vshll.u32 %v10258, 16
      %v10407 = vrot.slane %v10405, 5
      %v10408 = vor.u32 %v10404, %v10407
      %v10409 = vsel %vm6152, %v10399, %v10408
      %v10411 = vshrl.u32 %v10259, 16
      %v10413 = vrot.slane %v10411, 4
      %v10414 = vshll.u32 %v10259, 16
      %v10416 = vrot.slane %v10414, 5
      %v10417 = vor.u32 %v10413, %v10416
      %v10418 = vsel %vm6152, %v10408, %v10417
      %v10420 = vshrl.u32 %v10260, 16
      %v10422 = vrot.slane %v10420, 4
      %v10423 = vshll.u32 %v10260, 16
      %v10425 = vrot.slane %v10423, 5
      %v10426 = vor.u32 %v10422, %v10425
      %v10427 = vsel %vm6152, %v10417, %v10426
      %v10429 = vshrl.u32 %v10261, 16
      %v10431 = vrot.slane %v10429, 4
      %v10432 = vshll.u32 %v10261, 16
      %v10434 = vrot.slane %v10432, 5
      %v10435 = vor.u32 %v10431, %v10434
      %v10436 = vsel %vm6152, %v10426, %v10435
      %v10441 = vunpack.c.l.b16 %v10263
      %v10442 = vunpack.c.l.b16 %v10264
      %v10443 = vunpack.c.l.b16 %v10265
      %v10444 = vunpack.c.l.b16 %v10266
      %v10445 = vpack.c.b16 %v10442, %v10441
      %v10446 = vpack.c.b16 %v10444, %v10443
      %v10450 = vsel %vm3870, %v10283, 0
      %v10453 = vsel %vm3870, %v10292, 0
      %v10456 = vsel %vm3870, %v10301, 0
      %v10459 = vsel %vm3870, %v10310, 0
      %v10462 = vsel %vm3870, %v10319, 0
      %v10465 = vsel %vm3870, %v10328, 0
      %v10468 = vsel %vm3870, %v10337, 0
      %v10471 = vsel %vm3870, %v10346, 0
      %v10474 = vsel %vm3870, %v10355, 0
      %v10477 = vsel %vm3870, %v10364, 0
      %v10480 = vsel %vm3870, %v10373, 0
      %v10483 = vsel %vm3870, %v10382, 0
      %v10486 = vsel %vm3870, %v10391, 0
      %v10489 = vsel %vm3870, %v10400, 0
      %v10492 = vsel %vm3870, %v10409, 0
      %v10495 = vsel %vm3870, %v10418, 0
      %v10498 = vsel %vm3870, %v10427, 0
      %v10501 = vsel %vm3870, %v10436, 0
      %10503 = vmatprep.subr.bf16.mxu0 0
      %10504 = vmatpush1.bf16.msra.mxu0 %v10445
      %10505 = vmatprep.subr.bf16.mxu0 0
      %10506 = vmatpush1.bf16.msra.mxu0 %v10446
      %10507 = vmatprep.subr.bf16.mxu0 0
      %10508 = vmatpush1.bf16.msra.mxu0 0
      %10509 = vmatprep.subr.bf16.mxu0 0
      %10510 = vmatpush1.bf16.msra.mxu0 0
      %10511 = vmatprep.subr.bf16.mxu0 0
      %10512 = vmatpush1.bf16.msra.mxu0 0
      %10513 = vmatprep.subr.bf16.mxu0 0
      %10514 = vmatpush1.bf16.msra.mxu0 0
      %10515 = vmatprep.subr.bf16.mxu0 0
      %10516 = vmatpush1.bf16.msra.mxu0 0
      %10517 = vmatprep.subr.bf16.mxu0 0
      %10518 = vmatpush1.bf16.msra.mxu0 0
      %10519 = vmatprep.subr.bf16.mxu0 0
      %10520 = vmatpush1.bf16.msra.mxu0 0
      %10521 = vmatprep.subr.bf16.mxu0 0
      %10522 = vmatpush1.bf16.msra.mxu0 0
      %10523 = vmatprep.subr.bf16.mxu0 0
      %10524 = vmatpush1.bf16.msra.mxu0 0
      %10525 = vmatprep.subr.bf16.mxu0 0
      %10526 = vmatpush1.bf16.msra.mxu0 0
      %10527 = vmatprep.subr.bf16.mxu0 0
      %10528 = vmatpush1.bf16.msra.mxu0 0
      %10529 = vmatprep.subr.bf16.mxu0 0
      %10530 = vmatpush1.bf16.msra.mxu0 0
      %10531 = vmatprep.subr.bf16.mxu0 0
      %10532 = vmatpush1.bf16.msra.mxu0 0
      %10533 = vmatprep.subr.bf16.mxu0 0
      %10534 = vmatpush1.bf16.msra.mxu0 0
      %10535 = vmatprep.mubr.bf16.mxu0 0
      %10536 = vmatmul.mubr.bf16.gmra.mrb[0].mxu0 %v10450
      %v10537 = vpop.f32.mrb[0].mxu0
      %v10538 = vadd.f32 0.0, %v10537
      %v10539 = vpop.f32.mrb[0].mxu0
      %v10540 = vpop.f32.mrb[0].mxu0
      %v10541 = vadd.f32 0.0, %v10540
      %v10542 = vpop.f32.mrb[0].mxu0
      %10543 = vmatprep.mubr.bf16.mxu0 0
      %10544 = vmatmul.mubr.bf16.gmra.mrb[0].mxu0 %v10453
      %v10545 = vpop.f32.mrb[0].mxu0
      %v10546 = vadd.f32 0.0, %v10545
      %v10547 = vpop.f32.mrb[0].mxu0
      %v10548 = vpop.f32.mrb[0].mxu0
      %v10549 = vadd.f32 0.0, %v10548
      %v10550 = vpop.f32.mrb[0].mxu0
      %10551 = vmatprep.mubr.bf16.mxu0 0
      %10552 = vmatmul.mubr.bf16.gmra.mrb[0].mxu0 %v10456
      %v10553 = vpop.f32.mrb[0].mxu0
      %v10554 = vadd.f32 0.0, %v10553
      %v10555 = vpop.f32.mrb[0].mxu0
      %v10556 = vpop.f32.mrb[0].mxu0
      %v10557 = vadd.f32 0.0, %v10556
      %v10558 = vpop.f32.mrb[0].mxu0
      %10559 = vmatprep.mubr.bf16.mxu0 0
      %10560 = vmatmul.mubr.bf16.gmra.mrb[0].mxu0 %v10459
      %v10561 = vpop.f32.mrb[0].mxu0
      %v10562 = vadd.f32 0.0, %v10561
      %v10563 = vpop.f32.mrb[0].mxu0
      %v10564 = vpop.f32.mrb[0].mxu0
      %v10565 = vadd.f32 0.0, %v10564
      %v10566 = vpop.f32.mrb[0].mxu0
      %10567 = vmatprep.mubr.bf16.mxu0 0
      %10568 = vmatmul.mubr.bf16.gmra.mrb[0].mxu0 %v10462
      %v10569 = vpop.f32.mrb[0].mxu0
      %v10570 = vadd.f32 0.0, %v10569
      %v10571 = vpop.f32.mrb[0].mxu0
      %v10572 = vpop.f32.mrb[0].mxu0
      %v10573 = vadd.f32 0.0, %v10572
      %v10574 = vpop.f32.mrb[0].mxu0
      %10575 = vmatprep.mubr.bf16.mxu0 0
      %10576 = vmatmul.mubr.bf16.gmra.mrb[0].mxu0 %v10465
      %v10577 = vpop.f32.mrb[0].mxu0
      %v10578 = vadd.f32 0.0, %v10577
      %v10579 = vpop.f32.mrb[0].mxu0
      %v10580 = vpop.f32.mrb[0].mxu0
      %v10581 = vadd.f32 0.0, %v10580
      %v10582 = vpop.f32.mrb[0].mxu0
      %10583 = vmatprep.mubr.bf16.mxu0 0
      %10584 = vmatmul.mubr.bf16.gmra.mrb[0].mxu0 %v10468
      %v10585 = vpop.f32.mrb[0].mxu0
      %v10586 = vadd.f32 0.0, %v10585
      %v10587 = vpop.f32.mrb[0].mxu0
      %v10588 = vpop.f32.mrb[0].mxu0
      %v10589 = vadd.f32 0.0, %v10588
      %v10590 = vpop.f32.mrb[0].mxu0
      %10591 = vmatprep.mubr.bf16.mxu0 0
      %10592 = vmatmul.mubr.bf16.gmra.mrb[0].mxu0 %v10471
      %v10593 = vpop.f32.mrb[0].mxu0
      %v10594 = vadd.f32 0.0, %v10593
      %v10595 = vpop.f32.mrb[0].mxu0
      %v10596 = vpop.f32.mrb[0].mxu0
      %v10597 = vadd.f32 0.0, %v10596
      %v10598 = vpop.f32.mrb[0].mxu0
      %10599 = vmatprep.mubr.bf16.mxu0 0
      %10600 = vmatmul.mubr.bf16.gmra.mrb[0].mxu0 %v10474
      %v10601 = vpop.f32.mrb[0].mxu0
      %v10602 = vadd.f32 0.0, %v10601
      %v10603 = vpop.f32.mrb[0].mxu0
      %v10604 = vpop.f32.mrb[0].mxu0
      %v10605 = vadd.f32 0.0, %v10604
      %v10606 = vpop.f32.mrb[0].mxu0
      %10607 = vmatprep.mubr.bf16.mxu0 0
      %10608 = vmatmul.mubr.bf16.gmra.mrb[0].mxu0 %v10477
      %v10609 = vpop.f32.mrb[0].mxu0
      %v10610 = vadd.f32 0.0, %v10609
      %v10611 = vpop.f32.mrb[0].mxu0
      %v10612 = vpop.f32.mrb[0].mxu0
      %v10613 = vadd.f32 0.0, %v10612
      %v10614 = vpop.f32.mrb[0].mxu0
      %10615 = vmatprep.mubr.bf16.mxu0 0
      %10616 = vmatmul.mubr.bf16.gmra.mrb[0].mxu0 %v10480
      %v10617 = vpop.f32.mrb[0].mxu0
      %v10618 = vadd.f32 0.0, %v10617
      %v10619 = vpop.f32.mrb[0].mxu0
      %v10620 = vpop.f32.mrb[0].mxu0
      %v10621 = vadd.f32 0.0, %v10620
      %v10622 = vpop.f32.mrb[0].mxu0
      %10623 = vmatprep.mubr.bf16.mxu0 0
      %10624 = vmatmul.mubr.bf16.gmra.mrb[0].mxu0 %v10483
      %v10625 = vpop.f32.mrb[0].mxu0
      %v10626 = vadd.f32 0.0, %v10625
      %v10627 = vpop.f32.mrb[0].mxu0
      %v10628 = vpop.f32.mrb[0].mxu0
      %v10629 = vadd.f32 0.0, %v10628
      %v10630 = vpop.f32.mrb[0].mxu0
      %10631 = vmatprep.mubr.bf16.mxu0 0
      %10632 = vmatmul.mubr.bf16.gmra.mrb[0].mxu0 %v10486
      %v10633 = vpop.f32.mrb[0].mxu0
      %v10634 = vadd.f32 0.0, %v10633
      %v10635 = vpop.f32.mrb[0].mxu0
      %v10636 = vpop.f32.mrb[0].mxu0
      %v10637 = vadd.f32 0.0, %v10636
      %v10638 = vpop.f32.mrb[0].mxu0
      %10639 = vmatprep.mubr.bf16.mxu0 0
      %10640 = vmatmul.mubr.bf16.gmra.mrb[0].mxu0 %v10489
      %v10641 = vpop.f32.mrb[0].mxu0
      %v10642 = vadd.f32 0.0, %v10641
      %v10643 = vpop.f32.mrb[0].mxu0
      %v10644 = vpop.f32.mrb[0].mxu0
      %v10645 = vadd.f32 0.0, %v10644
      %v10646 = vpop.f32.mrb[0].mxu0
      %10647 = vmatprep.mubr.bf16.mxu0 0
      %10648 = vmatmul.mubr.bf16.gmra.mrb[0].mxu0 %v10492
      %v10649 = vpop.f32.mrb[0].mxu0
      %v10650 = vadd.f32 0.0, %v10649
      %v10651 = vpop.f32.mrb[0].mxu0
      %v10652 = vpop.f32.mrb[0].mxu0
      %v10653 = vadd.f32 0.0, %v10652
      %v10654 = vpop.f32.mrb[0].mxu0
      %10655 = vmatprep.mubr.bf16.mxu0 0
      %10656 = vmatmul.mubr.bf16.gmra.mrb[0].mxu0 %v10495
      %v10657 = vpop.f32.mrb[0].mxu0
      %v10658 = vadd.f32 0.0, %v10657
      %v10659 = vpop.f32.mrb[0].mxu0
      %v10660 = vpop.f32.mrb[0].mxu0
      %v10661 = vadd.f32 0.0, %v10660
      %v10662 = vpop.f32.mrb[0].mxu0
      %10663 = vmatprep.mubr.bf16.mxu0 0
      %10664 = vmatmul.mubr.bf16.gmra.mrb[0].mxu0 %v10498
      %v10665 = vpop.f32.mrb[0].mxu0
      %v10666 = vadd.f32 0.0, %v10665
      %v10667 = vpop.f32.mrb[0].mxu0
      %v10668 = vpop.f32.mrb[0].mxu0
      %v10669 = vadd.f32 0.0, %v10668
      %v10670 = vpop.f32.mrb[0].mxu0
      %10671 = vmatprep.mubr.bf16.mxu0 0
      %10672 = vmatmul.mubr.bf16.gmra.mrb[0].mxu0 %v10501
      %v10673 = vpop.f32.mrb[0].mxu0
      %v10674 = vadd.f32 0.0, %v10673
      %v10675 = vpop.f32.mrb[0].mxu0
      %v10676 = vpop.f32.mrb[0].mxu0
      %v10677 = vadd.f32 0.0, %v10676
      %v10678 = vpop.f32.mrb[0].mxu0
      %10679 = vdwg.mxu0
      %v10680 = vadd.f32 %v10207, %v10538
      %v10681 = vadd.f32 %v10208, %v10541
      %v10682 = vadd.f32 %v10209, %v10546
      %v10683 = vadd.f32 %v10210, %v10549
      %v10684 = vadd.f32 %v10211, %v10554
      %v10685 = vadd.f32 %v10212, %v10557
      %v10686 = vadd.f32 %v10213, %v10562
      %v10687 = vadd.f32 %v10214, %v10565
      %v10688 = vadd.f32 %v10215, %v10570
      %v10689 = vadd.f32 %v10216, %v10573
      %v10690 = vadd.f32 %v10217, %v10578
      %v10691 = vadd.f32 %v10218, %v10581
      %v10692 = vadd.f32 %v10219, %v10586
      %v10693 = vadd.f32 %v10220, %v10589
      %v10694 = vadd.f32 %v10221, %v10594
      %v10695 = vadd.f32 %v10222, %v10597
      %v10696 = vadd.f32 %v10223, %v10602
      %v10697 = vadd.f32 %v10224, %v10605
      %v10698 = vadd.f32 %v10225, %v10610
      %v10699 = vadd.f32 %v10226, %v10613
      %v10700 = vadd.f32 %v10227, %v10618
      %v10701 = vadd.f32 %v10228, %v10621
      %v10702 = vadd.f32 %v10229, %v10626
      %v10703 = vadd.f32 %v10230, %v10629
      %v10704 = vadd.f32 %v10231, %v10634
      %v10705 = vadd.f32 %v10232, %v10637
      %v10706 = vadd.f32 %v10233, %v10642
      %v10707 = vadd.f32 %v10234, %v10645
      %v10708 = vadd.f32 %v10235, %v10650
      %v10709 = vadd.f32 %v10236, %v10653
      %v10710 = vadd.f32 %v10237, %v10658
      %v10711 = vadd.f32 %v10238, %v10661
      %v10712 = vadd.f32 %v10239, %v10666
      %v10713 = vadd.f32 %v10240, %v10669
      %v10714 = vadd.f32 %v10241, %v10674
      %v10715 = vadd.f32 %v10242, %v10677
      %v10716 = vld [vmem:[#allocation3 + $0x10] sm:$0xe0]
      %s10717 = scalar_lea.vmem %s6, 112
      %v10718 = vld [vmem:[%s10717] sm:$0xf]
      %v10719 = vld [vmem:[%s10717 + $0x4] sm:$0xf]
      %v10720 = vld [vmem:[%s10717 + $0x8] sm:$0xf]
      %v10721 = vld [vmem:[%s10717 + $0xc] sm:$0xf]
      %v10741 = vrot.slane %v10716, 5
      %v10742 = vrot.slane %v10244, 5
      %v10743 = vsel %vm7015, %v10741, %v10742
      %v10744 = vrot.slane %v10245, 5
      %v10745 = vsel %vm7015, %v10742, %v10744
      %v10746 = vrot.slane %v10246, 5
      %v10747 = vsel %vm7015, %v10744, %v10746
      %v10748 = vrot.slane %v10247, 5
      %v10749 = vsel %vm7015, %v10746, %v10748
      %v10750 = vrot.slane %v10248, 5
      %v10751 = vsel %vm7015, %v10748, %v10750
      %v10752 = vrot.slane %v10249, 5
      %v10753 = vsel %vm7015, %v10750, %v10752
      %v10754 = vrot.slane %v10250, 5
      %v10755 = vsel %vm7015, %v10752, %v10754
      %v10756 = vrot.slane %v10251, 5
      %v10757 = vsel %vm7015, %v10754, %v10756
      %v10758 = vrot.slane %v10252, 5
      %v10759 = vsel %vm7015, %v10756, %v10758
      %v10760 = vrot.slane %v10253, 5
      %v10761 = vsel %vm7015, %v10758, %v10760
      %v10762 = vrot.slane %v10254, 5
      %v10763 = vsel %vm7015, %v10760, %v10762
      %v10764 = vrot.slane %v10255, 5
      %v10765 = vsel %vm7015, %v10762, %v10764
      %v10766 = vrot.slane %v10256, 5
      %v10767 = vsel %vm7015, %v10764, %v10766
      %v10768 = vrot.slane %v10257, 5
      %v10769 = vsel %vm7015, %v10766, %v10768
      %v10770 = vrot.slane %v10258, 5
      %v10771 = vsel %vm7015, %v10768, %v10770
      %v10772 = vrot.slane %v10259, 5
      %v10773 = vsel %vm7015, %v10770, %v10772
      %v10774 = vrot.slane %v10260, 5
      %v10775 = vsel %vm7015, %v10772, %v10774
      %v10776 = vrot.slane %v10261, 5
      %v10777 = vsel %vm7015, %v10774, %v10776
      %v10782 = vunpack.c.l.b16 %v10718
      %v10783 = vunpack.c.l.b16 %v10719
      %v10784 = vunpack.c.l.b16 %v10720
      %v10785 = vunpack.c.l.b16 %v10721
      %v10786 = vpack.c.b16 %v10783, %v10782
      %v10787 = vpack.c.b16 %v10785, %v10784
      %v10791 = vsel %vm3870, %v10743, 0
      %v10794 = vsel %vm3870, %v10745, 0
      %v10797 = vsel %vm3870, %v10747, 0
      %v10800 = vsel %vm3870, %v10749, 0
      %v10803 = vsel %vm3870, %v10751, 0
      %v10806 = vsel %vm3870, %v10753, 0
      %v10809 = vsel %vm3870, %v10755, 0
      %v10812 = vsel %vm3870, %v10757, 0
      %v10815 = vsel %vm3870, %v10759, 0
      %v10818 = vsel %vm3870, %v10761, 0
      %v10821 = vsel %vm3870, %v10763, 0
      %v10824 = vsel %vm3870, %v10765, 0
      %v10827 = vsel %vm3870, %v10767, 0
      %v10830 = vsel %vm3870, %v10769, 0
      %v10833 = vsel %vm3870, %v10771, 0
      %v10836 = vsel %vm3870, %v10773, 0
      %v10839 = vsel %vm3870, %v10775, 0
      %v10842 = vsel %vm3870, %v10777, 0
      %10844 = vmatprep.subr.bf16.mxu0 0
      %10845 = vmatpush1.bf16.msra.mxu0 %v10786
      %10846 = vmatprep.subr.bf16.mxu0 0
      %10847 = vmatpush1.bf16.msra.mxu0 %v10787
      %10848 = vmatprep.subr.bf16.mxu0 0
      %10849 = vmatpush1.bf16.msra.mxu0 0
      %10850 = vmatprep.subr.bf16.mxu0 0
      %10851 = vmatpush1.bf16.msra.mxu0 0
      %10852 = vmatprep.subr.bf16.mxu0 0
      %10853 = vmatpush1.bf16.msra.mxu0 0
      %10854 = vmatprep.subr.bf16.mxu0 0
      %10855 = vmatpush1.bf16.msra.mxu0 0
      %10856 = vmatprep.subr.bf16.mxu0 0
      %10857 = vmatpush1.bf16.msra.mxu0 0
      %10858 = vmatprep.subr.bf16.mxu0 0
      %10859 = vmatpush1.bf16.msra.mxu0 0
      %10860 = vmatprep.subr.bf16.mxu0 0
      %10861 = vmatpush1.bf16.msra.mxu0 0
      %10862 = vmatprep.subr.bf16.mxu0 0
      %10863 = vmatpush1.bf16.msra.mxu0 0
      %10864 = vmatprep.subr.bf16.mxu0 0
      %10865 = vmatpush1.bf16.msra.mxu0 0
      %10866 = vmatprep.subr.bf16.mxu0 0
      %10867 = vmatpush1.bf16.msra.mxu0 0
      %10868 = vmatprep.subr.bf16.mxu0 0
      %10869 = vmatpush1.bf16.msra.mxu0 0
      %10870 = vmatprep.subr.bf16.mxu0 0
      %10871 = vmatpush1.bf16.msra.mxu0 0
      %10872 = vmatprep.subr.bf16.mxu0 0
      %10873 = vmatpush1.bf16.msra.mxu0 0
      %10874 = vmatprep.subr.bf16.mxu0 0
      %10875 = vmatpush1.bf16.msra.mxu0 0
      %10876 = vmatprep.mubr.bf16.mxu0 0
      %10877 = vmatmul.mubr.bf16.gmra.mrb[0].mxu0 %v10791
      %v10878 = vpop.f32.mrb[0].mxu0
      %v10879 = vadd.f32 0.0, %v10878
      %v10880 = vpop.f32.mrb[0].mxu0
      %v10881 = vpop.f32.mrb[0].mxu0
      %v10882 = vadd.f32 0.0, %v10881
      %v10883 = vpop.f32.mrb[0].mxu0
      %10884 = vmatprep.mubr.bf16.mxu0 0
      %10885 = vmatmul.mubr.bf16.gmra.mrb[0].mxu0 %v10794
      %v10886 = vpop.f32.mrb[0].mxu0
      %v10887 = vadd.f32 0.0, %v10886
      %v10888 = vpop.f32.mrb[0].mxu0
      %v10889 = vpop.f32.mrb[0].mxu0
      %v10890 = vadd.f32 0.0, %v10889
      %v10891 = vpop.f32.mrb[0].mxu0
      %10892 = vmatprep.mubr.bf16.mxu0 0
      %10893 = vmatmul.mubr.bf16.gmra.mrb[0].mxu0 %v10797
      %v10894 = vpop.f32.mrb[0].mxu0
      %v10895 = vadd.f32 0.0, %v10894
      %v10896 = vpop.f32.mrb[0].mxu0
      %v10897 = vpop.f32.mrb[0].mxu0
      %v10898 = vadd.f32 0.0, %v10897
      %v10899 = vpop.f32.mrb[0].mxu0
      %10900 = vmatprep.mubr.bf16.mxu0 0
      %10901 = vmatmul.mubr.bf16.gmra.mrb[0].mxu0 %v10800
      %v10902 = vpop.f32.mrb[0].mxu0
      %v10903 = vadd.f32 0.0, %v10902
      %v10904 = vpop.f32.mrb[0].mxu0
      %v10905 = vpop.f32.mrb[0].mxu0
      %v10906 = vadd.f32 0.0, %v10905
      %v10907 = vpop.f32.mrb[0].mxu0
      %10908 = vmatprep.mubr.bf16.mxu0 0
      %10909 = vmatmul.mubr.bf16.gmra.mrb[0].mxu0 %v10803
      %v10910 = vpop.f32.mrb[0].mxu0
      %v10911 = vadd.f32 0.0, %v10910
      %v10912 = vpop.f32.mrb[0].mxu0
      %v10913 = vpop.f32.mrb[0].mxu0
      %v10914 = vadd.f32 0.0, %v10913
      %v10915 = vpop.f32.mrb[0].mxu0
      %10916 = vmatprep.mubr.bf16.mxu0 0
      %10917 = vmatmul.mubr.bf16.gmra.mrb[0].mxu0 %v10806
      %v10918 = vpop.f32.mrb[0].mxu0
      %v10919 = vadd.f32 0.0, %v10918
      %v10920 = vpop.f32.mrb[0].mxu0
      %v10921 = vpop.f32.mrb[0].mxu0
      %v10922 = vadd.f32 0.0, %v10921
      %v10923 = vpop.f32.mrb[0].mxu0
      %10924 = vmatprep.mubr.bf16.mxu0 0
      %10925 = vmatmul.mubr.bf16.gmra.mrb[0].mxu0 %v10809
      %v10926 = vpop.f32.mrb[0].mxu0
      %v10927 = vadd.f32 0.0, %v10926
      %v10928 = vpop.f32.mrb[0].mxu0
      %v10929 = vpop.f32.mrb[0].mxu0
      %v10930 = vadd.f32 0.0, %v10929
      %v10931 = vpop.f32.mrb[0].mxu0
      %10932 = vmatprep.mubr.bf16.mxu0 0
      %10933 = vmatmul.mubr.bf16.gmra.mrb[0].mxu0 %v10812
      %v10934 = vpop.f32.mrb[0].mxu0
      %v10935 = vadd.f32 0.0, %v10934
      %v10936 = vpop.f32.mrb[0].mxu0
      %v10937 = vpop.f32.mrb[0].mxu0
      %v10938 = vadd.f32 0.0, %v10937
      %v10939 = vpop.f32.mrb[0].mxu0
      %10940 = vmatprep.mubr.bf16.mxu0 0
      %10941 = vmatmul.mubr.bf16.gmra.mrb[0].mxu0 %v10815
      %v10942 = vpop.f32.mrb[0].mxu0
      %v10943 = vadd.f32 0.0, %v10942
      %v10944 = vpop.f32.mrb[0].mxu0
      %v10945 = vpop.f32.mrb[0].mxu0
      %v10946 = vadd.f32 0.0, %v10945
      %v10947 = vpop.f32.mrb[0].mxu0
      %10948 = vmatprep.mubr.bf16.mxu0 0
      %10949 = vmatmul.mubr.bf16.gmra.mrb[0].mxu0 %v10818
      %v10950 = vpop.f32.mrb[0].mxu0
      %v10951 = vadd.f32 0.0, %v10950
      %v10952 = vpop.f32.mrb[0].mxu0
      %v10953 = vpop.f32.mrb[0].mxu0
      %v10954 = vadd.f32 0.0, %v10953
      %v10955 = vpop.f32.mrb[0].mxu0
      %10956 = vmatprep.mubr.bf16.mxu0 0
      %10957 = vmatmul.mubr.bf16.gmra.mrb[0].mxu0 %v10821
      %v10958 = vpop.f32.mrb[0].mxu0
      %v10959 = vadd.f32 0.0, %v10958
      %v10960 = vpop.f32.mrb[0].mxu0
      %v10961 = vpop.f32.mrb[0].mxu0
      %v10962 = vadd.f32 0.0, %v10961
      %v10963 = vpop.f32.mrb[0].mxu0
      %10964 = vmatprep.mubr.bf16.mxu0 0
      %10965 = vmatmul.mubr.bf16.gmra.mrb[0].mxu0 %v10824
      %v10966 = vpop.f32.mrb[0].mxu0
      %v10967 = vadd.f32 0.0, %v10966
      %v10968 = vpop.f32.mrb[0].mxu0
      %v10969 = vpop.f32.mrb[0].mxu0
      %v10970 = vadd.f32 0.0, %v10969
      %v10971 = vpop.f32.mrb[0].mxu0
      %10972 = vmatprep.mubr.bf16.mxu0 0
      %10973 = vmatmul.mubr.bf16.gmra.mrb[0].mxu0 %v10827
      %v10974 = vpop.f32.mrb[0].mxu0
      %v10975 = vadd.f32 0.0, %v10974
      %v10976 = vpop.f32.mrb[0].mxu0
      %v10977 = vpop.f32.mrb[0].mxu0
      %v10978 = vadd.f32 0.0, %v10977
      %v10979 = vpop.f32.mrb[0].mxu0
      %10980 = vmatprep.mubr.bf16.mxu0 0
      %10981 = vmatmul.mubr.bf16.gmra.mrb[0].mxu0 %v10830
      %v10982 = vpop.f32.mrb[0].mxu0
      %v10983 = vadd.f32 0.0, %v10982
      %v10984 = vpop.f32.mrb[0].mxu0
      %v10985 = vpop.f32.mrb[0].mxu0
      %v10986 = vadd.f32 0.0, %v10985
      %v10987 = vpop.f32.mrb[0].mxu0
      %10988 = vmatprep.mubr.bf16.mxu0 0
      %10989 = vmatmul.mubr.bf16.gmra.mrb[0].mxu0 %v10833
      %v10990 = vpop.f32.mrb[0].mxu0
      %v10991 = vadd.f32 0.0, %v10990
      %v10992 = vpop.f32.mrb[0].mxu0
      %v10993 = vpop.f32.mrb[0].mxu0
      %v10994 = vadd.f32 0.0, %v10993
      %v10995 = vpop.f32.mrb[0].mxu0
      %10996 = vmatprep.mubr.bf16.mxu0 0
      %10997 = vmatmul.mubr.bf16.gmra.mrb[0].mxu0 %v10836
      %v10998 = vpop.f32.mrb[0].mxu0
      %v10999 = vadd.f32 0.0, %v10998
      %v11000 = vpop.f32.mrb[0].mxu0
      %v11001 = vpop.f32.mrb[0].mxu0
      %v11002 = vadd.f32 0.0, %v11001
      %v11003 = vpop.f32.mrb[0].mxu0
      %11004 = vmatprep.mubr.bf16.mxu0 0
      %11005 = vmatmul.mubr.bf16.gmra.mrb[0].mxu0 %v10839
      %v11006 = vpop.f32.mrb[0].mxu0
      %v11007 = vadd.f32 0.0, %v11006
      %v11008 = vpop.f32.mrb[0].mxu0
      %v11009 = vpop.f32.mrb[0].mxu0
      %v11010 = vadd.f32 0.0, %v11009
      %v11011 = vpop.f32.mrb[0].mxu0
      %11012 = vmatprep.mubr.bf16.mxu0 0
      %11013 = vmatmul.mubr.bf16.gmra.mrb[0].mxu0 %v10842
      %v11014 = vpop.f32.mrb[0].mxu0
      %v11015 = vadd.f32 0.0, %v11014
      %v11016 = vpop.f32.mrb[0].mxu0
      %v11017 = vpop.f32.mrb[0].mxu0
      %v11018 = vadd.f32 0.0, %v11017
      %v11019 = vpop.f32.mrb[0].mxu0
      %11020 = vdwg.mxu0
      %v11021 = vadd.f32 %v10680, %v10879
      %v11022 = vadd.f32 %v10681, %v10882
      %v11023 = vadd.f32 %v10682, %v10887
      %v11024 = vadd.f32 %v10683, %v10890
      %v11025 = vadd.f32 %v10684, %v10895
      %v11026 = vadd.f32 %v10685, %v10898
      %v11027 = vadd.f32 %v10686, %v10903
      %v11028 = vadd.f32 %v10687, %v10906
      %v11029 = vadd.f32 %v10688, %v10911
      %v11030 = vadd.f32 %v10689, %v10914
      %v11031 = vadd.f32 %v10690, %v10919
      %v11032 = vadd.f32 %v10691, %v10922
      %v11033 = vadd.f32 %v10692, %v10927
      %v11034 = vadd.f32 %v10693, %v10930
      %v11035 = vadd.f32 %v10694, %v10935
      %v11036 = vadd.f32 %v10695, %v10938
      %v11037 = vadd.f32 %v10696, %v10943
      %v11038 = vadd.f32 %v10697, %v10946
      %v11039 = vadd.f32 %v10698, %v10951
      %v11040 = vadd.f32 %v10699, %v10954
      %v11041 = vadd.f32 %v10700, %v10959
      %v11042 = vadd.f32 %v10701, %v10962
      %v11043 = vadd.f32 %v10702, %v10967
      %v11044 = vadd.f32 %v10703, %v10970
      %v11045 = vadd.f32 %v10704, %v10975
      %v11046 = vadd.f32 %v10705, %v10978
      %v11047 = vadd.f32 %v10706, %v10983
      %v11048 = vadd.f32 %v10707, %v10986
      %v11049 = vadd.f32 %v10708, %v10991
      %v11050 = vadd.f32 %v10709, %v10994
      %v11051 = vadd.f32 %v10710, %v10999
      %v11052 = vadd.f32 %v10711, %v11002
      %v11053 = vadd.f32 %v10712, %v11007
      %v11054 = vadd.f32 %v10713, %v11010
      %v11055 = vadd.f32 %v10714, %v11015
      %v11056 = vadd.f32 %v10715, %v11018
      %v11057 = vld [vmem:[#allocation3 + $0xa0] sm:$0x3f]
      %s11058 = scalar_lea.vmem %s6, 128
      %v11059 = vld [vmem:[%s11058] sm:$0xf]
      %v11060 = vld [vmem:[%s11058 + $0x4] sm:$0xf]
      %v11061 = vld [vmem:[%s11058 + $0x8] sm:$0xf]
      %v11062 = vld [vmem:[%s11058 + $0xc] sm:$0xf]
      %v11064 = vshrl.u32 %v10716, 16
      %v11066 = vrot.slane %v11064, 5
      %v11067 = vshll.u32 %v10716, 16
      %v11069 = vrot.slane %v11067, 6
      %v11070 = vor.u32 %v11066, %v11069
      %v11071 = vrot.slane %v10276, 5
      %v11072 = vrot.slane %v10279, 6
      %v11073 = vor.u32 %v11071, %v11072
      %v11074 = vsel %vm7338, %v11070, %v11073
      %v11075 = vrot.slane %v10285, 5
      %v11076 = vrot.slane %v10288, 6
      %v11077 = vor.u32 %v11075, %v11076
      %v11078 = vsel %vm7338, %v11073, %v11077
      %v11079 = vrot.slane %v10294, 5
      %v11080 = vrot.slane %v10297, 6
      %v11081 = vor.u32 %v11079, %v11080
      %v11082 = vsel %vm7338, %v11077, %v11081
      %v11083 = vrot.slane %v10303, 5
      %v11084 = vrot.slane %v10306, 6
      %v11085 = vor.u32 %v11083, %v11084
      %v11086 = vsel %vm7338, %v11081, %v11085
      %v11087 = vrot.slane %v10312, 5
      %v11088 = vrot.slane %v10315, 6
      %v11089 = vor.u32 %v11087, %v11088
      %v11090 = vsel %vm7338, %v11085, %v11089
      %v11091 = vrot.slane %v10321, 5
      %v11092 = vrot.slane %v10324, 6
      %v11093 = vor.u32 %v11091, %v11092
      %v11094 = vsel %vm7338, %v11089, %v11093
      %v11095 = vrot.slane %v10330, 5
      %v11096 = vrot.slane %v10333, 6
      %v11097 = vor.u32 %v11095, %v11096
      %v11098 = vsel %vm7338, %v11093, %v11097
      %v11099 = vrot.slane %v10339, 5
      %v11100 = vrot.slane %v10342, 6
      %v11101 = vor.u32 %v11099, %v11100
      %v11102 = vsel %vm7338, %v11097, %v11101
      %v11103 = vrot.slane %v10348, 5
      %v11104 = vrot.slane %v10351, 6
      %v11105 = vor.u32 %v11103, %v11104
      %v11106 = vsel %vm7338, %v11101, %v11105
      %v11107 = vrot.slane %v10357, 5
      %v11108 = vrot.slane %v10360, 6
      %v11109 = vor.u32 %v11107, %v11108
      %v11110 = vsel %vm7338, %v11105, %v11109
      %v11111 = vrot.slane %v10366, 5
      %v11112 = vrot.slane %v10369, 6
      %v11113 = vor.u32 %v11111, %v11112
      %v11114 = vsel %vm7338, %v11109, %v11113
      %v11115 = vrot.slane %v10375, 5
      %v11116 = vrot.slane %v10378, 6
      %v11117 = vor.u32 %v11115, %v11116
      %v11118 = vsel %vm7338, %v11113, %v11117
      %v11119 = vrot.slane %v10384, 5
      %v11120 = vrot.slane %v10387, 6
      %v11121 = vor.u32 %v11119, %v11120
      %v11122 = vsel %vm7338, %v11117, %v11121
      %v11123 = vrot.slane %v10393, 5
      %v11124 = vrot.slane %v10396, 6
      %v11125 = vor.u32 %v11123, %v11124
      %v11126 = vsel %vm7338, %v11121, %v11125
      %v11127 = vrot.slane %v10402, 5
      %v11128 = vrot.slane %v10405, 6
      %v11129 = vor.u32 %v11127, %v11128
      %v11130 = vsel %vm7338, %v11125, %v11129
      %v11131 = vrot.slane %v10411, 5
      %v11132 = vrot.slane %v10414, 6
      %v11133 = vor.u32 %v11131, %v11132
      %v11134 = vsel %vm7338, %v11129, %v11133
      %v11135 = vrot.slane %v10420, 5
      %v11136 = vrot.slane %v10423, 6
      %v11137 = vor.u32 %v11135, %v11136
      %v11138 = vsel %vm7338, %v11133, %v11137
      %v11140 = vshrl.u32 %v11057, 16
      %v11142 = vrot.slane %v11140, 5
      %v11143 = vshll.u32 %v11057, 16
      %v11145 = vrot.slane %v11143, 6
      %v11146 = vor.u32 %v11142, %v11145
      %v11147 = vsel %vm7338, %v11137, %v11146
      %v11152 = vunpack.c.l.b16 %v11059
      %v11153 = vunpack.c.l.b16 %v11060
      %v11154 = vunpack.c.l.b16 %v11061
      %v11155 = vunpack.c.l.b16 %v11062
      %v11156 = vpack.c.b16 %v11153, %v11152
      %v11157 = vpack.c.b16 %v11155, %v11154
      %v11161 = vsel %vm3870, %v11074, 0
      %v11164 = vsel %vm3870, %v11078, 0
      %v11167 = vsel %vm3870, %v11082, 0
      %v11170 = vsel %vm3870, %v11086, 0
      %v11173 = vsel %vm3870, %v11090, 0
      %v11176 = vsel %vm3870, %v11094, 0
      %v11179 = vsel %vm3870, %v11098, 0
      %v11182 = vsel %vm3870, %v11102, 0
      %v11185 = vsel %vm3870, %v11106, 0
      %v11188 = vsel %vm3870, %v11110, 0
      %v11191 = vsel %vm3870, %v11114, 0
      %v11194 = vsel %vm3870, %v11118, 0
      %v11197 = vsel %vm3870, %v11122, 0
      %v11200 = vsel %vm3870, %v11126, 0
      %v11203 = vsel %vm3870, %v11130, 0
      %v11206 = vsel %vm3870, %v11134, 0
      %v11209 = vsel %vm3870, %v11138, 0
      %v11212 = vsel %vm3870, %v11147, 0
      %11214 = vmatprep.subr.bf16.mxu0 0
      %11215 = vmatpush1.bf16.msra.mxu0 %v11156
      %11216 = vmatprep.subr.bf16.mxu0 0
      %11217 = vmatpush1.bf16.msra.mxu0 %v11157
      %11218 = vmatprep.subr.bf16.mxu0 0
      %11219 = vmatpush1.bf16.msra.mxu0 0
      %11220 = vmatprep.subr.bf16.mxu0 0
      %11221 = vmatpush1.bf16.msra.mxu0 0
      %11222 = vmatprep.subr.bf16.mxu0 0
      %11223 = vmatpush1.bf16.msra.mxu0 0
      %11224 = vmatprep.subr.bf16.mxu0 0
      %11225 = vmatpush1.bf16.msra.mxu0 0
      %11226 = vmatprep.subr.bf16.mxu0 0
      %11227 = vmatpush1.bf16.msra.mxu0 0
      %11228 = vmatprep.subr.bf16.mxu0 0
      %11229 = vmatpush1.bf16.msra.mxu0 0
      %11230 = vmatprep.subr.bf16.mxu0 0
      %11231 = vmatpush1.bf16.msra.mxu0 0
      %11232 = vmatprep.subr.bf16.mxu0 0
      %11233 = vmatpush1.bf16.msra.mxu0 0
      %11234 = vmatprep.subr.bf16.mxu0 0
      %11235 = vmatpush1.bf16.msra.mxu0 0
      %11236 = vmatprep.subr.bf16.mxu0 0
      %11237 = vmatpush1.bf16.msra.mxu0 0
      %11238 = vmatprep.subr.bf16.mxu0 0
      %11239 = vmatpush1.bf16.msra.mxu0 0
      %11240 = vmatprep.subr.bf16.mxu0 0
      %11241 = vmatpush1.bf16.msra.mxu0 0
      %11242 = vmatprep.subr.bf16.mxu0 0
      %11243 = vmatpush1.bf16.msra.mxu0 0
      %11244 = vmatprep.subr.bf16.mxu0 0
      %11245 = vmatpush1.bf16.msra.mxu0 0
      %11246 = vmatprep.mubr.bf16.mxu0 0
      %11247 = vmatmul.mubr.bf16.gmra.mrb[0].mxu0 %v11161
      %v11248 = vpop.f32.mrb[0].mxu0
      %v11249 = vadd.f32 0.0, %v11248
      %v11250 = vpop.f32.mrb[0].mxu0
      %v11251 = vpop.f32.mrb[0].mxu0
      %v11252 = vadd.f32 0.0, %v11251
      %v11253 = vpop.f32.mrb[0].mxu0
      %11254 = vmatprep.mubr.bf16.mxu0 0
      %11255 = vmatmul.mubr.bf16.gmra.mrb[0].mxu0 %v11164
      %v11256 = vpop.f32.mrb[0].mxu0
      %v11257 = vadd.f32 0.0, %v11256
      %v11258 = vpop.f32.mrb[0].mxu0
      %v11259 = vpop.f32.mrb[0].mxu0
      %v11260 = vadd.f32 0.0, %v11259
      %v11261 = vpop.f32.mrb[0].mxu0
      %11262 = vmatprep.mubr.bf16.mxu0 0
      %11263 = vmatmul.mubr.bf16.gmra.mrb[0].mxu0 %v11167
      %v11264 = vpop.f32.mrb[0].mxu0
      %v11265 = vadd.f32 0.0, %v11264
      %v11266 = vpop.f32.mrb[0].mxu0
      %v11267 = vpop.f32.mrb[0].mxu0
      %v11268 = vadd.f32 0.0, %v11267
      %v11269 = vpop.f32.mrb[0].mxu0
      %11270 = vmatprep.mubr.bf16.mxu0 0
      %11271 = vmatmul.mubr.bf16.gmra.mrb[0].mxu0 %v11170
      %v11272 = vpop.f32.mrb[0].mxu0
      %v11273 = vadd.f32 0.0, %v11272
      %v11274 = vpop.f32.mrb[0].mxu0
      %v11275 = vpop.f32.mrb[0].mxu0
      %v11276 = vadd.f32 0.0, %v11275
      %v11277 = vpop.f32.mrb[0].mxu0
      %11278 = vmatprep.mubr.bf16.mxu0 0
      %11279 = vmatmul.mubr.bf16.gmra.mrb[0].mxu0 %v11173
      %v11280 = vpop.f32.mrb[0].mxu0
      %v11281 = vadd.f32 0.0, %v11280
      %v11282 = vpop.f32.mrb[0].mxu0
      %v11283 = vpop.f32.mrb[0].mxu0
      %v11284 = vadd.f32 0.0, %v11283
      %v11285 = vpop.f32.mrb[0].mxu0
      %11286 = vmatprep.mubr.bf16.mxu0 0
      %11287 = vmatmul.mubr.bf16.gmra.mrb[0].mxu0 %v11176
      %v11288 = vpop.f32.mrb[0].mxu0
      %v11289 = vadd.f32 0.0, %v11288
      %v11290 = vpop.f32.mrb[0].mxu0
      %v11291 = vpop.f32.mrb[0].mxu0
      %v11292 = vadd.f32 0.0, %v11291
      %v11293 = vpop.f32.mrb[0].mxu0
      %11294 = vmatprep.mubr.bf16.mxu0 0
      %11295 = vmatmul.mubr.bf16.gmra.mrb[0].mxu0 %v11179
      %v11296 = vpop.f32.mrb[0].mxu0
      %v11297 = vadd.f32 0.0, %v11296
      %v11298 = vpop.f32.mrb[0].mxu0
      %v11299 = vpop.f32.mrb[0].mxu0
      %v11300 = vadd.f32 0.0, %v11299
      %v11301 = vpop.f32.mrb[0].mxu0
      %11302 = vmatprep.mubr.bf16.mxu0 0
      %11303 = vmatmul.mubr.bf16.gmra.mrb[0].mxu0 %v11182
      %v11304 = vpop.f32.mrb[0].mxu0
      %v11305 = vadd.f32 0.0, %v11304
      %v11306 = vpop.f32.mrb[0].mxu0
      %v11307 = vpop.f32.mrb[0].mxu0
      %v11308 = vadd.f32 0.0, %v11307
      %v11309 = vpop.f32.mrb[0].mxu0
      %11310 = vmatprep.mubr.bf16.mxu0 0
      %11311 = vmatmul.mubr.bf16.gmra.mrb[0].mxu0 %v11185
      %v11312 = vpop.f32.mrb[0].mxu0
      %v11313 = vadd.f32 0.0, %v11312
      %v11314 = vpop.f32.mrb[0].mxu0
      %v11315 = vpop.f32.mrb[0].mxu0
      %v11316 = vadd.f32 0.0, %v11315
      %v11317 = vpop.f32.mrb[0].mxu0
      %11318 = vmatprep.mubr.bf16.mxu0 0
      %11319 = vmatmul.mubr.bf16.gmra.mrb[0].mxu0 %v11188
      %v11320 = vpop.f32.mrb[0].mxu0
      %v11321 = vadd.f32 0.0, %v11320
      %v11322 = vpop.f32.mrb[0].mxu0
      %v11323 = vpop.f32.mrb[0].mxu0
      %v11324 = vadd.f32 0.0, %v11323
      %v11325 = vpop.f32.mrb[0].mxu0
      %11326 = vmatprep.mubr.bf16.mxu0 0
      %11327 = vmatmul.mubr.bf16.gmra.mrb[0].mxu0 %v11191
      %v11328 = vpop.f32.mrb[0].mxu0
      %v11329 = vadd.f32 0.0, %v11328
      %v11330 = vpop.f32.mrb[0].mxu0
      %v11331 = vpop.f32.mrb[0].mxu0
      %v11332 = vadd.f32 0.0, %v11331
      %v11333 = vpop.f32.mrb[0].mxu0
      %11334 = vmatprep.mubr.bf16.mxu0 0
      %11335 = vmatmul.mubr.bf16.gmra.mrb[0].mxu0 %v11194
      %v11336 = vpop.f32.mrb[0].mxu0
      %v11337 = vadd.f32 0.0, %v11336
      %v11338 = vpop.f32.mrb[0].mxu0
      %v11339 = vpop.f32.mrb[0].mxu0
      %v11340 = vadd.f32 0.0, %v11339
      %v11341 = vpop.f32.mrb[0].mxu0
      %11342 = vmatprep.mubr.bf16.mxu0 0
      %11343 = vmatmul.mubr.bf16.gmra.mrb[0].mxu0 %v11197
      %v11344 = vpop.f32.mrb[0].mxu0
      %v11345 = vadd.f32 0.0, %v11344
      %v11346 = vpop.f32.mrb[0].mxu0
      %v11347 = vpop.f32.mrb[0].mxu0
      %v11348 = vadd.f32 0.0, %v11347
      %v11349 = vpop.f32.mrb[0].mxu0
      %11350 = vmatprep.mubr.bf16.mxu0 0
      %11351 = vmatmul.mubr.bf16.gmra.mrb[0].mxu0 %v11200
      %v11352 = vpop.f32.mrb[0].mxu0
      %v11353 = vadd.f32 0.0, %v11352
      %v11354 = vpop.f32.mrb[0].mxu0
      %v11355 = vpop.f32.mrb[0].mxu0
      %v11356 = vadd.f32 0.0, %v11355
      %v11357 = vpop.f32.mrb[0].mxu0
      %11358 = vmatprep.mubr.bf16.mxu0 0
      %11359 = vmatmul.mubr.bf16.gmra.mrb[0].mxu0 %v11203
      %v11360 = vpop.f32.mrb[0].mxu0
      %v11361 = vadd.f32 0.0, %v11360
      %v11362 = vpop.f32.mrb[0].mxu0
      %v11363 = vpop.f32.mrb[0].mxu0
      %v11364 = vadd.f32 0.0, %v11363
      %v11365 = vpop.f32.mrb[0].mxu0
      %11366 = vmatprep.mubr.bf16.mxu0 0
      %11367 = vmatmul.mubr.bf16.gmra.mrb[0].mxu0 %v11206
      %v11368 = vpop.f32.mrb[0].mxu0
      %v11369 = vadd.f32 0.0, %v11368
      %v11370 = vpop.f32.mrb[0].mxu0
      %v11371 = vpop.f32.mrb[0].mxu0
      %v11372 = vadd.f32 0.0, %v11371
      %v11373 = vpop.f32.mrb[0].mxu0
      %11374 = vmatprep.mubr.bf16.mxu0 0
      %11375 = vmatmul.mubr.bf16.gmra.mrb[0].mxu0 %v11209
      %v11376 = vpop.f32.mrb[0].mxu0
      %v11377 = vadd.f32 0.0, %v11376
      %v11378 = vpop.f32.mrb[0].mxu0
      %v11379 = vpop.f32.mrb[0].mxu0
      %v11380 = vadd.f32 0.0, %v11379
      %v11381 = vpop.f32.mrb[0].mxu0
      %11382 = vmatprep.mubr.bf16.mxu0 0
      %11383 = vmatmul.mubr.bf16.gmra.mrb[0].mxu0 %v11212
      %v11384 = vpop.f32.mrb[0].mxu0
      %v11385 = vadd.f32 0.0, %v11384
      %v11386 = vpop.f32.mrb[0].mxu0
      %v11387 = vpop.f32.mrb[0].mxu0
      %v11388 = vadd.f32 0.0, %v11387
      %v11389 = vpop.f32.mrb[0].mxu0
      %11390 = vdwg.mxu0
      %v11391 = vadd.f32 %v11021, %v11249
      %v11392 = vadd.f32 %v11022, %v11252
      %v11393 = vadd.f32 %v11023, %v11257
      %v11394 = vadd.f32 %v11024, %v11260
      %v11395 = vadd.f32 %v11025, %v11265
      %v11396 = vadd.f32 %v11026, %v11268
      %v11397 = vadd.f32 %v11027, %v11273
      %v11398 = vadd.f32 %v11028, %v11276
      %v11399 = vadd.f32 %v11029, %v11281
      %v11400 = vadd.f32 %v11030, %v11284
      %v11401 = vadd.f32 %v11031, %v11289
      %v11402 = vadd.f32 %v11032, %v11292
      %v11403 = vadd.f32 %v11033, %v11297
      %v11404 = vadd.f32 %v11034, %v11300
      %v11405 = vadd.f32 %v11035, %v11305
      %v11406 = vadd.f32 %v11036, %v11308
      %v11407 = vadd.f32 %v11037, %v11313
      %v11408 = vadd.f32 %v11038, %v11316
      %v11409 = vadd.f32 %v11039, %v11321
      %v11410 = vadd.f32 %v11040, %v11324
      %v11411 = vadd.f32 %v11041, %v11329
      %v11412 = vadd.f32 %v11042, %v11332
      %v11413 = vadd.f32 %v11043, %v11337
      %v11414 = vadd.f32 %v11044, %v11340
      %v11415 = vadd.f32 %v11045, %v11345
      %v11416 = vadd.f32 %v11046, %v11348
      %v11417 = vadd.f32 %v11047, %v11353
      %v11418 = vadd.f32 %v11048, %v11356
      %v11419 = vadd.f32 %v11049, %v11361
      %v11420 = vadd.f32 %v11050, %v11364
      %v11421 = vadd.f32 %v11051, %v11369
      %v11422 = vadd.f32 %v11052, %v11372
      %v11423 = vadd.f32 %v11053, %v11377
      %v11424 = vadd.f32 %v11054, %v11380
      %v11425 = vadd.f32 %v11055, %v11385
      %v11426 = vadd.f32 %v11056, %v11388
      %v11427 = vld [vmem:[%s7] sm:$0x1]
      %v11429 = vlaneseq
      %v11430 = vshrl.u32 %v11429, 7
      %v11431 = vsub.s32 0, %v11430
      %v11432 = vrot.slane %v11427, %v11431
      %v11434 = vadd.f32 %v11391, %v11432
      %v11435 = vadd.f32 %v11392, %v11432
      %v11436 = vadd.f32 %v11393, %v11432
      %v11437 = vadd.f32 %v11394, %v11432
      %v11438 = vadd.f32 %v11395, %v11432
      %v11439 = vadd.f32 %v11396, %v11432
      %v11440 = vadd.f32 %v11397, %v11432
      %v11441 = vadd.f32 %v11398, %v11432
      %v11442 = vadd.f32 %v11399, %v11432
      %v11443 = vadd.f32 %v11400, %v11432
      %v11444 = vadd.f32 %v11401, %v11432
      %v11445 = vadd.f32 %v11402, %v11432
      %v11446 = vadd.f32 %v11403, %v11432
      %v11447 = vadd.f32 %v11404, %v11432
      %v11448 = vadd.f32 %v11405, %v11432
      %v11449 = vadd.f32 %v11406, %v11432
      %v11450 = vadd.f32 %v11407, %v11432
      %v11451 = vadd.f32 %v11408, %v11432
      %v11452 = vadd.f32 %v11409, %v11432
      %v11453 = vadd.f32 %v11410, %v11432
      %v11454 = vadd.f32 %v11411, %v11432
      %v11455 = vadd.f32 %v11412, %v11432
      %v11456 = vadd.f32 %v11413, %v11432
      %v11457 = vadd.f32 %v11414, %v11432
      %v11458 = vadd.f32 %v11415, %v11432
      %v11459 = vadd.f32 %v11416, %v11432
      %v11460 = vadd.f32 %v11417, %v11432
      %v11461 = vadd.f32 %v11418, %v11432
      %v11462 = vadd.f32 %v11419, %v11432
      %v11463 = vadd.f32 %v11420, %v11432
      %v11464 = vadd.f32 %v11421, %v11432
      %v11465 = vadd.f32 %v11422, %v11432
      %v11466 = vadd.f32 %v11423, %v11432
      %v11467 = vadd.f32 %v11424, %v11432
      %v11468 = vadd.f32 %v11425, %v11432
      %v11469 = vadd.f32 %v11426, %v11432
      %v11470 = vmax.f32 %v11434, 0.0
      %v11471 = vmax.f32 %v11435, 0.0
      %v11472 = vmax.f32 %v11436, 0.0
      %v11473 = vmax.f32 %v11437, 0.0
      %v11474 = vmax.f32 %v11438, 0.0
      %v11475 = vmax.f32 %v11439, 0.0
      %v11476 = vmax.f32 %v11440, 0.0
      %v11477 = vmax.f32 %v11441, 0.0
      %v11478 = vmax.f32 %v11442, 0.0
      %v11479 = vmax.f32 %v11443, 0.0
      %v11480 = vmax.f32 %v11444, 0.0
      %v11481 = vmax.f32 %v11445, 0.0
      %v11482 = vmax.f32 %v11446, 0.0
      %v11483 = vmax.f32 %v11447, 0.0
      %v11484 = vmax.f32 %v11448, 0.0
      %v11485 = vmax.f32 %v11449, 0.0
      %v11486 = vmax.f32 %v11450, 0.0
      %v11487 = vmax.f32 %v11451, 0.0
      %v11488 = vmax.f32 %v11452, 0.0
      %v11489 = vmax.f32 %v11453, 0.0
      %v11490 = vmax.f32 %v11454, 0.0
      %v11491 = vmax.f32 %v11455, 0.0
      %v11492 = vmax.f32 %v11456, 0.0
      %v11493 = vmax.f32 %v11457, 0.0
      %v11494 = vmax.f32 %v11458, 0.0
      %v11495 = vmax.f32 %v11459, 0.0
      %v11496 = vmax.f32 %v11460, 0.0
      %v11497 = vmax.f32 %v11461, 0.0
      %v11498 = vmax.f32 %v11462, 0.0
      %v11499 = vmax.f32 %v11463, 0.0
      %v11500 = vmax.f32 %v11464, 0.0
      %v11501 = vmax.f32 %v11465, 0.0
      %v11502 = vmax.f32 %v11466, 0.0
      %v11503 = vmax.f32 %v11467, 0.0
      %v11504 = vmax.f32 %v11468, 0.0
      %v11505 = vmax.f32 %v11469, 0.0
      %v11506 = vpack.c.bf16 %v11471, %v11470
      %v11507 = vpack.c.bf16 %v11473, %v11472
      %v11508 = vpack.c.bf16 %v11475, %v11474
      %v11509 = vpack.c.bf16 %v11477, %v11476
      %v11510 = vpack.c.bf16 %v11479, %v11478
      %v11511 = vpack.c.bf16 %v11481, %v11480
      %v11512 = vpack.c.bf16 %v11483, %v11482
      %v11513 = vpack.c.bf16 %v11485, %v11484
      %v11514 = vpack.c.bf16 %v11487, %v11486
      %v11515 = vpack.c.bf16 %v11489, %v11488
      %v11516 = vpack.c.bf16 %v11491, %v11490
      %v11517 = vpack.c.bf16 %v11493, %v11492
      %v11518 = vpack.c.bf16 %v11495, %v11494
      %v11519 = vpack.c.bf16 %v11497, %v11496
      %v11520 = vpack.c.bf16 %v11499, %v11498
      %v11521 = vpack.c.bf16 %v11501, %v11500
      %v11522 = vpack.c.bf16 %v11503, %v11502
      %v11523 = vpack.c.bf16 %v11505, %v11504
      %v11542 = vunpack.c.l.b16 %v11506
      %v11543 = vunpack.c.h.b16 %v11506
      %v11544 = vunpack.c.l.b16 %v11507
      %v11545 = vunpack.c.h.b16 %v11507
      %v11546 = vunpack.c.l.b16 %v11508
      %v11547 = vunpack.c.h.b16 %v11508
      %v11548 = vunpack.c.l.b16 %v11509
      %v11549 = vunpack.c.h.b16 %v11509
      %v11550 = vunpack.c.l.b16 %v11510
      %v11551 = vunpack.c.h.b16 %v11510
      %v11552 = vunpack.c.l.b16 %v11511
      %v11553 = vunpack.c.h.b16 %v11511
      %v11554 = vunpack.c.l.b16 %v11512
      %v11555 = vunpack.c.h.b16 %v11512
      %v11556 = vunpack.c.l.b16 %v11513
      %v11557 = vunpack.c.h.b16 %v11513
      %v11558 = vunpack.c.l.b16 %v11514
      %v11559 = vunpack.c.h.b16 %v11514
      %v11560 = vunpack.c.l.b16 %v11515
      %v11561 = vunpack.c.h.b16 %v11515
      %v11562 = vunpack.c.l.b16 %v11516
      %v11563 = vunpack.c.h.b16 %v11516
      %v11564 = vunpack.c.l.b16 %v11517
      %v11565 = vunpack.c.h.b16 %v11517
      %v11566 = vunpack.c.l.b16 %v11518
      %v11567 = vunpack.c.h.b16 %v11518
      %v11568 = vunpack.c.l.b16 %v11519
      %v11569 = vunpack.c.h.b16 %v11519
      %v11570 = vunpack.c.l.b16 %v11520
      %v11571 = vunpack.c.h.b16 %v11520
      %v11572 = vunpack.c.l.b16 %v11521
      %v11573 = vunpack.c.h.b16 %v11521
      %v11574 = vunpack.c.l.b16 %v11522
      %v11575 = vunpack.c.h.b16 %v11522
      %v11576 = vunpack.c.l.b16 %v11523
      %v11577 = vunpack.c.h.b16 %v11523
      %v11578 = vpack.c.b16 %v11542, %v11542
      %v11579 = vpack.c.b16 %v11543, %v11543
      %v11580 = vpack.c.b16 %v11544, %v11544
      %v11581 = vpack.c.b16 %v11545, %v11545
      %v11582 = vpack.c.b16 %v11546, %v11546
      %v11583 = vpack.c.b16 %v11547, %v11547
      %v11584 = vpack.c.b16 %v11548, %v11548
      %v11585 = vpack.c.b16 %v11549, %v11549
      %v11586 = vpack.c.b16 %v11550, %v11550
      %v11587 = vpack.c.b16 %v11551, %v11551
      %v11588 = vpack.c.b16 %v11552, %v11552
      %v11589 = vpack.c.b16 %v11553, %v11553
      %v11590 = vpack.c.b16 %v11554, %v11554
      %v11591 = vpack.c.b16 %v11555, %v11555
      %v11592 = vpack.c.b16 %v11556, %v11556
      %v11593 = vpack.c.b16 %v11557, %v11557
      %v11594 = vpack.c.b16 %v11558, %v11558
      %v11595 = vpack.c.b16 %v11559, %v11559
      %v11596 = vpack.c.b16 %v11560, %v11560
      %v11597 = vpack.c.b16 %v11561, %v11561
      %v11598 = vpack.c.b16 %v11562, %v11562
      %v11599 = vpack.c.b16 %v11563, %v11563
      %v11600 = vpack.c.b16 %v11564, %v11564
      %v11601 = vpack.c.b16 %v11565, %v11565
      %v11602 = vpack.c.b16 %v11566, %v11566
      %v11603 = vpack.c.b16 %v11567, %v11567
      %v11604 = vpack.c.b16 %v11568, %v11568
      %v11605 = vpack.c.b16 %v11569, %v11569
      %v11606 = vpack.c.b16 %v11570, %v11570
      %v11607 = vpack.c.b16 %v11571, %v11571
      %v11608 = vpack.c.b16 %v11572, %v11572
      %v11609 = vpack.c.b16 %v11573, %v11573
      %v11610 = vpack.c.b16 %v11574, %v11574
      %v11611 = vpack.c.b16 %v11575, %v11575
      %v11612 = vpack.c.b16 %v11576, %v11576
      %v11613 = vpack.c.b16 %v11577, %v11577
      %11650 = vst.msk [vmem:[%s305] sm:$0xf] %vm4218, %v11578
      %11651 = vst.msk [vmem:[%s305 + $0x4] sm:$0xf] %vm4218, %v11579
      %11652 = vst.msk [vmem:[%s305 + $0x8] sm:$0xf] %vm4218, %v11580
      %11653 = vst.msk [vmem:[%s305 + $0xc] sm:$0xf] %vm4218, %v11581
      %11654 = vst.msk [vmem:[%s305 + $0x10] sm:$0xf] %vm4218, %v11582
      %11655 = vst.msk [vmem:[%s305 + $0x14] sm:$0xf] %vm4218, %v11583
      %11656 = vst.msk [vmem:[%s305 + $0x18] sm:$0xf] %vm4218, %v11584
      %11657 = vst.msk [vmem:[%s305 + $0x1c] sm:$0xf] %vm4218, %v11585
      %11658 = vst.msk [vmem:[%s305 + $0x20] sm:$0xf] %vm4218, %v11586
      %11659 = vst.msk [vmem:[%s305 + $0x24] sm:$0xf] %vm4218, %v11587
      %11660 = vst.msk [vmem:[%s305 + $0x28] sm:$0xf] %vm4218, %v11588
      %11661 = vst.msk [vmem:[%s305 + $0x2c] sm:$0xf] %vm4218, %v11589
      %11662 = vst.msk [vmem:[%s305 + $0x30] sm:$0xf] %vm4218, %v11590
      %11663 = vst.msk [vmem:[%s305 + $0x34] sm:$0xf] %vm4218, %v11591
      %11664 = vst.msk [vmem:[%s305 + $0x38] sm:$0xf] %vm4218, %v11592
      %11665 = vst.msk [vmem:[%s305 + $0x3c] sm:$0xf] %vm4218, %v11593
      %11666 = vst.msk [vmem:[%s305 + $0x40] sm:$0xf] %vm4218, %v11594
      %11667 = vst.msk [vmem:[%s305 + $0x44] sm:$0xf] %vm4218, %v11595
      %11668 = vst.msk [vmem:[%s305 + $0x48] sm:$0xf] %vm4218, %v11596
      %11669 = vst.msk [vmem:[%s305 + $0x4c] sm:$0xf] %vm4218, %v11597
      %11670 = vst.msk [vmem:[%s305 + $0x50] sm:$0xf] %vm4218, %v11598
      %11671 = vst.msk [vmem:[%s305 + $0x54] sm:$0xf] %vm4218, %v11599
      %11672 = vst.msk [vmem:[%s305 + $0x58] sm:$0xf] %vm4218, %v11600
      %11673 = vst.msk [vmem:[%s305 + $0x5c] sm:$0xf] %vm4218, %v11601
      %11674 = vst.msk [vmem:[%s305 + $0x60] sm:$0xf] %vm4218, %v11602
      %11675 = vst.msk [vmem:[%s305 + $0x64] sm:$0xf] %vm4218, %v11603
      %11676 = vst.msk [vmem:[%s305 + $0x68] sm:$0xf] %vm4218, %v11604
      %11677 = vst.msk [vmem:[%s305 + $0x6c] sm:$0xf] %vm4218, %v11605
      %11678 = vst.msk [vmem:[%s305 + $0x70] sm:$0xf] %vm4218, %v11606
      %11679 = vst.msk [vmem:[%s305 + $0x74] sm:$0xf] %vm4218, %v11607
      %11680 = vst.msk [vmem:[%s305 + $0x78] sm:$0xf] %vm4218, %v11608
      %11681 = vst.msk [vmem:[%s305 + $0x7c] sm:$0xf] %vm4218, %v11609
      %11682 = vst.msk [vmem:[%s305 + $0x80] sm:$0xf] %vm4218, %v11610
      %11683 = vst.msk [vmem:[%s305 + $0x84] sm:$0xf] %vm4218, %v11611
      %11684 = vst.msk [vmem:[%s305 + $0x88] sm:$0xf] %vm4218, %v11612
      %11685 = vst.msk [vmem:[%s305 + $0x8c] sm:$0xf] %vm4218, %v11613
      %p11686 = scmp.lt.s32.totalorder %s19, 1
      %s11687 = scalar_select %p11686, %s19, 1
      %s11688 = smul.addr %s11687, 36
      %s11689 = smul.addr %s11688, 4
      %s11690 = scalar_lea.vmem %s8, %s11689
      // Predicated region
      $region53: #{feature_extraction_forward.1} parent=51 // pred_check
        %p11691 = pneg %p210
      $region54: #{feature_extraction_forward.1} parent=51 // pred_check_branch
        %11693 = sbr.rel (%p11691) target = $region56
      $region55: #{feature_extraction_forward.1} parent=51 // pred_region
        _
      $region56: #{feature_extraction_forward.1} parent=51 // pred_fallthru
        _
    $region52: #{feature_extraction_forward.1} parent=5 // pred_fallthru
      _
    %p11694 = scmp.le.s32.totalorder 2, %s14
    // Predicated region
    $region57: #{feature_extraction_forward.1} parent=5 // pred_check
      %p11695 = pneg %p11694
    $region58: #{feature_extraction_forward.1} parent=5 // pred_check_branch
      %11697 = sbr.rel (%p11695) target = $region60
    $region59: #{feature_extraction_forward.1} parent=5 // pred_region
      %s11698 = ssub.s32 %s14, 2
      // Predicated region
      $region61: #{feature_extraction_forward.1} parent=59 // pred_check
        %p11699 = pneg %p216
      $region62: #{feature_extraction_forward.1} parent=59 // pred_check_branch
        %11701 = sbr.rel (%p11699) target = $region64
      $region63: #{feature_extraction_forward.1} parent=59 // pred_region
        %p11702 = scmp.lt.s32.totalorder %s20, 1
        %s11703 = scalar_select %p11702, %s20, 1
        %s11704 = smul.addr %s11703, 36
        %s11705 = smul.addr %s11704, 4
        %s11706 = scalar_lea.vmem %s8, %s11705
      $region64: #{feature_extraction_forward.1} parent=59 // pred_fallthru
        _
    $region60: #{feature_extraction_forward.1} parent=5 // pred_fallthru
      _
  $region6: #{feature_extraction_forward.1} parent=0 // loop_footer
    %s18 = sadd.s32 1, %s14
  $region7: #{feature_extraction_forward.1} parent=0 // loop_footer_branch
    %13 = sbr.rel target = $region3
  $region8: #{feature_extraction_forward.1} parent=0 // loop_exit
    _

</llo_original>
